<compile_context>
chip_gen: v7x
topology: tpu7x:2x2x1
jax: 0.10.0
libtpu: 0.0.40
codegen_flags: <defaults>
</compile_context>

<pallas_src>
import functools

import jax
import jax.numpy as jnp
from jax.experimental import pallas as pl
from jax.experimental.pallas import tpu as pltpu

BN_EPS = 1e-5


def _round_up(x, m):
    return ((x + m - 1) // m) * m


def _device_kind():
    try:
        return jax.devices()[0].device_kind.lower()
    except Exception:
        return ""


def _default_stem_dtype():
    kind = _device_kind()
    # v6e / v7x have bf16-capable VALUs; v5e and older do not.
    if ("v6" in kind) or ("v7" in kind) or ("7x" in kind):
        return jnp.bfloat16
    return jnp.float32


def _vmem_limit_bytes():
    kind = _device_kind()
    if ("v7" in kind) or ("7x" in kind):
        return 40 << 20   # v7x: 64 MiB physical VMEM -> keep headroom
    return 64 << 20       # v5e / v6e: 128 MiB physical VMEM


# --------------------------------------------------------------------------- #
# Kernel 1: 1x1-conv stem + SiLU + spatial-sum pooling (streamed over HW)
# --------------------------------------------------------------------------- #
def _stem_pool_kernel(x_ref, wstem_ref, bstem_ref, sum_ref, *,
                      n_in_channels, cs, tile_n, n_chunks, chunk):
    j = pl.program_id(1)

    @pl.when(j == 0)
    def _():
        sum_ref[...] = jnp.zeros_like(sum_ref)

    w = wstem_ref[...]        # (C, Cs, 1)  stem dtype
    b = bstem_ref[...]        # (Cs, 1)     stem dtype

    def body(s, part):
        base = pl.multiple_of(s * chunk, chunk)
        xs = x_ref[:, :, pl.ds(base, chunk)]            # (tile_n, C, chunk)
        # 1x1 conv as C broadcast FMAs on the VPU (lane axis = HW).
        h = xs[:, 0:1, :] * w[0][None, :, :]            # (tile_n, Cs, chunk)
        for ci in range(1, n_in_channels):
            h = h + xs[:, ci:ci + 1, :] * w[ci][None, :, :]
        h = (h + b[None, :, :]).astype(jnp.float32)
        h = h * jax.nn.sigmoid(h)                       # SiLU (f32, EUP)
        return part + jnp.sum(h, axis=-1)               # partial spatial sum

    part = jax.lax.fori_loop(
        0, n_chunks, body, jnp.zeros((tile_n, cs), jnp.float32))
    sum_ref[...] += part                                # resident f32 accumulator


# --------------------------------------------------------------------------- #
# Kernel 2: feature projection + classifier head (Linear/BN folded/ReLU x2 + Linear)
# --------------------------------------------------------------------------- #
def _head_kernel(pooled_ref, wproj_ref, bproj_ref,
                 w1_ref, b1_ref, w2_ref, b2_ref, w3_ref, b3_ref, out_ref):
    def mm(a, wgt, bias):
        # bf16 x bf16 MXU matmul, f32 accumulation
        return jnp.dot(a.astype(wgt.dtype), wgt,
                       preferred_element_type=jnp.float32) + bias

    f = mm(pooled_ref[...], wproj_ref[...], bproj_ref[...])
    f = f * jax.nn.sigmoid(f)                                  # SiLU
    # Dropout = identity in eval; BN folded into w/b.
    z = jnp.maximum(mm(f, w1_ref[...], b1_ref[...]), 0.0)      # Linear+BN+ReLU
    z = jnp.maximum(mm(z, w2_ref[...], b2_ref[...]), 0.0)      # Linear+BN+ReLU
    out_ref[...] = mm(z, w3_ref[...], b3_ref[...])             # final Linear


def _prepare_params(p, num_classes, stem_dtype):
    """Fold BN into Linears, cast matmul weights to bf16, pad lane widths to 128."""
    f32, bf16 = jnp.float32, jnp.bfloat16
    c, cs = p["w_stem"].shape
    cs_pad = _round_up(cs, 128)

    s1 = p["g1"] * jax.lax.rsqrt(p["v1"] + BN_EPS)
    s2 = p["g2"] * jax.lax.rsqrt(p["v2"] + BN_EPS)
    w1f = (p["w1"] * s1).astype(bf16)
    b1f = ((p["b1"] - p["m1"]) * s1 + p["beta1"]).astype(f32)
    w2f = (p["w2"] * s2).astype(bf16)
    b2f = ((p["b2"] - p["m2"]) * s2 + p["beta2"]).astype(f32)

    nc_pad = _round_up(num_classes, 128)
    w3p = jnp.zeros((p["w3"].shape[0], nc_pad), bf16)
    w3p = w3p.at[:, :num_classes].set(p["w3"].astype(bf16))
    b3p = jnp.zeros((1, nc_pad), f32).at[:, :num_classes].set(p["b3"].astype(f32))

    nfeat = p["w_proj"].shape[1]
    wprojp = jnp.zeros((cs_pad, nfeat), bf16)
    wprojp = wprojp.at[:cs, :].set(p["w_proj"].astype(bf16))

    return dict(
        wstem=p["w_stem"].reshape(c, cs, 1).astype(stem_dtype),
        bstem=p["b_stem"].reshape(cs, 1).astype(stem_dtype),
        wproj=wprojp,
        bproj=p["b_proj"].astype(f32),
        w1=w1f, b1=b1f, w2=w2f, b2=b2f, w3=w3p, b3=b3p,
        cs=cs, cs_pad=cs_pad, nc_pad=nc_pad,
    )


def improved_pokemon_classifier_forward(x_nchw, params, *, tile_n=8,
                                        tile_hw=None, tile_m=None,
                                        hw_chunk=128, stem_dtype=None):
    """x_nchw: (N, C, H, W) float32. Returns logits (N, num_classes)."""
    n, c, h, w = x_nchw.shape
    hw = h * w
    num_classes = params["w3"].shape[1]
    cs = params["w_stem"].shape[1]

    if stem_dtype is None:
        stem_dtype = _default_stem_dtype()
    vmem_limit = _vmem_limit_bytes()

    prep = _prepare_params(params, num_classes, stem_dtype)
    cs_pad, nc_pad = prep["cs_pad"], prep["nc_pad"]

    # ---- spatial tiling (lane axis = HW); pad HW up to a tile boundary ------
    if tile_hw is None:
        tile_hw = 2048 if hw >= 2048 else _round_up(hw, hw_chunk)
    tile_hw = _round_up(tile_hw, hw_chunk)
    hw_pad = _round_up(hw, tile_hw)
    chunk = min(hw_chunk, tile_hw)
    n_chunks = tile_hw // chunk

    n_pad = _round_up(n, tile_n)
    # Free reshape: HW stays the lane-dense last axis (no NHWC transpose pass).
    x = x_nchw.reshape(n, c, hw).astype(stem_dtype)
    x = jnp.pad(x, ((0, n_pad - n), (0, 0), (0, hw_pad - hw)))

    grid = (n_pad // tile_n, hw_pad // tile_hw)

    stem_kernel = functools.partial(
        _stem_pool_kernel, n_in_channels=c, cs=cs, tile_n=tile_n,
        n_chunks=n_chunks, chunk=chunk)

    pool_sum = pl.pallas_call(
        stem_kernel,
        out_shape=jax.ShapeDtypeStruct((n_pad, cs), jnp.float32),
        grid=grid,
        in_specs=[
            pl.BlockSpec((tile_n, c, tile_hw), lambda i, j: (i, 0, j)),
            pl.BlockSpec(prep["wstem"].shape, lambda i, j: (0, 0, 0)),
            pl.BlockSpec(prep["bstem"].shape, lambda i, j: (0, 0)),
        ],
        out_specs=pl.BlockSpec((tile_n, cs), lambda i, j: (i, 0)),
        compiler_params=pltpu.CompilerParams(
            dimension_semantics=("parallel", "arbitrary"),
            vmem_limit_bytes=vmem_limit,
        ),
    )(x, prep["wstem"], prep["bstem"])

    # Zero-padded pixels each contribute exactly silu(bias); subtract, then mean.
    if hw_pad != hw:
        b32 = params["b_stem"].astype(stem_dtype).astype(jnp.float32)   # (1, cs)
        pad_contrib = b32 * jax.nn.sigmoid(b32)
        pool_sum = pool_sum - pad_contrib * float(hw_pad - hw)
    pooled = pool_sum * (1.0 / float(hw))                                # (n_pad, cs)

    # ---- classifier head: big-M batch tiles, full-lane (128) feature width --
    if tile_m is None:
        tile_m = min(128, n_pad)
    n_head = _round_up(n_pad, tile_m)
    pooled = jnp.pad(pooled, ((0, n_head - n_pad), (0, cs_pad - cs)))

    def wspec(arr):   # resident weight/bias: constant block index, DMA'd once
        return pl.BlockSpec(arr.shape, lambda i: (0, 0))

    logits = pl.pallas_call(
        _head_kernel,
        out_shape=jax.ShapeDtypeStruct((n_head, nc_pad), jnp.float32),
        grid=(n_head // tile_m,),
        in_specs=[
            pl.BlockSpec((tile_m, cs_pad), lambda i: (i, 0)),
            wspec(prep["wproj"]), wspec(prep["bproj"]),
            wspec(prep["w1"]), wspec(prep["b1"]),
            wspec(prep["w2"]), wspec(prep["b2"]),
            wspec(prep["w3"]), wspec(prep["b3"]),
        ],
        out_specs=pl.BlockSpec((tile_m, nc_pad), lambda i: (i, 0)),
        compiler_params=pltpu.CompilerParams(
            dimension_semantics=("parallel",),
            vmem_limit_bytes=vmem_limit,
        ),
    )(pooled, prep["wproj"], prep["bproj"],
      prep["w1"], prep["b1"], prep["w2"], prep["b2"],
      prep["w3"], prep["b3"])

    return logits[:n, :num_classes]


# --------------------------------------------------------------------------- #
# References
# --------------------------------------------------------------------------- #
def _reference_forward(x_nchw, p, stem_dtype):
    """Pure-JAX reference matching the kernel arithmetic (stem FMA in stem_dtype,
    SiLU/pool in f32, folded BN, bf16 MXU head with f32 accumulation)."""
    num_classes = p["w3"].shape[1]
    prep = _prepare_params(p, num_classes, stem_dtype)
    n, c, h, w = x_nchw.shape
    hw = h * w
    cs = p["w_stem"].shape[1]

    x = x_nchw.reshape(n, c, hw).astype(stem_dtype)
    ws = p["w_stem"].astype(stem_dtype)         # (c, cs)
    bs = p["b_stem"].astype(stem_dtype)         # (1, cs)
    acc = x[:, 0, :][:, None, :] * ws[0][None, :, None]
    for ci in range(1, c):
        acc = acc + x[:, ci, :][:, None, :] * ws[ci][None, :, None]
    hd = (acc + bs.reshape(1, cs, 1)).astype(jnp.float32)
    hd = hd * jax.nn.sigmoid(hd)
    pooled = jnp.mean(hd, axis=-1)                              # (n, cs)
    pooled = jnp.pad(pooled, ((0, 0), (0, prep["cs_pad"] - cs)))

    def mm(a, wgt, b):
        return jnp.dot(a.astype(wgt.dtype), wgt,
                       preferred_element_type=jnp.float32) + b

    f = mm(pooled, prep["wproj"], prep["bproj"])
    f = f * jax.nn.sigmoid(f)
    z = jnp.maximum(mm(f, prep["w1"], prep["b1"]), 0.0)
    z = jnp.maximum(mm(z, prep["w2"], prep["b2"]), 0.0)
    return mm(z, prep["w3"], prep["b3"])[:, :num_classes]


def _reference_forward_f32(x_nchw, p):
    """Full-f32, unfused reference (module eval semantics) for a loose check."""
    n, c, h, w = x_nchw.shape
    x = jnp.transpose(x_nchw, (0, 2, 3, 1)).reshape(n, h * w, c)
    hd = jnp.einsum("npc,cd->npd", x, p["w_stem"]) + p["b_stem"][None]
    hd = hd * jax.nn.sigmoid(hd)
    pooled = jnp.mean(hd, axis=1)
    f = pooled @ p["w_proj"] + p["b_proj"]
    f = f * jax.nn.sigmoid(f)
    z = f @ p["w1"] + p["b1"]
    z = (z - p["m1"]) / jnp.sqrt(p["v1"] + BN_EPS) * p["g1"] + p["beta1"]
    z = jnp.maximum(z, 0.0)
    z = z @ p["w2"] + p["b2"]
    z = (z - p["m2"]) / jnp.sqrt(p["v2"] + BN_EPS) * p["g2"] + p["beta2"]
    z = jnp.maximum(z, 0.0)
    return z @ p["w3"] + p["b3"]


def make_params(key, in_channels=3, c_stem=64, num_features=1280,
                num_classes=16):
    ks = jax.random.split(key, 18)
    f32 = jnp.float32

    def lin(k, fan_in, fan_out, scale=0.02):
        return jax.random.normal(k, (fan_in, fan_out), f32) * scale

    return {
        "w_stem": lin(ks[0], in_channels, c_stem, 0.1),
        "b_stem": jax.random.normal(ks[1], (1, c_stem), f32) * 0.01,
        "w_proj": lin(ks[2], c_stem, num_features, 0.05),
        "b_proj": jax.random.normal(ks[3], (1, num_features), f32) * 0.01,
        # Linear(num_features, 1024) + BatchNorm1d(1024)
        "w1": lin(ks[4], num_features, 1024),
        "b1": jax.random.normal(ks[5], (1, 1024), f32) * 0.01,
        "g1": 1.0 + jax.random.normal(ks[6], (1, 1024), f32) * 0.05,
        "beta1": jax.random.normal(ks[7], (1, 1024), f32) * 0.05,
        "m1": jax.random.normal(ks[8], (1, 1024), f32) * 0.05,
        "v1": 1.0 + jnp.abs(jax.random.normal(ks[9], (1, 1024), f32)) * 0.05,
        # Linear(1024, 512) + BatchNorm1d(512)
        "w2": lin(ks[10], 1024, 512),
        "b2": jax.random.normal(ks[11], (1, 512), f32) * 0.01,
        "g2": 1.0 + jax.random.normal(ks[12], (1, 512), f32) * 0.05,
        "beta2": jax.random.normal(ks[13], (1, 512), f32) * 0.05,
        "m2": jax.random.normal(ks[14], (1, 512), f32) * 0.05,
        "v2": 1.0 + jnp.abs(jax.random.normal(ks[15], (1, 512), f32)) * 0.05,
        # Linear(512, num_classes)
        "w3": lin(ks[16], 512, num_classes),
        "b3": jax.random.normal(ks[17], (1, num_classes), f32) * 0.01,
    }


if __name__ == "__main__":
    key = jax.random.PRNGKey(0)
    k_x, k_p, k_x2 = jax.random.split(key, 3)

    params = make_params(k_p, in_channels=3, c_stem=64,
                         num_features=1280, num_classes=16)
    stem_dtype = _default_stem_dtype()

    # Test 1: 16x16 image; tile_hw=128 -> 2 spatial grid steps exercise the
    # resident pooled-sum accumulator across hw tiles.
    x = jax.random.normal(k_x, (2, 3, 16, 16), jnp.float32)
    fwd = jax.jit(functools.partial(improved_pokemon_classifier_forward,
                                    tile_hw=128))
    logits = fwd(x, params)
    jax.block_until_ready(logits)
    assert logits.shape == (2, 16)

    ref = _reference_forward(x, params, stem_dtype)
    assert jnp.allclose(logits, ref, atol=5e-3, rtol=5e-3), \
        "mismatch vs matched reference"
    ref32 = _reference_forward_f32(x, params)
    assert jnp.allclose(logits, ref32, atol=2e-2, rtol=5e-2), \
        "mismatch vs f32 reference"

    # Test 2: 18x18 image (HW=324, not a multiple of 128) exercises HW padding
    # with exact pad-pixel correction and the in-kernel chunk loop (3 chunks).
    x2 = jax.random.normal(k_x2, (3, 3, 18, 18), jnp.float32)
    logits2 = jax.jit(improved_pokemon_classifier_forward)(x2, params)
    jax.block_until_ready(logits2)
    assert logits2.shape == (3, 16)
    ref2 = _reference_forward(x2, params, stem_dtype)
    assert jnp.allclose(logits2, ref2, atol=5e-3, rtol=5e-3), \
        "mismatch vs matched reference (padded HW)"

    print("KERNEL_OK")
</pallas_src>

<mosaic_0001>
module attributes {stable_mosaic.version = 11 : i64} {
  func.func @_head_kernel(%arg0: i32, %arg1: memref<8x128xf32, #tpu.memory_space<vmem>>, %arg2: memref<128x1280xbf16, #tpu.memory_space<vmem>>, %arg3: memref<1x1280xf32, #tpu.memory_space<vmem>>, %arg4: memref<1280x1024xbf16, #tpu.memory_space<vmem>>, %arg5: memref<1x1024xf32, #tpu.memory_space<vmem>>, %arg6: memref<1024x512xbf16, #tpu.memory_space<vmem>>, %arg7: memref<1x512xf32, #tpu.memory_space<vmem>>, %arg8: memref<512x128xbf16, #tpu.memory_space<vmem>>, %arg9: memref<1x128xf32, #tpu.memory_space<vmem>>, %arg10: memref<8x128xf32, #tpu.memory_space<vmem>>) attributes {dimension_semantics = [#tpu.dimension_semantics<parallel>], iteration_bounds = array<i64: 1>, scalar_prefetch = 0 : i64, scratch_operands = 0 : i64, tpu.core_type = #tpu.core_type<tc>, window_params = [{transform_indices = @transform_0, window_bounds = array<i64: 8, 128>}, {pipeline_mode = #tpu.pipeline_mode<synchronous>, transform_indices = @transform_1, window_bounds = array<i64: 128, 1280>}, {pipeline_mode = #tpu.pipeline_mode<synchronous>, transform_indices = @transform_2, window_bounds = array<i64: 1, 1280>}, {pipeline_mode = #tpu.pipeline_mode<synchronous>, transform_indices = @transform_3, window_bounds = array<i64: 1280, 1024>}, {pipeline_mode = #tpu.pipeline_mode<synchronous>, transform_indices = @transform_4, window_bounds = array<i64: 1, 1024>}, {pipeline_mode = #tpu.pipeline_mode<synchronous>, transform_indices = @transform_5, window_bounds = array<i64: 1024, 512>}, {pipeline_mode = #tpu.pipeline_mode<synchronous>, transform_indices = @transform_6, window_bounds = array<i64: 1, 512>}, {pipeline_mode = #tpu.pipeline_mode<synchronous>, transform_indices = @transform_7, window_bounds = array<i64: 512, 128>}, {pipeline_mode = #tpu.pipeline_mode<synchronous>, transform_indices = @transform_8, window_bounds = array<i64: 1, 128>}, {transform_indices = @transform_9, window_bounds = array<i64: 8, 128>}]} {
    %c0 = arith.constant 0 : index
    %c0_0 = arith.constant 0 : index
    %0 = vector.load %arg1[%c0, %c0_0] : memref<8x128xf32, #tpu.memory_space<vmem>>, vector<8x128xf32>
    %c0_1 = arith.constant 0 : index
    %c0_2 = arith.constant 0 : index
    %1 = vector.load %arg2[%c0_1, %c0_2] : memref<128x1280xbf16, #tpu.memory_space<vmem>>, vector<128x1280xbf16>
    %c0_3 = arith.constant 0 : index
    %c0_4 = arith.constant 0 : index
    %2 = vector.load %arg3[%c0_3, %c0_4] : memref<1x1280xf32, #tpu.memory_space<vmem>>, vector<1x1280xf32>
    %3 = arith.truncf %0 : vector<8x128xf32> to vector<8x128xbf16>
    %cst = arith.constant dense<0.000000e+00> : vector<8x1280xf32>
    %4 = tpu.matmul %3, %1, %cst {dimension_numbers = #tpu.dot_dimension_numbers<[1], [0], [0], [1], [0, 0, 1, 1], [], []>} : vector<8x128xbf16>, vector<128x1280xbf16>, vector<8x1280xf32> -> vector<8x1280xf32>
    %5 = vector.broadcast %2 : vector<1x1280xf32> to vector<8x1280xf32>
    %6 = arith.addf %4, %5 : vector<8x1280xf32>
    %7 = arith.negf %6 : vector<8x1280xf32>
    %8 = math.exp %7 : vector<8x1280xf32>
    %cst_5 = arith.constant 1.000000e+00 : f32
    %9 = vector.broadcast %cst_5 : f32 to vector<8x1280xf32>
    %10 = arith.addf %9, %8 : vector<8x1280xf32>
    %11 = arith.divf %9, %10 : vector<8x1280xf32>
    %12 = arith.mulf %6, %11 : vector<8x1280xf32>
    %c0_6 = arith.constant 0 : index
    %c0_7 = arith.constant 0 : index
    %13 = vector.load %arg4[%c0_6, %c0_7] : memref<1280x1024xbf16, #tpu.memory_space<vmem>>, vector<1280x1024xbf16>
    %c0_8 = arith.constant 0 : index
    %c0_9 = arith.constant 0 : index
    %14 = vector.load %arg5[%c0_8, %c0_9] : memref<1x1024xf32, #tpu.memory_space<vmem>>, vector<1x1024xf32>
    %15 = arith.truncf %12 : vector<8x1280xf32> to vector<8x1280xbf16>
    %cst_10 = arith.constant dense<0.000000e+00> : vector<8x1024xf32>
    %16 = tpu.matmul %15, %13, %cst_10 {dimension_numbers = #tpu.dot_dimension_numbers<[1], [0], [0], [1], [0, 0, 1, 1], [], []>} : vector<8x1280xbf16>, vector<1280x1024xbf16>, vector<8x1024xf32> -> vector<8x1024xf32>
    %17 = vector.broadcast %14 : vector<1x1024xf32> to vector<8x1024xf32>
    %18 = arith.addf %16, %17 : vector<8x1024xf32>
    %cst_11 = arith.constant 0.000000e+00 : f32
    %19 = vector.broadcast %cst_11 : f32 to vector<8x1024xf32>
    %20 = arith.maximumf %18, %19 : vector<8x1024xf32>
    %c0_12 = arith.constant 0 : index
    %c0_13 = arith.constant 0 : index
    %21 = vector.load %arg6[%c0_12, %c0_13] : memref<1024x512xbf16, #tpu.memory_space<vmem>>, vector<1024x512xbf16>
    %c0_14 = arith.constant 0 : index
    %c0_15 = arith.constant 0 : index
    %22 = vector.load %arg7[%c0_14, %c0_15] : memref<1x512xf32, #tpu.memory_space<vmem>>, vector<1x512xf32>
    %23 = arith.truncf %20 : vector<8x1024xf32> to vector<8x1024xbf16>
    %cst_16 = arith.constant dense<0.000000e+00> : vector<8x512xf32>
    %24 = tpu.matmul %23, %21, %cst_16 {dimension_numbers = #tpu.dot_dimension_numbers<[1], [0], [0], [1], [0, 0, 1, 1], [], []>} : vector<8x1024xbf16>, vector<1024x512xbf16>, vector<8x512xf32> -> vector<8x512xf32>
    %25 = vector.broadcast %22 : vector<1x512xf32> to vector<8x512xf32>
    %26 = arith.addf %24, %25 : vector<8x512xf32>
    %cst_17 = arith.constant 0.000000e+00 : f32
    %27 = vector.broadcast %cst_17 : f32 to vector<8x512xf32>
    %28 = arith.maximumf %26, %27 : vector<8x512xf32>
    %c0_18 = arith.constant 0 : index
    %c0_19 = arith.constant 0 : index
    %29 = vector.load %arg8[%c0_18, %c0_19] : memref<512x128xbf16, #tpu.memory_space<vmem>>, vector<512x128xbf16>
    %c0_20 = arith.constant 0 : index
    %c0_21 = arith.constant 0 : index
    %30 = vector.load %arg9[%c0_20, %c0_21] : memref<1x128xf32, #tpu.memory_space<vmem>>, vector<1x128xf32>
    %31 = arith.truncf %28 : vector<8x512xf32> to vector<8x512xbf16>
    %cst_22 = arith.constant dense<0.000000e+00> : vector<8x128xf32>
    %32 = tpu.matmul %31, %29, %cst_22 {dimension_numbers = #tpu.dot_dimension_numbers<[1], [0], [0], [1], [0, 0, 1, 1], [], []>} : vector<8x512xbf16>, vector<512x128xbf16>, vector<8x128xf32> -> vector<8x128xf32>
    %33 = vector.broadcast %30 : vector<1x128xf32> to vector<8x128xf32>
    %34 = arith.addf %32, %33 : vector<8x128xf32>
    %c0_23 = arith.constant 0 : index
    %c0_24 = arith.constant 0 : index
    %35 = vector.load %arg10[%c0_23, %c0_24] : memref<8x128xf32, #tpu.memory_space<vmem>>, vector<8x128xf32>
    tpu.vector_store %arg10[%c0_23, %c0_24], %34 {strides = array<i32>} : memref<8x128xf32, #tpu.memory_space<vmem>>, vector<8x128xf32>,
    return
  }
  func.func @transform_0(%arg0: i32) -> (i32, i32) {
    %c0_i32 = arith.constant 0 : i32
    %c0_i32_0 = arith.constant 0 : i32
    return %arg0, %c0_i32 : i32, i32
  }
  func.func @transform_1(%arg0: i32) -> (i32, i32) {
    %c0_i32 = arith.constant 0 : i32
    %c0_i32_0 = arith.constant 0 : i32
    %c0_i32_1 = arith.constant 0 : i32
    return %c0_i32, %c0_i32_0 : i32, i32
  }
  func.func @transform_2(%arg0: i32) -> (i32, i32) {
    %c0_i32 = arith.constant 0 : i32
    %c0_i32_0 = arith.constant 0 : i32
    %c0_i32_1 = arith.constant 0 : i32
    return %c0_i32, %c0_i32_0 : i32, i32
  }
  func.func @transform_3(%arg0: i32) -> (i32, i32) {
    %c0_i32 = arith.constant 0 : i32
    %c0_i32_0 = arith.constant 0 : i32
    %c0_i32_1 = arith.constant 0 : i32
    return %c0_i32, %c0_i32_0 : i32, i32
  }
  func.func @transform_4(%arg0: i32) -> (i32, i32) {
    %c0_i32 = arith.constant 0 : i32
    %c0_i32_0 = arith.constant 0 : i32
    %c0_i32_1 = arith.constant 0 : i32
    return %c0_i32, %c0_i32_0 : i32, i32
  }
  func.func @transform_5(%arg0: i32) -> (i32, i32) {
    %c0_i32 = arith.constant 0 : i32
    %c0_i32_0 = arith.constant 0 : i32
    %c0_i32_1 = arith.constant 0 : i32
    return %c0_i32, %c0_i32_0 : i32, i32
  }
  func.func @transform_6(%arg0: i32) -> (i32, i32) {
    %c0_i32 = arith.constant 0 : i32
    %c0_i32_0 = arith.constant 0 : i32
    %c0_i32_1 = arith.constant 0 : i32
    return %c0_i32, %c0_i32_0 : i32, i32
  }
  func.func @transform_7(%arg0: i32) -> (i32, i32) {
    %c0_i32 = arith.constant 0 : i32
    %c0_i32_0 = arith.constant 0 : i32
    %c0_i32_1 = arith.constant 0 : i32
    return %c0_i32, %c0_i32_0 : i32, i32
  }
  func.func @transform_8(%arg0: i32) -> (i32, i32) {
    %c0_i32 = arith.constant 0 : i32
    %c0_i32_0 = arith.constant 0 : i32
    %c0_i32_1 = arith.constant 0 : i32
    return %c0_i32, %c0_i32_0 : i32, i32
  }
  func.func @transform_9(%arg0: i32) -> (i32, i32) {
    %c0_i32 = arith.constant 0 : i32
    %c0_i32_0 = arith.constant 0 : i32
    return %arg0, %c0_i32 : i32, i32
  }
}

module attributes {stable_mosaic.version = 11 : i64} {
  func.func @_stem_pool_kernel(%arg0: i32, %arg1: i32, %arg2: memref<8x3x128xf32, #tpu.memory_space<vmem>>, %arg3: memref<3x64x1xf32, #tpu.memory_space<vmem>>, %arg4: memref<64x1xf32, #tpu.memory_space<vmem>>, %arg5: memref<8x64xf32, #tpu.memory_space<vmem>>) attributes {dimension_semantics = [#tpu.dimension_semantics<parallel>, #tpu.dimension_semantics<arbitrary>], iteration_bounds = array<i64: 1, 2>, scalar_prefetch = 0 : i64, scratch_operands = 0 : i64, tpu.core_type = #tpu.core_type<tc>, window_params = [{transform_indices = @transform_0, window_bounds = array<i64: 8, 3, 128>}, {pipeline_mode = #tpu.pipeline_mode<synchronous>, transform_indices = @transform_1, window_bounds = array<i64: 3, 64, 1>}, {pipeline_mode = #tpu.pipeline_mode<synchronous>, transform_indices = @transform_2, window_bounds = array<i64: 64, 1>}, {transform_indices = @transform_3, window_bounds = array<i64: 8, 64>}]} {
    %c0_i32 = arith.constant 0 : i32
    %0 = arith.cmpi eq, %arg1, %c0_i32 : i32
    %1 = arith.extui %0 : i1 to i32
    %c0_i32_0 = arith.constant 0 : i32
    %2 = arith.cmpi ne, %1, %c0_i32_0 : i32
    scf.if %2 {
      %cst_14 = arith.constant 0.000000e+00 : f32
      %47 = vector.broadcast %cst_14 : f32 to vector<8x64xf32>
      %c0_15 = arith.constant 0 : index
      %c0_16 = arith.constant 0 : index
      %48 = vector.load %arg5[%c0_15, %c0_16] : memref<8x64xf32, #tpu.memory_space<vmem>>, vector<8x64xf32>
      tpu.vector_store %arg5[%c0_15, %c0_16], %47 {strides = array<i32>} : memref<8x64xf32, #tpu.memory_space<vmem>>, vector<8x64xf32>,
    } else {
    }
    %c0 = arith.constant 0 : index
    %c0_1 = arith.constant 0 : index
    %c0_2 = arith.constant 0 : index
    %3 = vector.load %arg3[%c0, %c0_1, %c0_2] : memref<3x64x1xf32, #tpu.memory_space<vmem>>, vector<3x64x1xf32>
    %c0_3 = arith.constant 0 : index
    %c0_4 = arith.constant 0 : index
    %4 = vector.load %arg4[%c0_3, %c0_4] : memref<64x1xf32, #tpu.memory_space<vmem>>, vector<64x1xf32>
    %cst = arith.constant 0.000000e+00 : f32
    %5 = vector.broadcast %cst : f32 to vector<8x64xf32>
    %c0_i32_5 = arith.constant 0 : i32
    %c128_i32 = arith.constant 128 : i32
    %6 = arith.muli %c0_i32_5, %c128_i32 : i32
    %7 = tpu.assume_multiple %6, 128 : i32
    %c0_6 = arith.constant 0 : index
    %c0_7 = arith.constant 0 : index
    %8 = arith.index_cast %7 : i32 to index
    %9 = vector.load %arg2[%c0_6, %c0_7, %8] : memref<8x3x128xf32, #tpu.memory_space<vmem>>, vector<8x3x128xf32>
    %10 = vector.extract_strided_slice %9 {offsets = [0, 0, 0], sizes = [8, 1, 128], strides = [1, 1, 1]} : vector<8x3x128xf32> to vector<8x1x128xf32>
    %11 = vector.extract_strided_slice %3 {offsets = [0, 0, 0], sizes = [1, 64, 1], strides = [1, 1, 1]} : vector<3x64x1xf32> to vector<1x64x1xf32>
    %12 = vector.shape_cast %11 : vector<1x64x1xf32> to vector<64x1xf32>
    %13 = vector.shape_cast %12 : vector<64x1xf32> to vector<1x64x1xf32>
    %14 = vector.broadcast %10 : vector<8x1x128xf32> to vector<8x64x128xf32>
    %15 = vector.broadcast %13 : vector<1x64x1xf32> to vector<8x64x128xf32>
    %16 = arith.mulf %14, %15 : vector<8x64x128xf32>
    %17 = vector.extract_strided_slice %9 {offsets = [0, 1, 0], sizes = [8, 1, 128], strides = [1, 1, 1]} : vector<8x3x128xf32> to vector<8x1x128xf32>
    %18 = vector.extract_strided_slice %3 {offsets = [1, 0, 0], sizes = [1, 64, 1], strides = [1, 1, 1]} : vector<3x64x1xf32> to vector<1x64x1xf32>
    %19 = vector.shape_cast %18 : vector<1x64x1xf32> to vector<64x1xf32>
    %20 = vector.shape_cast %19 : vector<64x1xf32> to vector<1x64x1xf32>
    %21 = vector.broadcast %17 : vector<8x1x128xf32> to vector<8x64x128xf32>
    %22 = vector.broadcast %20 : vector<1x64x1xf32> to vector<8x64x128xf32>
    %23 = arith.mulf %21, %22 : vector<8x64x128xf32>
    %24 = arith.addf %16, %23 : vector<8x64x128xf32>
    %25 = vector.extract_strided_slice %9 {offsets = [0, 2, 0], sizes = [8, 1, 128], strides = [1, 1, 1]} : vector<8x3x128xf32> to vector<8x1x128xf32>
    %26 = vector.extract_strided_slice %3 {offsets = [2, 0, 0], sizes = [1, 64, 1], strides = [1, 1, 1]} : vector<3x64x1xf32> to vector<1x64x1xf32>
    %27 = vector.shape_cast %26 : vector<1x64x1xf32> to vector<64x1xf32>
    %28 = vector.shape_cast %27 : vector<64x1xf32> to vector<1x64x1xf32>
    %29 = vector.broadcast %25 : vector<8x1x128xf32> to vector<8x64x128xf32>
    %30 = vector.broadcast %28 : vector<1x64x1xf32> to vector<8x64x128xf32>
    %31 = arith.mulf %29, %30 : vector<8x64x128xf32>
    %32 = arith.addf %24, %31 : vector<8x64x128xf32>
    %33 = vector.shape_cast %4 : vector<64x1xf32> to vector<1x64x1xf32>
    %34 = vector.broadcast %33 : vector<1x64x1xf32> to vector<8x64x128xf32>
    %35 = arith.addf %32, %34 : vector<8x64x128xf32>
    %36 = arith.negf %35 : vector<8x64x128xf32>
    %37 = math.exp %36 : vector<8x64x128xf32>
    %cst_8 = arith.constant 1.000000e+00 : f32
    %38 = vector.broadcast %cst_8 : f32 to vector<8x64x128xf32>
    %39 = arith.addf %38, %37 : vector<8x64x128xf32>
    %40 = arith.divf %38, %39 : vector<8x64x128xf32>
    %41 = arith.mulf %35, %40 : vector<8x64x128xf32>
    %cst_9 = arith.constant dense<0.000000e+00> : vector<8x64xf32>
    %42 = vector.multi_reduction <add>, %41, %cst_9 [2] : vector<8x64x128xf32> to vector<8x64xf32>
    %43 = arith.addf %5, %42 : vector<8x64xf32>
    %c1_i32 = arith.constant 1 : i32
    %c0_10 = arith.constant 0 : index
    %c0_11 = arith.constant 0 : index
    %44 = vector.load %arg5[%c0_10, %c0_11] : memref<8x64xf32, #tpu.memory_space<vmem>>, vector<8x64xf32>
    %45 = arith.addf %44, %43 : vector<8x64xf32>
    %c0_12 = arith.constant 0 : index
    %c0_13 = arith.constant 0 : index
    %46 = vector.load %arg5[%c0_12, %c0_13] : memref<8x64xf32, #tpu.memory_space<vmem>>, vector<8x64xf32>
    tpu.vector_store %arg5[%c0_12, %c0_13], %45 {strides = array<i32>} : memref<8x64xf32, #tpu.memory_space<vmem>>, vector<8x64xf32>,
    return
  }
  func.func @transform_0(%arg0: i32, %arg1: i32) -> (i32, i32, i32) {
    %c0_i32 = arith.constant 0 : i32
    %c0_i32_0 = arith.constant 0 : i32
    return %arg0, %c0_i32, %arg1 : i32, i32, i32
  }
  func.func @transform_1(%arg0: i32, %arg1: i32) -> (i32, i32, i32) {
    %c0_i32 = arith.constant 0 : i32
    %c0_i32_0 = arith.constant 0 : i32
    %c0_i32_1 = arith.constant 0 : i32
    %c0_i32_2 = arith.constant 0 : i32
    return %c0_i32, %c0_i32_0, %c0_i32_1 : i32, i32, i32
  }
  func.func @transform_2(%arg0: i32, %arg1: i32) -> (i32, i32) {
    %c0_i32 = arith.constant 0 : i32
    %c0_i32_0 = arith.constant 0 : i32
    %c0_i32_1 = arith.constant 0 : i32
    return %c0_i32, %c0_i32_0 : i32, i32
  }
  func.func @transform_3(%arg0: i32, %arg1: i32) -> (i32, i32) {
    %c0_i32 = arith.constant 0 : i32
    %c0_i32_0 = arith.constant 0 : i32
    return %arg0, %c0_i32 : i32, i32
  }
}

</mosaic_0001>

<llo_original>
// kernel: improved_pokemon_classifier_forward.2
$region0: #{improved_pokemon_classifier_forward.2}
  #allocation0 [shape = 'u32[]', space=smem, size = 0x4, offset = 0x4, fixed_abs, tag = 'smem constant byte address 0x4 - core index']
  #allocation1 [shape = 'u32[144,128]{1,0:T(1,128)}', space=vmem, size = 0x12000, scoped, tag = 'internal scratch']
  %s0 = inlined_call_operand.hbm [shape: f32[8,3,256], index: 0, kind: input, shape index: {}]
  %s1 = inlined_call_operand.hbm [shape: f32[3,64,1], index: 1, kind: input, shape index: {}]
  %s2 = inlined_call_operand.hbm [shape: f32[64,1], index: 2, kind: input, shape index: {}]
  %s3 = inlined_call_operand.hbm [shape: f32[8,64], index: 3, kind: output, shape index: {}]
  %s4 = sld [smem:[#allocation0]]
  $region61: #{improved_pokemon_classifier_forward.2} parent=0
    _
  %s6 = ssub.s32 1, %s4
  %s7 = scalar_select 0, %s6, %s4
  $region1: #{improved_pokemon_classifier_forward.2} parent=0
    #allocation2 [shape = 'u8[32768]{0}', space=vmem, size = 0x8000, scoped, tag = 'input window, operand 0']
    #allocation3 [shape = 's32[2]{0}', space=sflag, size = 0x8, scoped, tag = 'scoped memory for improved_pokemon_classifier_forward.2']
    #allocation4 [shape = 's32[2]{0}', space=sflag, size = 0x8, scoped, tag = 'scoped memory for improved_pokemon_classifier_forward.2']
    #allocation5 [shape = 'u8[98304]{0}', space=vmem, size = 0x18000, scoped, tag = 'input window, operand 1, single buffered']
    #allocation6 [shape = 's32[1]{0}', space=sflag, size = 0x4, scoped, tag = 'scoped memory for improved_pokemon_classifier_forward.2']
    #allocation7 [shape = 'u8[32768]{0}', space=vmem, size = 0x8000, scoped, tag = 'input window, operand 2, single buffered']
    #allocation8 [shape = 'u8[4096]{0}', space=vmem, size = 0x1000, scoped, tag = 'output window, operand 0, single buffered']
    %8 = vsyncpa [#allocation3], 0
    %s9 = scalar_lea.sflag [#allocation3], 1
    %10 = vsyncpa %s9, 0
    %11 = vsyncpa [#allocation6], 0
    %12 = vsyncpa [#allocation4], 0
    loop: start=0, step=1, limit=4
    $region2: #{improved_pokemon_classifier_forward.2} parent=1 // loop_pre_header
      _
    $region3: #{improved_pokemon_classifier_forward.2} parent=1 // loop_header
      %s14 = sphi 0, %s18
      %p15 = scmp.ge.s32.totalorder %s14, 4
      %s21 = sphi 0, %s33
      %s22 = sphi 0, %s29
      %s23 = sphi 0, %s21
      %s24 = sphi 0, %s22
      %s25 = sphi 0, %s23
      %s26 = sphi 0, %s24
      %s38 = sphi 0, %s40
      %s41 = sphi 0, %s38
      %s42 = sphi 0, %s41
      %s58 = sphi 0, %s42
      %s62 = sphi 0, %s62
      %s64 = sphi 0, %s62
      %s65 = sphi 0, %s64
      %s79 = sphi 0, %s65
      %s83 = sphi 0, %s83
      %s85 = sphi 0, %s83
      %s86 = sphi 0, %s85
      %s100 = sphi 0, %s86
      %s106 = sphi 0, %s108
      %s109 = sphi 0, %s106
      %s110 = sphi 0, %s109
      %s126 = sphi 0, %s110
    $region4: #{improved_pokemon_classifier_forward.2} parent=1 // loop_header_branch
      %17 = sbr.rel (%p15) target = $region8
    $region5: #{improved_pokemon_classifier_forward.2} parent=1 // loop_body
      %s19 = ssub.s32 %s14, 1
      %s20 = ssub.s32 %s14, 2
      %s27 = sadd.s32 1, %s22
      %p28 = scmp.ge.s32.totalorder %s27, 2
      %s29 = scalar_select %p28, 0, %s27
      %s30 = sadd.s32 1, %s21
      %s31 = scalar_select %p28, %s30, %s21
      %p32 = scmp.ge.s32.totalorder %s31, 1
      %s33 = scalar_select %p32, 0, %s31
      %s34 = ssub.s32 %s21, %s33
      %s35 = ssub.s32 %s22, %s29
      %s36 = sor.u32 %s34, %s35
      %p37 = scmp.eq.s32.totalorder %s36, 0
      %s39 = sadd.s32 %s38, 1
      %s40 = scalar_select %p37, %s38, %s39
      %p43 = pneg %p37
      %p44 = scmp.eq.s32.totalorder %s14, 1
      %p45 = por %p43, %p44
      %p46 = scmp.ne.s32.totalorder %s38, %s41
      %p47 = scmp.eq.s32.totalorder %s14, 0
      %p48 = por %p46, %p47
      %p49 = scmp.ne.s32.totalorder %s38, %s41
      %p50 = scmp.eq.s32.totalorder %s19, 1
      %p51 = por %p49, %p50
      %p52 = scmp.ne.s32.totalorder %s41, %s42
      %p53 = scmp.eq.s32.totalorder %s19, 0
      %p54 = por %p52, %p53
      %p55 = scmp.ne.s32.totalorder %s41, %s42
      %p56 = scmp.eq.s32.totalorder %s20, 1
      %p57 = por %p55, %p56
      %p59 = scmp.ne.s32.totalorder %s42, %s58
      %p60 = scmp.eq.s32.totalorder %s20, 0
      %p61 = por %p59, %p60
      %s63 = sadd.s32 %s62, 1
      %p66 = scmp.eq.s32.totalorder %s14, 1
      %p67 = scmp.ne.s32.totalorder %s62, %s64
      %p68 = scmp.eq.s32.totalorder %s14, 0
      %p69 = por %p67, %p68
      %p70 = scmp.ne.s32.totalorder %s62, %s64
      %p71 = scmp.eq.s32.totalorder %s19, 1
      %p72 = por %p70, %p71
      %p73 = scmp.ne.s32.totalorder %s64, %s65
      %p74 = scmp.eq.s32.totalorder %s19, 0
      %p75 = por %p73, %p74
      %p76 = scmp.ne.s32.totalorder %s64, %s65
      %p77 = scmp.eq.s32.totalorder %s20, 1
      %p78 = por %p76, %p77
      %p80 = scmp.ne.s32.totalorder %s65, %s79
      %p81 = scmp.eq.s32.totalorder %s20, 0
      %p82 = por %p80, %p81
      %s84 = sadd.s32 %s83, 1
      %p87 = scmp.eq.s32.totalorder %s14, 1
      %p88 = scmp.ne.s32.totalorder %s83, %s85
      %p89 = scmp.eq.s32.totalorder %s14, 0
      %p90 = por %p88, %p89
      %p91 = scmp.ne.s32.totalorder %s83, %s85
      %p92 = scmp.eq.s32.totalorder %s19, 1
      %p93 = por %p91, %p92
      %p94 = scmp.ne.s32.totalorder %s85, %s86
      %p95 = scmp.eq.s32.totalorder %s19, 0
      %p96 = por %p94, %p95
      %p97 = scmp.ne.s32.totalorder %s85, %s86
      %p98 = scmp.eq.s32.totalorder %s20, 1
      %p99 = por %p97, %p98
      %p101 = scmp.ne.s32.totalorder %s86, %s100
      %p102 = scmp.eq.s32.totalorder %s20, 0
      %p103 = por %p101, %p102
      %s104 = ssub.s32 %s21, %s33
      %p105 = scmp.eq.s32.totalorder %s104, 0
      %s107 = sadd.s32 %s106, 1
      %s108 = scalar_select %p105, %s106, %s107
      %p111 = pneg %p105
      %p112 = scmp.eq.s32.totalorder %s14, 1
      %p113 = por %p111, %p112
      %p114 = scmp.ne.s32.totalorder %s106, %s109
      %p115 = scmp.eq.s32.totalorder %s14, 0
      %p116 = por %p114, %p115
      %p117 = scmp.ne.s32.totalorder %s106, %s109
      %p118 = scmp.eq.s32.totalorder %s19, 1
      %p119 = por %p117, %p118
      %p120 = scmp.ne.s32.totalorder %s109, %s110
      %p121 = scmp.eq.s32.totalorder %s19, 0
      %p122 = por %p120, %p121
      %p123 = scmp.ne.s32.totalorder %s109, %s110
      %p124 = scmp.eq.s32.totalorder %s20, 1
      %p125 = por %p123, %p124
      %p127 = scmp.ne.s32.totalorder %s110, %s126
      %p128 = scmp.eq.s32.totalorder %s20, 0
      %p129 = por %p127, %p128
      %p130 = scmp.le.s32.totalorder 1, %s14
      %p131 = scmp.lt.s32.totalorder %s14, 3
      %p132 = pnand %p130, %p131
      %p133 = pneg %p132
      // Predicated region
      $region9: #{improved_pokemon_classifier_forward.2} parent=5 // pred_check
        _
      $region10: #{improved_pokemon_classifier_forward.2} parent=5 // pred_check_branch
        %135 = sbr.rel (%p132) target = $region12
      $region11: #{improved_pokemon_classifier_forward.2} parent=5 // pred_region
        %s136 = ssub.s32 %s14, 1
        // Predicated region
        $region13: #{improved_pokemon_classifier_forward.2} parent=11 // pred_check
          %p137 = pneg %p75
        $region14: #{improved_pokemon_classifier_forward.2} parent=11 // pred_check_branch
          %139 = sbr.rel (%p137) target = $region16
        $region15: #{improved_pokemon_classifier_forward.2} parent=11 // pred_region
          %s141 = ssub.s32 3072, 3072
          %142 = vsyncadd [#allocation6], %s141
          %s143 = sshll.u32 [#allocation5], 4
          %s144 = int_to_ptr.vmem [resolvable:$true] %s143
          %149 = dma.hbm_to_vmem [thread:$0]  %s1, 3072, %s144, [#allocation6], 128, 128, 8
        $region16: #{improved_pokemon_classifier_forward.2} parent=11 // pred_fallthru
          _
        // Predicated region
        $region17: #{improved_pokemon_classifier_forward.2} parent=11 // pred_check
          %p150 = pneg %p96
        $region18: #{improved_pokemon_classifier_forward.2} parent=11 // pred_check_branch
          %152 = sbr.rel (%p150) target = $region20
        $region19: #{improved_pokemon_classifier_forward.2} parent=11 // pred_region
          %s154 = ssub.s32 1024, 1024
          %155 = vsyncadd [#allocation6], %s154
          %s156 = sshll.u32 [#allocation7], 4
          %s157 = int_to_ptr.vmem [resolvable:$true] %s156
          %162 = dma.hbm_to_vmem [thread:$0]  %s2, 1024, %s157, [#allocation6], 128, 128, 8
        $region20: #{improved_pokemon_classifier_forward.2} parent=11 // pred_fallthru
          _
      $region12: #{improved_pokemon_classifier_forward.2} parent=5 // pred_fallthru
        _
      %p163 = scmp.lt.s32.totalorder %s14, 2
      // Predicated region
      $region21: #{improved_pokemon_classifier_forward.2} parent=5 // pred_check
        %p164 = pneg %p163
      $region22: #{improved_pokemon_classifier_forward.2} parent=5 // pred_check_branch
        %166 = sbr.rel (%p164) target = $region24
      $region23: #{improved_pokemon_classifier_forward.2} parent=5 // pred_region
        // Predicated region
        $region25: #{improved_pokemon_classifier_forward.2} parent=23 // pred_check
          %p167 = pneg %p48
        $region26: #{improved_pokemon_classifier_forward.2} parent=23 // pred_check_branch
          %169 = sbr.rel (%p167) target = $region28
        $region27: #{improved_pokemon_classifier_forward.2} parent=23 // pred_region
          %s170 = sand.u32 %s38, 1
          %s171 = scalar_lea.sflag [#allocation3], %s170
          %s172 = sand.u32 %s38, 1
          %s173 = smul.addr %s172, 32
          %s174 = scalar_lea.vmem [#allocation2], %s173
          %s175 = smul.u32 8, %s21
          %s177 = ssub.s32 512, 512
          %178 = vsyncadd %s171, %s177
          %s179 = smul.addr %s175, 2
          %s180 = sadd.s32 %s22, %s179
          %s181 = smul.addr %s180, 64
          %s182 = scalar_lea.hbm %s0, %s181
          %s183 = sshll.u32 %s174, 4
          %s184 = int_to_ptr.vmem [resolvable:$true] %s183
          %189 = dma.hbm_to_vmem [thread:$0]  %s182, 512, %s184, %s171, 128, 64, 4
        $region28: #{improved_pokemon_classifier_forward.2} parent=23 // pred_fallthru
          _
      $region24: #{improved_pokemon_classifier_forward.2} parent=5 // pred_fallthru
        _
      %p190 = scmp.le.s32.totalorder 1, %s14
      %p191 = scmp.lt.s32.totalorder %s14, 3
      %p192 = pnand %p190, %p191
      %p193 = pneg %p192
      // Predicated region
      $region29: #{improved_pokemon_classifier_forward.2} parent=5 // pred_check
        _
      $region30: #{improved_pokemon_classifier_forward.2} parent=5 // pred_check_branch
        %195 = sbr.rel (%p192) target = $region32
      $region31: #{improved_pokemon_classifier_forward.2} parent=5 // pred_region
        %s196 = ssub.s32 %s14, 1
        %s197 = sand.u32 %s41, 1
        %s198 = scalar_lea.sflag [#allocation3], %s197
        %s199 = sand.u32 %s41, 1
        %s200 = smul.addr %s199, 32
        %s201 = scalar_lea.vmem [#allocation2], %s200
        // Predicated region
        $region33: #{improved_pokemon_classifier_forward.2} parent=31 // pred_check
          %p202 = pneg %p54
        $region34: #{improved_pokemon_classifier_forward.2} parent=31 // pred_check_branch
          %204 = sbr.rel (%p202) target = $region36
        $region35: #{improved_pokemon_classifier_forward.2} parent=31 // pred_region
          %205 = dma.done %s198, 512
        $region36: #{improved_pokemon_classifier_forward.2} parent=31 // pred_fallthru
          _
        // Predicated region
        $region37: #{improved_pokemon_classifier_forward.2} parent=31 // pred_check
          %p206 = pneg %p75
        $region38: #{improved_pokemon_classifier_forward.2} parent=31 // pred_check_branch
          %208 = sbr.rel (%p206) target = $region40
        $region39: #{improved_pokemon_classifier_forward.2} parent=31 // pred_region
          %209 = dma.done [#allocation6], 3072
        $region40: #{improved_pokemon_classifier_forward.2} parent=31 // pred_fallthru
          _
        // Predicated region
        $region41: #{improved_pokemon_classifier_forward.2} parent=31 // pred_check
          %p210 = pneg %p96
        $region42: #{improved_pokemon_classifier_forward.2} parent=31 // pred_check_branch
          %212 = sbr.rel (%p210) target = $region44
        $region43: #{improved_pokemon_classifier_forward.2} parent=31 // pred_region
          %213 = dma.done [#allocation6], 1024
        $region44: #{improved_pokemon_classifier_forward.2} parent=31 // pred_fallthru
          _
        %s214 = sand.u32 %s41, 1
        %s215 = scalar_lea.sflag [#allocation3], %s214
        %s216 = sand.u32 %s41, 1
        %s217 = smul.addr %s216, 32
        %s218 = scalar_lea.vmem [#allocation2], %s217
        %p219 = pneg %p54
        %p220 = pneg %p51
        %p221 = pneg %p75
        %p222 = pneg %p72
        %p223 = pneg %p96
        %p224 = pneg %p93
        %p225 = pneg %p122
        %p226 = pneg %p119
        %s227 = smul.u32 8, %s23
        %p228 = scmp.eq.s32.totalorder %s24, 0
        // Predicated region
        $region45: #{improved_pokemon_classifier_forward.2} parent=31 // pred_check
          %p229 = pneg %p228
        $region46: #{improved_pokemon_classifier_forward.2} parent=31 // pred_check_branch
          %231 = sbr.rel (%p229) target = $region48
        $region47: #{improved_pokemon_classifier_forward.2} parent=31 // pred_region
          %vm232 = vcmask 523264
          %233 = vst.msk [vmem:[#allocation8] sm:$0xff] %vm232, 0.0
        $region48: #{improved_pokemon_classifier_forward.2} parent=31 // pred_fallthru
          _
        %v234 = vld [vmem:[#allocation5] sm:$0xff]
        %v235 = vld [vmem:[#allocation5 + $0x8] sm:$0xff]
        %v236 = vld [vmem:[#allocation5 + $0x10] sm:$0xff]
        %v237 = vld [vmem:[#allocation5 + $0x18] sm:$0xff]
        %v238 = vld [vmem:[#allocation5 + $0x20] sm:$0xff]
        %v239 = vld [vmem:[#allocation5 + $0x28] sm:$0xff]
        %v240 = vld [vmem:[#allocation5 + $0x30] sm:$0xff]
        %v241 = vld [vmem:[#allocation5 + $0x38] sm:$0xff]
        %v242 = vld [vmem:[#allocation5 + $0x40] sm:$0xff]
        %v243 = vld [vmem:[#allocation5 + $0x48] sm:$0xff]
        %v244 = vld [vmem:[#allocation5 + $0x50] sm:$0xff]
        %v245 = vld [vmem:[#allocation5 + $0x58] sm:$0xff]
        %v246 = vld [vmem:[#allocation5 + $0x60] sm:$0xff]
        %v247 = vld [vmem:[#allocation5 + $0x68] sm:$0xff]
        %v248 = vld [vmem:[#allocation5 + $0x70] sm:$0xff]
        %v249 = vld [vmem:[#allocation5 + $0x78] sm:$0xff]
        %v250 = vld [vmem:[#allocation5 + $0x80] sm:$0xff]
        %v251 = vld [vmem:[#allocation5 + $0x88] sm:$0xff]
        %v252 = vld [vmem:[#allocation5 + $0x90] sm:$0xff]
        %v253 = vld [vmem:[#allocation5 + $0x98] sm:$0xff]
        %v254 = vld [vmem:[#allocation5 + $0xa0] sm:$0xff]
        %v255 = vld [vmem:[#allocation5 + $0xa8] sm:$0xff]
        %v256 = vld [vmem:[#allocation5 + $0xb0] sm:$0xff]
        %v257 = vld [vmem:[#allocation5 + $0xb8] sm:$0xff]
        %v258 = vld [vmem:[#allocation7] sm:$0xff]
        %v259 = vld [vmem:[#allocation7 + $0x8] sm:$0xff]
        %v260 = vld [vmem:[#allocation7 + $0x10] sm:$0xff]
        %v261 = vld [vmem:[#allocation7 + $0x18] sm:$0xff]
        %v262 = vld [vmem:[#allocation7 + $0x20] sm:$0xff]
        %v263 = vld [vmem:[#allocation7 + $0x28] sm:$0xff]
        %v264 = vld [vmem:[#allocation7 + $0x30] sm:$0xff]
        %v265 = vld [vmem:[#allocation7 + $0x38] sm:$0xff]
        %v266 = vld [vmem:[%s201] sm:$0x7]
        %v267 = vld [vmem:[%s201 + $0x4] sm:$0x7]
        %v268 = vld [vmem:[%s201 + $0x8] sm:$0x7]
        %v269 = vld [vmem:[%s201 + $0xc] sm:$0x7]
        %v270 = vld [vmem:[%s201 + $0x10] sm:$0x7]
        %v271 = vld [vmem:[%s201 + $0x14] sm:$0x7]
        %v272 = vld [vmem:[%s201 + $0x18] sm:$0x7]
        %v273 = vld [vmem:[%s201 + $0x1c] sm:$0x7]
        %v274 = vlaneseq
        %v275 = vshrl.u32 %v274, 7
        %v276 = vsub.s32 0, %v275
        %v277 = vrot.slane %v266, %v276
        %v278 = vlaneseq
        %v279 = vshrl.u32 %v278, 7
        %v280 = vsub.s32 0, %v279
        %v281 = vrot.slane %v267, %v280
        %v282 = vlaneseq
        %v283 = vshrl.u32 %v282, 7
        %v284 = vsub.s32 0, %v283
        %v285 = vrot.slane %v268, %v284
        %v286 = vlaneseq
        %v287 = vshrl.u32 %v286, 7
        %v288 = vsub.s32 0, %v287
        %v289 = vrot.slane %v269, %v288
        %v290 = vlaneseq
        %v291 = vshrl.u32 %v290, 7
        %v292 = vsub.s32 0, %v291
        %v293 = vrot.slane %v270, %v292
        %v294 = vlaneseq
        %v295 = vshrl.u32 %v294, 7
        %v296 = vsub.s32 0, %v295
        %v297 = vrot.slane %v271, %v296
        %v298 = vlaneseq
        %v299 = vshrl.u32 %v298, 7
        %v300 = vsub.s32 0, %v299
        %v301 = vrot.slane %v272, %v300
        %v302 = vlaneseq
        %v303 = vshrl.u32 %v302, 7
        %v304 = vsub.s32 0, %v303
        %v305 = vrot.slane %v273, %v304
        %307 = vset.pattern.permute.xlu0 0
        %308 = vperm.xlu0 %307, %v234
        %v309 = vpop.permute.xlu0 %308
        %312 = vset.pattern.permute.xlu0 0
        %313 = vperm.xlu0 %312, %v235
        %v314 = vpop.permute.xlu0 %313
        %317 = vset.pattern.permute.xlu0 0
        %318 = vperm.xlu0 %317, %v236
        %v319 = vpop.permute.xlu0 %318
        %322 = vset.pattern.permute.xlu0 0
        %323 = vperm.xlu0 %322, %v237
        %v324 = vpop.permute.xlu0 %323
        %327 = vset.pattern.permute.xlu0 0
        %328 = vperm.xlu0 %327, %v238
        %v329 = vpop.permute.xlu0 %328
        %332 = vset.pattern.permute.xlu0 0
        %333 = vperm.xlu0 %332, %v239
        %v334 = vpop.permute.xlu0 %333
        %337 = vset.pattern.permute.xlu0 0
        %338 = vperm.xlu0 %337, %v240
        %v339 = vpop.permute.xlu0 %338
        %342 = vset.pattern.permute.xlu0 0
        %343 = vperm.xlu0 %342, %v241
        %v344 = vpop.permute.xlu0 %343
        %v346 = vmul.f32 %v277, %v309
        %v347 = vmul.f32 %v277, %v314
        %v348 = vmul.f32 %v277, %v319
        %v349 = vmul.f32 %v277, %v324
        %v350 = vmul.f32 %v277, %v329
        %v351 = vmul.f32 %v277, %v334
        %v352 = vmul.f32 %v277, %v339
        %v353 = vmul.f32 %v277, %v344
        %v354 = vmul.f32 %v281, %v309
        %v355 = vmul.f32 %v281, %v314
        %v356 = vmul.f32 %v281, %v319
        %v357 = vmul.f32 %v281, %v324
        %v358 = vmul.f32 %v281, %v329
        %v359 = vmul.f32 %v281, %v334
        %v360 = vmul.f32 %v281, %v339
        %v361 = vmul.f32 %v281, %v344
        %v362 = vmul.f32 %v285, %v309
        %v363 = vmul.f32 %v285, %v314
        %v364 = vmul.f32 %v285, %v319
        %v365 = vmul.f32 %v285, %v324
        %v366 = vmul.f32 %v285, %v329
        %v367 = vmul.f32 %v285, %v334
        %v368 = vmul.f32 %v285, %v339
        %v369 = vmul.f32 %v285, %v344
        %v370 = vmul.f32 %v289, %v309
        %v371 = vmul.f32 %v289, %v314
        %v372 = vmul.f32 %v289, %v319
        %v373 = vmul.f32 %v289, %v324
        %v374 = vmul.f32 %v289, %v329
        %v375 = vmul.f32 %v289, %v334
        %v376 = vmul.f32 %v289, %v339
        %v377 = vmul.f32 %v289, %v344
        %v378 = vmul.f32 %v293, %v309
        %v379 = vmul.f32 %v293, %v314
        %v380 = vmul.f32 %v293, %v319
        %v381 = vmul.f32 %v293, %v324
        %v382 = vmul.f32 %v293, %v329
        %v383 = vmul.f32 %v293, %v334
        %v384 = vmul.f32 %v293, %v339
        %v385 = vmul.f32 %v293, %v344
        %v386 = vmul.f32 %v297, %v309
        %v387 = vmul.f32 %v297, %v314
        %v388 = vmul.f32 %v297, %v319
        %v389 = vmul.f32 %v297, %v324
        %v390 = vmul.f32 %v297, %v329
        %v391 = vmul.f32 %v297, %v334
        %v392 = vmul.f32 %v297, %v339
        %v393 = vmul.f32 %v297, %v344
        %v394 = vmul.f32 %v301, %v309
        %v395 = vmul.f32 %v301, %v314
        %v396 = vmul.f32 %v301, %v319
        %v397 = vmul.f32 %v301, %v324
        %v398 = vmul.f32 %v301, %v329
        %v399 = vmul.f32 %v301, %v334
        %v400 = vmul.f32 %v301, %v339
        %v401 = vmul.f32 %v301, %v344
        %v402 = vmul.f32 %v305, %v309
        %v403 = vmul.f32 %v305, %v314
        %v404 = vmul.f32 %v305, %v319
        %v405 = vmul.f32 %v305, %v324
        %v406 = vmul.f32 %v305, %v329
        %v407 = vmul.f32 %v305, %v334
        %v408 = vmul.f32 %v305, %v339
        %v409 = vmul.f32 %v305, %v344
        %v410 = vlaneseq
        %v411 = vshrl.u32 %v410, 7
        %v412 = vsub.s32 1, %v411
        %v413 = vrot.slane %v266, %v412
        %v414 = vlaneseq
        %v415 = vshrl.u32 %v414, 7
        %v416 = vsub.s32 1, %v415
        %v417 = vrot.slane %v267, %v416
        %v418 = vlaneseq
        %v419 = vshrl.u32 %v418, 7
        %v420 = vsub.s32 1, %v419
        %v421 = vrot.slane %v268, %v420
        %v422 = vlaneseq
        %v423 = vshrl.u32 %v422, 7
        %v424 = vsub.s32 1, %v423
        %v425 = vrot.slane %v269, %v424
        %v426 = vlaneseq
        %v427 = vshrl.u32 %v426, 7
        %v428 = vsub.s32 1, %v427
        %v429 = vrot.slane %v270, %v428
        %v430 = vlaneseq
        %v431 = vshrl.u32 %v430, 7
        %v432 = vsub.s32 1, %v431
        %v433 = vrot.slane %v271, %v432
        %v434 = vlaneseq
        %v435 = vshrl.u32 %v434, 7
        %v436 = vsub.s32 1, %v435
        %v437 = vrot.slane %v272, %v436
        %v438 = vlaneseq
        %v439 = vshrl.u32 %v438, 7
        %v440 = vsub.s32 1, %v439
        %v441 = vrot.slane %v273, %v440
        %443 = vset.pattern.permute.xlu0 0
        %444 = vperm.xlu0 %443, %v242
        %v445 = vpop.permute.xlu0 %444
        %448 = vset.pattern.permute.xlu0 0
        %449 = vperm.xlu0 %448, %v243
        %v450 = vpop.permute.xlu0 %449
        %453 = vset.pattern.permute.xlu0 0
        %454 = vperm.xlu0 %453, %v244
        %v455 = vpop.permute.xlu0 %454
        %458 = vset.pattern.permute.xlu0 0
        %459 = vperm.xlu0 %458, %v245
        %v460 = vpop.permute.xlu0 %459
        %463 = vset.pattern.permute.xlu0 0
        %464 = vperm.xlu0 %463, %v246
        %v465 = vpop.permute.xlu0 %464
        %468 = vset.pattern.permute.xlu0 0
        %469 = vperm.xlu0 %468, %v247
        %v470 = vpop.permute.xlu0 %469
        %473 = vset.pattern.permute.xlu0 0
        %474 = vperm.xlu0 %473, %v248
        %v475 = vpop.permute.xlu0 %474
        %478 = vset.pattern.permute.xlu0 0
        %479 = vperm.xlu0 %478, %v249
        %v480 = vpop.permute.xlu0 %479
        %v482 = vmul.f32 %v413, %v445
        %v483 = vmul.f32 %v413, %v450
        %v484 = vmul.f32 %v413, %v455
        %v485 = vmul.f32 %v413, %v460
        %v486 = vmul.f32 %v413, %v465
        %v487 = vmul.f32 %v413, %v470
        %v488 = vmul.f32 %v413, %v475
        %v489 = vmul.f32 %v413, %v480
        %v490 = vmul.f32 %v417, %v445
        %v491 = vmul.f32 %v417, %v450
        %v492 = vmul.f32 %v417, %v455
        %v493 = vmul.f32 %v417, %v460
        %v494 = vmul.f32 %v417, %v465
        %v495 = vmul.f32 %v417, %v470
        %v496 = vmul.f32 %v417, %v475
        %v497 = vmul.f32 %v417, %v480
        %v498 = vmul.f32 %v421, %v445
        %v499 = vmul.f32 %v421, %v450
        %v500 = vmul.f32 %v421, %v455
        %v501 = vmul.f32 %v421, %v460
        %v502 = vmul.f32 %v421, %v465
        %v503 = vmul.f32 %v421, %v470
        %v504 = vmul.f32 %v421, %v475
        %v505 = vmul.f32 %v421, %v480
        %v506 = vmul.f32 %v425, %v445
        %v507 = vmul.f32 %v425, %v450
        %v508 = vmul.f32 %v425, %v455
        %v509 = vmul.f32 %v425, %v460
        %v510 = vmul.f32 %v425, %v465
        %v511 = vmul.f32 %v425, %v470
        %v512 = vmul.f32 %v425, %v475
        %v513 = vmul.f32 %v425, %v480
        %v514 = vmul.f32 %v429, %v445
        %v515 = vmul.f32 %v429, %v450
        %v516 = vmul.f32 %v429, %v455
        %v517 = vmul.f32 %v429, %v460
        %v518 = vmul.f32 %v429, %v465
        %v519 = vmul.f32 %v429, %v470
        %v520 = vmul.f32 %v429, %v475
        %v521 = vmul.f32 %v429, %v480
        %v522 = vmul.f32 %v433, %v445
        %v523 = vmul.f32 %v433, %v450
        %v524 = vmul.f32 %v433, %v455
        %v525 = vmul.f32 %v433, %v460
        %v526 = vmul.f32 %v433, %v465
        %v527 = vmul.f32 %v433, %v470
        %v528 = vmul.f32 %v433, %v475
        %v529 = vmul.f32 %v433, %v480
        %v530 = vmul.f32 %v437, %v445
        %v531 = vmul.f32 %v437, %v450
        %v532 = vmul.f32 %v437, %v455
        %v533 = vmul.f32 %v437, %v460
        %v534 = vmul.f32 %v437, %v465
        %v535 = vmul.f32 %v437, %v470
        %v536 = vmul.f32 %v437, %v475
        %v537 = vmul.f32 %v437, %v480
        %v538 = vmul.f32 %v441, %v445
        %v539 = vmul.f32 %v441, %v450
        %v540 = vmul.f32 %v441, %v455
        %v541 = vmul.f32 %v441, %v460
        %v542 = vmul.f32 %v441, %v465
        %v543 = vmul.f32 %v441, %v470
        %v544 = vmul.f32 %v441, %v475
        %v545 = vmul.f32 %v441, %v480
        %v546 = vadd.f32 %v346, %v482
        %v547 = vadd.f32 %v347, %v483
        %v548 = vadd.f32 %v348, %v484
        %v549 = vadd.f32 %v349, %v485
        %v550 = vadd.f32 %v350, %v486
        %v551 = vadd.f32 %v351, %v487
        %v552 = vadd.f32 %v352, %v488
        %v553 = vadd.f32 %v353, %v489
        %v554 = vadd.f32 %v354, %v490
        %v555 = vadd.f32 %v355, %v491
        %v556 = vadd.f32 %v356, %v492
        %v557 = vadd.f32 %v357, %v493
        %v558 = vadd.f32 %v358, %v494
        %v559 = vadd.f32 %v359, %v495
        %v560 = vadd.f32 %v360, %v496
        %v561 = vadd.f32 %v361, %v497
        %v562 = vadd.f32 %v362, %v498
        %v563 = vadd.f32 %v363, %v499
        %v564 = vadd.f32 %v364, %v500
        %v565 = vadd.f32 %v365, %v501
        %v566 = vadd.f32 %v366, %v502
        %v567 = vadd.f32 %v367, %v503
        %v568 = vadd.f32 %v368, %v504
        %v569 = vadd.f32 %v369, %v505
        %v570 = vadd.f32 %v370, %v506
        %v571 = vadd.f32 %v371, %v507
        %v572 = vadd.f32 %v372, %v508
        %v573 = vadd.f32 %v373, %v509
        %v574 = vadd.f32 %v374, %v510
        %v575 = vadd.f32 %v375, %v511
        %v576 = vadd.f32 %v376, %v512
        %v577 = vadd.f32 %v377, %v513
        %v578 = vadd.f32 %v378, %v514
        %v579 = vadd.f32 %v379, %v515
        %v580 = vadd.f32 %v380, %v516
        %v581 = vadd.f32 %v381, %v517
        %v582 = vadd.f32 %v382, %v518
        %v583 = vadd.f32 %v383, %v519
        %v584 = vadd.f32 %v384, %v520
        %v585 = vadd.f32 %v385, %v521
        %v586 = vadd.f32 %v386, %v522
        %v587 = vadd.f32 %v387, %v523
        %v588 = vadd.f32 %v388, %v524
        %v589 = vadd.f32 %v389, %v525
        %v590 = vadd.f32 %v390, %v526
        %v591 = vadd.f32 %v391, %v527
        %v592 = vadd.f32 %v392, %v528
        %v593 = vadd.f32 %v393, %v529
        %v594 = vadd.f32 %v394, %v530
        %v595 = vadd.f32 %v395, %v531
        %v596 = vadd.f32 %v396, %v532
        %v597 = vadd.f32 %v397, %v533
        %v598 = vadd.f32 %v398, %v534
        %v599 = vadd.f32 %v399, %v535
        %v600 = vadd.f32 %v400, %v536
        %v601 = vadd.f32 %v401, %v537
        %v602 = vadd.f32 %v402, %v538
        %v603 = vadd.f32 %v403, %v539
        %v604 = vadd.f32 %v404, %v540
        %v605 = vadd.f32 %v405, %v541
        %v606 = vadd.f32 %v406, %v542
        %v607 = vadd.f32 %v407, %v543
        %v608 = vadd.f32 %v408, %v544
        %v609 = vadd.f32 %v409, %v545
        %v610 = vlaneseq
        %v611 = vshrl.u32 %v610, 7
        %v612 = vsub.s32 2, %v611
        %v613 = vrot.slane %v266, %v612
        %v614 = vlaneseq
        %v615 = vshrl.u32 %v614, 7
        %v616 = vsub.s32 2, %v615
        %v617 = vrot.slane %v267, %v616
        %v618 = vlaneseq
        %v619 = vshrl.u32 %v618, 7
        %v620 = vsub.s32 2, %v619
        %v621 = vrot.slane %v268, %v620
        %v622 = vlaneseq
        %v623 = vshrl.u32 %v622, 7
        %v624 = vsub.s32 2, %v623
        %v625 = vrot.slane %v269, %v624
        %v626 = vlaneseq
        %v627 = vshrl.u32 %v626, 7
        %v628 = vsub.s32 2, %v627
        %v629 = vrot.slane %v270, %v628
        %v630 = vlaneseq
        %v631 = vshrl.u32 %v630, 7
        %v632 = vsub.s32 2, %v631
        %v633 = vrot.slane %v271, %v632
        %v634 = vlaneseq
        %v635 = vshrl.u32 %v634, 7
        %v636 = vsub.s32 2, %v635
        %v637 = vrot.slane %v272, %v636
        %v638 = vlaneseq
        %v639 = vshrl.u32 %v638, 7
        %v640 = vsub.s32 2, %v639
        %v641 = vrot.slane %v273, %v640
        %643 = vset.pattern.permute.xlu0 0
        %644 = vperm.xlu0 %643, %v250
        %v645 = vpop.permute.xlu0 %644
        %648 = vset.pattern.permute.xlu0 0
        %649 = vperm.xlu0 %648, %v251
        %v650 = vpop.permute.xlu0 %649
        %653 = vset.pattern.permute.xlu0 0
        %654 = vperm.xlu0 %653, %v252
        %v655 = vpop.permute.xlu0 %654
        %658 = vset.pattern.permute.xlu0 0
        %659 = vperm.xlu0 %658, %v253
        %v660 = vpop.permute.xlu0 %659
        %663 = vset.pattern.permute.xlu0 0
        %664 = vperm.xlu0 %663, %v254
        %v665 = vpop.permute.xlu0 %664
        %668 = vset.pattern.permute.xlu0 0
        %669 = vperm.xlu0 %668, %v255
        %v670 = vpop.permute.xlu0 %669
        %673 = vset.pattern.permute.xlu0 0
        %674 = vperm.xlu0 %673, %v256
        %v675 = vpop.permute.xlu0 %674
        %678 = vset.pattern.permute.xlu0 0
        %679 = vperm.xlu0 %678, %v257
        %v680 = vpop.permute.xlu0 %679
        %v682 = vmul.f32 %v613, %v645
        %v683 = vmul.f32 %v613, %v650
        %v684 = vmul.f32 %v613, %v655
        %v685 = vmul.f32 %v613, %v660
        %v686 = vmul.f32 %v613, %v665
        %v687 = vmul.f32 %v613, %v670
        %v688 = vmul.f32 %v613, %v675
        %v689 = vmul.f32 %v613, %v680
        %v690 = vmul.f32 %v617, %v645
        %v691 = vmul.f32 %v617, %v650
        %v692 = vmul.f32 %v617, %v655
        %v693 = vmul.f32 %v617, %v660
        %v694 = vmul.f32 %v617, %v665
        %v695 = vmul.f32 %v617, %v670
        %v696 = vmul.f32 %v617, %v675
        %v697 = vmul.f32 %v617, %v680
        %v698 = vmul.f32 %v621, %v645
        %v699 = vmul.f32 %v621, %v650
        %v700 = vmul.f32 %v621, %v655
        %v701 = vmul.f32 %v621, %v660
        %v702 = vmul.f32 %v621, %v665
        %v703 = vmul.f32 %v621, %v670
        %v704 = vmul.f32 %v621, %v675
        %v705 = vmul.f32 %v621, %v680
        %v706 = vmul.f32 %v625, %v645
        %v707 = vmul.f32 %v625, %v650
        %v708 = vmul.f32 %v625, %v655
        %v709 = vmul.f32 %v625, %v660
        %v710 = vmul.f32 %v625, %v665
        %v711 = vmul.f32 %v625, %v670
        %v712 = vmul.f32 %v625, %v675
        %v713 = vmul.f32 %v625, %v680
        %v714 = vmul.f32 %v629, %v645
        %v715 = vmul.f32 %v629, %v650
        %v716 = vmul.f32 %v629, %v655
        %v717 = vmul.f32 %v629, %v660
        %v718 = vmul.f32 %v629, %v665
        %v719 = vmul.f32 %v629, %v670
        %v720 = vmul.f32 %v629, %v675
        %v721 = vmul.f32 %v629, %v680
        %v722 = vmul.f32 %v633, %v645
        %v723 = vmul.f32 %v633, %v650
        %v724 = vmul.f32 %v633, %v655
        %v725 = vmul.f32 %v633, %v660
        %v726 = vmul.f32 %v633, %v665
        %v727 = vmul.f32 %v633, %v670
        %v728 = vmul.f32 %v633, %v675
        %v729 = vmul.f32 %v633, %v680
        %v730 = vmul.f32 %v637, %v645
        %v731 = vmul.f32 %v637, %v650
        %v732 = vmul.f32 %v637, %v655
        %v733 = vmul.f32 %v637, %v660
        %v734 = vmul.f32 %v637, %v665
        %v735 = vmul.f32 %v637, %v670
        %v736 = vmul.f32 %v637, %v675
        %v737 = vmul.f32 %v637, %v680
        %v738 = vmul.f32 %v641, %v645
        %v739 = vmul.f32 %v641, %v650
        %v740 = vmul.f32 %v641, %v655
        %v741 = vmul.f32 %v641, %v660
        %v742 = vmul.f32 %v641, %v665
        %v743 = vmul.f32 %v641, %v670
        %v744 = vmul.f32 %v641, %v675
        %v745 = vmul.f32 %v641, %v680
        %v746 = vadd.f32 %v546, %v682
        %v747 = vadd.f32 %v547, %v683
        %v748 = vadd.f32 %v548, %v684
        %v749 = vadd.f32 %v549, %v685
        %v750 = vadd.f32 %v550, %v686
        %v751 = vadd.f32 %v551, %v687
        %v752 = vadd.f32 %v552, %v688
        %v753 = vadd.f32 %v553, %v689
        %v754 = vadd.f32 %v554, %v690
        %v755 = vadd.f32 %v555, %v691
        %v756 = vadd.f32 %v556, %v692
        %v757 = vadd.f32 %v557, %v693
        %v758 = vadd.f32 %v558, %v694
        %v759 = vadd.f32 %v559, %v695
        %v760 = vadd.f32 %v560, %v696
        %v761 = vadd.f32 %v561, %v697
        %v762 = vadd.f32 %v562, %v698
        %v763 = vadd.f32 %v563, %v699
        %v764 = vadd.f32 %v564, %v700
        %v765 = vadd.f32 %v565, %v701
        %v766 = vadd.f32 %v566, %v702
        %v767 = vadd.f32 %v567, %v703
        %v768 = vadd.f32 %v568, %v704
        %v769 = vadd.f32 %v569, %v705
        %v770 = vadd.f32 %v570, %v706
        %v771 = vadd.f32 %v571, %v707
        %v772 = vadd.f32 %v572, %v708
        %v773 = vadd.f32 %v573, %v709
        %v774 = vadd.f32 %v574, %v710
        %v775 = vadd.f32 %v575, %v711
        %v776 = vadd.f32 %v576, %v712
        %v777 = vadd.f32 %v577, %v713
        %v778 = vadd.f32 %v578, %v714
        %v779 = vadd.f32 %v579, %v715
        %v780 = vadd.f32 %v580, %v716
        %v781 = vadd.f32 %v581, %v717
        %v782 = vadd.f32 %v582, %v718
        %v783 = vadd.f32 %v583, %v719
        %v784 = vadd.f32 %v584, %v720
        %v785 = vadd.f32 %v585, %v721
        %v786 = vadd.f32 %v586, %v722
        %v787 = vadd.f32 %v587, %v723
        %v788 = vadd.f32 %v588, %v724
        %v789 = vadd.f32 %v589, %v725
        %v790 = vadd.f32 %v590, %v726
        %v791 = vadd.f32 %v591, %v727
        %v792 = vadd.f32 %v592, %v728
        %v793 = vadd.f32 %v593, %v729
        %v794 = vadd.f32 %v594, %v730
        %v795 = vadd.f32 %v595, %v731
        %v796 = vadd.f32 %v596, %v732
        %v797 = vadd.f32 %v597, %v733
        %v798 = vadd.f32 %v598, %v734
        %v799 = vadd.f32 %v599, %v735
        %v800 = vadd.f32 %v600, %v736
        %v801 = vadd.f32 %v601, %v737
        %v802 = vadd.f32 %v602, %v738
        %v803 = vadd.f32 %v603, %v739
        %v804 = vadd.f32 %v604, %v740
        %v805 = vadd.f32 %v605, %v741
        %v806 = vadd.f32 %v606, %v742
        %v807 = vadd.f32 %v607, %v743
        %v808 = vadd.f32 %v608, %v744
        %v809 = vadd.f32 %v609, %v745
        %811 = vset.pattern.permute.xlu0 0
        %812 = vperm.xlu0 %811, %v258
        %v813 = vpop.permute.xlu0 %812
        %816 = vset.pattern.permute.xlu0 0
        %817 = vperm.xlu0 %816, %v259
        %v818 = vpop.permute.xlu0 %817
        %821 = vset.pattern.permute.xlu0 0
        %822 = vperm.xlu0 %821, %v260
        %v823 = vpop.permute.xlu0 %822
        %826 = vset.pattern.permute.xlu0 0
        %827 = vperm.xlu0 %826, %v261
        %v828 = vpop.permute.xlu0 %827
        %831 = vset.pattern.permute.xlu0 0
        %832 = vperm.xlu0 %831, %v262
        %v833 = vpop.permute.xlu0 %832
        %836 = vset.pattern.permute.xlu0 0
        %837 = vperm.xlu0 %836, %v263
        %v838 = vpop.permute.xlu0 %837
        %841 = vset.pattern.permute.xlu0 0
        %842 = vperm.xlu0 %841, %v264
        %v843 = vpop.permute.xlu0 %842
        %846 = vset.pattern.permute.xlu0 0
        %847 = vperm.xlu0 %846, %v265
        %v848 = vpop.permute.xlu0 %847
        %v850 = vadd.f32 %v746, %v813
        %v851 = vadd.f32 %v747, %v818
        %v852 = vadd.f32 %v748, %v823
        %v853 = vadd.f32 %v749, %v828
        %v854 = vadd.f32 %v750, %v833
        %v855 = vadd.f32 %v751, %v838
        %v856 = vadd.f32 %v752, %v843
        %v857 = vadd.f32 %v753, %v848
        %v858 = vadd.f32 %v754, %v813
        %v859 = vadd.f32 %v755, %v818
        %v860 = vadd.f32 %v756, %v823
        %v861 = vadd.f32 %v757, %v828
        %v862 = vadd.f32 %v758, %v833
        %v863 = vadd.f32 %v759, %v838
        %v864 = vadd.f32 %v760, %v843
        %v865 = vadd.f32 %v761, %v848
        %v866 = vadd.f32 %v762, %v813
        %v867 = vadd.f32 %v763, %v818
        %v868 = vadd.f32 %v764, %v823
        %v869 = vadd.f32 %v765, %v828
        %v870 = vadd.f32 %v766, %v833
        %v871 = vadd.f32 %v767, %v838
        %v872 = vadd.f32 %v768, %v843
        %v873 = vadd.f32 %v769, %v848
        %v874 = vadd.f32 %v770, %v813
        %v875 = vadd.f32 %v771, %v818
        %v876 = vadd.f32 %v772, %v823
        %v877 = vadd.f32 %v773, %v828
        %v878 = vadd.f32 %v774, %v833
        %v879 = vadd.f32 %v775, %v838
        %v880 = vadd.f32 %v776, %v843
        %v881 = vadd.f32 %v777, %v848
        %v882 = vadd.f32 %v778, %v813
        %v883 = vadd.f32 %v779, %v818
        %v884 = vadd.f32 %v780, %v823
        %v885 = vadd.f32 %v781, %v828
        %v886 = vadd.f32 %v782, %v833
        %v887 = vadd.f32 %v783, %v838
        %v888 = vadd.f32 %v784, %v843
        %v889 = vadd.f32 %v785, %v848
        %v890 = vadd.f32 %v786, %v813
        %v891 = vadd.f32 %v787, %v818
        %v892 = vadd.f32 %v788, %v823
        %v893 = vadd.f32 %v789, %v828
        %v894 = vadd.f32 %v790, %v833
        %v895 = vadd.f32 %v791, %v838
        %v896 = vadd.f32 %v792, %v843
        %v897 = vadd.f32 %v793, %v848
        %v898 = vadd.f32 %v794, %v813
        %v899 = vadd.f32 %v795, %v818
        %v900 = vadd.f32 %v796, %v823
        %v901 = vadd.f32 %v797, %v828
        %v902 = vadd.f32 %v798, %v833
        %v903 = vadd.f32 %v799, %v838
        %v904 = vadd.f32 %v800, %v843
        %v905 = vadd.f32 %v801, %v848
        %v906 = vadd.f32 %v802, %v813
        %v907 = vadd.f32 %v803, %v818
        %v908 = vadd.f32 %v804, %v823
        %v909 = vadd.f32 %v805, %v828
        %v910 = vadd.f32 %v806, %v833
        %v911 = vadd.f32 %v807, %v838
        %v912 = vadd.f32 %v808, %v843
        %v913 = vadd.f32 %v809, %v848
        %v914 = vxor.u32 %v850, 2147483648
        %v915 = vxor.u32 %v851, 2147483648
        %v916 = vxor.u32 %v852, 2147483648
        %v917 = vxor.u32 %v853, 2147483648
        %v918 = vxor.u32 %v854, 2147483648
        %v919 = vxor.u32 %v855, 2147483648
        %v920 = vxor.u32 %v856, 2147483648
        %v921 = vxor.u32 %v857, 2147483648
        %v922 = vxor.u32 %v858, 2147483648
        %v923 = vxor.u32 %v859, 2147483648
        %v924 = vxor.u32 %v860, 2147483648
        %v925 = vxor.u32 %v861, 2147483648
        %v926 = vxor.u32 %v862, 2147483648
        %v927 = vxor.u32 %v863, 2147483648
        %v928 = vxor.u32 %v864, 2147483648
        %v929 = vxor.u32 %v865, 2147483648
        %v930 = vxor.u32 %v866, 2147483648
        %v931 = vxor.u32 %v867, 2147483648
        %v932 = vxor.u32 %v868, 2147483648
        %v933 = vxor.u32 %v869, 2147483648
        %v934 = vxor.u32 %v870, 2147483648
        %v935 = vxor.u32 %v871, 2147483648
        %v936 = vxor.u32 %v872, 2147483648
        %v937 = vxor.u32 %v873, 2147483648
        %v938 = vxor.u32 %v874, 2147483648
        %v939 = vxor.u32 %v875, 2147483648
        %v940 = vxor.u32 %v876, 2147483648
        %v941 = vxor.u32 %v877, 2147483648
        %v942 = vxor.u32 %v878, 2147483648
        %v943 = vxor.u32 %v879, 2147483648
        %v944 = vxor.u32 %v880, 2147483648
        %v945 = vxor.u32 %v881, 2147483648
        %v946 = vxor.u32 %v882, 2147483648
        %v947 = vxor.u32 %v883, 2147483648
        %v948 = vxor.u32 %v884, 2147483648
        %v949 = vxor.u32 %v885, 2147483648
        %v950 = vxor.u32 %v886, 2147483648
        %v951 = vxor.u32 %v887, 2147483648
        %v952 = vxor.u32 %v888, 2147483648
        %v953 = vxor.u32 %v889, 2147483648
        %v954 = vxor.u32 %v890, 2147483648
        %v955 = vxor.u32 %v891, 2147483648
        %v956 = vxor.u32 %v892, 2147483648
        %v957 = vxor.u32 %v893, 2147483648
        %v958 = vxor.u32 %v894, 2147483648
        %v959 = vxor.u32 %v895, 2147483648
        %v960 = vxor.u32 %v896, 2147483648
        %v961 = vxor.u32 %v897, 2147483648
        %v962 = vxor.u32 %v898, 2147483648
        %v963 = vxor.u32 %v899, 2147483648
        %v964 = vxor.u32 %v900, 2147483648
        %v965 = vxor.u32 %v901, 2147483648
        %v966 = vxor.u32 %v902, 2147483648
        %v967 = vxor.u32 %v903, 2147483648
        %v968 = vxor.u32 %v904, 2147483648
        %v969 = vxor.u32 %v905, 2147483648
        %v970 = vxor.u32 %v906, 2147483648
        %v971 = vxor.u32 %v907, 2147483648
        %v972 = vxor.u32 %v908, 2147483648
        %v973 = vxor.u32 %v909, 2147483648
        %v974 = vxor.u32 %v910, 2147483648
        %v975 = vxor.u32 %v911, 2147483648
        %v976 = vxor.u32 %v912, 2147483648
        %v977 = vxor.u32 %v913, 2147483648
        %v978 = vmul.f32 %v914, 1.442695
        %v979 = vpow.pop %v978
        %v980 = vmul.f32 %v915, 1.442695
        %v981 = vpow.pop %v980
        %v982 = vmul.f32 %v916, 1.442695
        %v983 = vpow.pop %v982
        %v984 = vmul.f32 %v917, 1.442695
        %v985 = vpow.pop %v984
        %v986 = vmul.f32 %v918, 1.442695
        %v987 = vpow.pop %v986
        %v988 = vmul.f32 %v919, 1.442695
        %v989 = vpow.pop %v988
        %v990 = vmul.f32 %v920, 1.442695
        %v991 = vpow.pop %v990
        %v992 = vmul.f32 %v921, 1.442695
        %v993 = vpow.pop %v992
        %v994 = vmul.f32 %v922, 1.442695
        %v995 = vpow.pop %v994
        %v996 = vmul.f32 %v923, 1.442695
        %v997 = vpow.pop %v996
        %v998 = vmul.f32 %v924, 1.442695
        %v999 = vpow.pop %v998
        %v1000 = vmul.f32 %v925, 1.442695
        %v1001 = vpow.pop %v1000
        %v1002 = vmul.f32 %v926, 1.442695
        %v1003 = vpow.pop %v1002
        %v1004 = vmul.f32 %v927, 1.442695
        %v1005 = vpow.pop %v1004
        %v1006 = vmul.f32 %v928, 1.442695
        %v1007 = vpow.pop %v1006
        %v1008 = vmul.f32 %v929, 1.442695
        %v1009 = vpow.pop %v1008
        %v1010 = vmul.f32 %v930, 1.442695
        %v1011 = vpow.pop %v1010
        %v1012 = vmul.f32 %v931, 1.442695
        %v1013 = vpow.pop %v1012
        %v1014 = vmul.f32 %v932, 1.442695
        %v1015 = vpow.pop %v1014
        %v1016 = vmul.f32 %v933, 1.442695
        %v1017 = vpow.pop %v1016
        %v1018 = vmul.f32 %v934, 1.442695
        %v1019 = vpow.pop %v1018
        %v1020 = vmul.f32 %v935, 1.442695
        %v1021 = vpow.pop %v1020
        %v1022 = vmul.f32 %v936, 1.442695
        %v1023 = vpow.pop %v1022
        %v1024 = vmul.f32 %v937, 1.442695
        %v1025 = vpow.pop %v1024
        %v1026 = vmul.f32 %v938, 1.442695
        %v1027 = vpow.pop %v1026
        %v1028 = vmul.f32 %v939, 1.442695
        %v1029 = vpow.pop %v1028
        %v1030 = vmul.f32 %v940, 1.442695
        %v1031 = vpow.pop %v1030
        %v1032 = vmul.f32 %v941, 1.442695
        %v1033 = vpow.pop %v1032
        %v1034 = vmul.f32 %v942, 1.442695
        %v1035 = vpow.pop %v1034
        %v1036 = vmul.f32 %v943, 1.442695
        %v1037 = vpow.pop %v1036
        %v1038 = vmul.f32 %v944, 1.442695
        %v1039 = vpow.pop %v1038
        %v1040 = vmul.f32 %v945, 1.442695
        %v1041 = vpow.pop %v1040
        %v1042 = vmul.f32 %v946, 1.442695
        %v1043 = vpow.pop %v1042
        %v1044 = vmul.f32 %v947, 1.442695
        %v1045 = vpow.pop %v1044
        %v1046 = vmul.f32 %v948, 1.442695
        %v1047 = vpow.pop %v1046
        %v1048 = vmul.f32 %v949, 1.442695
        %v1049 = vpow.pop %v1048
        %v1050 = vmul.f32 %v950, 1.442695
        %v1051 = vpow.pop %v1050
        %v1052 = vmul.f32 %v951, 1.442695
        %v1053 = vpow.pop %v1052
        %v1054 = vmul.f32 %v952, 1.442695
        %v1055 = vpow.pop %v1054
        %v1056 = vmul.f32 %v953, 1.442695
        %v1057 = vpow.pop %v1056
        %v1058 = vmul.f32 %v954, 1.442695
        %v1059 = vpow.pop %v1058
        %v1060 = vmul.f32 %v955, 1.442695
        %v1061 = vpow.pop %v1060
        %v1062 = vmul.f32 %v956, 1.442695
        %v1063 = vpow.pop %v1062
        %v1064 = vmul.f32 %v957, 1.442695
        %v1065 = vpow.pop %v1064
        %v1066 = vmul.f32 %v958, 1.442695
        %v1067 = vpow.pop %v1066
        %v1068 = vmul.f32 %v959, 1.442695
        %v1069 = vpow.pop %v1068
        %v1070 = vmul.f32 %v960, 1.442695
        %v1071 = vpow.pop %v1070
        %v1072 = vmul.f32 %v961, 1.442695
        %v1073 = vpow.pop %v1072
        %v1074 = vmul.f32 %v962, 1.442695
        %v1075 = vpow.pop %v1074
        %v1076 = vmul.f32 %v963, 1.442695
        %v1077 = vpow.pop %v1076
        %v1078 = vmul.f32 %v964, 1.442695
        %v1079 = vpow.pop %v1078
        %v1080 = vmul.f32 %v965, 1.442695
        %v1081 = vpow.pop %v1080
        %v1082 = vmul.f32 %v966, 1.442695
        %v1083 = vpow.pop %v1082
        %v1084 = vmul.f32 %v967, 1.442695
        %v1085 = vpow.pop %v1084
        %v1086 = vmul.f32 %v968, 1.442695
        %v1087 = vpow.pop %v1086
        %v1088 = vmul.f32 %v969, 1.442695
        %v1089 = vpow.pop %v1088
        %v1090 = vmul.f32 %v970, 1.442695
        %v1091 = vpow.pop %v1090
        %v1092 = vmul.f32 %v971, 1.442695
        %v1093 = vpow.pop %v1092
        %v1094 = vmul.f32 %v972, 1.442695
        %v1095 = vpow.pop %v1094
        %v1096 = vmul.f32 %v973, 1.442695
        %v1097 = vpow.pop %v1096
        %v1098 = vmul.f32 %v974, 1.442695
        %v1099 = vpow.pop %v1098
        %v1100 = vmul.f32 %v975, 1.442695
        %v1101 = vpow.pop %v1100
        %v1102 = vmul.f32 %v976, 1.442695
        %v1103 = vpow.pop %v1102
        %v1104 = vmul.f32 %v977, 1.442695
        %v1105 = vpow.pop %v1104
        %v1106 = vadd.f32 %v979, 1.0
        %v1107 = vadd.f32 %v981, 1.0
        %v1108 = vadd.f32 %v983, 1.0
        %v1109 = vadd.f32 %v985, 1.0
        %v1110 = vadd.f32 %v987, 1.0
        %v1111 = vadd.f32 %v989, 1.0
        %v1112 = vadd.f32 %v991, 1.0
        %v1113 = vadd.f32 %v993, 1.0
        %v1114 = vadd.f32 %v995, 1.0
        %v1115 = vadd.f32 %v997, 1.0
        %v1116 = vadd.f32 %v999, 1.0
        %v1117 = vadd.f32 %v1001, 1.0
        %v1118 = vadd.f32 %v1003, 1.0
        %v1119 = vadd.f32 %v1005, 1.0
        %v1120 = vadd.f32 %v1007, 1.0
        %v1121 = vadd.f32 %v1009, 1.0
        %v1122 = vadd.f32 %v1011, 1.0
        %v1123 = vadd.f32 %v1013, 1.0
        %v1124 = vadd.f32 %v1015, 1.0
        %v1125 = vadd.f32 %v1017, 1.0
        %v1126 = vadd.f32 %v1019, 1.0
        %v1127 = vadd.f32 %v1021, 1.0
        %v1128 = vadd.f32 %v1023, 1.0
        %v1129 = vadd.f32 %v1025, 1.0
        %v1130 = vadd.f32 %v1027, 1.0
        %v1131 = vadd.f32 %v1029, 1.0
        %v1132 = vadd.f32 %v1031, 1.0
        %v1133 = vadd.f32 %v1033, 1.0
        %v1134 = vadd.f32 %v1035, 1.0
        %v1135 = vadd.f32 %v1037, 1.0
        %v1136 = vadd.f32 %v1039, 1.0
        %v1137 = vadd.f32 %v1041, 1.0
        %v1138 = vadd.f32 %v1043, 1.0
        %v1139 = vadd.f32 %v1045, 1.0
        %v1140 = vadd.f32 %v1047, 1.0
        %v1141 = vadd.f32 %v1049, 1.0
        %v1142 = vadd.f32 %v1051, 1.0
        %v1143 = vadd.f32 %v1053, 1.0
        %v1144 = vadd.f32 %v1055, 1.0
        %v1145 = vadd.f32 %v1057, 1.0
        %v1146 = vadd.f32 %v1059, 1.0
        %v1147 = vadd.f32 %v1061, 1.0
        %v1148 = vadd.f32 %v1063, 1.0
        %v1149 = vadd.f32 %v1065, 1.0
        %v1150 = vadd.f32 %v1067, 1.0
        %v1151 = vadd.f32 %v1069, 1.0
        %v1152 = vadd.f32 %v1071, 1.0
        %v1153 = vadd.f32 %v1073, 1.0
        %v1154 = vadd.f32 %v1075, 1.0
        %v1155 = vadd.f32 %v1077, 1.0
        %v1156 = vadd.f32 %v1079, 1.0
        %v1157 = vadd.f32 %v1081, 1.0
        %v1158 = vadd.f32 %v1083, 1.0
        %v1159 = vadd.f32 %v1085, 1.0
        %v1160 = vadd.f32 %v1087, 1.0
        %v1161 = vadd.f32 %v1089, 1.0
        %v1162 = vadd.f32 %v1091, 1.0
        %v1163 = vadd.f32 %v1093, 1.0
        %v1164 = vadd.f32 %v1095, 1.0
        %v1165 = vadd.f32 %v1097, 1.0
        %v1166 = vadd.f32 %v1099, 1.0
        %v1167 = vadd.f32 %v1101, 1.0
        %v1168 = vadd.f32 %v1103, 1.0
        %v1169 = vadd.f32 %v1105, 1.0
        %v1170 = vrcp.pop %v1106
        %v1171 = vmul.f32 1.0, %v1170
        %v1172 = vrcp.pop %v1107
        %v1173 = vmul.f32 1.0, %v1172
        %v1174 = vrcp.pop %v1108
        %v1175 = vmul.f32 1.0, %v1174
        %v1176 = vrcp.pop %v1109
        %v1177 = vmul.f32 1.0, %v1176
        %v1178 = vrcp.pop %v1110
        %v1179 = vmul.f32 1.0, %v1178
        %v1180 = vrcp.pop %v1111
        %v1181 = vmul.f32 1.0, %v1180
        %v1182 = vrcp.pop %v1112
        %v1183 = vmul.f32 1.0, %v1182
        %v1184 = vrcp.pop %v1113
        %v1185 = vmul.f32 1.0, %v1184
        %v1186 = vrcp.pop %v1114
        %v1187 = vmul.f32 1.0, %v1186
        %v1188 = vrcp.pop %v1115
        %v1189 = vmul.f32 1.0, %v1188
        %v1190 = vrcp.pop %v1116
        %v1191 = vmul.f32 1.0, %v1190
        %v1192 = vrcp.pop %v1117
        %v1193 = vmul.f32 1.0, %v1192
        %v1194 = vrcp.pop %v1118
        %v1195 = vmul.f32 1.0, %v1194
        %v1196 = vrcp.pop %v1119
        %v1197 = vmul.f32 1.0, %v1196
        %v1198 = vrcp.pop %v1120
        %v1199 = vmul.f32 1.0, %v1198
        %v1200 = vrcp.pop %v1121
        %v1201 = vmul.f32 1.0, %v1200
        %v1202 = vrcp.pop %v1122
        %v1203 = vmul.f32 1.0, %v1202
        %v1204 = vrcp.pop %v1123
        %v1205 = vmul.f32 1.0, %v1204
        %v1206 = vrcp.pop %v1124
        %v1207 = vmul.f32 1.0, %v1206
        %v1208 = vrcp.pop %v1125
        %v1209 = vmul.f32 1.0, %v1208
        %v1210 = vrcp.pop %v1126
        %v1211 = vmul.f32 1.0, %v1210
        %v1212 = vrcp.pop %v1127
        %v1213 = vmul.f32 1.0, %v1212
        %v1214 = vrcp.pop %v1128
        %v1215 = vmul.f32 1.0, %v1214
        %v1216 = vrcp.pop %v1129
        %v1217 = vmul.f32 1.0, %v1216
        %v1218 = vrcp.pop %v1130
        %v1219 = vmul.f32 1.0, %v1218
        %v1220 = vrcp.pop %v1131
        %v1221 = vmul.f32 1.0, %v1220
        %v1222 = vrcp.pop %v1132
        %v1223 = vmul.f32 1.0, %v1222
        %v1224 = vrcp.pop %v1133
        %v1225 = vmul.f32 1.0, %v1224
        %v1226 = vrcp.pop %v1134
        %v1227 = vmul.f32 1.0, %v1226
        %v1228 = vrcp.pop %v1135
        %v1229 = vmul.f32 1.0, %v1228
        %v1230 = vrcp.pop %v1136
        %v1231 = vmul.f32 1.0, %v1230
        %v1232 = vrcp.pop %v1137
        %v1233 = vmul.f32 1.0, %v1232
        %v1234 = vrcp.pop %v1138
        %v1235 = vmul.f32 1.0, %v1234
        %v1236 = vrcp.pop %v1139
        %v1237 = vmul.f32 1.0, %v1236
        %v1238 = vrcp.pop %v1140
        %v1239 = vmul.f32 1.0, %v1238
        %v1240 = vrcp.pop %v1141
        %v1241 = vmul.f32 1.0, %v1240
        %v1242 = vrcp.pop %v1142
        %v1243 = vmul.f32 1.0, %v1242
        %v1244 = vrcp.pop %v1143
        %v1245 = vmul.f32 1.0, %v1244
        %v1246 = vrcp.pop %v1144
        %v1247 = vmul.f32 1.0, %v1246
        %v1248 = vrcp.pop %v1145
        %v1249 = vmul.f32 1.0, %v1248
        %v1250 = vrcp.pop %v1146
        %v1251 = vmul.f32 1.0, %v1250
        %v1252 = vrcp.pop %v1147
        %v1253 = vmul.f32 1.0, %v1252
        %v1254 = vrcp.pop %v1148
        %v1255 = vmul.f32 1.0, %v1254
        %v1256 = vrcp.pop %v1149
        %v1257 = vmul.f32 1.0, %v1256
        %v1258 = vrcp.pop %v1150
        %v1259 = vmul.f32 1.0, %v1258
        %v1260 = vrcp.pop %v1151
        %v1261 = vmul.f32 1.0, %v1260
        %v1262 = vrcp.pop %v1152
        %v1263 = vmul.f32 1.0, %v1262
        %v1264 = vrcp.pop %v1153
        %v1265 = vmul.f32 1.0, %v1264
        %v1266 = vrcp.pop %v1154
        %v1267 = vmul.f32 1.0, %v1266
        %v1268 = vrcp.pop %v1155
        %v1269 = vmul.f32 1.0, %v1268
        %v1270 = vrcp.pop %v1156
        %v1271 = vmul.f32 1.0, %v1270
        %v1272 = vrcp.pop %v1157
        %v1273 = vmul.f32 1.0, %v1272
        %v1274 = vrcp.pop %v1158
        %v1275 = vmul.f32 1.0, %v1274
        %v1276 = vrcp.pop %v1159
        %v1277 = vmul.f32 1.0, %v1276
        %v1278 = vrcp.pop %v1160
        %v1279 = vmul.f32 1.0, %v1278
        %v1280 = vrcp.pop %v1161
        %v1281 = vmul.f32 1.0, %v1280
        %v1282 = vrcp.pop %v1162
        %v1283 = vmul.f32 1.0, %v1282
        %v1284 = vrcp.pop %v1163
        %v1285 = vmul.f32 1.0, %v1284
        %v1286 = vrcp.pop %v1164
        %v1287 = vmul.f32 1.0, %v1286
        %v1288 = vrcp.pop %v1165
        %v1289 = vmul.f32 1.0, %v1288
        %v1290 = vrcp.pop %v1166
        %v1291 = vmul.f32 1.0, %v1290
        %v1292 = vrcp.pop %v1167
        %v1293 = vmul.f32 1.0, %v1292
        %v1294 = vrcp.pop %v1168
        %v1295 = vmul.f32 1.0, %v1294
        %v1296 = vrcp.pop %v1169
        %v1297 = vmul.f32 1.0, %v1296
        %v1298 = vmul.f32 %v850, %v1171
        %v1299 = vmul.f32 %v851, %v1173
        %v1300 = vmul.f32 %v852, %v1175
        %v1301 = vmul.f32 %v853, %v1177
        %v1302 = vmul.f32 %v854, %v1179
        %v1303 = vmul.f32 %v855, %v1181
        %v1304 = vmul.f32 %v856, %v1183
        %v1305 = vmul.f32 %v857, %v1185
        %v1306 = vmul.f32 %v858, %v1187
        %v1307 = vmul.f32 %v859, %v1189
        %v1308 = vmul.f32 %v860, %v1191
        %v1309 = vmul.f32 %v861, %v1193
        %v1310 = vmul.f32 %v862, %v1195
        %v1311 = vmul.f32 %v863, %v1197
        %v1312 = vmul.f32 %v864, %v1199
        %v1313 = vmul.f32 %v865, %v1201
        %v1314 = vmul.f32 %v866, %v1203
        %v1315 = vmul.f32 %v867, %v1205
        %v1316 = vmul.f32 %v868, %v1207
        %v1317 = vmul.f32 %v869, %v1209
        %v1318 = vmul.f32 %v870, %v1211
        %v1319 = vmul.f32 %v871, %v1213
        %v1320 = vmul.f32 %v872, %v1215
        %v1321 = vmul.f32 %v873, %v1217
        %v1322 = vmul.f32 %v874, %v1219
        %v1323 = vmul.f32 %v875, %v1221
        %v1324 = vmul.f32 %v876, %v1223
        %v1325 = vmul.f32 %v877, %v1225
        %v1326 = vmul.f32 %v878, %v1227
        %v1327 = vmul.f32 %v879, %v1229
        %v1328 = vmul.f32 %v880, %v1231
        %v1329 = vmul.f32 %v881, %v1233
        %v1330 = vmul.f32 %v882, %v1235
        %v1331 = vmul.f32 %v883, %v1237
        %v1332 = vmul.f32 %v884, %v1239
        %v1333 = vmul.f32 %v885, %v1241
        %v1334 = vmul.f32 %v886, %v1243
        %v1335 = vmul.f32 %v887, %v1245
        %v1336 = vmul.f32 %v888, %v1247
        %v1337 = vmul.f32 %v889, %v1249
        %v1338 = vmul.f32 %v890, %v1251
        %v1339 = vmul.f32 %v891, %v1253
        %v1340 = vmul.f32 %v892, %v1255
        %v1341 = vmul.f32 %v893, %v1257
        %v1342 = vmul.f32 %v894, %v1259
        %v1343 = vmul.f32 %v895, %v1261
        %v1344 = vmul.f32 %v896, %v1263
        %v1345 = vmul.f32 %v897, %v1265
        %v1346 = vmul.f32 %v898, %v1267
        %v1347 = vmul.f32 %v899, %v1269
        %v1348 = vmul.f32 %v900, %v1271
        %v1349 = vmul.f32 %v901, %v1273
        %v1350 = vmul.f32 %v902, %v1275
        %v1351 = vmul.f32 %v903, %v1277
        %v1352 = vmul.f32 %v904, %v1279
        %v1353 = vmul.f32 %v905, %v1281
        %v1354 = vmul.f32 %v906, %v1283
        %v1355 = vmul.f32 %v907, %v1285
        %v1356 = vmul.f32 %v908, %v1287
        %v1357 = vmul.f32 %v909, %v1289
        %v1358 = vmul.f32 %v910, %v1291
        %v1359 = vmul.f32 %v911, %v1293
        %v1360 = vmul.f32 %v912, %v1295
        %v1361 = vmul.f32 %v913, %v1297
        %1362 = vadd.xlane.f32.xlu0 %v1298
        %v1363 = vpop.xlane.xlu0 %1362
        %1364 = vadd.xlane.f32.xlu0 %v1299
        %v1365 = vpop.xlane.xlu0 %1364
        %1366 = vadd.xlane.f32.xlu0 %v1300
        %v1367 = vpop.xlane.xlu0 %1366
        %1368 = vadd.xlane.f32.xlu0 %v1301
        %v1369 = vpop.xlane.xlu0 %1368
        %1370 = vadd.xlane.f32.xlu0 %v1302
        %v1371 = vpop.xlane.xlu0 %1370
        %1372 = vadd.xlane.f32.xlu0 %v1303
        %v1373 = vpop.xlane.xlu0 %1372
        %1374 = vadd.xlane.f32.xlu0 %v1304
        %v1375 = vpop.xlane.xlu0 %1374
        %1376 = vadd.xlane.f32.xlu0 %v1305
        %v1377 = vpop.xlane.xlu0 %1376
        %1378 = vadd.xlane.f32.xlu0 %v1306
        %v1379 = vpop.xlane.xlu0 %1378
        %1380 = vadd.xlane.f32.xlu0 %v1307
        %v1381 = vpop.xlane.xlu0 %1380
        %1382 = vadd.xlane.f32.xlu0 %v1308
        %v1383 = vpop.xlane.xlu0 %1382
        %1384 = vadd.xlane.f32.xlu0 %v1309
        %v1385 = vpop.xlane.xlu0 %1384
        %1386 = vadd.xlane.f32.xlu0 %v1310
        %v1387 = vpop.xlane.xlu0 %1386
        %1388 = vadd.xlane.f32.xlu0 %v1311
        %v1389 = vpop.xlane.xlu0 %1388
        %1390 = vadd.xlane.f32.xlu0 %v1312
        %v1391 = vpop.xlane.xlu0 %1390
        %1392 = vadd.xlane.f32.xlu0 %v1313
        %v1393 = vpop.xlane.xlu0 %1392
        %1394 = vadd.xlane.f32.xlu0 %v1314
        %v1395 = vpop.xlane.xlu0 %1394
        %1396 = vadd.xlane.f32.xlu0 %v1315
        %v1397 = vpop.xlane.xlu0 %1396
        %1398 = vadd.xlane.f32.xlu0 %v1316
        %v1399 = vpop.xlane.xlu0 %1398
        %1400 = vadd.xlane.f32.xlu0 %v1317
        %v1401 = vpop.xlane.xlu0 %1400
        %1402 = vadd.xlane.f32.xlu0 %v1318
        %v1403 = vpop.xlane.xlu0 %1402
        %1404 = vadd.xlane.f32.xlu0 %v1319
        %v1405 = vpop.xlane.xlu0 %1404
        %1406 = vadd.xlane.f32.xlu0 %v1320
        %v1407 = vpop.xlane.xlu0 %1406
        %1408 = vadd.xlane.f32.xlu0 %v1321
        %v1409 = vpop.xlane.xlu0 %1408
        %1410 = vadd.xlane.f32.xlu0 %v1322
        %v1411 = vpop.xlane.xlu0 %1410
        %1412 = vadd.xlane.f32.xlu0 %v1323
        %v1413 = vpop.xlane.xlu0 %1412
        %1414 = vadd.xlane.f32.xlu0 %v1324
        %v1415 = vpop.xlane.xlu0 %1414
        %1416 = vadd.xlane.f32.xlu0 %v1325
        %v1417 = vpop.xlane.xlu0 %1416
        %1418 = vadd.xlane.f32.xlu0 %v1326
        %v1419 = vpop.xlane.xlu0 %1418
        %1420 = vadd.xlane.f32.xlu0 %v1327
        %v1421 = vpop.xlane.xlu0 %1420
        %1422 = vadd.xlane.f32.xlu0 %v1328
        %v1423 = vpop.xlane.xlu0 %1422
        %1424 = vadd.xlane.f32.xlu0 %v1329
        %v1425 = vpop.xlane.xlu0 %1424
        %1426 = vadd.xlane.f32.xlu0 %v1330
        %v1427 = vpop.xlane.xlu0 %1426
        %1428 = vadd.xlane.f32.xlu0 %v1331
        %v1429 = vpop.xlane.xlu0 %1428
        %1430 = vadd.xlane.f32.xlu0 %v1332
        %v1431 = vpop.xlane.xlu0 %1430
        %1432 = vadd.xlane.f32.xlu0 %v1333
        %v1433 = vpop.xlane.xlu0 %1432
        %1434 = vadd.xlane.f32.xlu0 %v1334
        %v1435 = vpop.xlane.xlu0 %1434
        %1436 = vadd.xlane.f32.xlu0 %v1335
        %v1437 = vpop.xlane.xlu0 %1436
        %1438 = vadd.xlane.f32.xlu0 %v1336
        %v1439 = vpop.xlane.xlu0 %1438
        %1440 = vadd.xlane.f32.xlu0 %v1337
        %v1441 = vpop.xlane.xlu0 %1440
        %1442 = vadd.xlane.f32.xlu0 %v1338
        %v1443 = vpop.xlane.xlu0 %1442
        %1444 = vadd.xlane.f32.xlu0 %v1339
        %v1445 = vpop.xlane.xlu0 %1444
        %1446 = vadd.xlane.f32.xlu0 %v1340
        %v1447 = vpop.xlane.xlu0 %1446
        %1448 = vadd.xlane.f32.xlu0 %v1341
        %v1449 = vpop.xlane.xlu0 %1448
        %1450 = vadd.xlane.f32.xlu0 %v1342
        %v1451 = vpop.xlane.xlu0 %1450
        %1452 = vadd.xlane.f32.xlu0 %v1343
        %v1453 = vpop.xlane.xlu0 %1452
        %1454 = vadd.xlane.f32.xlu0 %v1344
        %v1455 = vpop.xlane.xlu0 %1454
        %1456 = vadd.xlane.f32.xlu0 %v1345
        %v1457 = vpop.xlane.xlu0 %1456
        %1458 = vadd.xlane.f32.xlu0 %v1346
        %v1459 = vpop.xlane.xlu0 %1458
        %1460 = vadd.xlane.f32.xlu0 %v1347
        %v1461 = vpop.xlane.xlu0 %1460
        %1462 = vadd.xlane.f32.xlu0 %v1348
        %v1463 = vpop.xlane.xlu0 %1462
        %1464 = vadd.xlane.f32.xlu0 %v1349
        %v1465 = vpop.xlane.xlu0 %1464
        %1466 = vadd.xlane.f32.xlu0 %v1350
        %v1467 = vpop.xlane.xlu0 %1466
        %1468 = vadd.xlane.f32.xlu0 %v1351
        %v1469 = vpop.xlane.xlu0 %1468
        %1470 = vadd.xlane.f32.xlu0 %v1352
        %v1471 = vpop.xlane.xlu0 %1470
        %1472 = vadd.xlane.f32.xlu0 %v1353
        %v1473 = vpop.xlane.xlu0 %1472
        %1474 = vadd.xlane.f32.xlu0 %v1354
        %v1475 = vpop.xlane.xlu0 %1474
        %1476 = vadd.xlane.f32.xlu0 %v1355
        %v1477 = vpop.xlane.xlu0 %1476
        %1478 = vadd.xlane.f32.xlu0 %v1356
        %v1479 = vpop.xlane.xlu0 %1478
        %1480 = vadd.xlane.f32.xlu0 %v1357
        %v1481 = vpop.xlane.xlu0 %1480
        %1482 = vadd.xlane.f32.xlu0 %v1358
        %v1483 = vpop.xlane.xlu0 %1482
        %1484 = vadd.xlane.f32.xlu0 %v1359
        %v1485 = vpop.xlane.xlu0 %1484
        %1486 = vadd.xlane.f32.xlu0 %v1360
        %v1487 = vpop.xlane.xlu0 %1486
        %1488 = vadd.xlane.f32.xlu0 %v1361
        %v1489 = vpop.xlane.xlu0 %1488
        %v1490 = vadd.f32 %v1363, 0.0
        %v1491 = vadd.f32 %v1365, 0.0
        %v1492 = vadd.f32 %v1367, 0.0
        %v1493 = vadd.f32 %v1369, 0.0
        %v1494 = vadd.f32 %v1371, 0.0
        %v1495 = vadd.f32 %v1373, 0.0
        %v1496 = vadd.f32 %v1375, 0.0
        %v1497 = vadd.f32 %v1377, 0.0
        %v1498 = vadd.f32 %v1379, 0.0
        %v1499 = vadd.f32 %v1381, 0.0
        %v1500 = vadd.f32 %v1383, 0.0
        %v1501 = vadd.f32 %v1385, 0.0
        %v1502 = vadd.f32 %v1387, 0.0
        %v1503 = vadd.f32 %v1389, 0.0
        %v1504 = vadd.f32 %v1391, 0.0
        %v1505 = vadd.f32 %v1393, 0.0
        %v1506 = vadd.f32 %v1395, 0.0
        %v1507 = vadd.f32 %v1397, 0.0
        %v1508 = vadd.f32 %v1399, 0.0
        %v1509 = vadd.f32 %v1401, 0.0
        %v1510 = vadd.f32 %v1403, 0.0
        %v1511 = vadd.f32 %v1405, 0.0
        %v1512 = vadd.f32 %v1407, 0.0
        %v1513 = vadd.f32 %v1409, 0.0
        %v1514 = vadd.f32 %v1411, 0.0
        %v1515 = vadd.f32 %v1413, 0.0
        %v1516 = vadd.f32 %v1415, 0.0
        %v1517 = vadd.f32 %v1417, 0.0
        %v1518 = vadd.f32 %v1419, 0.0
        %v1519 = vadd.f32 %v1421, 0.0
        %v1520 = vadd.f32 %v1423, 0.0
        %v1521 = vadd.f32 %v1425, 0.0
        %v1522 = vadd.f32 %v1427, 0.0
        %v1523 = vadd.f32 %v1429, 0.0
        %v1524 = vadd.f32 %v1431, 0.0
        %v1525 = vadd.f32 %v1433, 0.0
        %v1526 = vadd.f32 %v1435, 0.0
        %v1527 = vadd.f32 %v1437, 0.0
        %v1528 = vadd.f32 %v1439, 0.0
        %v1529 = vadd.f32 %v1441, 0.0
        %v1530 = vadd.f32 %v1443, 0.0
        %v1531 = vadd.f32 %v1445, 0.0
        %v1532 = vadd.f32 %v1447, 0.0
        %v1533 = vadd.f32 %v1449, 0.0
        %v1534 = vadd.f32 %v1451, 0.0
        %v1535 = vadd.f32 %v1453, 0.0
        %v1536 = vadd.f32 %v1455, 0.0
        %v1537 = vadd.f32 %v1457, 0.0
        %v1538 = vadd.f32 %v1459, 0.0
        %v1539 = vadd.f32 %v1461, 0.0
        %v1540 = vadd.f32 %v1463, 0.0
        %v1541 = vadd.f32 %v1465, 0.0
        %v1542 = vadd.f32 %v1467, 0.0
        %v1543 = vadd.f32 %v1469, 0.0
        %v1544 = vadd.f32 %v1471, 0.0
        %v1545 = vadd.f32 %v1473, 0.0
        %v1546 = vadd.f32 %v1475, 0.0
        %v1547 = vadd.f32 %v1477, 0.0
        %v1548 = vadd.f32 %v1479, 0.0
        %v1549 = vadd.f32 %v1481, 0.0
        %v1550 = vadd.f32 %v1483, 0.0
        %v1551 = vadd.f32 %v1485, 0.0
        %v1552 = vadd.f32 %v1487, 0.0
        %v1553 = vadd.f32 %v1489, 0.0
        %v1554 = vld [vmem:[#allocation8] sm:$0xff]
        %v1619 = vlaneseq
        %v1620 = vand.u32 %v1619, 127
        %v1621 = vlaneseq
        %v1622 = vshrl.u32 %v1621, 7
        %v1623 = vsub.s32 %v1620, %v1622
        %v1624 = vrot.slane %v1490, %v1623
        %v1625 = vadd.s32 %v1620, 4294967288
        %v1626 = vlaneseq
        %v1627 = vshrl.u32 %v1626, 7
        %v1628 = vsub.s32 %v1625, %v1627
        %v1629 = vrot.slane %v1491, %v1628
        %vm1630 = vcmask 130112
        %v1631 = vsel %vm1630, %v1629, %v1624
        %v1632 = vadd.s32 %v1620, 4294967280
        %v1633 = vlaneseq
        %v1634 = vshrl.u32 %v1633, 7
        %v1635 = vsub.s32 %v1632, %v1634
        %v1636 = vrot.slane %v1492, %v1635
        %vm1637 = vcmask 195712
        %v1638 = vsel %vm1637, %v1636, %v1631
        %v1639 = vadd.s32 %v1620, 4294967272
        %v1640 = vlaneseq
        %v1641 = vshrl.u32 %v1640, 7
        %v1642 = vsub.s32 %v1639, %v1641
        %v1643 = vrot.slane %v1493, %v1642
        %vm1644 = vcmask 261312
        %v1645 = vsel %vm1644, %v1643, %v1638
        %v1646 = vadd.s32 %v1620, 4294967264
        %v1647 = vlaneseq
        %v1648 = vshrl.u32 %v1647, 7
        %v1649 = vsub.s32 %v1646, %v1648
        %v1650 = vrot.slane %v1494, %v1649
        %vm1651 = vcmask 326912
        %v1652 = vsel %vm1651, %v1650, %v1645
        %v1653 = vadd.s32 %v1620, 4294967256
        %v1654 = vlaneseq
        %v1655 = vshrl.u32 %v1654, 7
        %v1656 = vsub.s32 %v1653, %v1655
        %v1657 = vrot.slane %v1495, %v1656
        %vm1658 = vcmask 392512
        %v1659 = vsel %vm1658, %v1657, %v1652
        %v1660 = vadd.s32 %v1620, 4294967248
        %v1661 = vlaneseq
        %v1662 = vshrl.u32 %v1661, 7
        %v1663 = vsub.s32 %v1660, %v1662
        %v1664 = vrot.slane %v1496, %v1663
        %vm1665 = vcmask 458112
        %v1666 = vsel %vm1665, %v1664, %v1659
        %v1667 = vadd.s32 %v1620, 4294967240
        %v1668 = vlaneseq
        %v1669 = vshrl.u32 %v1668, 7
        %v1670 = vsub.s32 %v1667, %v1669
        %v1671 = vrot.slane %v1497, %v1670
        %vm1672 = vcmask 523712
        %v1673 = vsel %vm1672, %v1671, %v1666
        %v1674 = vlaneseq
        %v1675 = vshrl.u32 %v1674, 7
        %v1676 = vsub.s32 %v1620, %v1675
        %v1677 = vrot.slane %v1498, %v1676
        %v1678 = vlaneseq
        %v1679 = vshrl.u32 %v1678, 7
        %v1680 = vsub.s32 %v1625, %v1679
        %v1681 = vrot.slane %v1499, %v1680
        %v1682 = vsel %vm1630, %v1681, %v1677
        %v1683 = vlaneseq
        %v1684 = vshrl.u32 %v1683, 7
        %v1685 = vsub.s32 %v1632, %v1684
        %v1686 = vrot.slane %v1500, %v1685
        %v1687 = vsel %vm1637, %v1686, %v1682
        %v1688 = vlaneseq
        %v1689 = vshrl.u32 %v1688, 7
        %v1690 = vsub.s32 %v1639, %v1689
        %v1691 = vrot.slane %v1501, %v1690
        %v1692 = vsel %vm1644, %v1691, %v1687
        %v1693 = vlaneseq
        %v1694 = vshrl.u32 %v1693, 7
        %v1695 = vsub.s32 %v1646, %v1694
        %v1696 = vrot.slane %v1502, %v1695
        %v1697 = vsel %vm1651, %v1696, %v1692
        %v1698 = vlaneseq
        %v1699 = vshrl.u32 %v1698, 7
        %v1700 = vsub.s32 %v1653, %v1699
        %v1701 = vrot.slane %v1503, %v1700
        %v1702 = vsel %vm1658, %v1701, %v1697
        %v1703 = vlaneseq
        %v1704 = vshrl.u32 %v1703, 7
        %v1705 = vsub.s32 %v1660, %v1704
        %v1706 = vrot.slane %v1504, %v1705
        %v1707 = vsel %vm1665, %v1706, %v1702
        %v1708 = vlaneseq
        %v1709 = vshrl.u32 %v1708, 7
        %v1710 = vsub.s32 %v1667, %v1709
        %v1711 = vrot.slane %v1505, %v1710
        %v1712 = vsel %vm1672, %v1711, %v1707
        %v1713 = vlaneseq
        %v1714 = vshrl.u32 %v1713, 7
        %v1715 = vsub.s32 %v1620, %v1714
        %v1716 = vrot.slane %v1506, %v1715
        %v1717 = vlaneseq
        %v1718 = vshrl.u32 %v1717, 7
        %v1719 = vsub.s32 %v1625, %v1718
        %v1720 = vrot.slane %v1507, %v1719
        %v1721 = vsel %vm1630, %v1720, %v1716
        %v1722 = vlaneseq
        %v1723 = vshrl.u32 %v1722, 7
        %v1724 = vsub.s32 %v1632, %v1723
        %v1725 = vrot.slane %v1508, %v1724
        %v1726 = vsel %vm1637, %v1725, %v1721
        %v1727 = vlaneseq
        %v1728 = vshrl.u32 %v1727, 7
        %v1729 = vsub.s32 %v1639, %v1728
        %v1730 = vrot.slane %v1509, %v1729
        %v1731 = vsel %vm1644, %v1730, %v1726
        %v1732 = vlaneseq
        %v1733 = vshrl.u32 %v1732, 7
        %v1734 = vsub.s32 %v1646, %v1733
        %v1735 = vrot.slane %v1510, %v1734
        %v1736 = vsel %vm1651, %v1735, %v1731
        %v1737 = vlaneseq
        %v1738 = vshrl.u32 %v1737, 7
        %v1739 = vsub.s32 %v1653, %v1738
        %v1740 = vrot.slane %v1511, %v1739
        %v1741 = vsel %vm1658, %v1740, %v1736
        %v1742 = vlaneseq
        %v1743 = vshrl.u32 %v1742, 7
        %v1744 = vsub.s32 %v1660, %v1743
        %v1745 = vrot.slane %v1512, %v1744
        %v1746 = vsel %vm1665, %v1745, %v1741
        %v1747 = vlaneseq
        %v1748 = vshrl.u32 %v1747, 7
        %v1749 = vsub.s32 %v1667, %v1748
        %v1750 = vrot.slane %v1513, %v1749
        %v1751 = vsel %vm1672, %v1750, %v1746
        %v1752 = vlaneseq
        %v1753 = vshrl.u32 %v1752, 7
        %v1754 = vsub.s32 %v1620, %v1753
        %v1755 = vrot.slane %v1514, %v1754
        %v1756 = vlaneseq
        %v1757 = vshrl.u32 %v1756, 7
        %v1758 = vsub.s32 %v1625, %v1757
        %v1759 = vrot.slane %v1515, %v1758
        %v1760 = vsel %vm1630, %v1759, %v1755
        %v1761 = vlaneseq
        %v1762 = vshrl.u32 %v1761, 7
        %v1763 = vsub.s32 %v1632, %v1762
        %v1764 = vrot.slane %v1516, %v1763
        %v1765 = vsel %vm1637, %v1764, %v1760
        %v1766 = vlaneseq
        %v1767 = vshrl.u32 %v1766, 7
        %v1768 = vsub.s32 %v1639, %v1767
        %v1769 = vrot.slane %v1517, %v1768
        %v1770 = vsel %vm1644, %v1769, %v1765
        %v1771 = vlaneseq
        %v1772 = vshrl.u32 %v1771, 7
        %v1773 = vsub.s32 %v1646, %v1772
        %v1774 = vrot.slane %v1518, %v1773
        %v1775 = vsel %vm1651, %v1774, %v1770
        %v1776 = vlaneseq
        %v1777 = vshrl.u32 %v1776, 7
        %v1778 = vsub.s32 %v1653, %v1777
        %v1779 = vrot.slane %v1519, %v1778
        %v1780 = vsel %vm1658, %v1779, %v1775
        %v1781 = vlaneseq
        %v1782 = vshrl.u32 %v1781, 7
        %v1783 = vsub.s32 %v1660, %v1782
        %v1784 = vrot.slane %v1520, %v1783
        %v1785 = vsel %vm1665, %v1784, %v1780
        %v1786 = vlaneseq
        %v1787 = vshrl.u32 %v1786, 7
        %v1788 = vsub.s32 %v1667, %v1787
        %v1789 = vrot.slane %v1521, %v1788
        %v1790 = vsel %vm1672, %v1789, %v1785
        %v1791 = vlaneseq
        %v1792 = vshrl.u32 %v1791, 7
        %v1793 = vsub.s32 %v1620, %v1792
        %v1794 = vrot.slane %v1522, %v1793
        %v1795 = vlaneseq
        %v1796 = vshrl.u32 %v1795, 7
        %v1797 = vsub.s32 %v1625, %v1796
        %v1798 = vrot.slane %v1523, %v1797
        %v1799 = vsel %vm1630, %v1798, %v1794
        %v1800 = vlaneseq
        %v1801 = vshrl.u32 %v1800, 7
        %v1802 = vsub.s32 %v1632, %v1801
        %v1803 = vrot.slane %v1524, %v1802
        %v1804 = vsel %vm1637, %v1803, %v1799
        %v1805 = vlaneseq
        %v1806 = vshrl.u32 %v1805, 7
        %v1807 = vsub.s32 %v1639, %v1806
        %v1808 = vrot.slane %v1525, %v1807
        %v1809 = vsel %vm1644, %v1808, %v1804
        %v1810 = vlaneseq
        %v1811 = vshrl.u32 %v1810, 7
        %v1812 = vsub.s32 %v1646, %v1811
        %v1813 = vrot.slane %v1526, %v1812
        %v1814 = vsel %vm1651, %v1813, %v1809
        %v1815 = vlaneseq
        %v1816 = vshrl.u32 %v1815, 7
        %v1817 = vsub.s32 %v1653, %v1816
        %v1818 = vrot.slane %v1527, %v1817
        %v1819 = vsel %vm1658, %v1818, %v1814
        %v1820 = vlaneseq
        %v1821 = vshrl.u32 %v1820, 7
        %v1822 = vsub.s32 %v1660, %v1821
        %v1823 = vrot.slane %v1528, %v1822
        %v1824 = vsel %vm1665, %v1823, %v1819
        %v1825 = vlaneseq
        %v1826 = vshrl.u32 %v1825, 7
        %v1827 = vsub.s32 %v1667, %v1826
        %v1828 = vrot.slane %v1529, %v1827
        %v1829 = vsel %vm1672, %v1828, %v1824
        %v1830 = vlaneseq
        %v1831 = vshrl.u32 %v1830, 7
        %v1832 = vsub.s32 %v1620, %v1831
        %v1833 = vrot.slane %v1530, %v1832
        %v1834 = vlaneseq
        %v1835 = vshrl.u32 %v1834, 7
        %v1836 = vsub.s32 %v1625, %v1835
        %v1837 = vrot.slane %v1531, %v1836
        %v1838 = vsel %vm1630, %v1837, %v1833
        %v1839 = vlaneseq
        %v1840 = vshrl.u32 %v1839, 7
        %v1841 = vsub.s32 %v1632, %v1840
        %v1842 = vrot.slane %v1532, %v1841
        %v1843 = vsel %vm1637, %v1842, %v1838
        %v1844 = vlaneseq
        %v1845 = vshrl.u32 %v1844, 7
        %v1846 = vsub.s32 %v1639, %v1845
        %v1847 = vrot.slane %v1533, %v1846
        %v1848 = vsel %vm1644, %v1847, %v1843
        %v1849 = vlaneseq
        %v1850 = vshrl.u32 %v1849, 7
        %v1851 = vsub.s32 %v1646, %v1850
        %v1852 = vrot.slane %v1534, %v1851
        %v1853 = vsel %vm1651, %v1852, %v1848
        %v1854 = vlaneseq
        %v1855 = vshrl.u32 %v1854, 7
        %v1856 = vsub.s32 %v1653, %v1855
        %v1857 = vrot.slane %v1535, %v1856
        %v1858 = vsel %vm1658, %v1857, %v1853
        %v1859 = vlaneseq
        %v1860 = vshrl.u32 %v1859, 7
        %v1861 = vsub.s32 %v1660, %v1860
        %v1862 = vrot.slane %v1536, %v1861
        %v1863 = vsel %vm1665, %v1862, %v1858
        %v1864 = vlaneseq
        %v1865 = vshrl.u32 %v1864, 7
        %v1866 = vsub.s32 %v1667, %v1865
        %v1867 = vrot.slane %v1537, %v1866
        %v1868 = vsel %vm1672, %v1867, %v1863
        %v1869 = vlaneseq
        %v1870 = vshrl.u32 %v1869, 7
        %v1871 = vsub.s32 %v1620, %v1870
        %v1872 = vrot.slane %v1538, %v1871
        %v1873 = vlaneseq
        %v1874 = vshrl.u32 %v1873, 7
        %v1875 = vsub.s32 %v1625, %v1874
        %v1876 = vrot.slane %v1539, %v1875
        %v1877 = vsel %vm1630, %v1876, %v1872
        %v1878 = vlaneseq
        %v1879 = vshrl.u32 %v1878, 7
        %v1880 = vsub.s32 %v1632, %v1879
        %v1881 = vrot.slane %v1540, %v1880
        %v1882 = vsel %vm1637, %v1881, %v1877
        %v1883 = vlaneseq
        %v1884 = vshrl.u32 %v1883, 7
        %v1885 = vsub.s32 %v1639, %v1884
        %v1886 = vrot.slane %v1541, %v1885
        %v1887 = vsel %vm1644, %v1886, %v1882
        %v1888 = vlaneseq
        %v1889 = vshrl.u32 %v1888, 7
        %v1890 = vsub.s32 %v1646, %v1889
        %v1891 = vrot.slane %v1542, %v1890
        %v1892 = vsel %vm1651, %v1891, %v1887
        %v1893 = vlaneseq
        %v1894 = vshrl.u32 %v1893, 7
        %v1895 = vsub.s32 %v1653, %v1894
        %v1896 = vrot.slane %v1543, %v1895
        %v1897 = vsel %vm1658, %v1896, %v1892
        %v1898 = vlaneseq
        %v1899 = vshrl.u32 %v1898, 7
        %v1900 = vsub.s32 %v1660, %v1899
        %v1901 = vrot.slane %v1544, %v1900
        %v1902 = vsel %vm1665, %v1901, %v1897
        %v1903 = vlaneseq
        %v1904 = vshrl.u32 %v1903, 7
        %v1905 = vsub.s32 %v1667, %v1904
        %v1906 = vrot.slane %v1545, %v1905
        %v1907 = vsel %vm1672, %v1906, %v1902
        %v1908 = vlaneseq
        %v1909 = vshrl.u32 %v1908, 7
        %v1910 = vsub.s32 %v1620, %v1909
        %v1911 = vrot.slane %v1546, %v1910
        %v1912 = vlaneseq
        %v1913 = vshrl.u32 %v1912, 7
        %v1914 = vsub.s32 %v1625, %v1913
        %v1915 = vrot.slane %v1547, %v1914
        %v1916 = vsel %vm1630, %v1915, %v1911
        %v1917 = vlaneseq
        %v1918 = vshrl.u32 %v1917, 7
        %v1919 = vsub.s32 %v1632, %v1918
        %v1920 = vrot.slane %v1548, %v1919
        %v1921 = vsel %vm1637, %v1920, %v1916
        %v1922 = vlaneseq
        %v1923 = vshrl.u32 %v1922, 7
        %v1924 = vsub.s32 %v1639, %v1923
        %v1925 = vrot.slane %v1549, %v1924
        %v1926 = vsel %vm1644, %v1925, %v1921
        %v1927 = vlaneseq
        %v1928 = vshrl.u32 %v1927, 7
        %v1929 = vsub.s32 %v1646, %v1928
        %v1930 = vrot.slane %v1550, %v1929
        %v1931 = vsel %vm1651, %v1930, %v1926
        %v1932 = vlaneseq
        %v1933 = vshrl.u32 %v1932, 7
        %v1934 = vsub.s32 %v1653, %v1933
        %v1935 = vrot.slane %v1551, %v1934
        %v1936 = vsel %vm1658, %v1935, %v1931
        %v1937 = vlaneseq
        %v1938 = vshrl.u32 %v1937, 7
        %v1939 = vsub.s32 %v1660, %v1938
        %v1940 = vrot.slane %v1552, %v1939
        %v1941 = vsel %vm1665, %v1940, %v1936
        %v1942 = vlaneseq
        %v1943 = vshrl.u32 %v1942, 7
        %v1944 = vsub.s32 %v1667, %v1943
        %v1945 = vrot.slane %v1553, %v1944
        %v1946 = vsel %vm1672, %v1945, %v1941
        %vm1947 = vcmask 1041409
        %v1948 = vsel %vm1947, %v1712, %v1673
        %vm1949 = vcmask 1042434
        %v1950 = vsel %vm1949, %v1751, %v1948
        %vm1951 = vcmask 1043459
        %v1952 = vsel %vm1951, %v1790, %v1950
        %vm1953 = vcmask 1044484
        %v1954 = vsel %vm1953, %v1829, %v1952
        %vm1955 = vcmask 1045509
        %v1956 = vsel %vm1955, %v1868, %v1954
        %vm1957 = vcmask 1046534
        %v1958 = vsel %vm1957, %v1907, %v1956
        %vm1959 = vcmask 1047559
        %v1960 = vsel %vm1959, %v1946, %v1958
        %v1962 = vadd.f32 %v1554, %v1960
        %vm1963 = vcmask 523264
        %1964 = vst.msk [vmem:[#allocation8] sm:$0xff] %vm1963, %v1962
        // Predicated region
        $region49: #{improved_pokemon_classifier_forward.2} parent=31 // pred_check
          %p1965 = pneg %p119
        $region50: #{improved_pokemon_classifier_forward.2} parent=31 // pred_check_branch
          %1967 = sbr.rel (%p1965) target = $region52
        $region51: #{improved_pokemon_classifier_forward.2} parent=31 // pred_region
          %s1969 = ssub.s32 128, 128
          %1970 = vsyncadd [#allocation4], %s1969
          %s1971 = smul.addr %s23, 128
          %s1972 = scalar_lea.hbm %s3, %s1971
          %s1974 = sshll.u32 [#allocation8], 4
          %s1975 = int_to_ptr.vmem [resolvable:$true] %s1974
          %1977 = dma.vmem_to_hbm [thread:$0]  %s1975, 128, %s1972, [#allocation4]
        $region52: #{improved_pokemon_classifier_forward.2} parent=31 // pred_fallthru
          _
        // Predicated region
        $region53: #{improved_pokemon_classifier_forward.2} parent=31 // pred_check
          %p1978 = pneg %p119
        $region54: #{improved_pokemon_classifier_forward.2} parent=31 // pred_check_branch
          %1980 = sbr.rel (%p1978) target = $region56
        $region55: #{improved_pokemon_classifier_forward.2} parent=31 // pred_region
          %1981 = dma.done [#allocation4], 128
        $region56: #{improved_pokemon_classifier_forward.2} parent=31 // pred_fallthru
          _
      $region32: #{improved_pokemon_classifier_forward.2} parent=5 // pred_fallthru
        _
      %p1982 = scmp.le.s32.totalorder 2, %s14
      // Predicated region
      $region57: #{improved_pokemon_classifier_forward.2} parent=5 // pred_check
        %p1983 = pneg %p1982
      $region58: #{improved_pokemon_classifier_forward.2} parent=5 // pred_check_branch
        %1985 = sbr.rel (%p1983) target = $region60
      $region59: #{improved_pokemon_classifier_forward.2} parent=5 // pred_region
        %s1986 = ssub.s32 %s14, 2
      $region60: #{improved_pokemon_classifier_forward.2} parent=5 // pred_fallthru
        _
    $region6: #{improved_pokemon_classifier_forward.2} parent=1 // loop_footer
      %s18 = sadd.s32 1, %s14
    $region7: #{improved_pokemon_classifier_forward.2} parent=1 // loop_footer_branch
      %13 = sbr.rel target = $region3
    $region8: #{improved_pokemon_classifier_forward.2} parent=1 // loop_exit
      _
    %1987 = vsyncpa [#allocation3], 1
    %s1988 = scalar_lea.sflag [#allocation3], 1
    %1989 = vsyncpa %s1988, 1
    %1990 = vsyncpa [#allocation6], 1
    %1991 = vsyncpa [#allocation4], 1
    %s1992 = scalar_lea.sflag [#allocation4], 1
    %1993 = vsyncpa %s1992, 1

// kernel: improved_pokemon_classifier_forward.3
$region0: #{improved_pokemon_classifier_forward.3}
  #allocation0 [shape = 'u32[]', space=smem, size = 0x4, offset = 0x4, fixed_abs, tag = 'smem constant byte address 0x4 - core index']
  #allocation1 [shape = 'u32[144,128]{1,0:T(1,128)}', space=vmem, size = 0x12000, scoped, tag = 'internal scratch']
  %s0 = inlined_call_operand.hbm [shape: f32[8,128], index: 0, kind: input, shape index: {}]
  %s1 = inlined_call_operand.hbm [shape: bf16[128,1280], index: 1, kind: input, shape index: {}]
  %s2 = inlined_call_operand.hbm [shape: f32[1,1280], index: 2, kind: input, shape index: {}]
  %s3 = inlined_call_operand.hbm [shape: bf16[1280,1024], index: 3, kind: input, shape index: {}]
  %s4 = inlined_call_operand.hbm [shape: f32[1,1024], index: 4, kind: input, shape index: {}]
  %s5 = inlined_call_operand.hbm [shape: bf16[1024,512], index: 5, kind: input, shape index: {}]
  %s6 = inlined_call_operand.hbm [shape: f32[1,512], index: 6, kind: input, shape index: {}]
  %s7 = inlined_call_operand.hbm [shape: bf16[512,128], index: 7, kind: input, shape index: {}]
  %s8 = inlined_call_operand.hbm [shape: f32[1,128], index: 8, kind: input, shape index: {}]
  %s9 = inlined_call_operand.hbm [shape: f32[8,128], index: 9, kind: output, shape index: {}]
  %s10 = sld [smem:[#allocation0]]
  $region82: #{improved_pokemon_classifier_forward.3} parent=0
    _
  %s12 = ssub.s32 1, %s10
  %s13 = scalar_select 0, %s12, %s10
  $region1: #{improved_pokemon_classifier_forward.3} parent=0
    #allocation2 [shape = 'u8[4096]{0}', space=vmem, size = 0x1000, scoped, tag = 'input window, operand 0, single buffered']
    #allocation3 [shape = 's32[1]{0}', space=sflag, size = 0x4, scoped, tag = 'scoped memory for improved_pokemon_classifier_forward.3']
    #allocation4 [shape = 's32[1]{0}', space=sflag, size = 0x4, scoped, tag = 'scoped memory for improved_pokemon_classifier_forward.3']
    #allocation5 [shape = 'u8[327680]{0}', space=vmem, size = 0x50000, scoped, tag = 'input window, operand 1, single buffered']
    #allocation6 [shape = 's32[1]{0}', space=sflag, size = 0x4, scoped, tag = 'scoped memory for improved_pokemon_classifier_forward.3']
    #allocation7 [shape = 'u8[5120]{0}', space=vmem, size = 0x1400, scoped, tag = 'input window, operand 2, single buffered']
    #allocation8 [shape = 'u8[2621440]{0}', space=vmem, size = 0x280000, scoped, tag = 'input window, operand 3, single buffered']
    #allocation9 [shape = 's32[1]{0}', space=sflag, size = 0x4, scoped, tag = 'scoped memory for improved_pokemon_classifier_forward.3']
    #allocation10 [shape = 'u8[4096]{0}', space=vmem, size = 0x1000, scoped, tag = 'input window, operand 4, single buffered']
    #allocation11 [shape = 'u8[1048576]{0}', space=vmem, size = 0x100000, scoped, tag = 'input window, operand 5, single buffered']
    #allocation12 [shape = 's32[1]{0}', space=sflag, size = 0x4, scoped, tag = 'scoped memory for improved_pokemon_classifier_forward.3']
    #allocation13 [shape = 'u8[2048]{0}', space=vmem, size = 0x800, scoped, tag = 'input window, operand 6, single buffered']
    #allocation14 [shape = 'u8[131072]{0}', space=vmem, size = 0x20000, scoped, tag = 'input window, operand 7, single buffered']
    #allocation15 [shape = 's32[1]{0}', space=sflag, size = 0x4, scoped, tag = 'scoped memory for improved_pokemon_classifier_forward.3']
    #allocation16 [shape = 'u8[512]{0}', space=vmem, size = 0x400, scoped, tag = 'input window, operand 8, single buffered']
    #allocation17 [shape = 'u8[4096]{0}', space=vmem, size = 0x1000, scoped, tag = 'output window, operand 0, single buffered']
    %14 = vsyncpa [#allocation3], 0
    %15 = vsyncpa [#allocation6], 0
    %16 = vsyncpa [#allocation9], 0
    %17 = vsyncpa [#allocation12], 0
    %18 = vsyncpa [#allocation15], 0
    %19 = vsyncpa [#allocation4], 0
    // Predicated region
    $region2: #{improved_pokemon_classifier_forward.3} parent=1 // pred_check
      _
    $region3: #{improved_pokemon_classifier_forward.3} parent=1 // pred_check_branch
      %21 = sbr.rel (0) target = $region5
    $region4: #{improved_pokemon_classifier_forward.3} parent=1 // pred_region
      %s23 = ssub.s32 128, 128
      %24 = vsyncadd [#allocation3], %s23
      %s26 = sshll.u32 [#allocation2], 4
      %s27 = int_to_ptr.vmem [resolvable:$true] %s26
      %29 = dma.hbm_to_vmem [thread:$0]  %s0, 128, %s27, [#allocation3]
    $region5: #{improved_pokemon_classifier_forward.3} parent=1 // pred_fallthru
      _
    // Predicated region
    $region6: #{improved_pokemon_classifier_forward.3} parent=1 // pred_check
      _
    $region7: #{improved_pokemon_classifier_forward.3} parent=1 // pred_check_branch
      %31 = sbr.rel (0) target = $region9
    $region8: #{improved_pokemon_classifier_forward.3} parent=1 // pred_region
      %s33 = ssub.s32 10240, 10240
      %34 = vsyncadd [#allocation6], %s33
      %s35 = sshll.u32 [#allocation5], 4
      %s36 = int_to_ptr.vmem [resolvable:$true] %s35
      %41 = dma.hbm_to_vmem [thread:$0]  %s1, 10240, %s36, [#allocation6], 640, 640, 40
    $region9: #{improved_pokemon_classifier_forward.3} parent=1 // pred_fallthru
      _
    // Predicated region
    $region10: #{improved_pokemon_classifier_forward.3} parent=1 // pred_check
      _
    $region11: #{improved_pokemon_classifier_forward.3} parent=1 // pred_check_branch
      %43 = sbr.rel (0) target = $region13
    $region12: #{improved_pokemon_classifier_forward.3} parent=1 // pred_region
      %s45 = ssub.s32 160, 160
      %46 = vsyncadd [#allocation6], %s45
      %s48 = sshll.u32 [#allocation7], 4
      %s49 = int_to_ptr.vmem [resolvable:$true] %s48
      %51 = dma.hbm_to_vmem [thread:$0]  %s2, 160, %s49, [#allocation6]
    $region13: #{improved_pokemon_classifier_forward.3} parent=1 // pred_fallthru
      _
    // Predicated region
    $region14: #{improved_pokemon_classifier_forward.3} parent=1 // pred_check
      _
    $region15: #{improved_pokemon_classifier_forward.3} parent=1 // pred_check_branch
      %53 = sbr.rel (0) target = $region17
    $region16: #{improved_pokemon_classifier_forward.3} parent=1 // pred_region
      %s55 = ssub.s32 81920, 81920
      %56 = vsyncadd [#allocation9], %s55
      %s57 = sshll.u32 [#allocation8], 4
      %s58 = int_to_ptr.vmem [resolvable:$true] %s57
      %63 = dma.hbm_to_vmem [thread:$0]  %s3, 81920, %s58, [#allocation9], 512, 512, 32
    $region17: #{improved_pokemon_classifier_forward.3} parent=1 // pred_fallthru
      _
    // Predicated region
    $region18: #{improved_pokemon_classifier_forward.3} parent=1 // pred_check
      _
    $region19: #{improved_pokemon_classifier_forward.3} parent=1 // pred_check_branch
      %65 = sbr.rel (0) target = $region21
    $region20: #{improved_pokemon_classifier_forward.3} parent=1 // pred_region
      %s67 = ssub.s32 128, 128
      %68 = vsyncadd [#allocation9], %s67
      %s70 = sshll.u32 [#allocation10], 4
      %s71 = int_to_ptr.vmem [resolvable:$true] %s70
      %73 = dma.hbm_to_vmem [thread:$0]  %s4, 128, %s71, [#allocation9]
    $region21: #{improved_pokemon_classifier_forward.3} parent=1 // pred_fallthru
      _
    // Predicated region
    $region22: #{improved_pokemon_classifier_forward.3} parent=1 // pred_check
      _
    $region23: #{improved_pokemon_classifier_forward.3} parent=1 // pred_check_branch
      %75 = sbr.rel (0) target = $region25
    $region24: #{improved_pokemon_classifier_forward.3} parent=1 // pred_region
      %s77 = ssub.s32 32768, 32768
      %78 = vsyncadd [#allocation12], %s77
      %s79 = sshll.u32 [#allocation11], 4
      %s80 = int_to_ptr.vmem [resolvable:$true] %s79
      %85 = dma.hbm_to_vmem [thread:$0]  %s5, 32768, %s80, [#allocation12], 256, 256, 16
    $region25: #{improved_pokemon_classifier_forward.3} parent=1 // pred_fallthru
      _
    // Predicated region
    $region26: #{improved_pokemon_classifier_forward.3} parent=1 // pred_check
      _
    $region27: #{improved_pokemon_classifier_forward.3} parent=1 // pred_check_branch
      %87 = sbr.rel (0) target = $region29
    $region28: #{improved_pokemon_classifier_forward.3} parent=1 // pred_region
      %s89 = ssub.s32 64, 64
      %90 = vsyncadd [#allocation12], %s89
      %s92 = sshll.u32 [#allocation13], 4
      %s93 = int_to_ptr.vmem [resolvable:$true] %s92
      %95 = dma.hbm_to_vmem [thread:$0]  %s6, 64, %s93, [#allocation12]
    $region29: #{improved_pokemon_classifier_forward.3} parent=1 // pred_fallthru
      _
    // Predicated region
    $region30: #{improved_pokemon_classifier_forward.3} parent=1 // pred_check
      _
    $region31: #{improved_pokemon_classifier_forward.3} parent=1 // pred_check_branch
      %97 = sbr.rel (0) target = $region33
    $region32: #{improved_pokemon_classifier_forward.3} parent=1 // pred_region
      %s99 = ssub.s32 4096, 4096
      %100 = vsyncadd [#allocation15], %s99
      %s101 = sshll.u32 [#allocation14], 4
      %s102 = int_to_ptr.vmem [resolvable:$true] %s101
      %107 = dma.hbm_to_vmem [thread:$0]  %s7, 4096, %s102, [#allocation15], 64, 64, 4
    $region33: #{improved_pokemon_classifier_forward.3} parent=1 // pred_fallthru
      _
    // Predicated region
    $region34: #{improved_pokemon_classifier_forward.3} parent=1 // pred_check
      _
    $region35: #{improved_pokemon_classifier_forward.3} parent=1 // pred_check_branch
      %109 = sbr.rel (0) target = $region37
    $region36: #{improved_pokemon_classifier_forward.3} parent=1 // pred_region
      %s111 = ssub.s32 16, 16
      %112 = vsyncadd [#allocation15], %s111
      %s114 = sshll.u32 [#allocation16], 4
      %s115 = int_to_ptr.vmem [resolvable:$true] %s114
      %117 = dma.hbm_to_vmem [thread:$0]  %s8, 16, %s115, [#allocation15]
    $region37: #{improved_pokemon_classifier_forward.3} parent=1 // pred_fallthru
      _
    // Predicated region
    $region38: #{improved_pokemon_classifier_forward.3} parent=1 // pred_check
      _
    $region39: #{improved_pokemon_classifier_forward.3} parent=1 // pred_check_branch
      %119 = sbr.rel (0) target = $region41
    $region40: #{improved_pokemon_classifier_forward.3} parent=1 // pred_region
      %120 = dma.done [#allocation3], 128
    $region41: #{improved_pokemon_classifier_forward.3} parent=1 // pred_fallthru
      _
    // Predicated region
    $region42: #{improved_pokemon_classifier_forward.3} parent=1 // pred_check
      _
    $region43: #{improved_pokemon_classifier_forward.3} parent=1 // pred_check_branch
      %122 = sbr.rel (0) target = $region45
    $region44: #{improved_pokemon_classifier_forward.3} parent=1 // pred_region
      %123 = dma.done [#allocation6], 10240
    $region45: #{improved_pokemon_classifier_forward.3} parent=1 // pred_fallthru
      _
    // Predicated region
    $region46: #{improved_pokemon_classifier_forward.3} parent=1 // pred_check
      _
    $region47: #{improved_pokemon_classifier_forward.3} parent=1 // pred_check_branch
      %125 = sbr.rel (0) target = $region49
    $region48: #{improved_pokemon_classifier_forward.3} parent=1 // pred_region
      %126 = dma.done [#allocation6], 160
    $region49: #{improved_pokemon_classifier_forward.3} parent=1 // pred_fallthru
      _
    // Predicated region
    $region50: #{improved_pokemon_classifier_forward.3} parent=1 // pred_check
      _
    $region51: #{improved_pokemon_classifier_forward.3} parent=1 // pred_check_branch
      %128 = sbr.rel (0) target = $region53
    $region52: #{improved_pokemon_classifier_forward.3} parent=1 // pred_region
      %129 = dma.done [#allocation9], 81920
    $region53: #{improved_pokemon_classifier_forward.3} parent=1 // pred_fallthru
      _
    // Predicated region
    $region54: #{improved_pokemon_classifier_forward.3} parent=1 // pred_check
      _
    $region55: #{improved_pokemon_classifier_forward.3} parent=1 // pred_check_branch
      %131 = sbr.rel (0) target = $region57
    $region56: #{improved_pokemon_classifier_forward.3} parent=1 // pred_region
      %132 = dma.done [#allocation9], 128
    $region57: #{improved_pokemon_classifier_forward.3} parent=1 // pred_fallthru
      _
    // Predicated region
    $region58: #{improved_pokemon_classifier_forward.3} parent=1 // pred_check
      _
    $region59: #{improved_pokemon_classifier_forward.3} parent=1 // pred_check_branch
      %134 = sbr.rel (0) target = $region61
    $region60: #{improved_pokemon_classifier_forward.3} parent=1 // pred_region
      %135 = dma.done [#allocation12], 32768
    $region61: #{improved_pokemon_classifier_forward.3} parent=1 // pred_fallthru
      _
    // Predicated region
    $region62: #{improved_pokemon_classifier_forward.3} parent=1 // pred_check
      _
    $region63: #{improved_pokemon_classifier_forward.3} parent=1 // pred_check_branch
      %137 = sbr.rel (0) target = $region65
    $region64: #{improved_pokemon_classifier_forward.3} parent=1 // pred_region
      %138 = dma.done [#allocation12], 64
    $region65: #{improved_pokemon_classifier_forward.3} parent=1 // pred_fallthru
      _
    // Predicated region
    $region66: #{improved_pokemon_classifier_forward.3} parent=1 // pred_check
      _
    $region67: #{improved_pokemon_classifier_forward.3} parent=1 // pred_check_branch
      %140 = sbr.rel (0) target = $region69
    $region68: #{improved_pokemon_classifier_forward.3} parent=1 // pred_region
      %141 = dma.done [#allocation15], 4096
    $region69: #{improved_pokemon_classifier_forward.3} parent=1 // pred_fallthru
      _
    // Predicated region
    $region70: #{improved_pokemon_classifier_forward.3} parent=1 // pred_check
      _
    $region71: #{improved_pokemon_classifier_forward.3} parent=1 // pred_check_branch
      %143 = sbr.rel (0) target = $region73
    $region72: #{improved_pokemon_classifier_forward.3} parent=1 // pred_region
      %144 = dma.done [#allocation15], 16
    $region73: #{improved_pokemon_classifier_forward.3} parent=1 // pred_fallthru
      _
    %v146 = vld [vmem:[#allocation2] sm:$0xff]
    %v147 = vld [vmem:[#allocation5] sm:$0xff]
    %v148 = vld [vmem:[#allocation5 + $0x8] sm:$0xff]
    %v149 = vld [vmem:[#allocation5 + $0x10] sm:$0xff]
    %v150 = vld [vmem:[#allocation5 + $0x18] sm:$0xff]
    %v151 = vld [vmem:[#allocation5 + $0x20] sm:$0xff]
    %v152 = vld [vmem:[#allocation5 + $0x28] sm:$0xff]
    %v153 = vld [vmem:[#allocation5 + $0x30] sm:$0xff]
    %v154 = vld [vmem:[#allocation5 + $0x38] sm:$0xff]
    %v155 = vld [vmem:[#allocation5 + $0x40] sm:$0xff]
    %v156 = vld [vmem:[#allocation5 + $0x48] sm:$0xff]
    %v157 = vld [vmem:[#allocation5 + $0x50] sm:$0xff]
    %v158 = vld [vmem:[#allocation5 + $0x58] sm:$0xff]
    %v159 = vld [vmem:[#allocation5 + $0x60] sm:$0xff]
    %v160 = vld [vmem:[#allocation5 + $0x68] sm:$0xff]
    %v161 = vld [vmem:[#allocation5 + $0x70] sm:$0xff]
    %v162 = vld [vmem:[#allocation5 + $0x78] sm:$0xff]
    %v163 = vld [vmem:[#allocation5 + $0x80] sm:$0xff]
    %v164 = vld [vmem:[#allocation5 + $0x88] sm:$0xff]
    %v165 = vld [vmem:[#allocation5 + $0x90] sm:$0xff]
    %v166 = vld [vmem:[#allocation5 + $0x98] sm:$0xff]
    %v167 = vld [vmem:[#allocation5 + $0xa0] sm:$0xff]
    %v168 = vld [vmem:[#allocation5 + $0xa8] sm:$0xff]
    %v169 = vld [vmem:[#allocation5 + $0xb0] sm:$0xff]
    %v170 = vld [vmem:[#allocation5 + $0xb8] sm:$0xff]
    %v171 = vld [vmem:[#allocation5 + $0xc0] sm:$0xff]
    %v172 = vld [vmem:[#allocation5 + $0xc8] sm:$0xff]
    %v173 = vld [vmem:[#allocation5 + $0xd0] sm:$0xff]
    %v174 = vld [vmem:[#allocation5 + $0xd8] sm:$0xff]
    %v175 = vld [vmem:[#allocation5 + $0xe0] sm:$0xff]
    %v176 = vld [vmem:[#allocation5 + $0xe8] sm:$0xff]
    %v177 = vld [vmem:[#allocation5 + $0xf0] sm:$0xff]
    %v178 = vld [vmem:[#allocation5 + $0xf8] sm:$0xff]
    %v179 = vld [vmem:[#allocation5 + $0x100] sm:$0xff]
    %v180 = vld [vmem:[#allocation5 + $0x108] sm:$0xff]
    %v181 = vld [vmem:[#allocation5 + $0x110] sm:$0xff]
    %v182 = vld [vmem:[#allocation5 + $0x118] sm:$0xff]
    %v183 = vld [vmem:[#allocation5 + $0x120] sm:$0xff]
    %v184 = vld [vmem:[#allocation5 + $0x128] sm:$0xff]
    %v185 = vld [vmem:[#allocation5 + $0x130] sm:$0xff]
    %v186 = vld [vmem:[#allocation5 + $0x138] sm:$0xff]
    %v187 = vld [vmem:[#allocation5 + $0x140] sm:$0xff]
    %v188 = vld [vmem:[#allocation5 + $0x148] sm:$0xff]
    %v189 = vld [vmem:[#allocation5 + $0x150] sm:$0xff]
    %v190 = vld [vmem:[#allocation5 + $0x158] sm:$0xff]
    %v191 = vld [vmem:[#allocation5 + $0x160] sm:$0xff]
    %v192 = vld [vmem:[#allocation5 + $0x168] sm:$0xff]
    %v193 = vld [vmem:[#allocation5 + $0x170] sm:$0xff]
    %v194 = vld [vmem:[#allocation5 + $0x178] sm:$0xff]
    %v195 = vld [vmem:[#allocation5 + $0x180] sm:$0xff]
    %v196 = vld [vmem:[#allocation5 + $0x188] sm:$0xff]
    %v197 = vld [vmem:[#allocation5 + $0x190] sm:$0xff]
    %v198 = vld [vmem:[#allocation5 + $0x198] sm:$0xff]
    %v199 = vld [vmem:[#allocation5 + $0x1a0] sm:$0xff]
    %v200 = vld [vmem:[#allocation5 + $0x1a8] sm:$0xff]
    %v201 = vld [vmem:[#allocation5 + $0x1b0] sm:$0xff]
    %v202 = vld [vmem:[#allocation5 + $0x1b8] sm:$0xff]
    %v203 = vld [vmem:[#allocation5 + $0x1c0] sm:$0xff]
    %v204 = vld [vmem:[#allocation5 + $0x1c8] sm:$0xff]
    %v205 = vld [vmem:[#allocation5 + $0x1d0] sm:$0xff]
    %v206 = vld [vmem:[#allocation5 + $0x1d8] sm:$0xff]
    %v207 = vld [vmem:[#allocation5 + $0x1e0] sm:$0xff]
    %v208 = vld [vmem:[#allocation5 + $0x1e8] sm:$0xff]
    %v209 = vld [vmem:[#allocation5 + $0x1f0] sm:$0xff]
    %v210 = vld [vmem:[#allocation5 + $0x1f8] sm:$0xff]
    %v211 = vld [vmem:[#allocation5 + $0x200] sm:$0xff]
    %v212 = vld [vmem:[#allocation5 + $0x208] sm:$0xff]
    %v213 = vld [vmem:[#allocation5 + $0x210] sm:$0xff]
    %v214 = vld [vmem:[#allocation5 + $0x218] sm:$0xff]
    %v215 = vld [vmem:[#allocation5 + $0x220] sm:$0xff]
    %v216 = vld [vmem:[#allocation5 + $0x228] sm:$0xff]
    %v217 = vld [vmem:[#allocation5 + $0x230] sm:$0xff]
    %v218 = vld [vmem:[#allocation5 + $0x238] sm:$0xff]
    %v219 = vld [vmem:[#allocation5 + $0x240] sm:$0xff]
    %v220 = vld [vmem:[#allocation5 + $0x248] sm:$0xff]
    %v221 = vld [vmem:[#allocation5 + $0x250] sm:$0xff]
    %v222 = vld [vmem:[#allocation5 + $0x258] sm:$0xff]
    %v223 = vld [vmem:[#allocation5 + $0x260] sm:$0xff]
    %v224 = vld [vmem:[#allocation5 + $0x268] sm:$0xff]
    %v225 = vld [vmem:[#allocation5 + $0x270] sm:$0xff]
    %v226 = vld [vmem:[#allocation5 + $0x278] sm:$0xff]
    %v227 = vld [vmem:[#allocation7] sm:$0xff]
    %v228 = vld [vmem:[#allocation7 + $0x8] sm:$0x3]
    %v229 = vpack.c.bf16 %v146, %v146
    %v232 = vlaneseq
    %v233 = vshrl.u32 %v232, 7
    %v234 = vsub.s32 0, %v233
    %v235 = vrot.slane %v227, %v234
    %v236 = vlaneseq
    %v237 = vshrl.u32 %v236, 7
    %v238 = vsub.s32 1, %v237
    %v239 = vrot.slane %v227, %v238
    %v240 = vlaneseq
    %v241 = vshrl.u32 %v240, 7
    %v242 = vsub.s32 2, %v241
    %v243 = vrot.slane %v227, %v242
    %v244 = vlaneseq
    %v245 = vshrl.u32 %v244, 7
    %v246 = vsub.s32 3, %v245
    %v247 = vrot.slane %v227, %v246
    %v248 = vlaneseq
    %v249 = vshrl.u32 %v248, 7
    %v250 = vsub.s32 4, %v249
    %v251 = vrot.slane %v227, %v250
    %v252 = vlaneseq
    %v253 = vshrl.u32 %v252, 7
    %v254 = vsub.s32 5, %v253
    %v255 = vrot.slane %v227, %v254
    %v256 = vlaneseq
    %v257 = vshrl.u32 %v256, 7
    %v258 = vsub.s32 6, %v257
    %v259 = vrot.slane %v227, %v258
    %v260 = vlaneseq
    %v261 = vshrl.u32 %v260, 7
    %v262 = vsub.s32 7, %v261
    %v263 = vrot.slane %v227, %v262
    %v264 = vlaneseq
    %v265 = vshrl.u32 %v264, 7
    %v266 = vsub.s32 0, %v265
    %v267 = vrot.slane %v228, %v266
    %v268 = vlaneseq
    %v269 = vshrl.u32 %v268, 7
    %v270 = vsub.s32 1, %v269
    %v271 = vrot.slane %v228, %v270
    %v362 = vunpack.c.l.b16 %v147
    %v363 = vunpack.c.h.b16 %v147
    %v364 = vunpack.c.l.b16 %v148
    %v365 = vunpack.c.h.b16 %v148
    %v366 = vunpack.c.l.b16 %v149
    %v367 = vunpack.c.h.b16 %v149
    %v368 = vunpack.c.l.b16 %v150
    %v369 = vunpack.c.h.b16 %v150
    %v370 = vunpack.c.l.b16 %v151
    %v371 = vunpack.c.h.b16 %v151
    %v372 = vunpack.c.l.b16 %v152
    %v373 = vunpack.c.h.b16 %v152
    %v374 = vunpack.c.l.b16 %v153
    %v375 = vunpack.c.h.b16 %v153
    %v376 = vunpack.c.l.b16 %v154
    %v377 = vunpack.c.h.b16 %v154
    %v378 = vunpack.c.l.b16 %v155
    %v379 = vunpack.c.h.b16 %v155
    %v380 = vunpack.c.l.b16 %v156
    %v381 = vunpack.c.h.b16 %v156
    %v382 = vunpack.c.l.b16 %v157
    %v383 = vunpack.c.h.b16 %v157
    %v384 = vunpack.c.l.b16 %v158
    %v385 = vunpack.c.h.b16 %v158
    %v386 = vunpack.c.l.b16 %v159
    %v387 = vunpack.c.h.b16 %v159
    %v388 = vunpack.c.l.b16 %v160
    %v389 = vunpack.c.h.b16 %v160
    %v390 = vunpack.c.l.b16 %v161
    %v391 = vunpack.c.h.b16 %v161
    %v392 = vunpack.c.l.b16 %v162
    %v393 = vunpack.c.h.b16 %v162
    %v394 = vunpack.c.l.b16 %v163
    %v395 = vunpack.c.h.b16 %v163
    %v396 = vunpack.c.l.b16 %v164
    %v397 = vunpack.c.h.b16 %v164
    %v398 = vunpack.c.l.b16 %v165
    %v399 = vunpack.c.h.b16 %v165
    %v400 = vunpack.c.l.b16 %v166
    %v401 = vunpack.c.h.b16 %v166
    %v402 = vunpack.c.l.b16 %v167
    %v403 = vunpack.c.h.b16 %v167
    %v404 = vunpack.c.l.b16 %v168
    %v405 = vunpack.c.h.b16 %v168
    %v406 = vunpack.c.l.b16 %v169
    %v407 = vunpack.c.h.b16 %v169
    %v408 = vunpack.c.l.b16 %v170
    %v409 = vunpack.c.h.b16 %v170
    %v410 = vunpack.c.l.b16 %v171
    %v411 = vunpack.c.h.b16 %v171
    %v412 = vunpack.c.l.b16 %v172
    %v413 = vunpack.c.h.b16 %v172
    %v414 = vunpack.c.l.b16 %v173
    %v415 = vunpack.c.h.b16 %v173
    %v416 = vunpack.c.l.b16 %v174
    %v417 = vunpack.c.h.b16 %v174
    %v418 = vunpack.c.l.b16 %v175
    %v419 = vunpack.c.h.b16 %v175
    %v420 = vunpack.c.l.b16 %v176
    %v421 = vunpack.c.h.b16 %v176
    %v422 = vunpack.c.l.b16 %v177
    %v423 = vunpack.c.h.b16 %v177
    %v424 = vunpack.c.l.b16 %v178
    %v425 = vunpack.c.h.b16 %v178
    %v426 = vunpack.c.l.b16 %v179
    %v427 = vunpack.c.h.b16 %v179
    %v428 = vunpack.c.l.b16 %v180
    %v429 = vunpack.c.h.b16 %v180
    %v430 = vunpack.c.l.b16 %v181
    %v431 = vunpack.c.h.b16 %v181
    %v432 = vunpack.c.l.b16 %v182
    %v433 = vunpack.c.h.b16 %v182
    %v434 = vunpack.c.l.b16 %v183
    %v435 = vunpack.c.h.b16 %v183
    %v436 = vunpack.c.l.b16 %v184
    %v437 = vunpack.c.h.b16 %v184
    %v438 = vunpack.c.l.b16 %v185
    %v439 = vunpack.c.h.b16 %v185
    %v440 = vunpack.c.l.b16 %v186
    %v441 = vunpack.c.h.b16 %v186
    %v442 = vunpack.c.l.b16 %v187
    %v443 = vunpack.c.h.b16 %v187
    %v444 = vunpack.c.l.b16 %v188
    %v445 = vunpack.c.h.b16 %v188
    %v446 = vunpack.c.l.b16 %v189
    %v447 = vunpack.c.h.b16 %v189
    %v448 = vunpack.c.l.b16 %v190
    %v449 = vunpack.c.h.b16 %v190
    %v450 = vunpack.c.l.b16 %v191
    %v451 = vunpack.c.h.b16 %v191
    %v452 = vunpack.c.l.b16 %v192
    %v453 = vunpack.c.h.b16 %v192
    %v454 = vunpack.c.l.b16 %v193
    %v455 = vunpack.c.h.b16 %v193
    %v456 = vunpack.c.l.b16 %v194
    %v457 = vunpack.c.h.b16 %v194
    %v458 = vunpack.c.l.b16 %v195
    %v459 = vunpack.c.h.b16 %v195
    %v460 = vunpack.c.l.b16 %v196
    %v461 = vunpack.c.h.b16 %v196
    %v462 = vunpack.c.l.b16 %v197
    %v463 = vunpack.c.h.b16 %v197
    %v464 = vunpack.c.l.b16 %v198
    %v465 = vunpack.c.h.b16 %v198
    %v466 = vunpack.c.l.b16 %v199
    %v467 = vunpack.c.h.b16 %v199
    %v468 = vunpack.c.l.b16 %v200
    %v469 = vunpack.c.h.b16 %v200
    %v470 = vunpack.c.l.b16 %v201
    %v471 = vunpack.c.h.b16 %v201
    %v472 = vunpack.c.l.b16 %v202
    %v473 = vunpack.c.h.b16 %v202
    %v474 = vunpack.c.l.b16 %v203
    %v475 = vunpack.c.h.b16 %v203
    %v476 = vunpack.c.l.b16 %v204
    %v477 = vunpack.c.h.b16 %v204
    %v478 = vunpack.c.l.b16 %v205
    %v479 = vunpack.c.h.b16 %v205
    %v480 = vunpack.c.l.b16 %v206
    %v481 = vunpack.c.h.b16 %v206
    %v482 = vunpack.c.l.b16 %v207
    %v483 = vunpack.c.h.b16 %v207
    %v484 = vunpack.c.l.b16 %v208
    %v485 = vunpack.c.h.b16 %v208
    %v486 = vunpack.c.l.b16 %v209
    %v487 = vunpack.c.h.b16 %v209
    %v488 = vunpack.c.l.b16 %v210
    %v489 = vunpack.c.h.b16 %v210
    %v490 = vunpack.c.l.b16 %v211
    %v491 = vunpack.c.h.b16 %v211
    %v492 = vunpack.c.l.b16 %v212
    %v493 = vunpack.c.h.b16 %v212
    %v494 = vunpack.c.l.b16 %v213
    %v495 = vunpack.c.h.b16 %v213
    %v496 = vunpack.c.l.b16 %v214
    %v497 = vunpack.c.h.b16 %v214
    %v498 = vunpack.c.l.b16 %v215
    %v499 = vunpack.c.h.b16 %v215
    %v500 = vunpack.c.l.b16 %v216
    %v501 = vunpack.c.h.b16 %v216
    %v502 = vunpack.c.l.b16 %v217
    %v503 = vunpack.c.h.b16 %v217
    %v504 = vunpack.c.l.b16 %v218
    %v505 = vunpack.c.h.b16 %v218
    %v506 = vunpack.c.l.b16 %v219
    %v507 = vunpack.c.h.b16 %v219
    %v508 = vunpack.c.l.b16 %v220
    %v509 = vunpack.c.h.b16 %v220
    %v510 = vunpack.c.l.b16 %v221
    %v511 = vunpack.c.h.b16 %v221
    %v512 = vunpack.c.l.b16 %v222
    %v513 = vunpack.c.h.b16 %v222
    %v514 = vunpack.c.l.b16 %v223
    %v515 = vunpack.c.h.b16 %v223
    %v516 = vunpack.c.l.b16 %v224
    %v517 = vunpack.c.h.b16 %v224
    %v518 = vunpack.c.l.b16 %v225
    %v519 = vunpack.c.h.b16 %v225
    %v520 = vunpack.c.l.b16 %v226
    %v521 = vunpack.c.h.b16 %v226
    %v522 = vpack.c.b16 %v372, %v362
    %v523 = vpack.c.b16 %v373, %v363
    %v524 = vpack.c.b16 %v374, %v364
    %v525 = vpack.c.b16 %v375, %v365
    %v526 = vpack.c.b16 %v376, %v366
    %v527 = vpack.c.b16 %v377, %v367
    %v528 = vpack.c.b16 %v378, %v368
    %v529 = vpack.c.b16 %v379, %v369
    %v530 = vpack.c.b16 %v380, %v370
    %v531 = vpack.c.b16 %v381, %v371
    %v532 = vpack.c.b16 %v392, %v382
    %v533 = vpack.c.b16 %v393, %v383
    %v534 = vpack.c.b16 %v394, %v384
    %v535 = vpack.c.b16 %v395, %v385
    %v536 = vpack.c.b16 %v396, %v386
    %v537 = vpack.c.b16 %v397, %v387
    %v538 = vpack.c.b16 %v398, %v388
    %v539 = vpack.c.b16 %v399, %v389
    %v540 = vpack.c.b16 %v400, %v390
    %v541 = vpack.c.b16 %v401, %v391
    %v542 = vpack.c.b16 %v412, %v402
    %v543 = vpack.c.b16 %v413, %v403
    %v544 = vpack.c.b16 %v414, %v404
    %v545 = vpack.c.b16 %v415, %v405
    %v546 = vpack.c.b16 %v416, %v406
    %v547 = vpack.c.b16 %v417, %v407
    %v548 = vpack.c.b16 %v418, %v408
    %v549 = vpack.c.b16 %v419, %v409
    %v550 = vpack.c.b16 %v420, %v410
    %v551 = vpack.c.b16 %v421, %v411
    %v552 = vpack.c.b16 %v432, %v422
    %v553 = vpack.c.b16 %v433, %v423
    %v554 = vpack.c.b16 %v434, %v424
    %v555 = vpack.c.b16 %v435, %v425
    %v556 = vpack.c.b16 %v436, %v426
    %v557 = vpack.c.b16 %v437, %v427
    %v558 = vpack.c.b16 %v438, %v428
    %v559 = vpack.c.b16 %v439, %v429
    %v560 = vpack.c.b16 %v440, %v430
    %v561 = vpack.c.b16 %v441, %v431
    %v562 = vpack.c.b16 %v452, %v442
    %v563 = vpack.c.b16 %v453, %v443
    %v564 = vpack.c.b16 %v454, %v444
    %v565 = vpack.c.b16 %v455, %v445
    %v566 = vpack.c.b16 %v456, %v446
    %v567 = vpack.c.b16 %v457, %v447
    %v568 = vpack.c.b16 %v458, %v448
    %v569 = vpack.c.b16 %v459, %v449
    %v570 = vpack.c.b16 %v460, %v450
    %v571 = vpack.c.b16 %v461, %v451
    %v572 = vpack.c.b16 %v472, %v462
    %v573 = vpack.c.b16 %v473, %v463
    %v574 = vpack.c.b16 %v474, %v464
    %v575 = vpack.c.b16 %v475, %v465
    %v576 = vpack.c.b16 %v476, %v466
    %v577 = vpack.c.b16 %v477, %v467
    %v578 = vpack.c.b16 %v478, %v468
    %v579 = vpack.c.b16 %v479, %v469
    %v580 = vpack.c.b16 %v480, %v470
    %v581 = vpack.c.b16 %v481, %v471
    %v582 = vpack.c.b16 %v492, %v482
    %v583 = vpack.c.b16 %v493, %v483
    %v584 = vpack.c.b16 %v494, %v484
    %v585 = vpack.c.b16 %v495, %v485
    %v586 = vpack.c.b16 %v496, %v486
    %v587 = vpack.c.b16 %v497, %v487
    %v588 = vpack.c.b16 %v498, %v488
    %v589 = vpack.c.b16 %v499, %v489
    %v590 = vpack.c.b16 %v500, %v490
    %v591 = vpack.c.b16 %v501, %v491
    %v592 = vpack.c.b16 %v512, %v502
    %v593 = vpack.c.b16 %v513, %v503
    %v594 = vpack.c.b16 %v514, %v504
    %v595 = vpack.c.b16 %v515, %v505
    %v596 = vpack.c.b16 %v516, %v506
    %v597 = vpack.c.b16 %v517, %v507
    %v598 = vpack.c.b16 %v518, %v508
    %v599 = vpack.c.b16 %v519, %v509
    %v600 = vpack.c.b16 %v520, %v510
    %v601 = vpack.c.b16 %v521, %v511
    %682 = vmatprep.subr.bf16.mxu0 %v523
    %683 = vmatpush1.bf16.msra.mxu0 %v522
    %684 = vmatprep.subr.bf16.mxu0 %v533
    %685 = vmatpush1.bf16.msra.mxu0 %v532
    %686 = vmatprep.subr.bf16.mxu0 %v543
    %687 = vmatpush1.bf16.msra.mxu0 %v542
    %688 = vmatprep.subr.bf16.mxu0 %v553
    %689 = vmatpush1.bf16.msra.mxu0 %v552
    %690 = vmatprep.subr.bf16.mxu0 %v563
    %691 = vmatpush1.bf16.msra.mxu0 %v562
    %692 = vmatprep.subr.bf16.mxu0 %v573
    %693 = vmatpush1.bf16.msra.mxu0 %v572
    %694 = vmatprep.subr.bf16.mxu0 %v583
    %695 = vmatpush1.bf16.msra.mxu0 %v582
    %696 = vmatprep.subr.bf16.mxu0 %v593
    %697 = vmatpush1.bf16.msra.mxu0 %v592
    %698 = vmatprep.subr.bf16.mxu0 0
    %699 = vmatpush1.bf16.msra.mxu0 0
    %700 = vmatprep.subr.bf16.mxu0 0
    %701 = vmatpush1.bf16.msra.mxu0 0
    %702 = vmatprep.subr.bf16.mxu0 0
    %703 = vmatpush1.bf16.msra.mxu0 0
    %704 = vmatprep.subr.bf16.mxu0 0
    %705 = vmatpush1.bf16.msra.mxu0 0
    %706 = vmatprep.subr.bf16.mxu0 0
    %707 = vmatpush1.bf16.msra.mxu0 0
    %708 = vmatprep.subr.bf16.mxu0 0
    %709 = vmatpush1.bf16.msra.mxu0 0
    %710 = vmatprep.subr.bf16.mxu0 0
    %711 = vmatpush1.bf16.msra.mxu0 0
    %712 = vmatprep.subr.bf16.mxu0 0
    %713 = vmatpush1.bf16.msra.mxu0 0
    %714 = vmatprep.mubr.bf16.mxu0 0
    %715 = vmatmul.mubr.bf16.gmra.mrb[0].mxu0 %v229
    %v716 = vpop.f32.mrb[0].mxu0
    %v717 = vadd.f32 %v235, %v716
    %v718 = vpop.f32.mrb[0].mxu0
    %v719 = vadd.f32 %v239, %v718
    %v720 = vpop.f32.mrb[0].mxu0
    %v721 = vpop.f32.mrb[0].mxu0
    %722 = vdwg.mxu0
    %723 = vmatprep.subr.bf16.mxu0 %v525
    %724 = vmatpush1.bf16.msra.mxu0 %v524
    %725 = vmatprep.subr.bf16.mxu0 %v535
    %726 = vmatpush1.bf16.msra.mxu0 %v534
    %727 = vmatprep.subr.bf16.mxu0 %v545
    %728 = vmatpush1.bf16.msra.mxu0 %v544
    %729 = vmatprep.subr.bf16.mxu0 %v555
    %730 = vmatpush1.bf16.msra.mxu0 %v554
    %731 = vmatprep.subr.bf16.mxu0 %v565
    %732 = vmatpush1.bf16.msra.mxu0 %v564
    %733 = vmatprep.subr.bf16.mxu0 %v575
    %734 = vmatpush1.bf16.msra.mxu0 %v574
    %735 = vmatprep.subr.bf16.mxu0 %v585
    %736 = vmatpush1.bf16.msra.mxu0 %v584
    %737 = vmatprep.subr.bf16.mxu0 %v595
    %738 = vmatpush1.bf16.msra.mxu0 %v594
    %739 = vmatprep.subr.bf16.mxu0 0
    %740 = vmatpush1.bf16.msra.mxu0 0
    %741 = vmatprep.subr.bf16.mxu0 0
    %742 = vmatpush1.bf16.msra.mxu0 0
    %743 = vmatprep.subr.bf16.mxu0 0
    %744 = vmatpush1.bf16.msra.mxu0 0
    %745 = vmatprep.subr.bf16.mxu0 0
    %746 = vmatpush1.bf16.msra.mxu0 0
    %747 = vmatprep.subr.bf16.mxu0 0
    %748 = vmatpush1.bf16.msra.mxu0 0
    %749 = vmatprep.subr.bf16.mxu0 0
    %750 = vmatpush1.bf16.msra.mxu0 0
    %751 = vmatprep.subr.bf16.mxu0 0
    %752 = vmatpush1.bf16.msra.mxu0 0
    %753 = vmatprep.subr.bf16.mxu0 0
    %754 = vmatpush1.bf16.msra.mxu0 0
    %755 = vmatprep.mubr.bf16.mxu0 0
    %756 = vmatmul.mubr.bf16.gmra.mrb[0].mxu0 %v229
    %v757 = vpop.f32.mrb[0].mxu0
    %v758 = vadd.f32 %v243, %v757
    %v759 = vpop.f32.mrb[0].mxu0
    %v760 = vadd.f32 %v247, %v759
    %v761 = vpop.f32.mrb[0].mxu0
    %v762 = vpop.f32.mrb[0].mxu0
    %763 = vdwg.mxu0
    %764 = vmatprep.subr.bf16.mxu0 %v527
    %765 = vmatpush1.bf16.msra.mxu0 %v526
    %766 = vmatprep.subr.bf16.mxu0 %v537
    %767 = vmatpush1.bf16.msra.mxu0 %v536
    %768 = vmatprep.subr.bf16.mxu0 %v547
    %769 = vmatpush1.bf16.msra.mxu0 %v546
    %770 = vmatprep.subr.bf16.mxu0 %v557
    %771 = vmatpush1.bf16.msra.mxu0 %v556
    %772 = vmatprep.subr.bf16.mxu0 %v567
    %773 = vmatpush1.bf16.msra.mxu0 %v566
    %774 = vmatprep.subr.bf16.mxu0 %v577
    %775 = vmatpush1.bf16.msra.mxu0 %v576
    %776 = vmatprep.subr.bf16.mxu0 %v587
    %777 = vmatpush1.bf16.msra.mxu0 %v586
    %778 = vmatprep.subr.bf16.mxu0 %v597
    %779 = vmatpush1.bf16.msra.mxu0 %v596
    %780 = vmatprep.subr.bf16.mxu0 0
    %781 = vmatpush1.bf16.msra.mxu0 0
    %782 = vmatprep.subr.bf16.mxu0 0
    %783 = vmatpush1.bf16.msra.mxu0 0
    %784 = vmatprep.subr.bf16.mxu0 0
    %785 = vmatpush1.bf16.msra.mxu0 0
    %786 = vmatprep.subr.bf16.mxu0 0
    %787 = vmatpush1.bf16.msra.mxu0 0
    %788 = vmatprep.subr.bf16.mxu0 0
    %789 = vmatpush1.bf16.msra.mxu0 0
    %790 = vmatprep.subr.bf16.mxu0 0
    %791 = vmatpush1.bf16.msra.mxu0 0
    %792 = vmatprep.subr.bf16.mxu0 0
    %793 = vmatpush1.bf16.msra.mxu0 0
    %794 = vmatprep.subr.bf16.mxu0 0
    %795 = vmatpush1.bf16.msra.mxu0 0
    %796 = vmatprep.mubr.bf16.mxu0 0
    %797 = vmatmul.mubr.bf16.gmra.mrb[0].mxu0 %v229
    %v798 = vpop.f32.mrb[0].mxu0
    %v799 = vadd.f32 %v251, %v798
    %v800 = vpop.f32.mrb[0].mxu0
    %v801 = vadd.f32 %v255, %v800
    %v802 = vpop.f32.mrb[0].mxu0
    %v803 = vpop.f32.mrb[0].mxu0
    %804 = vdwg.mxu0
    %805 = vmatprep.subr.bf16.mxu0 %v529
    %806 = vmatpush1.bf16.msra.mxu0 %v528
    %807 = vmatprep.subr.bf16.mxu0 %v539
    %808 = vmatpush1.bf16.msra.mxu0 %v538
    %809 = vmatprep.subr.bf16.mxu0 %v549
    %810 = vmatpush1.bf16.msra.mxu0 %v548
    %811 = vmatprep.subr.bf16.mxu0 %v559
    %812 = vmatpush1.bf16.msra.mxu0 %v558
    %813 = vmatprep.subr.bf16.mxu0 %v569
    %814 = vmatpush1.bf16.msra.mxu0 %v568
    %815 = vmatprep.subr.bf16.mxu0 %v579
    %816 = vmatpush1.bf16.msra.mxu0 %v578
    %817 = vmatprep.subr.bf16.mxu0 %v589
    %818 = vmatpush1.bf16.msra.mxu0 %v588
    %819 = vmatprep.subr.bf16.mxu0 %v599
    %820 = vmatpush1.bf16.msra.mxu0 %v598
    %821 = vmatprep.subr.bf16.mxu0 0
    %822 = vmatpush1.bf16.msra.mxu0 0
    %823 = vmatprep.subr.bf16.mxu0 0
    %824 = vmatpush1.bf16.msra.mxu0 0
    %825 = vmatprep.subr.bf16.mxu0 0
    %826 = vmatpush1.bf16.msra.mxu0 0
    %827 = vmatprep.subr.bf16.mxu0 0
    %828 = vmatpush1.bf16.msra.mxu0 0
    %829 = vmatprep.subr.bf16.mxu0 0
    %830 = vmatpush1.bf16.msra.mxu0 0
    %831 = vmatprep.subr.bf16.mxu0 0
    %832 = vmatpush1.bf16.msra.mxu0 0
    %833 = vmatprep.subr.bf16.mxu0 0
    %834 = vmatpush1.bf16.msra.mxu0 0
    %835 = vmatprep.subr.bf16.mxu0 0
    %836 = vmatpush1.bf16.msra.mxu0 0
    %837 = vmatprep.mubr.bf16.mxu0 0
    %838 = vmatmul.mubr.bf16.gmra.mrb[0].mxu0 %v229
    %v839 = vpop.f32.mrb[0].mxu0
    %v840 = vadd.f32 %v259, %v839
    %v841 = vpop.f32.mrb[0].mxu0
    %v842 = vadd.f32 %v263, %v841
    %v843 = vpop.f32.mrb[0].mxu0
    %v844 = vpop.f32.mrb[0].mxu0
    %845 = vdwg.mxu0
    %846 = vmatprep.subr.bf16.mxu0 %v531
    %847 = vmatpush1.bf16.msra.mxu0 %v530
    %848 = vmatprep.subr.bf16.mxu0 %v541
    %849 = vmatpush1.bf16.msra.mxu0 %v540
    %850 = vmatprep.subr.bf16.mxu0 %v551
    %851 = vmatpush1.bf16.msra.mxu0 %v550
    %852 = vmatprep.subr.bf16.mxu0 %v561
    %853 = vmatpush1.bf16.msra.mxu0 %v560
    %854 = vmatprep.subr.bf16.mxu0 %v571
    %855 = vmatpush1.bf16.msra.mxu0 %v570
    %856 = vmatprep.subr.bf16.mxu0 %v581
    %857 = vmatpush1.bf16.msra.mxu0 %v580
    %858 = vmatprep.subr.bf16.mxu0 %v591
    %859 = vmatpush1.bf16.msra.mxu0 %v590
    %860 = vmatprep.subr.bf16.mxu0 %v601
    %861 = vmatpush1.bf16.msra.mxu0 %v600
    %862 = vmatprep.subr.bf16.mxu0 0
    %863 = vmatpush1.bf16.msra.mxu0 0
    %864 = vmatprep.subr.bf16.mxu0 0
    %865 = vmatpush1.bf16.msra.mxu0 0
    %866 = vmatprep.subr.bf16.mxu0 0
    %867 = vmatpush1.bf16.msra.mxu0 0
    %868 = vmatprep.subr.bf16.mxu0 0
    %869 = vmatpush1.bf16.msra.mxu0 0
    %870 = vmatprep.subr.bf16.mxu0 0
    %871 = vmatpush1.bf16.msra.mxu0 0
    %872 = vmatprep.subr.bf16.mxu0 0
    %873 = vmatpush1.bf16.msra.mxu0 0
    %874 = vmatprep.subr.bf16.mxu0 0
    %875 = vmatpush1.bf16.msra.mxu0 0
    %876 = vmatprep.subr.bf16.mxu0 0
    %877 = vmatpush1.bf16.msra.mxu0 0
    %878 = vmatprep.mubr.bf16.mxu0 0
    %879 = vmatmul.mubr.bf16.gmra.mrb[0].mxu0 %v229
    %v880 = vpop.f32.mrb[0].mxu0
    %v881 = vadd.f32 %v267, %v880
    %v882 = vpop.f32.mrb[0].mxu0
    %v883 = vadd.f32 %v271, %v882
    %v884 = vpop.f32.mrb[0].mxu0
    %v885 = vpop.f32.mrb[0].mxu0
    %886 = vdwg.mxu0
    %v887 = vxor.u32 %v717, 2147483648
    %v888 = vxor.u32 %v719, 2147483648
    %v889 = vxor.u32 %v758, 2147483648
    %v890 = vxor.u32 %v760, 2147483648
    %v891 = vxor.u32 %v799, 2147483648
    %v892 = vxor.u32 %v801, 2147483648
    %v893 = vxor.u32 %v840, 2147483648
    %v894 = vxor.u32 %v842, 2147483648
    %v895 = vxor.u32 %v881, 2147483648
    %v896 = vxor.u32 %v883, 2147483648
    %v897 = vmul.f32 %v887, 1.442695
    %v898 = vpow.pop %v897
    %v899 = vmul.f32 %v888, 1.442695
    %v900 = vpow.pop %v899
    %v901 = vmul.f32 %v889, 1.442695
    %v902 = vpow.pop %v901
    %v903 = vmul.f32 %v890, 1.442695
    %v904 = vpow.pop %v903
    %v905 = vmul.f32 %v891, 1.442695
    %v906 = vpow.pop %v905
    %v907 = vmul.f32 %v892, 1.442695
    %v908 = vpow.pop %v907
    %v909 = vmul.f32 %v893, 1.442695
    %v910 = vpow.pop %v909
    %v911 = vmul.f32 %v894, 1.442695
    %v912 = vpow.pop %v911
    %v913 = vmul.f32 %v895, 1.442695
    %v914 = vpow.pop %v913
    %v915 = vmul.f32 %v896, 1.442695
    %v916 = vpow.pop %v915
    %v917 = vadd.f32 %v898, 1.0
    %v918 = vadd.f32 %v900, 1.0
    %v919 = vadd.f32 %v902, 1.0
    %v920 = vadd.f32 %v904, 1.0
    %v921 = vadd.f32 %v906, 1.0
    %v922 = vadd.f32 %v908, 1.0
    %v923 = vadd.f32 %v910, 1.0
    %v924 = vadd.f32 %v912, 1.0
    %v925 = vadd.f32 %v914, 1.0
    %v926 = vadd.f32 %v916, 1.0
    %v927 = vrcp.pop %v917
    %v928 = vmul.f32 1.0, %v927
    %v929 = vrcp.pop %v918
    %v930 = vmul.f32 1.0, %v929
    %v931 = vrcp.pop %v919
    %v932 = vmul.f32 1.0, %v931
    %v933 = vrcp.pop %v920
    %v934 = vmul.f32 1.0, %v933
    %v935 = vrcp.pop %v921
    %v936 = vmul.f32 1.0, %v935
    %v937 = vrcp.pop %v922
    %v938 = vmul.f32 1.0, %v937
    %v939 = vrcp.pop %v923
    %v940 = vmul.f32 1.0, %v939
    %v941 = vrcp.pop %v924
    %v942 = vmul.f32 1.0, %v941
    %v943 = vrcp.pop %v925
    %v944 = vmul.f32 1.0, %v943
    %v945 = vrcp.pop %v926
    %v946 = vmul.f32 1.0, %v945
    %v947 = vmul.f32 %v717, %v928
    %v948 = vmul.f32 %v719, %v930
    %v949 = vmul.f32 %v758, %v932
    %v950 = vmul.f32 %v760, %v934
    %v951 = vmul.f32 %v799, %v936
    %v952 = vmul.f32 %v801, %v938
    %v953 = vmul.f32 %v840, %v940
    %v954 = vmul.f32 %v842, %v942
    %v955 = vmul.f32 %v881, %v944
    %v956 = vmul.f32 %v883, %v946
    %v957 = vld [vmem:[#allocation8] sm:$0xff]
    %v958 = vld [vmem:[#allocation8 + $0x8] sm:$0xff]
    %v959 = vld [vmem:[#allocation8 + $0x10] sm:$0xff]
    %v960 = vld [vmem:[#allocation8 + $0x18] sm:$0xff]
    %v961 = vld [vmem:[#allocation8 + $0x20] sm:$0xff]
    %v962 = vld [vmem:[#allocation8 + $0x28] sm:$0xff]
    %v963 = vld [vmem:[#allocation8 + $0x30] sm:$0xff]
    %v964 = vld [vmem:[#allocation8 + $0x38] sm:$0xff]
    %v965 = vld [vmem:[#allocation8 + $0x40] sm:$0xff]
    %v966 = vld [vmem:[#allocation8 + $0x48] sm:$0xff]
    %v967 = vld [vmem:[#allocation8 + $0x50] sm:$0xff]
    %v968 = vld [vmem:[#allocation8 + $0x58] sm:$0xff]
    %v969 = vld [vmem:[#allocation8 + $0x60] sm:$0xff]
    %v970 = vld [vmem:[#allocation8 + $0x68] sm:$0xff]
    %v971 = vld [vmem:[#allocation8 + $0x70] sm:$0xff]
    %v972 = vld [vmem:[#allocation8 + $0x78] sm:$0xff]
    %v973 = vld [vmem:[#allocation8 + $0x80] sm:$0xff]
    %v974 = vld [vmem:[#allocation8 + $0x88] sm:$0xff]
    %v975 = vld [vmem:[#allocation8 + $0x90] sm:$0xff]
    %v976 = vld [vmem:[#allocation8 + $0x98] sm:$0xff]
    %v977 = vld [vmem:[#allocation8 + $0xa0] sm:$0xff]
    %v978 = vld [vmem:[#allocation8 + $0xa8] sm:$0xff]
    %v979 = vld [vmem:[#allocation8 + $0xb0] sm:$0xff]
    %v980 = vld [vmem:[#allocation8 + $0xb8] sm:$0xff]
    %v981 = vld [vmem:[#allocation8 + $0xc0] sm:$0xff]
    %v982 = vld [vmem:[#allocation8 + $0xc8] sm:$0xff]
    %v983 = vld [vmem:[#allocation8 + $0xd0] sm:$0xff]
    %v984 = vld [vmem:[#allocation8 + $0xd8] sm:$0xff]
    %v985 = vld [vmem:[#allocation8 + $0xe0] sm:$0xff]
    %v986 = vld [vmem:[#allocation8 + $0xe8] sm:$0xff]
    %v987 = vld [vmem:[#allocation8 + $0xf0] sm:$0xff]
    %v988 = vld [vmem:[#allocation8 + $0xf8] sm:$0xff]
    %v989 = vld [vmem:[#allocation8 + $0x100] sm:$0xff]
    %v990 = vld [vmem:[#allocation8 + $0x108] sm:$0xff]
    %v991 = vld [vmem:[#allocation8 + $0x110] sm:$0xff]
    %v992 = vld [vmem:[#allocation8 + $0x118] sm:$0xff]
    %v993 = vld [vmem:[#allocation8 + $0x120] sm:$0xff]
    %v994 = vld [vmem:[#allocation8 + $0x128] sm:$0xff]
    %v995 = vld [vmem:[#allocation8 + $0x130] sm:$0xff]
    %v996 = vld [vmem:[#allocation8 + $0x138] sm:$0xff]
    %v997 = vld [vmem:[#allocation8 + $0x140] sm:$0xff]
    %v998 = vld [vmem:[#allocation8 + $0x148] sm:$0xff]
    %v999 = vld [vmem:[#allocation8 + $0x150] sm:$0xff]
    %v1000 = vld [vmem:[#allocation8 + $0x158] sm:$0xff]
    %v1001 = vld [vmem:[#allocation8 + $0x160] sm:$0xff]
    %v1002 = vld [vmem:[#allocation8 + $0x168] sm:$0xff]
    %v1003 = vld [vmem:[#allocation8 + $0x170] sm:$0xff]
    %v1004 = vld [vmem:[#allocation8 + $0x178] sm:$0xff]
    %v1005 = vld [vmem:[#allocation8 + $0x180] sm:$0xff]
    %v1006 = vld [vmem:[#allocation8 + $0x188] sm:$0xff]
    %v1007 = vld [vmem:[#allocation8 + $0x190] sm:$0xff]
    %v1008 = vld [vmem:[#allocation8 + $0x198] sm:$0xff]
    %v1009 = vld [vmem:[#allocation8 + $0x1a0] sm:$0xff]
    %v1010 = vld [vmem:[#allocation8 + $0x1a8] sm:$0xff]
    %v1011 = vld [vmem:[#allocation8 + $0x1b0] sm:$0xff]
    %v1012 = vld [vmem:[#allocation8 + $0x1b8] sm:$0xff]
    %v1013 = vld [vmem:[#allocation8 + $0x1c0] sm:$0xff]
    %v1014 = vld [vmem:[#allocation8 + $0x1c8] sm:$0xff]
    %v1015 = vld [vmem:[#allocation8 + $0x1d0] sm:$0xff]
    %v1016 = vld [vmem:[#allocation8 + $0x1d8] sm:$0xff]
    %v1017 = vld [vmem:[#allocation8 + $0x1e0] sm:$0xff]
    %v1018 = vld [vmem:[#allocation8 + $0x1e8] sm:$0xff]
    %v1019 = vld [vmem:[#allocation8 + $0x1f0] sm:$0xff]
    %v1020 = vld [vmem:[#allocation8 + $0x1f8] sm:$0xff]
    %v1021 = vld [vmem:[#allocation8 + $0x200] sm:$0xff]
    %v1022 = vld [vmem:[#allocation8 + $0x208] sm:$0xff]
    %v1023 = vld [vmem:[#allocation8 + $0x210] sm:$0xff]
    %v1024 = vld [vmem:[#allocation8 + $0x218] sm:$0xff]
    %v1025 = vld [vmem:[#allocation8 + $0x220] sm:$0xff]
    %v1026 = vld [vmem:[#allocation8 + $0x228] sm:$0xff]
    %v1027 = vld [vmem:[#allocation8 + $0x230] sm:$0xff]
    %v1028 = vld [vmem:[#allocation8 + $0x238] sm:$0xff]
    %v1029 = vld [vmem:[#allocation8 + $0x240] sm:$0xff]
    %v1030 = vld [vmem:[#allocation8 + $0x248] sm:$0xff]
    %v1031 = vld [vmem:[#allocation8 + $0x250] sm:$0xff]
    %v1032 = vld [vmem:[#allocation8 + $0x258] sm:$0xff]
    %v1033 = vld [vmem:[#allocation8 + $0x260] sm:$0xff]
    %v1034 = vld [vmem:[#allocation8 + $0x268] sm:$0xff]
    %v1035 = vld [vmem:[#allocation8 + $0x270] sm:$0xff]
    %v1036 = vld [vmem:[#allocation8 + $0x278] sm:$0xff]
    %v1037 = vld [vmem:[#allocation8 + $0x280] sm:$0xff]
    %v1038 = vld [vmem:[#allocation8 + $0x288] sm:$0xff]
    %v1039 = vld [vmem:[#allocation8 + $0x290] sm:$0xff]
    %v1040 = vld [vmem:[#allocation8 + $0x298] sm:$0xff]
    %v1041 = vld [vmem:[#allocation8 + $0x2a0] sm:$0xff]
    %v1042 = vld [vmem:[#allocation8 + $0x2a8] sm:$0xff]
    %v1043 = vld [vmem:[#allocation8 + $0x2b0] sm:$0xff]
    %v1044 = vld [vmem:[#allocation8 + $0x2b8] sm:$0xff]
    %v1045 = vld [vmem:[#allocation8 + $0x2c0] sm:$0xff]
    %v1046 = vld [vmem:[#allocation8 + $0x2c8] sm:$0xff]
    %v1047 = vld [vmem:[#allocation8 + $0x2d0] sm:$0xff]
    %v1048 = vld [vmem:[#allocation8 + $0x2d8] sm:$0xff]
    %v1049 = vld [vmem:[#allocation8 + $0x2e0] sm:$0xff]
    %v1050 = vld [vmem:[#allocation8 + $0x2e8] sm:$0xff]
    %v1051 = vld [vmem:[#allocation8 + $0x2f0] sm:$0xff]
    %v1052 = vld [vmem:[#allocation8 + $0x2f8] sm:$0xff]
    %v1053 = vld [vmem:[#allocation8 + $0x300] sm:$0xff]
    %v1054 = vld [vmem:[#allocation8 + $0x308] sm:$0xff]
    %v1055 = vld [vmem:[#allocation8 + $0x310] sm:$0xff]
    %v1056 = vld [vmem:[#allocation8 + $0x318] sm:$0xff]
    %v1057 = vld [vmem:[#allocation8 + $0x320] sm:$0xff]
    %v1058 = vld [vmem:[#allocation8 + $0x328] sm:$0xff]
    %v1059 = vld [vmem:[#allocation8 + $0x330] sm:$0xff]
    %v1060 = vld [vmem:[#allocation8 + $0x338] sm:$0xff]
    %v1061 = vld [vmem:[#allocation8 + $0x340] sm:$0xff]
    %v1062 = vld [vmem:[#allocation8 + $0x348] sm:$0xff]
    %v1063 = vld [vmem:[#allocation8 + $0x350] sm:$0xff]
    %v1064 = vld [vmem:[#allocation8 + $0x358] sm:$0xff]
    %v1065 = vld [vmem:[#allocation8 + $0x360] sm:$0xff]
    %v1066 = vld [vmem:[#allocation8 + $0x368] sm:$0xff]
    %v1067 = vld [vmem:[#allocation8 + $0x370] sm:$0xff]
    %v1068 = vld [vmem:[#allocation8 + $0x378] sm:$0xff]
    %v1069 = vld [vmem:[#allocation8 + $0x380] sm:$0xff]
    %v1070 = vld [vmem:[#allocation8 + $0x388] sm:$0xff]
    %v1071 = vld [vmem:[#allocation8 + $0x390] sm:$0xff]
    %v1072 = vld [vmem:[#allocation8 + $0x398] sm:$0xff]
    %v1073 = vld [vmem:[#allocation8 + $0x3a0] sm:$0xff]
    %v1074 = vld [vmem:[#allocation8 + $0x3a8] sm:$0xff]
    %v1075 = vld [vmem:[#allocation8 + $0x3b0] sm:$0xff]
    %v1076 = vld [vmem:[#allocation8 + $0x3b8] sm:$0xff]
    %v1077 = vld [vmem:[#allocation8 + $0x3c0] sm:$0xff]
    %v1078 = vld [vmem:[#allocation8 + $0x3c8] sm:$0xff]
    %v1079 = vld [vmem:[#allocation8 + $0x3d0] sm:$0xff]
    %v1080 = vld [vmem:[#allocation8 + $0x3d8] sm:$0xff]
    %v1081 = vld [vmem:[#allocation8 + $0x3e0] sm:$0xff]
    %v1082 = vld [vmem:[#allocation8 + $0x3e8] sm:$0xff]
    %v1083 = vld [vmem:[#allocation8 + $0x3f0] sm:$0xff]
    %v1084 = vld [vmem:[#allocation8 + $0x3f8] sm:$0xff]
    %v1085 = vld [vmem:[#allocation8 + $0x400] sm:$0xff]
    %v1086 = vld [vmem:[#allocation8 + $0x408] sm:$0xff]
    %v1087 = vld [vmem:[#allocation8 + $0x410] sm:$0xff]
    %v1088 = vld [vmem:[#allocation8 + $0x418] sm:$0xff]
    %v1089 = vld [vmem:[#allocation8 + $0x420] sm:$0xff]
    %v1090 = vld [vmem:[#allocation8 + $0x428] sm:$0xff]
    %v1091 = vld [vmem:[#allocation8 + $0x430] sm:$0xff]
    %v1092 = vld [vmem:[#allocation8 + $0x438] sm:$0xff]
    %v1093 = vld [vmem:[#allocation8 + $0x440] sm:$0xff]
    %v1094 = vld [vmem:[#allocation8 + $0x448] sm:$0xff]
    %v1095 = vld [vmem:[#allocation8 + $0x450] sm:$0xff]
    %v1096 = vld [vmem:[#allocation8 + $0x458] sm:$0xff]
    %v1097 = vld [vmem:[#allocation8 + $0x460] sm:$0xff]
    %v1098 = vld [vmem:[#allocation8 + $0x468] sm:$0xff]
    %v1099 = vld [vmem:[#allocation8 + $0x470] sm:$0xff]
    %v1100 = vld [vmem:[#allocation8 + $0x478] sm:$0xff]
    %v1101 = vld [vmem:[#allocation8 + $0x480] sm:$0xff]
    %v1102 = vld [vmem:[#allocation8 + $0x488] sm:$0xff]
    %v1103 = vld [vmem:[#allocation8 + $0x490] sm:$0xff]
    %v1104 = vld [vmem:[#allocation8 + $0x498] sm:$0xff]
    %v1105 = vld [vmem:[#allocation8 + $0x4a0] sm:$0xff]
    %v1106 = vld [vmem:[#allocation8 + $0x4a8] sm:$0xff]
    %v1107 = vld [vmem:[#allocation8 + $0x4b0] sm:$0xff]
    %v1108 = vld [vmem:[#allocation8 + $0x4b8] sm:$0xff]
    %v1109 = vld [vmem:[#allocation8 + $0x4c0] sm:$0xff]
    %v1110 = vld [vmem:[#allocation8 + $0x4c8] sm:$0xff]
    %v1111 = vld [vmem:[#allocation8 + $0x4d0] sm:$0xff]
    %v1112 = vld [vmem:[#allocation8 + $0x4d8] sm:$0xff]
    %v1113 = vld [vmem:[#allocation8 + $0x4e0] sm:$0xff]
    %v1114 = vld [vmem:[#allocation8 + $0x4e8] sm:$0xff]
    %v1115 = vld [vmem:[#allocation8 + $0x4f0] sm:$0xff]
    %v1116 = vld [vmem:[#allocation8 + $0x4f8] sm:$0xff]
    %v1117 = vld [vmem:[#allocation8 + $0x500] sm:$0xff]
    %v1118 = vld [vmem:[#allocation8 + $0x508] sm:$0xff]
    %v1119 = vld [vmem:[#allocation8 + $0x510] sm:$0xff]
    %v1120 = vld [vmem:[#allocation8 + $0x518] sm:$0xff]
    %v1121 = vld [vmem:[#allocation8 + $0x520] sm:$0xff]
    %v1122 = vld [vmem:[#allocation8 + $0x528] sm:$0xff]
    %v1123 = vld [vmem:[#allocation8 + $0x530] sm:$0xff]
    %v1124 = vld [vmem:[#allocation8 + $0x538] sm:$0xff]
    %v1125 = vld [vmem:[#allocation8 + $0x540] sm:$0xff]
    %v1126 = vld [vmem:[#allocation8 + $0x548] sm:$0xff]
    %v1127 = vld [vmem:[#allocation8 + $0x550] sm:$0xff]
    %v1128 = vld [vmem:[#allocation8 + $0x558] sm:$0xff]
    %v1129 = vld [vmem:[#allocation8 + $0x560] sm:$0xff]
    %v1130 = vld [vmem:[#allocation8 + $0x568] sm:$0xff]
    %v1131 = vld [vmem:[#allocation8 + $0x570] sm:$0xff]
    %v1132 = vld [vmem:[#allocation8 + $0x578] sm:$0xff]
    %v1133 = vld [vmem:[#allocation8 + $0x580] sm:$0xff]
    %v1134 = vld [vmem:[#allocation8 + $0x588] sm:$0xff]
    %v1135 = vld [vmem:[#allocation8 + $0x590] sm:$0xff]
    %v1136 = vld [vmem:[#allocation8 + $0x598] sm:$0xff]
    %v1137 = vld [vmem:[#allocation8 + $0x5a0] sm:$0xff]
    %v1138 = vld [vmem:[#allocation8 + $0x5a8] sm:$0xff]
    %v1139 = vld [vmem:[#allocation8 + $0x5b0] sm:$0xff]
    %v1140 = vld [vmem:[#allocation8 + $0x5b8] sm:$0xff]
    %v1141 = vld [vmem:[#allocation8 + $0x5c0] sm:$0xff]
    %v1142 = vld [vmem:[#allocation8 + $0x5c8] sm:$0xff]
    %v1143 = vld [vmem:[#allocation8 + $0x5d0] sm:$0xff]
    %v1144 = vld [vmem:[#allocation8 + $0x5d8] sm:$0xff]
    %v1145 = vld [vmem:[#allocation8 + $0x5e0] sm:$0xff]
    %v1146 = vld [vmem:[#allocation8 + $0x5e8] sm:$0xff]
    %v1147 = vld [vmem:[#allocation8 + $0x5f0] sm:$0xff]
    %v1148 = vld [vmem:[#allocation8 + $0x5f8] sm:$0xff]
    %v1149 = vld [vmem:[#allocation8 + $0x600] sm:$0xff]
    %v1150 = vld [vmem:[#allocation8 + $0x608] sm:$0xff]
    %v1151 = vld [vmem:[#allocation8 + $0x610] sm:$0xff]
    %v1152 = vld [vmem:[#allocation8 + $0x618] sm:$0xff]
    %v1153 = vld [vmem:[#allocation8 + $0x620] sm:$0xff]
    %v1154 = vld [vmem:[#allocation8 + $0x628] sm:$0xff]
    %v1155 = vld [vmem:[#allocation8 + $0x630] sm:$0xff]
    %v1156 = vld [vmem:[#allocation8 + $0x638] sm:$0xff]
    %v1157 = vld [vmem:[#allocation8 + $0x640] sm:$0xff]
    %v1158 = vld [vmem:[#allocation8 + $0x648] sm:$0xff]
    %v1159 = vld [vmem:[#allocation8 + $0x650] sm:$0xff]
    %v1160 = vld [vmem:[#allocation8 + $0x658] sm:$0xff]
    %v1161 = vld [vmem:[#allocation8 + $0x660] sm:$0xff]
    %v1162 = vld [vmem:[#allocation8 + $0x668] sm:$0xff]
    %v1163 = vld [vmem:[#allocation8 + $0x670] sm:$0xff]
    %v1164 = vld [vmem:[#allocation8 + $0x678] sm:$0xff]
    %v1165 = vld [vmem:[#allocation8 + $0x680] sm:$0xff]
    %v1166 = vld [vmem:[#allocation8 + $0x688] sm:$0xff]
    %v1167 = vld [vmem:[#allocation8 + $0x690] sm:$0xff]
    %v1168 = vld [vmem:[#allocation8 + $0x698] sm:$0xff]
    %v1169 = vld [vmem:[#allocation8 + $0x6a0] sm:$0xff]
    %v1170 = vld [vmem:[#allocation8 + $0x6a8] sm:$0xff]
    %v1171 = vld [vmem:[#allocation8 + $0x6b0] sm:$0xff]
    %v1172 = vld [vmem:[#allocation8 + $0x6b8] sm:$0xff]
    %v1173 = vld [vmem:[#allocation8 + $0x6c0] sm:$0xff]
    %v1174 = vld [vmem:[#allocation8 + $0x6c8] sm:$0xff]
    %v1175 = vld [vmem:[#allocation8 + $0x6d0] sm:$0xff]
    %v1176 = vld [vmem:[#allocation8 + $0x6d8] sm:$0xff]
    %v1177 = vld [vmem:[#allocation8 + $0x6e0] sm:$0xff]
    %v1178 = vld [vmem:[#allocation8 + $0x6e8] sm:$0xff]
    %v1179 = vld [vmem:[#allocation8 + $0x6f0] sm:$0xff]
    %v1180 = vld [vmem:[#allocation8 + $0x6f8] sm:$0xff]
    %v1181 = vld [vmem:[#allocation8 + $0x700] sm:$0xff]
    %v1182 = vld [vmem:[#allocation8 + $0x708] sm:$0xff]
    %v1183 = vld [vmem:[#allocation8 + $0x710] sm:$0xff]
    %v1184 = vld [vmem:[#allocation8 + $0x718] sm:$0xff]
    %v1185 = vld [vmem:[#allocation8 + $0x720] sm:$0xff]
    %v1186 = vld [vmem:[#allocation8 + $0x728] sm:$0xff]
    %v1187 = vld [vmem:[#allocation8 + $0x730] sm:$0xff]
    %v1188 = vld [vmem:[#allocation8 + $0x738] sm:$0xff]
    %v1189 = vld [vmem:[#allocation8 + $0x740] sm:$0xff]
    %v1190 = vld [vmem:[#allocation8 + $0x748] sm:$0xff]
    %v1191 = vld [vmem:[#allocation8 + $0x750] sm:$0xff]
    %v1192 = vld [vmem:[#allocation8 + $0x758] sm:$0xff]
    %v1193 = vld [vmem:[#allocation8 + $0x760] sm:$0xff]
    %v1194 = vld [vmem:[#allocation8 + $0x768] sm:$0xff]
    %v1195 = vld [vmem:[#allocation8 + $0x770] sm:$0xff]
    %v1196 = vld [vmem:[#allocation8 + $0x778] sm:$0xff]
    %v1197 = vld [vmem:[#allocation8 + $0x780] sm:$0xff]
    %v1198 = vld [vmem:[#allocation8 + $0x788] sm:$0xff]
    %v1199 = vld [vmem:[#allocation8 + $0x790] sm:$0xff]
    %v1200 = vld [vmem:[#allocation8 + $0x798] sm:$0xff]
    %v1201 = vld [vmem:[#allocation8 + $0x7a0] sm:$0xff]
    %v1202 = vld [vmem:[#allocation8 + $0x7a8] sm:$0xff]
    %v1203 = vld [vmem:[#allocation8 + $0x7b0] sm:$0xff]
    %v1204 = vld [vmem:[#allocation8 + $0x7b8] sm:$0xff]
    %v1205 = vld [vmem:[#allocation8 + $0x7c0] sm:$0xff]
    %v1206 = vld [vmem:[#allocation8 + $0x7c8] sm:$0xff]
    %v1207 = vld [vmem:[#allocation8 + $0x7d0] sm:$0xff]
    %v1208 = vld [vmem:[#allocation8 + $0x7d8] sm:$0xff]
    %v1209 = vld [vmem:[#allocation8 + $0x7e0] sm:$0xff]
    %v1210 = vld [vmem:[#allocation8 + $0x7e8] sm:$0xff]
    %v1211 = vld [vmem:[#allocation8 + $0x7f0] sm:$0xff]
    %v1212 = vld [vmem:[#allocation8 + $0x7f8] sm:$0xff]
    %v1213 = vld [vmem:[#allocation8 + $0x800] sm:$0xff]
    %v1214 = vld [vmem:[#allocation8 + $0x808] sm:$0xff]
    %v1215 = vld [vmem:[#allocation8 + $0x810] sm:$0xff]
    %v1216 = vld [vmem:[#allocation8 + $0x818] sm:$0xff]
    %v1217 = vld [vmem:[#allocation8 + $0x820] sm:$0xff]
    %v1218 = vld [vmem:[#allocation8 + $0x828] sm:$0xff]
    %v1219 = vld [vmem:[#allocation8 + $0x830] sm:$0xff]
    %v1220 = vld [vmem:[#allocation8 + $0x838] sm:$0xff]
    %v1221 = vld [vmem:[#allocation8 + $0x840] sm:$0xff]
    %v1222 = vld [vmem:[#allocation8 + $0x848] sm:$0xff]
    %v1223 = vld [vmem:[#allocation8 + $0x850] sm:$0xff]
    %v1224 = vld [vmem:[#allocation8 + $0x858] sm:$0xff]
    %v1225 = vld [vmem:[#allocation8 + $0x860] sm:$0xff]
    %v1226 = vld [vmem:[#allocation8 + $0x868] sm:$0xff]
    %v1227 = vld [vmem:[#allocation8 + $0x870] sm:$0xff]
    %v1228 = vld [vmem:[#allocation8 + $0x878] sm:$0xff]
    %v1229 = vld [vmem:[#allocation8 + $0x880] sm:$0xff]
    %v1230 = vld [vmem:[#allocation8 + $0x888] sm:$0xff]
    %v1231 = vld [vmem:[#allocation8 + $0x890] sm:$0xff]
    %v1232 = vld [vmem:[#allocation8 + $0x898] sm:$0xff]
    %v1233 = vld [vmem:[#allocation8 + $0x8a0] sm:$0xff]
    %v1234 = vld [vmem:[#allocation8 + $0x8a8] sm:$0xff]
    %v1235 = vld [vmem:[#allocation8 + $0x8b0] sm:$0xff]
    %v1236 = vld [vmem:[#allocation8 + $0x8b8] sm:$0xff]
    %v1237 = vld [vmem:[#allocation8 + $0x8c0] sm:$0xff]
    %v1238 = vld [vmem:[#allocation8 + $0x8c8] sm:$0xff]
    %v1239 = vld [vmem:[#allocation8 + $0x8d0] sm:$0xff]
    %v1240 = vld [vmem:[#allocation8 + $0x8d8] sm:$0xff]
    %v1241 = vld [vmem:[#allocation8 + $0x8e0] sm:$0xff]
    %v1242 = vld [vmem:[#allocation8 + $0x8e8] sm:$0xff]
    %v1243 = vld [vmem:[#allocation8 + $0x8f0] sm:$0xff]
    %v1244 = vld [vmem:[#allocation8 + $0x8f8] sm:$0xff]
    %v1245 = vld [vmem:[#allocation8 + $0x900] sm:$0xff]
    %v1246 = vld [vmem:[#allocation8 + $0x908] sm:$0xff]
    %v1247 = vld [vmem:[#allocation8 + $0x910] sm:$0xff]
    %v1248 = vld [vmem:[#allocation8 + $0x918] sm:$0xff]
    %v1249 = vld [vmem:[#allocation8 + $0x920] sm:$0xff]
    %v1250 = vld [vmem:[#allocation8 + $0x928] sm:$0xff]
    %v1251 = vld [vmem:[#allocation8 + $0x930] sm:$0xff]
    %v1252 = vld [vmem:[#allocation8 + $0x938] sm:$0xff]
    %v1253 = vld [vmem:[#allocation8 + $0x940] sm:$0xff]
    %v1254 = vld [vmem:[#allocation8 + $0x948] sm:$0xff]
    %v1255 = vld [vmem:[#allocation8 + $0x950] sm:$0xff]
    %v1256 = vld [vmem:[#allocation8 + $0x958] sm:$0xff]
    %v1257 = vld [vmem:[#allocation8 + $0x960] sm:$0xff]
    %v1258 = vld [vmem:[#allocation8 + $0x968] sm:$0xff]
    %v1259 = vld [vmem:[#allocation8 + $0x970] sm:$0xff]
    %v1260 = vld [vmem:[#allocation8 + $0x978] sm:$0xff]
    %v1261 = vld [vmem:[#allocation8 + $0x980] sm:$0xff]
    %v1262 = vld [vmem:[#allocation8 + $0x988] sm:$0xff]
    %v1263 = vld [vmem:[#allocation8 + $0x990] sm:$0xff]
    %v1264 = vld [vmem:[#allocation8 + $0x998] sm:$0xff]
    %v1265 = vld [vmem:[#allocation8 + $0x9a0] sm:$0xff]
    %v1266 = vld [vmem:[#allocation8 + $0x9a8] sm:$0xff]
    %v1267 = vld [vmem:[#allocation8 + $0x9b0] sm:$0xff]
    %v1268 = vld [vmem:[#allocation8 + $0x9b8] sm:$0xff]
    %v1269 = vld [vmem:[#allocation8 + $0x9c0] sm:$0xff]
    %v1270 = vld [vmem:[#allocation8 + $0x9c8] sm:$0xff]
    %v1271 = vld [vmem:[#allocation8 + $0x9d0] sm:$0xff]
    %v1272 = vld [vmem:[#allocation8 + $0x9d8] sm:$0xff]
    %v1273 = vld [vmem:[#allocation8 + $0x9e0] sm:$0xff]
    %v1274 = vld [vmem:[#allocation8 + $0x9e8] sm:$0xff]
    %v1275 = vld [vmem:[#allocation8 + $0x9f0] sm:$0xff]
    %v1276 = vld [vmem:[#allocation8 + $0x9f8] sm:$0xff]
    %v1277 = vld [vmem:[#allocation8 + $0xa00] sm:$0xff]
    %v1278 = vld [vmem:[#allocation8 + $0xa08] sm:$0xff]
    %v1279 = vld [vmem:[#allocation8 + $0xa10] sm:$0xff]
    %v1280 = vld [vmem:[#allocation8 + $0xa18] sm:$0xff]
    %v1281 = vld [vmem:[#allocation8 + $0xa20] sm:$0xff]
    %v1282 = vld [vmem:[#allocation8 + $0xa28] sm:$0xff]
    %v1283 = vld [vmem:[#allocation8 + $0xa30] sm:$0xff]
    %v1284 = vld [vmem:[#allocation8 + $0xa38] sm:$0xff]
    %v1285 = vld [vmem:[#allocation8 + $0xa40] sm:$0xff]
    %v1286 = vld [vmem:[#allocation8 + $0xa48] sm:$0xff]
    %v1287 = vld [vmem:[#allocation8 + $0xa50] sm:$0xff]
    %v1288 = vld [vmem:[#allocation8 + $0xa58] sm:$0xff]
    %v1289 = vld [vmem:[#allocation8 + $0xa60] sm:$0xff]
    %v1290 = vld [vmem:[#allocation8 + $0xa68] sm:$0xff]
    %v1291 = vld [vmem:[#allocation8 + $0xa70] sm:$0xff]
    %v1292 = vld [vmem:[#allocation8 + $0xa78] sm:$0xff]
    %v1293 = vld [vmem:[#allocation8 + $0xa80] sm:$0xff]
    %v1294 = vld [vmem:[#allocation8 + $0xa88] sm:$0xff]
    %v1295 = vld [vmem:[#allocation8 + $0xa90] sm:$0xff]
    %v1296 = vld [vmem:[#allocation8 + $0xa98] sm:$0xff]
    %v1297 = vld [vmem:[#allocation8 + $0xaa0] sm:$0xff]
    %v1298 = vld [vmem:[#allocation8 + $0xaa8] sm:$0xff]
    %v1299 = vld [vmem:[#allocation8 + $0xab0] sm:$0xff]
    %v1300 = vld [vmem:[#allocation8 + $0xab8] sm:$0xff]
    %v1301 = vld [vmem:[#allocation8 + $0xac0] sm:$0xff]
    %v1302 = vld [vmem:[#allocation8 + $0xac8] sm:$0xff]
    %v1303 = vld [vmem:[#allocation8 + $0xad0] sm:$0xff]
    %v1304 = vld [vmem:[#allocation8 + $0xad8] sm:$0xff]
    %v1305 = vld [vmem:[#allocation8 + $0xae0] sm:$0xff]
    %v1306 = vld [vmem:[#allocation8 + $0xae8] sm:$0xff]
    %v1307 = vld [vmem:[#allocation8 + $0xaf0] sm:$0xff]
    %v1308 = vld [vmem:[#allocation8 + $0xaf8] sm:$0xff]
    %v1309 = vld [vmem:[#allocation8 + $0xb00] sm:$0xff]
    %v1310 = vld [vmem:[#allocation8 + $0xb08] sm:$0xff]
    %v1311 = vld [vmem:[#allocation8 + $0xb10] sm:$0xff]
    %v1312 = vld [vmem:[#allocation8 + $0xb18] sm:$0xff]
    %v1313 = vld [vmem:[#allocation8 + $0xb20] sm:$0xff]
    %v1314 = vld [vmem:[#allocation8 + $0xb28] sm:$0xff]
    %v1315 = vld [vmem:[#allocation8 + $0xb30] sm:$0xff]
    %v1316 = vld [vmem:[#allocation8 + $0xb38] sm:$0xff]
    %v1317 = vld [vmem:[#allocation8 + $0xb40] sm:$0xff]
    %v1318 = vld [vmem:[#allocation8 + $0xb48] sm:$0xff]
    %v1319 = vld [vmem:[#allocation8 + $0xb50] sm:$0xff]
    %v1320 = vld [vmem:[#allocation8 + $0xb58] sm:$0xff]
    %v1321 = vld [vmem:[#allocation8 + $0xb60] sm:$0xff]
    %v1322 = vld [vmem:[#allocation8 + $0xb68] sm:$0xff]
    %v1323 = vld [vmem:[#allocation8 + $0xb70] sm:$0xff]
    %v1324 = vld [vmem:[#allocation8 + $0xb78] sm:$0xff]
    %v1325 = vld [vmem:[#allocation8 + $0xb80] sm:$0xff]
    %v1326 = vld [vmem:[#allocation8 + $0xb88] sm:$0xff]
    %v1327 = vld [vmem:[#allocation8 + $0xb90] sm:$0xff]
    %v1328 = vld [vmem:[#allocation8 + $0xb98] sm:$0xff]
    %v1329 = vld [vmem:[#allocation8 + $0xba0] sm:$0xff]
    %v1330 = vld [vmem:[#allocation8 + $0xba8] sm:$0xff]
    %v1331 = vld [vmem:[#allocation8 + $0xbb0] sm:$0xff]
    %v1332 = vld [vmem:[#allocation8 + $0xbb8] sm:$0xff]
    %v1333 = vld [vmem:[#allocation8 + $0xbc0] sm:$0xff]
    %v1334 = vld [vmem:[#allocation8 + $0xbc8] sm:$0xff]
    %v1335 = vld [vmem:[#allocation8 + $0xbd0] sm:$0xff]
    %v1336 = vld [vmem:[#allocation8 + $0xbd8] sm:$0xff]
    %v1337 = vld [vmem:[#allocation8 + $0xbe0] sm:$0xff]
    %v1338 = vld [vmem:[#allocation8 + $0xbe8] sm:$0xff]
    %v1339 = vld [vmem:[#allocation8 + $0xbf0] sm:$0xff]
    %v1340 = vld [vmem:[#allocation8 + $0xbf8] sm:$0xff]
    %v1341 = vld [vmem:[#allocation8 + $0xc00] sm:$0xff]
    %v1342 = vld [vmem:[#allocation8 + $0xc08] sm:$0xff]
    %v1343 = vld [vmem:[#allocation8 + $0xc10] sm:$0xff]
    %v1344 = vld [vmem:[#allocation8 + $0xc18] sm:$0xff]
    %v1345 = vld [vmem:[#allocation8 + $0xc20] sm:$0xff]
    %v1346 = vld [vmem:[#allocation8 + $0xc28] sm:$0xff]
    %v1347 = vld [vmem:[#allocation8 + $0xc30] sm:$0xff]
    %v1348 = vld [vmem:[#allocation8 + $0xc38] sm:$0xff]
    %v1349 = vld [vmem:[#allocation8 + $0xc40] sm:$0xff]
    %v1350 = vld [vmem:[#allocation8 + $0xc48] sm:$0xff]
    %v1351 = vld [vmem:[#allocation8 + $0xc50] sm:$0xff]
    %v1352 = vld [vmem:[#allocation8 + $0xc58] sm:$0xff]
    %v1353 = vld [vmem:[#allocation8 + $0xc60] sm:$0xff]
    %v1354 = vld [vmem:[#allocation8 + $0xc68] sm:$0xff]
    %v1355 = vld [vmem:[#allocation8 + $0xc70] sm:$0xff]
    %v1356 = vld [vmem:[#allocation8 + $0xc78] sm:$0xff]
    %v1357 = vld [vmem:[#allocation8 + $0xc80] sm:$0xff]
    %v1358 = vld [vmem:[#allocation8 + $0xc88] sm:$0xff]
    %v1359 = vld [vmem:[#allocation8 + $0xc90] sm:$0xff]
    %v1360 = vld [vmem:[#allocation8 + $0xc98] sm:$0xff]
    %v1361 = vld [vmem:[#allocation8 + $0xca0] sm:$0xff]
    %v1362 = vld [vmem:[#allocation8 + $0xca8] sm:$0xff]
    %v1363 = vld [vmem:[#allocation8 + $0xcb0] sm:$0xff]
    %v1364 = vld [vmem:[#allocation8 + $0xcb8] sm:$0xff]
    %v1365 = vld [vmem:[#allocation8 + $0xcc0] sm:$0xff]
    %v1366 = vld [vmem:[#allocation8 + $0xcc8] sm:$0xff]
    %v1367 = vld [vmem:[#allocation8 + $0xcd0] sm:$0xff]
    %v1368 = vld [vmem:[#allocation8 + $0xcd8] sm:$0xff]
    %v1369 = vld [vmem:[#allocation8 + $0xce0] sm:$0xff]
    %v1370 = vld [vmem:[#allocation8 + $0xce8] sm:$0xff]
    %v1371 = vld [vmem:[#allocation8 + $0xcf0] sm:$0xff]
    %v1372 = vld [vmem:[#allocation8 + $0xcf8] sm:$0xff]
    %v1373 = vld [vmem:[#allocation8 + $0xd00] sm:$0xff]
    %v1374 = vld [vmem:[#allocation8 + $0xd08] sm:$0xff]
    %v1375 = vld [vmem:[#allocation8 + $0xd10] sm:$0xff]
    %v1376 = vld [vmem:[#allocation8 + $0xd18] sm:$0xff]
    %v1377 = vld [vmem:[#allocation8 + $0xd20] sm:$0xff]
    %v1378 = vld [vmem:[#allocation8 + $0xd28] sm:$0xff]
    %v1379 = vld [vmem:[#allocation8 + $0xd30] sm:$0xff]
    %v1380 = vld [vmem:[#allocation8 + $0xd38] sm:$0xff]
    %v1381 = vld [vmem:[#allocation8 + $0xd40] sm:$0xff]
    %v1382 = vld [vmem:[#allocation8 + $0xd48] sm:$0xff]
    %v1383 = vld [vmem:[#allocation8 + $0xd50] sm:$0xff]
    %v1384 = vld [vmem:[#allocation8 + $0xd58] sm:$0xff]
    %v1385 = vld [vmem:[#allocation8 + $0xd60] sm:$0xff]
    %v1386 = vld [vmem:[#allocation8 + $0xd68] sm:$0xff]
    %v1387 = vld [vmem:[#allocation8 + $0xd70] sm:$0xff]
    %v1388 = vld [vmem:[#allocation8 + $0xd78] sm:$0xff]
    %v1389 = vld [vmem:[#allocation8 + $0xd80] sm:$0xff]
    %v1390 = vld [vmem:[#allocation8 + $0xd88] sm:$0xff]
    %v1391 = vld [vmem:[#allocation8 + $0xd90] sm:$0xff]
    %v1392 = vld [vmem:[#allocation8 + $0xd98] sm:$0xff]
    %v1393 = vld [vmem:[#allocation8 + $0xda0] sm:$0xff]
    %v1394 = vld [vmem:[#allocation8 + $0xda8] sm:$0xff]
    %v1395 = vld [vmem:[#allocation8 + $0xdb0] sm:$0xff]
    %v1396 = vld [vmem:[#allocation8 + $0xdb8] sm:$0xff]
    %v1397 = vld [vmem:[#allocation8 + $0xdc0] sm:$0xff]
    %v1398 = vld [vmem:[#allocation8 + $0xdc8] sm:$0xff]
    %v1399 = vld [vmem:[#allocation8 + $0xdd0] sm:$0xff]
    %v1400 = vld [vmem:[#allocation8 + $0xdd8] sm:$0xff]
    %v1401 = vld [vmem:[#allocation8 + $0xde0] sm:$0xff]
    %v1402 = vld [vmem:[#allocation8 + $0xde8] sm:$0xff]
    %v1403 = vld [vmem:[#allocation8 + $0xdf0] sm:$0xff]
    %v1404 = vld [vmem:[#allocation8 + $0xdf8] sm:$0xff]
    %v1405 = vld [vmem:[#allocation8 + $0xe00] sm:$0xff]
    %v1406 = vld [vmem:[#allocation8 + $0xe08] sm:$0xff]
    %v1407 = vld [vmem:[#allocation8 + $0xe10] sm:$0xff]
    %v1408 = vld [vmem:[#allocation8 + $0xe18] sm:$0xff]
    %v1409 = vld [vmem:[#allocation8 + $0xe20] sm:$0xff]
    %v1410 = vld [vmem:[#allocation8 + $0xe28] sm:$0xff]
    %v1411 = vld [vmem:[#allocation8 + $0xe30] sm:$0xff]
    %v1412 = vld [vmem:[#allocation8 + $0xe38] sm:$0xff]
    %v1413 = vld [vmem:[#allocation8 + $0xe40] sm:$0xff]
    %v1414 = vld [vmem:[#allocation8 + $0xe48] sm:$0xff]
    %v1415 = vld [vmem:[#allocation8 + $0xe50] sm:$0xff]
    %v1416 = vld [vmem:[#allocation8 + $0xe58] sm:$0xff]
    %v1417 = vld [vmem:[#allocation8 + $0xe60] sm:$0xff]
    %v1418 = vld [vmem:[#allocation8 + $0xe68] sm:$0xff]
    %v1419 = vld [vmem:[#allocation8 + $0xe70] sm:$0xff]
    %v1420 = vld [vmem:[#allocation8 + $0xe78] sm:$0xff]
    %v1421 = vld [vmem:[#allocation8 + $0xe80] sm:$0xff]
    %v1422 = vld [vmem:[#allocation8 + $0xe88] sm:$0xff]
    %v1423 = vld [vmem:[#allocation8 + $0xe90] sm:$0xff]
    %v1424 = vld [vmem:[#allocation8 + $0xe98] sm:$0xff]
    %v1425 = vld [vmem:[#allocation8 + $0xea0] sm:$0xff]
    %v1426 = vld [vmem:[#allocation8 + $0xea8] sm:$0xff]
    %v1427 = vld [vmem:[#allocation8 + $0xeb0] sm:$0xff]
    %v1428 = vld [vmem:[#allocation8 + $0xeb8] sm:$0xff]
    %v1429 = vld [vmem:[#allocation8 + $0xec0] sm:$0xff]
    %v1430 = vld [vmem:[#allocation8 + $0xec8] sm:$0xff]
    %v1431 = vld [vmem:[#allocation8 + $0xed0] sm:$0xff]
    %v1432 = vld [vmem:[#allocation8 + $0xed8] sm:$0xff]
    %v1433 = vld [vmem:[#allocation8 + $0xee0] sm:$0xff]
    %v1434 = vld [vmem:[#allocation8 + $0xee8] sm:$0xff]
    %v1435 = vld [vmem:[#allocation8 + $0xef0] sm:$0xff]
    %v1436 = vld [vmem:[#allocation8 + $0xef8] sm:$0xff]
    %v1437 = vld [vmem:[#allocation8 + $0xf00] sm:$0xff]
    %v1438 = vld [vmem:[#allocation8 + $0xf08] sm:$0xff]
    %v1439 = vld [vmem:[#allocation8 + $0xf10] sm:$0xff]
    %v1440 = vld [vmem:[#allocation8 + $0xf18] sm:$0xff]
    %v1441 = vld [vmem:[#allocation8 + $0xf20] sm:$0xff]
    %v1442 = vld [vmem:[#allocation8 + $0xf28] sm:$0xff]
    %v1443 = vld [vmem:[#allocation8 + $0xf30] sm:$0xff]
    %v1444 = vld [vmem:[#allocation8 + $0xf38] sm:$0xff]
    %v1445 = vld [vmem:[#allocation8 + $0xf40] sm:$0xff]
    %v1446 = vld [vmem:[#allocation8 + $0xf48] sm:$0xff]
    %v1447 = vld [vmem:[#allocation8 + $0xf50] sm:$0xff]
    %v1448 = vld [vmem:[#allocation8 + $0xf58] sm:$0xff]
    %v1449 = vld [vmem:[#allocation8 + $0xf60] sm:$0xff]
    %v1450 = vld [vmem:[#allocation8 + $0xf68] sm:$0xff]
    %v1451 = vld [vmem:[#allocation8 + $0xf70] sm:$0xff]
    %v1452 = vld [vmem:[#allocation8 + $0xf78] sm:$0xff]
    %v1453 = vld [vmem:[#allocation8 + $0xf80] sm:$0xff]
    %v1454 = vld [vmem:[#allocation8 + $0xf88] sm:$0xff]
    %v1455 = vld [vmem:[#allocation8 + $0xf90] sm:$0xff]
    %v1456 = vld [vmem:[#allocation8 + $0xf98] sm:$0xff]
    %v1457 = vld [vmem:[#allocation8 + $0xfa0] sm:$0xff]
    %v1458 = vld [vmem:[#allocation8 + $0xfa8] sm:$0xff]
    %v1459 = vld [vmem:[#allocation8 + $0xfb0] sm:$0xff]
    %v1460 = vld [vmem:[#allocation8 + $0xfb8] sm:$0xff]
    %v1461 = vld [vmem:[#allocation8 + $0xfc0] sm:$0xff]
    %v1462 = vld [vmem:[#allocation8 + $0xfc8] sm:$0xff]
    %v1463 = vld [vmem:[#allocation8 + $0xfd0] sm:$0xff]
    %v1464 = vld [vmem:[#allocation8 + $0xfd8] sm:$0xff]
    %v1465 = vld [vmem:[#allocation8 + $0xfe0] sm:$0xff]
    %v1466 = vld [vmem:[#allocation8 + $0xfe8] sm:$0xff]
    %v1467 = vld [vmem:[#allocation8 + $0xff0] sm:$0xff]
    %v1468 = vld [vmem:[#allocation8 + $0xff8] sm:$0xff]
    %v1469 = vld [vmem:[#allocation8 + $0x1000] sm:$0xff]
    %v1470 = vld [vmem:[#allocation8 + $0x1008] sm:$0xff]
    %v1471 = vld [vmem:[#allocation8 + $0x1010] sm:$0xff]
    %v1472 = vld [vmem:[#allocation8 + $0x1018] sm:$0xff]
    %v1473 = vld [vmem:[#allocation8 + $0x1020] sm:$0xff]
    %v1474 = vld [vmem:[#allocation8 + $0x1028] sm:$0xff]
    %v1475 = vld [vmem:[#allocation8 + $0x1030] sm:$0xff]
    %v1476 = vld [vmem:[#allocation8 + $0x1038] sm:$0xff]
    %v1477 = vld [vmem:[#allocation8 + $0x1040] sm:$0xff]
    %v1478 = vld [vmem:[#allocation8 + $0x1048] sm:$0xff]
    %v1479 = vld [vmem:[#allocation8 + $0x1050] sm:$0xff]
    %v1480 = vld [vmem:[#allocation8 + $0x1058] sm:$0xff]
    %v1481 = vld [vmem:[#allocation8 + $0x1060] sm:$0xff]
    %v1482 = vld [vmem:[#allocation8 + $0x1068] sm:$0xff]
    %v1483 = vld [vmem:[#allocation8 + $0x1070] sm:$0xff]
    %v1484 = vld [vmem:[#allocation8 + $0x1078] sm:$0xff]
    %v1485 = vld [vmem:[#allocation8 + $0x1080] sm:$0xff]
    %v1486 = vld [vmem:[#allocation8 + $0x1088] sm:$0xff]
    %v1487 = vld [vmem:[#allocation8 + $0x1090] sm:$0xff]
    %v1488 = vld [vmem:[#allocation8 + $0x1098] sm:$0xff]
    %v1489 = vld [vmem:[#allocation8 + $0x10a0] sm:$0xff]
    %v1490 = vld [vmem:[#allocation8 + $0x10a8] sm:$0xff]
    %v1491 = vld [vmem:[#allocation8 + $0x10b0] sm:$0xff]
    %v1492 = vld [vmem:[#allocation8 + $0x10b8] sm:$0xff]
    %v1493 = vld [vmem:[#allocation8 + $0x10c0] sm:$0xff]
    %v1494 = vld [vmem:[#allocation8 + $0x10c8] sm:$0xff]
    %v1495 = vld [vmem:[#allocation8 + $0x10d0] sm:$0xff]
    %v1496 = vld [vmem:[#allocation8 + $0x10d8] sm:$0xff]
    %v1497 = vld [vmem:[#allocation8 + $0x10e0] sm:$0xff]
    %v1498 = vld [vmem:[#allocation8 + $0x10e8] sm:$0xff]
    %v1499 = vld [vmem:[#allocation8 + $0x10f0] sm:$0xff]
    %v1500 = vld [vmem:[#allocation8 + $0x10f8] sm:$0xff]
    %v1501 = vld [vmem:[#allocation8 + $0x1100] sm:$0xff]
    %v1502 = vld [vmem:[#allocation8 + $0x1108] sm:$0xff]
    %v1503 = vld [vmem:[#allocation8 + $0x1110] sm:$0xff]
    %v1504 = vld [vmem:[#allocation8 + $0x1118] sm:$0xff]
    %v1505 = vld [vmem:[#allocation8 + $0x1120] sm:$0xff]
    %v1506 = vld [vmem:[#allocation8 + $0x1128] sm:$0xff]
    %v1507 = vld [vmem:[#allocation8 + $0x1130] sm:$0xff]
    %v1508 = vld [vmem:[#allocation8 + $0x1138] sm:$0xff]
    %v1509 = vld [vmem:[#allocation8 + $0x1140] sm:$0xff]
    %v1510 = vld [vmem:[#allocation8 + $0x1148] sm:$0xff]
    %v1511 = vld [vmem:[#allocation8 + $0x1150] sm:$0xff]
    %v1512 = vld [vmem:[#allocation8 + $0x1158] sm:$0xff]
    %v1513 = vld [vmem:[#allocation8 + $0x1160] sm:$0xff]
    %v1514 = vld [vmem:[#allocation8 + $0x1168] sm:$0xff]
    %v1515 = vld [vmem:[#allocation8 + $0x1170] sm:$0xff]
    %v1516 = vld [vmem:[#allocation8 + $0x1178] sm:$0xff]
    %v1517 = vld [vmem:[#allocation8 + $0x1180] sm:$0xff]
    %v1518 = vld [vmem:[#allocation8 + $0x1188] sm:$0xff]
    %v1519 = vld [vmem:[#allocation8 + $0x1190] sm:$0xff]
    %v1520 = vld [vmem:[#allocation8 + $0x1198] sm:$0xff]
    %v1521 = vld [vmem:[#allocation8 + $0x11a0] sm:$0xff]
    %v1522 = vld [vmem:[#allocation8 + $0x11a8] sm:$0xff]
    %v1523 = vld [vmem:[#allocation8 + $0x11b0] sm:$0xff]
    %v1524 = vld [vmem:[#allocation8 + $0x11b8] sm:$0xff]
    %v1525 = vld [vmem:[#allocation8 + $0x11c0] sm:$0xff]
    %v1526 = vld [vmem:[#allocation8 + $0x11c8] sm:$0xff]
    %v1527 = vld [vmem:[#allocation8 + $0x11d0] sm:$0xff]
    %v1528 = vld [vmem:[#allocation8 + $0x11d8] sm:$0xff]
    %v1529 = vld [vmem:[#allocation8 + $0x11e0] sm:$0xff]
    %v1530 = vld [vmem:[#allocation8 + $0x11e8] sm:$0xff]
    %v1531 = vld [vmem:[#allocation8 + $0x11f0] sm:$0xff]
    %v1532 = vld [vmem:[#allocation8 + $0x11f8] sm:$0xff]
    %v1533 = vld [vmem:[#allocation8 + $0x1200] sm:$0xff]
    %v1534 = vld [vmem:[#allocation8 + $0x1208] sm:$0xff]
    %v1535 = vld [vmem:[#allocation8 + $0x1210] sm:$0xff]
    %v1536 = vld [vmem:[#allocation8 + $0x1218] sm:$0xff]
    %v1537 = vld [vmem:[#allocation8 + $0x1220] sm:$0xff]
    %v1538 = vld [vmem:[#allocation8 + $0x1228] sm:$0xff]
    %v1539 = vld [vmem:[#allocation8 + $0x1230] sm:$0xff]
    %v1540 = vld [vmem:[#allocation8 + $0x1238] sm:$0xff]
    %v1541 = vld [vmem:[#allocation8 + $0x1240] sm:$0xff]
    %v1542 = vld [vmem:[#allocation8 + $0x1248] sm:$0xff]
    %v1543 = vld [vmem:[#allocation8 + $0x1250] sm:$0xff]
    %v1544 = vld [vmem:[#allocation8 + $0x1258] sm:$0xff]
    %v1545 = vld [vmem:[#allocation8 + $0x1260] sm:$0xff]
    %v1546 = vld [vmem:[#allocation8 + $0x1268] sm:$0xff]
    %v1547 = vld [vmem:[#allocation8 + $0x1270] sm:$0xff]
    %v1548 = vld [vmem:[#allocation8 + $0x1278] sm:$0xff]
    %v1549 = vld [vmem:[#allocation8 + $0x1280] sm:$0xff]
    %v1550 = vld [vmem:[#allocation8 + $0x1288] sm:$0xff]
    %v1551 = vld [vmem:[#allocation8 + $0x1290] sm:$0xff]
    %v1552 = vld [vmem:[#allocation8 + $0x1298] sm:$0xff]
    %v1553 = vld [vmem:[#allocation8 + $0x12a0] sm:$0xff]
    %v1554 = vld [vmem:[#allocation8 + $0x12a8] sm:$0xff]
    %v1555 = vld [vmem:[#allocation8 + $0x12b0] sm:$0xff]
    %v1556 = vld [vmem:[#allocation8 + $0x12b8] sm:$0xff]
    %v1557 = vld [vmem:[#allocation8 + $0x12c0] sm:$0xff]
    %v1558 = vld [vmem:[#allocation8 + $0x12c8] sm:$0xff]
    %v1559 = vld [vmem:[#allocation8 + $0x12d0] sm:$0xff]
    %v1560 = vld [vmem:[#allocation8 + $0x12d8] sm:$0xff]
    %v1561 = vld [vmem:[#allocation8 + $0x12e0] sm:$0xff]
    %v1562 = vld [vmem:[#allocation8 + $0x12e8] sm:$0xff]
    %v1563 = vld [vmem:[#allocation8 + $0x12f0] sm:$0xff]
    %v1564 = vld [vmem:[#allocation8 + $0x12f8] sm:$0xff]
    %v1565 = vld [vmem:[#allocation8 + $0x1300] sm:$0xff]
    %v1566 = vld [vmem:[#allocation8 + $0x1308] sm:$0xff]
    %v1567 = vld [vmem:[#allocation8 + $0x1310] sm:$0xff]
    %v1568 = vld [vmem:[#allocation8 + $0x1318] sm:$0xff]
    %v1569 = vld [vmem:[#allocation8 + $0x1320] sm:$0xff]
    %v1570 = vld [vmem:[#allocation8 + $0x1328] sm:$0xff]
    %v1571 = vld [vmem:[#allocation8 + $0x1330] sm:$0xff]
    %v1572 = vld [vmem:[#allocation8 + $0x1338] sm:$0xff]
    %v1573 = vld [vmem:[#allocation8 + $0x1340] sm:$0xff]
    %v1574 = vld [vmem:[#allocation8 + $0x1348] sm:$0xff]
    %v1575 = vld [vmem:[#allocation8 + $0x1350] sm:$0xff]
    %v1576 = vld [vmem:[#allocation8 + $0x1358] sm:$0xff]
    %v1577 = vld [vmem:[#allocation8 + $0x1360] sm:$0xff]
    %v1578 = vld [vmem:[#allocation8 + $0x1368] sm:$0xff]
    %v1579 = vld [vmem:[#allocation8 + $0x1370] sm:$0xff]
    %v1580 = vld [vmem:[#allocation8 + $0x1378] sm:$0xff]
    %v1581 = vld [vmem:[#allocation8 + $0x1380] sm:$0xff]
    %v1582 = vld [vmem:[#allocation8 + $0x1388] sm:$0xff]
    %v1583 = vld [vmem:[#allocation8 + $0x1390] sm:$0xff]
    %v1584 = vld [vmem:[#allocation8 + $0x1398] sm:$0xff]
    %v1585 = vld [vmem:[#allocation8 + $0x13a0] sm:$0xff]
    %v1586 = vld [vmem:[#allocation8 + $0x13a8] sm:$0xff]
    %v1587 = vld [vmem:[#allocation8 + $0x13b0] sm:$0xff]
    %v1588 = vld [vmem:[#allocation8 + $0x13b8] sm:$0xff]
    %v1589 = vld [vmem:[#allocation8 + $0x13c0] sm:$0xff]
    %v1590 = vld [vmem:[#allocation8 + $0x13c8] sm:$0xff]
    %v1591 = vld [vmem:[#allocation8 + $0x13d0] sm:$0xff]
    %v1592 = vld [vmem:[#allocation8 + $0x13d8] sm:$0xff]
    %v1593 = vld [vmem:[#allocation8 + $0x13e0] sm:$0xff]
    %v1594 = vld [vmem:[#allocation8 + $0x13e8] sm:$0xff]
    %v1595 = vld [vmem:[#allocation8 + $0x13f0] sm:$0xff]
    %v1596 = vld [vmem:[#allocation8 + $0x13f8] sm:$0xff]
    %v1597 = vld [vmem:[#allocation10] sm:$0xff]
    %v1598 = vpack.c.bf16 %v947, %v947
    %v1599 = vpack.c.bf16 %v948, %v948
    %v1600 = vpack.c.bf16 %v949, %v949
    %v1601 = vpack.c.bf16 %v950, %v950
    %v1602 = vpack.c.bf16 %v951, %v951
    %v1603 = vpack.c.bf16 %v952, %v952
    %v1604 = vpack.c.bf16 %v953, %v953
    %v1605 = vpack.c.bf16 %v954, %v954
    %v1606 = vpack.c.bf16 %v955, %v955
    %v1607 = vpack.c.bf16 %v956, %v956
    %v1609 = vlaneseq
    %v1610 = vshrl.u32 %v1609, 7
    %v1611 = vsub.s32 0, %v1610
    %v1612 = vrot.slane %v1597, %v1611
    %v1613 = vlaneseq
    %v1614 = vshrl.u32 %v1613, 7
    %v1615 = vsub.s32 1, %v1614
    %v1616 = vrot.slane %v1597, %v1615
    %v1617 = vlaneseq
    %v1618 = vshrl.u32 %v1617, 7
    %v1619 = vsub.s32 2, %v1618
    %v1620 = vrot.slane %v1597, %v1619
    %v1621 = vlaneseq
    %v1622 = vshrl.u32 %v1621, 7
    %v1623 = vsub.s32 3, %v1622
    %v1624 = vrot.slane %v1597, %v1623
    %v1625 = vlaneseq
    %v1626 = vshrl.u32 %v1625, 7
    %v1627 = vsub.s32 4, %v1626
    %v1628 = vrot.slane %v1597, %v1627
    %v1629 = vlaneseq
    %v1630 = vshrl.u32 %v1629, 7
    %v1631 = vsub.s32 5, %v1630
    %v1632 = vrot.slane %v1597, %v1631
    %v1633 = vlaneseq
    %v1634 = vshrl.u32 %v1633, 7
    %v1635 = vsub.s32 6, %v1634
    %v1636 = vrot.slane %v1597, %v1635
    %v1637 = vlaneseq
    %v1638 = vshrl.u32 %v1637, 7
    %v1639 = vsub.s32 7, %v1638
    %v1640 = vrot.slane %v1597, %v1639
    %v2289 = vunpack.c.l.b16 %v957
    %v2290 = vunpack.c.h.b16 %v957
    %v2291 = vunpack.c.l.b16 %v958
    %v2292 = vunpack.c.h.b16 %v958
    %v2293 = vunpack.c.l.b16 %v959
    %v2294 = vunpack.c.h.b16 %v959
    %v2295 = vunpack.c.l.b16 %v960
    %v2296 = vunpack.c.h.b16 %v960
    %v2297 = vunpack.c.l.b16 %v961
    %v2298 = vunpack.c.h.b16 %v961
    %v2299 = vunpack.c.l.b16 %v962
    %v2300 = vunpack.c.h.b16 %v962
    %v2301 = vunpack.c.l.b16 %v963
    %v2302 = vunpack.c.h.b16 %v963
    %v2303 = vunpack.c.l.b16 %v964
    %v2304 = vunpack.c.h.b16 %v964
    %v2305 = vunpack.c.l.b16 %v965
    %v2306 = vunpack.c.h.b16 %v965
    %v2307 = vunpack.c.l.b16 %v966
    %v2308 = vunpack.c.h.b16 %v966
    %v2309 = vunpack.c.l.b16 %v967
    %v2310 = vunpack.c.h.b16 %v967
    %v2311 = vunpack.c.l.b16 %v968
    %v2312 = vunpack.c.h.b16 %v968
    %v2313 = vunpack.c.l.b16 %v969
    %v2314 = vunpack.c.h.b16 %v969
    %v2315 = vunpack.c.l.b16 %v970
    %v2316 = vunpack.c.h.b16 %v970
    %v2317 = vunpack.c.l.b16 %v971
    %v2318 = vunpack.c.h.b16 %v971
    %v2319 = vunpack.c.l.b16 %v972
    %v2320 = vunpack.c.h.b16 %v972
    %v2321 = vunpack.c.l.b16 %v973
    %v2322 = vunpack.c.h.b16 %v973
    %v2323 = vunpack.c.l.b16 %v974
    %v2324 = vunpack.c.h.b16 %v974
    %v2325 = vunpack.c.l.b16 %v975
    %v2326 = vunpack.c.h.b16 %v975
    %v2327 = vunpack.c.l.b16 %v976
    %v2328 = vunpack.c.h.b16 %v976
    %v2329 = vunpack.c.l.b16 %v977
    %v2330 = vunpack.c.h.b16 %v977
    %v2331 = vunpack.c.l.b16 %v978
    %v2332 = vunpack.c.h.b16 %v978
    %v2333 = vunpack.c.l.b16 %v979
    %v2334 = vunpack.c.h.b16 %v979
    %v2335 = vunpack.c.l.b16 %v980
    %v2336 = vunpack.c.h.b16 %v980
    %v2337 = vunpack.c.l.b16 %v981
    %v2338 = vunpack.c.h.b16 %v981
    %v2339 = vunpack.c.l.b16 %v982
    %v2340 = vunpack.c.h.b16 %v982
    %v2341 = vunpack.c.l.b16 %v983
    %v2342 = vunpack.c.h.b16 %v983
    %v2343 = vunpack.c.l.b16 %v984
    %v2344 = vunpack.c.h.b16 %v984
    %v2345 = vunpack.c.l.b16 %v985
    %v2346 = vunpack.c.h.b16 %v985
    %v2347 = vunpack.c.l.b16 %v986
    %v2348 = vunpack.c.h.b16 %v986
    %v2349 = vunpack.c.l.b16 %v987
    %v2350 = vunpack.c.h.b16 %v987
    %v2351 = vunpack.c.l.b16 %v988
    %v2352 = vunpack.c.h.b16 %v988
    %v2353 = vunpack.c.l.b16 %v989
    %v2354 = vunpack.c.h.b16 %v989
    %v2355 = vunpack.c.l.b16 %v990
    %v2356 = vunpack.c.h.b16 %v990
    %v2357 = vunpack.c.l.b16 %v991
    %v2358 = vunpack.c.h.b16 %v991
    %v2359 = vunpack.c.l.b16 %v992
    %v2360 = vunpack.c.h.b16 %v992
    %v2361 = vunpack.c.l.b16 %v993
    %v2362 = vunpack.c.h.b16 %v993
    %v2363 = vunpack.c.l.b16 %v994
    %v2364 = vunpack.c.h.b16 %v994
    %v2365 = vunpack.c.l.b16 %v995
    %v2366 = vunpack.c.h.b16 %v995
    %v2367 = vunpack.c.l.b16 %v996
    %v2368 = vunpack.c.h.b16 %v996
    %v2369 = vunpack.c.l.b16 %v997
    %v2370 = vunpack.c.h.b16 %v997
    %v2371 = vunpack.c.l.b16 %v998
    %v2372 = vunpack.c.h.b16 %v998
    %v2373 = vunpack.c.l.b16 %v999
    %v2374 = vunpack.c.h.b16 %v999
    %v2375 = vunpack.c.l.b16 %v1000
    %v2376 = vunpack.c.h.b16 %v1000
    %v2377 = vunpack.c.l.b16 %v1001
    %v2378 = vunpack.c.h.b16 %v1001
    %v2379 = vunpack.c.l.b16 %v1002
    %v2380 = vunpack.c.h.b16 %v1002
    %v2381 = vunpack.c.l.b16 %v1003
    %v2382 = vunpack.c.h.b16 %v1003
    %v2383 = vunpack.c.l.b16 %v1004
    %v2384 = vunpack.c.h.b16 %v1004
    %v2385 = vunpack.c.l.b16 %v1005
    %v2386 = vunpack.c.h.b16 %v1005
    %v2387 = vunpack.c.l.b16 %v1006
    %v2388 = vunpack.c.h.b16 %v1006
    %v2389 = vunpack.c.l.b16 %v1007
    %v2390 = vunpack.c.h.b16 %v1007
    %v2391 = vunpack.c.l.b16 %v1008
    %v2392 = vunpack.c.h.b16 %v1008
    %v2393 = vunpack.c.l.b16 %v1009
    %v2394 = vunpack.c.h.b16 %v1009
    %v2395 = vunpack.c.l.b16 %v1010
    %v2396 = vunpack.c.h.b16 %v1010
    %v2397 = vunpack.c.l.b16 %v1011
    %v2398 = vunpack.c.h.b16 %v1011
    %v2399 = vunpack.c.l.b16 %v1012
    %v2400 = vunpack.c.h.b16 %v1012
    %v2401 = vunpack.c.l.b16 %v1013
    %v2402 = vunpack.c.h.b16 %v1013
    %v2403 = vunpack.c.l.b16 %v1014
    %v2404 = vunpack.c.h.b16 %v1014
    %v2405 = vunpack.c.l.b16 %v1015
    %v2406 = vunpack.c.h.b16 %v1015
    %v2407 = vunpack.c.l.b16 %v1016
    %v2408 = vunpack.c.h.b16 %v1016
    %v2409 = vunpack.c.l.b16 %v1017
    %v2410 = vunpack.c.h.b16 %v1017
    %v2411 = vunpack.c.l.b16 %v1018
    %v2412 = vunpack.c.h.b16 %v1018
    %v2413 = vunpack.c.l.b16 %v1019
    %v2414 = vunpack.c.h.b16 %v1019
    %v2415 = vunpack.c.l.b16 %v1020
    %v2416 = vunpack.c.h.b16 %v1020
    %v2417 = vunpack.c.l.b16 %v1021
    %v2418 = vunpack.c.h.b16 %v1021
    %v2419 = vunpack.c.l.b16 %v1022
    %v2420 = vunpack.c.h.b16 %v1022
    %v2421 = vunpack.c.l.b16 %v1023
    %v2422 = vunpack.c.h.b16 %v1023
    %v2423 = vunpack.c.l.b16 %v1024
    %v2424 = vunpack.c.h.b16 %v1024
    %v2425 = vunpack.c.l.b16 %v1025
    %v2426 = vunpack.c.h.b16 %v1025
    %v2427 = vunpack.c.l.b16 %v1026
    %v2428 = vunpack.c.h.b16 %v1026
    %v2429 = vunpack.c.l.b16 %v1027
    %v2430 = vunpack.c.h.b16 %v1027
    %v2431 = vunpack.c.l.b16 %v1028
    %v2432 = vunpack.c.h.b16 %v1028
    %v2433 = vunpack.c.l.b16 %v1029
    %v2434 = vunpack.c.h.b16 %v1029
    %v2435 = vunpack.c.l.b16 %v1030
    %v2436 = vunpack.c.h.b16 %v1030
    %v2437 = vunpack.c.l.b16 %v1031
    %v2438 = vunpack.c.h.b16 %v1031
    %v2439 = vunpack.c.l.b16 %v1032
    %v2440 = vunpack.c.h.b16 %v1032
    %v2441 = vunpack.c.l.b16 %v1033
    %v2442 = vunpack.c.h.b16 %v1033
    %v2443 = vunpack.c.l.b16 %v1034
    %v2444 = vunpack.c.h.b16 %v1034
    %v2445 = vunpack.c.l.b16 %v1035
    %v2446 = vunpack.c.h.b16 %v1035
    %v2447 = vunpack.c.l.b16 %v1036
    %v2448 = vunpack.c.h.b16 %v1036
    %v2449 = vunpack.c.l.b16 %v1037
    %v2450 = vunpack.c.h.b16 %v1037
    %v2451 = vunpack.c.l.b16 %v1038
    %v2452 = vunpack.c.h.b16 %v1038
    %v2453 = vunpack.c.l.b16 %v1039
    %v2454 = vunpack.c.h.b16 %v1039
    %v2455 = vunpack.c.l.b16 %v1040
    %v2456 = vunpack.c.h.b16 %v1040
    %v2457 = vunpack.c.l.b16 %v1041
    %v2458 = vunpack.c.h.b16 %v1041
    %v2459 = vunpack.c.l.b16 %v1042
    %v2460 = vunpack.c.h.b16 %v1042
    %v2461 = vunpack.c.l.b16 %v1043
    %v2462 = vunpack.c.h.b16 %v1043
    %v2463 = vunpack.c.l.b16 %v1044
    %v2464 = vunpack.c.h.b16 %v1044
    %v2465 = vunpack.c.l.b16 %v1045
    %v2466 = vunpack.c.h.b16 %v1045
    %v2467 = vunpack.c.l.b16 %v1046
    %v2468 = vunpack.c.h.b16 %v1046
    %v2469 = vunpack.c.l.b16 %v1047
    %v2470 = vunpack.c.h.b16 %v1047
    %v2471 = vunpack.c.l.b16 %v1048
    %v2472 = vunpack.c.h.b16 %v1048
    %v2473 = vunpack.c.l.b16 %v1049
    %v2474 = vunpack.c.h.b16 %v1049
    %v2475 = vunpack.c.l.b16 %v1050
    %v2476 = vunpack.c.h.b16 %v1050
    %v2477 = vunpack.c.l.b16 %v1051
    %v2478 = vunpack.c.h.b16 %v1051
    %v2479 = vunpack.c.l.b16 %v1052
    %v2480 = vunpack.c.h.b16 %v1052
    %v2481 = vunpack.c.l.b16 %v1053
    %v2482 = vunpack.c.h.b16 %v1053
    %v2483 = vunpack.c.l.b16 %v1054
    %v2484 = vunpack.c.h.b16 %v1054
    %v2485 = vunpack.c.l.b16 %v1055
    %v2486 = vunpack.c.h.b16 %v1055
    %v2487 = vunpack.c.l.b16 %v1056
    %v2488 = vunpack.c.h.b16 %v1056
    %v2489 = vunpack.c.l.b16 %v1057
    %v2490 = vunpack.c.h.b16 %v1057
    %v2491 = vunpack.c.l.b16 %v1058
    %v2492 = vunpack.c.h.b16 %v1058
    %v2493 = vunpack.c.l.b16 %v1059
    %v2494 = vunpack.c.h.b16 %v1059
    %v2495 = vunpack.c.l.b16 %v1060
    %v2496 = vunpack.c.h.b16 %v1060
    %v2497 = vunpack.c.l.b16 %v1061
    %v2498 = vunpack.c.h.b16 %v1061
    %v2499 = vunpack.c.l.b16 %v1062
    %v2500 = vunpack.c.h.b16 %v1062
    %v2501 = vunpack.c.l.b16 %v1063
    %v2502 = vunpack.c.h.b16 %v1063
    %v2503 = vunpack.c.l.b16 %v1064
    %v2504 = vunpack.c.h.b16 %v1064
    %v2505 = vunpack.c.l.b16 %v1065
    %v2506 = vunpack.c.h.b16 %v1065
    %v2507 = vunpack.c.l.b16 %v1066
    %v2508 = vunpack.c.h.b16 %v1066
    %v2509 = vunpack.c.l.b16 %v1067
    %v2510 = vunpack.c.h.b16 %v1067
    %v2511 = vunpack.c.l.b16 %v1068
    %v2512 = vunpack.c.h.b16 %v1068
    %v2513 = vunpack.c.l.b16 %v1069
    %v2514 = vunpack.c.h.b16 %v1069
    %v2515 = vunpack.c.l.b16 %v1070
    %v2516 = vunpack.c.h.b16 %v1070
    %v2517 = vunpack.c.l.b16 %v1071
    %v2518 = vunpack.c.h.b16 %v1071
    %v2519 = vunpack.c.l.b16 %v1072
    %v2520 = vunpack.c.h.b16 %v1072
    %v2521 = vunpack.c.l.b16 %v1073
    %v2522 = vunpack.c.h.b16 %v1073
    %v2523 = vunpack.c.l.b16 %v1074
    %v2524 = vunpack.c.h.b16 %v1074
    %v2525 = vunpack.c.l.b16 %v1075
    %v2526 = vunpack.c.h.b16 %v1075
    %v2527 = vunpack.c.l.b16 %v1076
    %v2528 = vunpack.c.h.b16 %v1076
    %v2529 = vunpack.c.l.b16 %v1077
    %v2530 = vunpack.c.h.b16 %v1077
    %v2531 = vunpack.c.l.b16 %v1078
    %v2532 = vunpack.c.h.b16 %v1078
    %v2533 = vunpack.c.l.b16 %v1079
    %v2534 = vunpack.c.h.b16 %v1079
    %v2535 = vunpack.c.l.b16 %v1080
    %v2536 = vunpack.c.h.b16 %v1080
    %v2537 = vunpack.c.l.b16 %v1081
    %v2538 = vunpack.c.h.b16 %v1081
    %v2539 = vunpack.c.l.b16 %v1082
    %v2540 = vunpack.c.h.b16 %v1082
    %v2541 = vunpack.c.l.b16 %v1083
    %v2542 = vunpack.c.h.b16 %v1083
    %v2543 = vunpack.c.l.b16 %v1084
    %v2544 = vunpack.c.h.b16 %v1084
    %v2545 = vunpack.c.l.b16 %v1085
    %v2546 = vunpack.c.h.b16 %v1085
    %v2547 = vunpack.c.l.b16 %v1086
    %v2548 = vunpack.c.h.b16 %v1086
    %v2549 = vunpack.c.l.b16 %v1087
    %v2550 = vunpack.c.h.b16 %v1087
    %v2551 = vunpack.c.l.b16 %v1088
    %v2552 = vunpack.c.h.b16 %v1088
    %v2553 = vunpack.c.l.b16 %v1089
    %v2554 = vunpack.c.h.b16 %v1089
    %v2555 = vunpack.c.l.b16 %v1090
    %v2556 = vunpack.c.h.b16 %v1090
    %v2557 = vunpack.c.l.b16 %v1091
    %v2558 = vunpack.c.h.b16 %v1091
    %v2559 = vunpack.c.l.b16 %v1092
    %v2560 = vunpack.c.h.b16 %v1092
    %v2561 = vunpack.c.l.b16 %v1093
    %v2562 = vunpack.c.h.b16 %v1093
    %v2563 = vunpack.c.l.b16 %v1094
    %v2564 = vunpack.c.h.b16 %v1094
    %v2565 = vunpack.c.l.b16 %v1095
    %v2566 = vunpack.c.h.b16 %v1095
    %v2567 = vunpack.c.l.b16 %v1096
    %v2568 = vunpack.c.h.b16 %v1096
    %v2569 = vunpack.c.l.b16 %v1097
    %v2570 = vunpack.c.h.b16 %v1097
    %v2571 = vunpack.c.l.b16 %v1098
    %v2572 = vunpack.c.h.b16 %v1098
    %v2573 = vunpack.c.l.b16 %v1099
    %v2574 = vunpack.c.h.b16 %v1099
    %v2575 = vunpack.c.l.b16 %v1100
    %v2576 = vunpack.c.h.b16 %v1100
    %v2577 = vunpack.c.l.b16 %v1101
    %v2578 = vunpack.c.h.b16 %v1101
    %v2579 = vunpack.c.l.b16 %v1102
    %v2580 = vunpack.c.h.b16 %v1102
    %v2581 = vunpack.c.l.b16 %v1103
    %v2582 = vunpack.c.h.b16 %v1103
    %v2583 = vunpack.c.l.b16 %v1104
    %v2584 = vunpack.c.h.b16 %v1104
    %v2585 = vunpack.c.l.b16 %v1105
    %v2586 = vunpack.c.h.b16 %v1105
    %v2587 = vunpack.c.l.b16 %v1106
    %v2588 = vunpack.c.h.b16 %v1106
    %v2589 = vunpack.c.l.b16 %v1107
    %v2590 = vunpack.c.h.b16 %v1107
    %v2591 = vunpack.c.l.b16 %v1108
    %v2592 = vunpack.c.h.b16 %v1108
    %v2593 = vunpack.c.l.b16 %v1109
    %v2594 = vunpack.c.h.b16 %v1109
    %v2595 = vunpack.c.l.b16 %v1110
    %v2596 = vunpack.c.h.b16 %v1110
    %v2597 = vunpack.c.l.b16 %v1111
    %v2598 = vunpack.c.h.b16 %v1111
    %v2599 = vunpack.c.l.b16 %v1112
    %v2600 = vunpack.c.h.b16 %v1112
    %v2601 = vunpack.c.l.b16 %v1113
    %v2602 = vunpack.c.h.b16 %v1113
    %v2603 = vunpack.c.l.b16 %v1114
    %v2604 = vunpack.c.h.b16 %v1114
    %v2605 = vunpack.c.l.b16 %v1115
    %v2606 = vunpack.c.h.b16 %v1115
    %v2607 = vunpack.c.l.b16 %v1116
    %v2608 = vunpack.c.h.b16 %v1116
    %v2609 = vunpack.c.l.b16 %v1117
    %v2610 = vunpack.c.h.b16 %v1117
    %v2611 = vunpack.c.l.b16 %v1118
    %v2612 = vunpack.c.h.b16 %v1118
    %v2613 = vunpack.c.l.b16 %v1119
    %v2614 = vunpack.c.h.b16 %v1119
    %v2615 = vunpack.c.l.b16 %v1120
    %v2616 = vunpack.c.h.b16 %v1120
    %v2617 = vunpack.c.l.b16 %v1121
    %v2618 = vunpack.c.h.b16 %v1121
    %v2619 = vunpack.c.l.b16 %v1122
    %v2620 = vunpack.c.h.b16 %v1122
    %v2621 = vunpack.c.l.b16 %v1123
    %v2622 = vunpack.c.h.b16 %v1123
    %v2623 = vunpack.c.l.b16 %v1124
    %v2624 = vunpack.c.h.b16 %v1124
    %v2625 = vunpack.c.l.b16 %v1125
    %v2626 = vunpack.c.h.b16 %v1125
    %v2627 = vunpack.c.l.b16 %v1126
    %v2628 = vunpack.c.h.b16 %v1126
    %v2629 = vunpack.c.l.b16 %v1127
    %v2630 = vunpack.c.h.b16 %v1127
    %v2631 = vunpack.c.l.b16 %v1128
    %v2632 = vunpack.c.h.b16 %v1128
    %v2633 = vunpack.c.l.b16 %v1129
    %v2634 = vunpack.c.h.b16 %v1129
    %v2635 = vunpack.c.l.b16 %v1130
    %v2636 = vunpack.c.h.b16 %v1130
    %v2637 = vunpack.c.l.b16 %v1131
    %v2638 = vunpack.c.h.b16 %v1131
    %v2639 = vunpack.c.l.b16 %v1132
    %v2640 = vunpack.c.h.b16 %v1132
    %v2641 = vunpack.c.l.b16 %v1133
    %v2642 = vunpack.c.h.b16 %v1133
    %v2643 = vunpack.c.l.b16 %v1134
    %v2644 = vunpack.c.h.b16 %v1134
    %v2645 = vunpack.c.l.b16 %v1135
    %v2646 = vunpack.c.h.b16 %v1135
    %v2647 = vunpack.c.l.b16 %v1136
    %v2648 = vunpack.c.h.b16 %v1136
    %v2649 = vunpack.c.l.b16 %v1137
    %v2650 = vunpack.c.h.b16 %v1137
    %v2651 = vunpack.c.l.b16 %v1138
    %v2652 = vunpack.c.h.b16 %v1138
    %v2653 = vunpack.c.l.b16 %v1139
    %v2654 = vunpack.c.h.b16 %v1139
    %v2655 = vunpack.c.l.b16 %v1140
    %v2656 = vunpack.c.h.b16 %v1140
    %v2657 = vunpack.c.l.b16 %v1141
    %v2658 = vunpack.c.h.b16 %v1141
    %v2659 = vunpack.c.l.b16 %v1142
    %v2660 = vunpack.c.h.b16 %v1142
    %v2661 = vunpack.c.l.b16 %v1143
    %v2662 = vunpack.c.h.b16 %v1143
    %v2663 = vunpack.c.l.b16 %v1144
    %v2664 = vunpack.c.h.b16 %v1144
    %v2665 = vunpack.c.l.b16 %v1145
    %v2666 = vunpack.c.h.b16 %v1145
    %v2667 = vunpack.c.l.b16 %v1146
    %v2668 = vunpack.c.h.b16 %v1146
    %v2669 = vunpack.c.l.b16 %v1147
    %v2670 = vunpack.c.h.b16 %v1147
    %v2671 = vunpack.c.l.b16 %v1148
    %v2672 = vunpack.c.h.b16 %v1148
    %v2673 = vunpack.c.l.b16 %v1149
    %v2674 = vunpack.c.h.b16 %v1149
    %v2675 = vunpack.c.l.b16 %v1150
    %v2676 = vunpack.c.h.b16 %v1150
    %v2677 = vunpack.c.l.b16 %v1151
    %v2678 = vunpack.c.h.b16 %v1151
    %v2679 = vunpack.c.l.b16 %v1152
    %v2680 = vunpack.c.h.b16 %v1152
    %v2681 = vunpack.c.l.b16 %v1153
    %v2682 = vunpack.c.h.b16 %v1153
    %v2683 = vunpack.c.l.b16 %v1154
    %v2684 = vunpack.c.h.b16 %v1154
    %v2685 = vunpack.c.l.b16 %v1155
    %v2686 = vunpack.c.h.b16 %v1155
    %v2687 = vunpack.c.l.b16 %v1156
    %v2688 = vunpack.c.h.b16 %v1156
    %v2689 = vunpack.c.l.b16 %v1157
    %v2690 = vunpack.c.h.b16 %v1157
    %v2691 = vunpack.c.l.b16 %v1158
    %v2692 = vunpack.c.h.b16 %v1158
    %v2693 = vunpack.c.l.b16 %v1159
    %v2694 = vunpack.c.h.b16 %v1159
    %v2695 = vunpack.c.l.b16 %v1160
    %v2696 = vunpack.c.h.b16 %v1160
    %v2697 = vunpack.c.l.b16 %v1161
    %v2698 = vunpack.c.h.b16 %v1161
    %v2699 = vunpack.c.l.b16 %v1162
    %v2700 = vunpack.c.h.b16 %v1162
    %v2701 = vunpack.c.l.b16 %v1163
    %v2702 = vunpack.c.h.b16 %v1163
    %v2703 = vunpack.c.l.b16 %v1164
    %v2704 = vunpack.c.h.b16 %v1164
    %v2705 = vunpack.c.l.b16 %v1165
    %v2706 = vunpack.c.h.b16 %v1165
    %v2707 = vunpack.c.l.b16 %v1166
    %v2708 = vunpack.c.h.b16 %v1166
    %v2709 = vunpack.c.l.b16 %v1167
    %v2710 = vunpack.c.h.b16 %v1167
    %v2711 = vunpack.c.l.b16 %v1168
    %v2712 = vunpack.c.h.b16 %v1168
    %v2713 = vunpack.c.l.b16 %v1169
    %v2714 = vunpack.c.h.b16 %v1169
    %v2715 = vunpack.c.l.b16 %v1170
    %v2716 = vunpack.c.h.b16 %v1170
    %v2717 = vunpack.c.l.b16 %v1171
    %v2718 = vunpack.c.h.b16 %v1171
    %v2719 = vunpack.c.l.b16 %v1172
    %v2720 = vunpack.c.h.b16 %v1172
    %v2721 = vunpack.c.l.b16 %v1173
    %v2722 = vunpack.c.h.b16 %v1173
    %v2723 = vunpack.c.l.b16 %v1174
    %v2724 = vunpack.c.h.b16 %v1174
    %v2725 = vunpack.c.l.b16 %v1175
    %v2726 = vunpack.c.h.b16 %v1175
    %v2727 = vunpack.c.l.b16 %v1176
    %v2728 = vunpack.c.h.b16 %v1176
    %v2729 = vunpack.c.l.b16 %v1177
    %v2730 = vunpack.c.h.b16 %v1177
    %v2731 = vunpack.c.l.b16 %v1178
    %v2732 = vunpack.c.h.b16 %v1178
    %v2733 = vunpack.c.l.b16 %v1179
    %v2734 = vunpack.c.h.b16 %v1179
    %v2735 = vunpack.c.l.b16 %v1180
    %v2736 = vunpack.c.h.b16 %v1180
    %v2737 = vunpack.c.l.b16 %v1181
    %v2738 = vunpack.c.h.b16 %v1181
    %v2739 = vunpack.c.l.b16 %v1182
    %v2740 = vunpack.c.h.b16 %v1182
    %v2741 = vunpack.c.l.b16 %v1183
    %v2742 = vunpack.c.h.b16 %v1183
    %v2743 = vunpack.c.l.b16 %v1184
    %v2744 = vunpack.c.h.b16 %v1184
    %v2745 = vunpack.c.l.b16 %v1185
    %v2746 = vunpack.c.h.b16 %v1185
    %v2747 = vunpack.c.l.b16 %v1186
    %v2748 = vunpack.c.h.b16 %v1186
    %v2749 = vunpack.c.l.b16 %v1187
    %v2750 = vunpack.c.h.b16 %v1187
    %v2751 = vunpack.c.l.b16 %v1188
    %v2752 = vunpack.c.h.b16 %v1188
    %v2753 = vunpack.c.l.b16 %v1189
    %v2754 = vunpack.c.h.b16 %v1189
    %v2755 = vunpack.c.l.b16 %v1190
    %v2756 = vunpack.c.h.b16 %v1190
    %v2757 = vunpack.c.l.b16 %v1191
    %v2758 = vunpack.c.h.b16 %v1191
    %v2759 = vunpack.c.l.b16 %v1192
    %v2760 = vunpack.c.h.b16 %v1192
    %v2761 = vunpack.c.l.b16 %v1193
    %v2762 = vunpack.c.h.b16 %v1193
    %v2763 = vunpack.c.l.b16 %v1194
    %v2764 = vunpack.c.h.b16 %v1194
    %v2765 = vunpack.c.l.b16 %v1195
    %v2766 = vunpack.c.h.b16 %v1195
    %v2767 = vunpack.c.l.b16 %v1196
    %v2768 = vunpack.c.h.b16 %v1196
    %v2769 = vunpack.c.l.b16 %v1197
    %v2770 = vunpack.c.h.b16 %v1197
    %v2771 = vunpack.c.l.b16 %v1198
    %v2772 = vunpack.c.h.b16 %v1198
    %v2773 = vunpack.c.l.b16 %v1199
    %v2774 = vunpack.c.h.b16 %v1199
    %v2775 = vunpack.c.l.b16 %v1200
    %v2776 = vunpack.c.h.b16 %v1200
    %v2777 = vunpack.c.l.b16 %v1201
    %v2778 = vunpack.c.h.b16 %v1201
    %v2779 = vunpack.c.l.b16 %v1202
    %v2780 = vunpack.c.h.b16 %v1202
    %v2781 = vunpack.c.l.b16 %v1203
    %v2782 = vunpack.c.h.b16 %v1203
    %v2783 = vunpack.c.l.b16 %v1204
    %v2784 = vunpack.c.h.b16 %v1204
    %v2785 = vunpack.c.l.b16 %v1205
    %v2786 = vunpack.c.h.b16 %v1205
    %v2787 = vunpack.c.l.b16 %v1206
    %v2788 = vunpack.c.h.b16 %v1206
    %v2789 = vunpack.c.l.b16 %v1207
    %v2790 = vunpack.c.h.b16 %v1207
    %v2791 = vunpack.c.l.b16 %v1208
    %v2792 = vunpack.c.h.b16 %v1208
    %v2793 = vunpack.c.l.b16 %v1209
    %v2794 = vunpack.c.h.b16 %v1209
    %v2795 = vunpack.c.l.b16 %v1210
    %v2796 = vunpack.c.h.b16 %v1210
    %v2797 = vunpack.c.l.b16 %v1211
    %v2798 = vunpack.c.h.b16 %v1211
    %v2799 = vunpack.c.l.b16 %v1212
    %v2800 = vunpack.c.h.b16 %v1212
    %v2801 = vunpack.c.l.b16 %v1213
    %v2802 = vunpack.c.h.b16 %v1213
    %v2803 = vunpack.c.l.b16 %v1214
    %v2804 = vunpack.c.h.b16 %v1214
    %v2805 = vunpack.c.l.b16 %v1215
    %v2806 = vunpack.c.h.b16 %v1215
    %v2807 = vunpack.c.l.b16 %v1216
    %v2808 = vunpack.c.h.b16 %v1216
    %v2809 = vunpack.c.l.b16 %v1217
    %v2810 = vunpack.c.h.b16 %v1217
    %v2811 = vunpack.c.l.b16 %v1218
    %v2812 = vunpack.c.h.b16 %v1218
    %v2813 = vunpack.c.l.b16 %v1219
    %v2814 = vunpack.c.h.b16 %v1219
    %v2815 = vunpack.c.l.b16 %v1220
    %v2816 = vunpack.c.h.b16 %v1220
    %v2817 = vunpack.c.l.b16 %v1221
    %v2818 = vunpack.c.h.b16 %v1221
    %v2819 = vunpack.c.l.b16 %v1222
    %v2820 = vunpack.c.h.b16 %v1222
    %v2821 = vunpack.c.l.b16 %v1223
    %v2822 = vunpack.c.h.b16 %v1223
    %v2823 = vunpack.c.l.b16 %v1224
    %v2824 = vunpack.c.h.b16 %v1224
    %v2825 = vunpack.c.l.b16 %v1225
    %v2826 = vunpack.c.h.b16 %v1225
    %v2827 = vunpack.c.l.b16 %v1226
    %v2828 = vunpack.c.h.b16 %v1226
    %v2829 = vunpack.c.l.b16 %v1227
    %v2830 = vunpack.c.h.b16 %v1227
    %v2831 = vunpack.c.l.b16 %v1228
    %v2832 = vunpack.c.h.b16 %v1228
    %v2833 = vunpack.c.l.b16 %v1229
    %v2834 = vunpack.c.h.b16 %v1229
    %v2835 = vunpack.c.l.b16 %v1230
    %v2836 = vunpack.c.h.b16 %v1230
    %v2837 = vunpack.c.l.b16 %v1231
    %v2838 = vunpack.c.h.b16 %v1231
    %v2839 = vunpack.c.l.b16 %v1232
    %v2840 = vunpack.c.h.b16 %v1232
    %v2841 = vunpack.c.l.b16 %v1233
    %v2842 = vunpack.c.h.b16 %v1233
    %v2843 = vunpack.c.l.b16 %v1234
    %v2844 = vunpack.c.h.b16 %v1234
    %v2845 = vunpack.c.l.b16 %v1235
    %v2846 = vunpack.c.h.b16 %v1235
    %v2847 = vunpack.c.l.b16 %v1236
    %v2848 = vunpack.c.h.b16 %v1236
    %v2849 = vunpack.c.l.b16 %v1237
    %v2850 = vunpack.c.h.b16 %v1237
    %v2851 = vunpack.c.l.b16 %v1238
    %v2852 = vunpack.c.h.b16 %v1238
    %v2853 = vunpack.c.l.b16 %v1239
    %v2854 = vunpack.c.h.b16 %v1239
    %v2855 = vunpack.c.l.b16 %v1240
    %v2856 = vunpack.c.h.b16 %v1240
    %v2857 = vunpack.c.l.b16 %v1241
    %v2858 = vunpack.c.h.b16 %v1241
    %v2859 = vunpack.c.l.b16 %v1242
    %v2860 = vunpack.c.h.b16 %v1242
    %v2861 = vunpack.c.l.b16 %v1243
    %v2862 = vunpack.c.h.b16 %v1243
    %v2863 = vunpack.c.l.b16 %v1244
    %v2864 = vunpack.c.h.b16 %v1244
    %v2865 = vunpack.c.l.b16 %v1245
    %v2866 = vunpack.c.h.b16 %v1245
    %v2867 = vunpack.c.l.b16 %v1246
    %v2868 = vunpack.c.h.b16 %v1246
    %v2869 = vunpack.c.l.b16 %v1247
    %v2870 = vunpack.c.h.b16 %v1247
    %v2871 = vunpack.c.l.b16 %v1248
    %v2872 = vunpack.c.h.b16 %v1248
    %v2873 = vunpack.c.l.b16 %v1249
    %v2874 = vunpack.c.h.b16 %v1249
    %v2875 = vunpack.c.l.b16 %v1250
    %v2876 = vunpack.c.h.b16 %v1250
    %v2877 = vunpack.c.l.b16 %v1251
    %v2878 = vunpack.c.h.b16 %v1251
    %v2879 = vunpack.c.l.b16 %v1252
    %v2880 = vunpack.c.h.b16 %v1252
    %v2881 = vunpack.c.l.b16 %v1253
    %v2882 = vunpack.c.h.b16 %v1253
    %v2883 = vunpack.c.l.b16 %v1254
    %v2884 = vunpack.c.h.b16 %v1254
    %v2885 = vunpack.c.l.b16 %v1255
    %v2886 = vunpack.c.h.b16 %v1255
    %v2887 = vunpack.c.l.b16 %v1256
    %v2888 = vunpack.c.h.b16 %v1256
    %v2889 = vunpack.c.l.b16 %v1257
    %v2890 = vunpack.c.h.b16 %v1257
    %v2891 = vunpack.c.l.b16 %v1258
    %v2892 = vunpack.c.h.b16 %v1258
    %v2893 = vunpack.c.l.b16 %v1259
    %v2894 = vunpack.c.h.b16 %v1259
    %v2895 = vunpack.c.l.b16 %v1260
    %v2896 = vunpack.c.h.b16 %v1260
    %v2897 = vunpack.c.l.b16 %v1261
    %v2898 = vunpack.c.h.b16 %v1261
    %v2899 = vunpack.c.l.b16 %v1262
    %v2900 = vunpack.c.h.b16 %v1262
    %v2901 = vunpack.c.l.b16 %v1263
    %v2902 = vunpack.c.h.b16 %v1263
    %v2903 = vunpack.c.l.b16 %v1264
    %v2904 = vunpack.c.h.b16 %v1264
    %v2905 = vunpack.c.l.b16 %v1265
    %v2906 = vunpack.c.h.b16 %v1265
    %v2907 = vunpack.c.l.b16 %v1266
    %v2908 = vunpack.c.h.b16 %v1266
    %v2909 = vunpack.c.l.b16 %v1267
    %v2910 = vunpack.c.h.b16 %v1267
    %v2911 = vunpack.c.l.b16 %v1268
    %v2912 = vunpack.c.h.b16 %v1268
    %v2913 = vunpack.c.l.b16 %v1269
    %v2914 = vunpack.c.h.b16 %v1269
    %v2915 = vunpack.c.l.b16 %v1270
    %v2916 = vunpack.c.h.b16 %v1270
    %v2917 = vunpack.c.l.b16 %v1271
    %v2918 = vunpack.c.h.b16 %v1271
    %v2919 = vunpack.c.l.b16 %v1272
    %v2920 = vunpack.c.h.b16 %v1272
    %v2921 = vunpack.c.l.b16 %v1273
    %v2922 = vunpack.c.h.b16 %v1273
    %v2923 = vunpack.c.l.b16 %v1274
    %v2924 = vunpack.c.h.b16 %v1274
    %v2925 = vunpack.c.l.b16 %v1275
    %v2926 = vunpack.c.h.b16 %v1275
    %v2927 = vunpack.c.l.b16 %v1276
    %v2928 = vunpack.c.h.b16 %v1276
    %v2929 = vunpack.c.l.b16 %v1277
    %v2930 = vunpack.c.h.b16 %v1277
    %v2931 = vunpack.c.l.b16 %v1278
    %v2932 = vunpack.c.h.b16 %v1278
    %v2933 = vunpack.c.l.b16 %v1279
    %v2934 = vunpack.c.h.b16 %v1279
    %v2935 = vunpack.c.l.b16 %v1280
    %v2936 = vunpack.c.h.b16 %v1280
    %v2937 = vunpack.c.l.b16 %v1281
    %v2938 = vunpack.c.h.b16 %v1281
    %v2939 = vunpack.c.l.b16 %v1282
    %v2940 = vunpack.c.h.b16 %v1282
    %v2941 = vunpack.c.l.b16 %v1283
    %v2942 = vunpack.c.h.b16 %v1283
    %v2943 = vunpack.c.l.b16 %v1284
    %v2944 = vunpack.c.h.b16 %v1284
    %v2945 = vunpack.c.l.b16 %v1285
    %v2946 = vunpack.c.h.b16 %v1285
    %v2947 = vunpack.c.l.b16 %v1286
    %v2948 = vunpack.c.h.b16 %v1286
    %v2949 = vunpack.c.l.b16 %v1287
    %v2950 = vunpack.c.h.b16 %v1287
    %v2951 = vunpack.c.l.b16 %v1288
    %v2952 = vunpack.c.h.b16 %v1288
    %v2953 = vunpack.c.l.b16 %v1289
    %v2954 = vunpack.c.h.b16 %v1289
    %v2955 = vunpack.c.l.b16 %v1290
    %v2956 = vunpack.c.h.b16 %v1290
    %v2957 = vunpack.c.l.b16 %v1291
    %v2958 = vunpack.c.h.b16 %v1291
    %v2959 = vunpack.c.l.b16 %v1292
    %v2960 = vunpack.c.h.b16 %v1292
    %v2961 = vunpack.c.l.b16 %v1293
    %v2962 = vunpack.c.h.b16 %v1293
    %v2963 = vunpack.c.l.b16 %v1294
    %v2964 = vunpack.c.h.b16 %v1294
    %v2965 = vunpack.c.l.b16 %v1295
    %v2966 = vunpack.c.h.b16 %v1295
    %v2967 = vunpack.c.l.b16 %v1296
    %v2968 = vunpack.c.h.b16 %v1296
    %v2969 = vunpack.c.l.b16 %v1297
    %v2970 = vunpack.c.h.b16 %v1297
    %v2971 = vunpack.c.l.b16 %v1298
    %v2972 = vunpack.c.h.b16 %v1298
    %v2973 = vunpack.c.l.b16 %v1299
    %v2974 = vunpack.c.h.b16 %v1299
    %v2975 = vunpack.c.l.b16 %v1300
    %v2976 = vunpack.c.h.b16 %v1300
    %v2977 = vunpack.c.l.b16 %v1301
    %v2978 = vunpack.c.h.b16 %v1301
    %v2979 = vunpack.c.l.b16 %v1302
    %v2980 = vunpack.c.h.b16 %v1302
    %v2981 = vunpack.c.l.b16 %v1303
    %v2982 = vunpack.c.h.b16 %v1303
    %v2983 = vunpack.c.l.b16 %v1304
    %v2984 = vunpack.c.h.b16 %v1304
    %v2985 = vunpack.c.l.b16 %v1305
    %v2986 = vunpack.c.h.b16 %v1305
    %v2987 = vunpack.c.l.b16 %v1306
    %v2988 = vunpack.c.h.b16 %v1306
    %v2989 = vunpack.c.l.b16 %v1307
    %v2990 = vunpack.c.h.b16 %v1307
    %v2991 = vunpack.c.l.b16 %v1308
    %v2992 = vunpack.c.h.b16 %v1308
    %v2993 = vunpack.c.l.b16 %v1309
    %v2994 = vunpack.c.h.b16 %v1309
    %v2995 = vunpack.c.l.b16 %v1310
    %v2996 = vunpack.c.h.b16 %v1310
    %v2997 = vunpack.c.l.b16 %v1311
    %v2998 = vunpack.c.h.b16 %v1311
    %v2999 = vunpack.c.l.b16 %v1312
    %v3000 = vunpack.c.h.b16 %v1312
    %v3001 = vunpack.c.l.b16 %v1313
    %v3002 = vunpack.c.h.b16 %v1313
    %v3003 = vunpack.c.l.b16 %v1314
    %v3004 = vunpack.c.h.b16 %v1314
    %v3005 = vunpack.c.l.b16 %v1315
    %v3006 = vunpack.c.h.b16 %v1315
    %v3007 = vunpack.c.l.b16 %v1316
    %v3008 = vunpack.c.h.b16 %v1316
    %v3009 = vunpack.c.l.b16 %v1317
    %v3010 = vunpack.c.h.b16 %v1317
    %v3011 = vunpack.c.l.b16 %v1318
    %v3012 = vunpack.c.h.b16 %v1318
    %v3013 = vunpack.c.l.b16 %v1319
    %v3014 = vunpack.c.h.b16 %v1319
    %v3015 = vunpack.c.l.b16 %v1320
    %v3016 = vunpack.c.h.b16 %v1320
    %v3017 = vunpack.c.l.b16 %v1321
    %v3018 = vunpack.c.h.b16 %v1321
    %v3019 = vunpack.c.l.b16 %v1322
    %v3020 = vunpack.c.h.b16 %v1322
    %v3021 = vunpack.c.l.b16 %v1323
    %v3022 = vunpack.c.h.b16 %v1323
    %v3023 = vunpack.c.l.b16 %v1324
    %v3024 = vunpack.c.h.b16 %v1324
    %v3025 = vunpack.c.l.b16 %v1325
    %v3026 = vunpack.c.h.b16 %v1325
    %v3027 = vunpack.c.l.b16 %v1326
    %v3028 = vunpack.c.h.b16 %v1326
    %v3029 = vunpack.c.l.b16 %v1327
    %v3030 = vunpack.c.h.b16 %v1327
    %v3031 = vunpack.c.l.b16 %v1328
    %v3032 = vunpack.c.h.b16 %v1328
    %v3033 = vunpack.c.l.b16 %v1329
    %v3034 = vunpack.c.h.b16 %v1329
    %v3035 = vunpack.c.l.b16 %v1330
    %v3036 = vunpack.c.h.b16 %v1330
    %v3037 = vunpack.c.l.b16 %v1331
    %v3038 = vunpack.c.h.b16 %v1331
    %v3039 = vunpack.c.l.b16 %v1332
    %v3040 = vunpack.c.h.b16 %v1332
    %v3041 = vunpack.c.l.b16 %v1333
    %v3042 = vunpack.c.h.b16 %v1333
    %v3043 = vunpack.c.l.b16 %v1334
    %v3044 = vunpack.c.h.b16 %v1334
    %v3045 = vunpack.c.l.b16 %v1335
    %v3046 = vunpack.c.h.b16 %v1335
    %v3047 = vunpack.c.l.b16 %v1336
    %v3048 = vunpack.c.h.b16 %v1336
    %v3049 = vunpack.c.l.b16 %v1337
    %v3050 = vunpack.c.h.b16 %v1337
    %v3051 = vunpack.c.l.b16 %v1338
    %v3052 = vunpack.c.h.b16 %v1338
    %v3053 = vunpack.c.l.b16 %v1339
    %v3054 = vunpack.c.h.b16 %v1339
    %v3055 = vunpack.c.l.b16 %v1340
    %v3056 = vunpack.c.h.b16 %v1340
    %v3057 = vunpack.c.l.b16 %v1341
    %v3058 = vunpack.c.h.b16 %v1341
    %v3059 = vunpack.c.l.b16 %v1342
    %v3060 = vunpack.c.h.b16 %v1342
    %v3061 = vunpack.c.l.b16 %v1343
    %v3062 = vunpack.c.h.b16 %v1343
    %v3063 = vunpack.c.l.b16 %v1344
    %v3064 = vunpack.c.h.b16 %v1344
    %v3065 = vunpack.c.l.b16 %v1345
    %v3066 = vunpack.c.h.b16 %v1345
    %v3067 = vunpack.c.l.b16 %v1346
    %v3068 = vunpack.c.h.b16 %v1346
    %v3069 = vunpack.c.l.b16 %v1347
    %v3070 = vunpack.c.h.b16 %v1347
    %v3071 = vunpack.c.l.b16 %v1348
    %v3072 = vunpack.c.h.b16 %v1348
    %v3073 = vunpack.c.l.b16 %v1349
    %v3074 = vunpack.c.h.b16 %v1349
    %v3075 = vunpack.c.l.b16 %v1350
    %v3076 = vunpack.c.h.b16 %v1350
    %v3077 = vunpack.c.l.b16 %v1351
    %v3078 = vunpack.c.h.b16 %v1351
    %v3079 = vunpack.c.l.b16 %v1352
    %v3080 = vunpack.c.h.b16 %v1352
    %v3081 = vunpack.c.l.b16 %v1353
    %v3082 = vunpack.c.h.b16 %v1353
    %v3083 = vunpack.c.l.b16 %v1354
    %v3084 = vunpack.c.h.b16 %v1354
    %v3085 = vunpack.c.l.b16 %v1355
    %v3086 = vunpack.c.h.b16 %v1355
    %v3087 = vunpack.c.l.b16 %v1356
    %v3088 = vunpack.c.h.b16 %v1356
    %v3089 = vunpack.c.l.b16 %v1357
    %v3090 = vunpack.c.h.b16 %v1357
    %v3091 = vunpack.c.l.b16 %v1358
    %v3092 = vunpack.c.h.b16 %v1358
    %v3093 = vunpack.c.l.b16 %v1359
    %v3094 = vunpack.c.h.b16 %v1359
    %v3095 = vunpack.c.l.b16 %v1360
    %v3096 = vunpack.c.h.b16 %v1360
    %v3097 = vunpack.c.l.b16 %v1361
    %v3098 = vunpack.c.h.b16 %v1361
    %v3099 = vunpack.c.l.b16 %v1362
    %v3100 = vunpack.c.h.b16 %v1362
    %v3101 = vunpack.c.l.b16 %v1363
    %v3102 = vunpack.c.h.b16 %v1363
    %v3103 = vunpack.c.l.b16 %v1364
    %v3104 = vunpack.c.h.b16 %v1364
    %v3105 = vunpack.c.l.b16 %v1365
    %v3106 = vunpack.c.h.b16 %v1365
    %v3107 = vunpack.c.l.b16 %v1366
    %v3108 = vunpack.c.h.b16 %v1366
    %v3109 = vunpack.c.l.b16 %v1367
    %v3110 = vunpack.c.h.b16 %v1367
    %v3111 = vunpack.c.l.b16 %v1368
    %v3112 = vunpack.c.h.b16 %v1368
    %v3113 = vunpack.c.l.b16 %v1369
    %v3114 = vunpack.c.h.b16 %v1369
    %v3115 = vunpack.c.l.b16 %v1370
    %v3116 = vunpack.c.h.b16 %v1370
    %v3117 = vunpack.c.l.b16 %v1371
    %v3118 = vunpack.c.h.b16 %v1371
    %v3119 = vunpack.c.l.b16 %v1372
    %v3120 = vunpack.c.h.b16 %v1372
    %v3121 = vunpack.c.l.b16 %v1373
    %v3122 = vunpack.c.h.b16 %v1373
    %v3123 = vunpack.c.l.b16 %v1374
    %v3124 = vunpack.c.h.b16 %v1374
    %v3125 = vunpack.c.l.b16 %v1375
    %v3126 = vunpack.c.h.b16 %v1375
    %v3127 = vunpack.c.l.b16 %v1376
    %v3128 = vunpack.c.h.b16 %v1376
    %v3129 = vunpack.c.l.b16 %v1377
    %v3130 = vunpack.c.h.b16 %v1377
    %v3131 = vunpack.c.l.b16 %v1378
    %v3132 = vunpack.c.h.b16 %v1378
    %v3133 = vunpack.c.l.b16 %v1379
    %v3134 = vunpack.c.h.b16 %v1379
    %v3135 = vunpack.c.l.b16 %v1380
    %v3136 = vunpack.c.h.b16 %v1380
    %v3137 = vunpack.c.l.b16 %v1381
    %v3138 = vunpack.c.h.b16 %v1381
    %v3139 = vunpack.c.l.b16 %v1382
    %v3140 = vunpack.c.h.b16 %v1382
    %v3141 = vunpack.c.l.b16 %v1383
    %v3142 = vunpack.c.h.b16 %v1383
    %v3143 = vunpack.c.l.b16 %v1384
    %v3144 = vunpack.c.h.b16 %v1384
    %v3145 = vunpack.c.l.b16 %v1385
    %v3146 = vunpack.c.h.b16 %v1385
    %v3147 = vunpack.c.l.b16 %v1386
    %v3148 = vunpack.c.h.b16 %v1386
    %v3149 = vunpack.c.l.b16 %v1387
    %v3150 = vunpack.c.h.b16 %v1387
    %v3151 = vunpack.c.l.b16 %v1388
    %v3152 = vunpack.c.h.b16 %v1388
    %v3153 = vunpack.c.l.b16 %v1389
    %v3154 = vunpack.c.h.b16 %v1389
    %v3155 = vunpack.c.l.b16 %v1390
    %v3156 = vunpack.c.h.b16 %v1390
    %v3157 = vunpack.c.l.b16 %v1391
    %v3158 = vunpack.c.h.b16 %v1391
    %v3159 = vunpack.c.l.b16 %v1392
    %v3160 = vunpack.c.h.b16 %v1392
    %v3161 = vunpack.c.l.b16 %v1393
    %v3162 = vunpack.c.h.b16 %v1393
    %v3163 = vunpack.c.l.b16 %v1394
    %v3164 = vunpack.c.h.b16 %v1394
    %v3165 = vunpack.c.l.b16 %v1395
    %v3166 = vunpack.c.h.b16 %v1395
    %v3167 = vunpack.c.l.b16 %v1396
    %v3168 = vunpack.c.h.b16 %v1396
    %v3169 = vunpack.c.l.b16 %v1397
    %v3170 = vunpack.c.h.b16 %v1397
    %v3171 = vunpack.c.l.b16 %v1398
    %v3172 = vunpack.c.h.b16 %v1398
    %v3173 = vunpack.c.l.b16 %v1399
    %v3174 = vunpack.c.h.b16 %v1399
    %v3175 = vunpack.c.l.b16 %v1400
    %v3176 = vunpack.c.h.b16 %v1400
    %v3177 = vunpack.c.l.b16 %v1401
    %v3178 = vunpack.c.h.b16 %v1401
    %v3179 = vunpack.c.l.b16 %v1402
    %v3180 = vunpack.c.h.b16 %v1402
    %v3181 = vunpack.c.l.b16 %v1403
    %v3182 = vunpack.c.h.b16 %v1403
    %v3183 = vunpack.c.l.b16 %v1404
    %v3184 = vunpack.c.h.b16 %v1404
    %v3185 = vunpack.c.l.b16 %v1405
    %v3186 = vunpack.c.h.b16 %v1405
    %v3187 = vunpack.c.l.b16 %v1406
    %v3188 = vunpack.c.h.b16 %v1406
    %v3189 = vunpack.c.l.b16 %v1407
    %v3190 = vunpack.c.h.b16 %v1407
    %v3191 = vunpack.c.l.b16 %v1408
    %v3192 = vunpack.c.h.b16 %v1408
    %v3193 = vunpack.c.l.b16 %v1409
    %v3194 = vunpack.c.h.b16 %v1409
    %v3195 = vunpack.c.l.b16 %v1410
    %v3196 = vunpack.c.h.b16 %v1410
    %v3197 = vunpack.c.l.b16 %v1411
    %v3198 = vunpack.c.h.b16 %v1411
    %v3199 = vunpack.c.l.b16 %v1412
    %v3200 = vunpack.c.h.b16 %v1412
    %v3201 = vunpack.c.l.b16 %v1413
    %v3202 = vunpack.c.h.b16 %v1413
    %v3203 = vunpack.c.l.b16 %v1414
    %v3204 = vunpack.c.h.b16 %v1414
    %v3205 = vunpack.c.l.b16 %v1415
    %v3206 = vunpack.c.h.b16 %v1415
    %v3207 = vunpack.c.l.b16 %v1416
    %v3208 = vunpack.c.h.b16 %v1416
    %v3209 = vunpack.c.l.b16 %v1417
    %v3210 = vunpack.c.h.b16 %v1417
    %v3211 = vunpack.c.l.b16 %v1418
    %v3212 = vunpack.c.h.b16 %v1418
    %v3213 = vunpack.c.l.b16 %v1419
    %v3214 = vunpack.c.h.b16 %v1419
    %v3215 = vunpack.c.l.b16 %v1420
    %v3216 = vunpack.c.h.b16 %v1420
    %v3217 = vunpack.c.l.b16 %v1421
    %v3218 = vunpack.c.h.b16 %v1421
    %v3219 = vunpack.c.l.b16 %v1422
    %v3220 = vunpack.c.h.b16 %v1422
    %v3221 = vunpack.c.l.b16 %v1423
    %v3222 = vunpack.c.h.b16 %v1423
    %v3223 = vunpack.c.l.b16 %v1424
    %v3224 = vunpack.c.h.b16 %v1424
    %v3225 = vunpack.c.l.b16 %v1425
    %v3226 = vunpack.c.h.b16 %v1425
    %v3227 = vunpack.c.l.b16 %v1426
    %v3228 = vunpack.c.h.b16 %v1426
    %v3229 = vunpack.c.l.b16 %v1427
    %v3230 = vunpack.c.h.b16 %v1427
    %v3231 = vunpack.c.l.b16 %v1428
    %v3232 = vunpack.c.h.b16 %v1428
    %v3233 = vunpack.c.l.b16 %v1429
    %v3234 = vunpack.c.h.b16 %v1429
    %v3235 = vunpack.c.l.b16 %v1430
    %v3236 = vunpack.c.h.b16 %v1430
    %v3237 = vunpack.c.l.b16 %v1431
    %v3238 = vunpack.c.h.b16 %v1431
    %v3239 = vunpack.c.l.b16 %v1432
    %v3240 = vunpack.c.h.b16 %v1432
    %v3241 = vunpack.c.l.b16 %v1433
    %v3242 = vunpack.c.h.b16 %v1433
    %v3243 = vunpack.c.l.b16 %v1434
    %v3244 = vunpack.c.h.b16 %v1434
    %v3245 = vunpack.c.l.b16 %v1435
    %v3246 = vunpack.c.h.b16 %v1435
    %v3247 = vunpack.c.l.b16 %v1436
    %v3248 = vunpack.c.h.b16 %v1436
    %v3249 = vunpack.c.l.b16 %v1437
    %v3250 = vunpack.c.h.b16 %v1437
    %v3251 = vunpack.c.l.b16 %v1438
    %v3252 = vunpack.c.h.b16 %v1438
    %v3253 = vunpack.c.l.b16 %v1439
    %v3254 = vunpack.c.h.b16 %v1439
    %v3255 = vunpack.c.l.b16 %v1440
    %v3256 = vunpack.c.h.b16 %v1440
    %v3257 = vunpack.c.l.b16 %v1441
    %v3258 = vunpack.c.h.b16 %v1441
    %v3259 = vunpack.c.l.b16 %v1442
    %v3260 = vunpack.c.h.b16 %v1442
    %v3261 = vunpack.c.l.b16 %v1443
    %v3262 = vunpack.c.h.b16 %v1443
    %v3263 = vunpack.c.l.b16 %v1444
    %v3264 = vunpack.c.h.b16 %v1444
    %v3265 = vunpack.c.l.b16 %v1445
    %v3266 = vunpack.c.h.b16 %v1445
    %v3267 = vunpack.c.l.b16 %v1446
    %v3268 = vunpack.c.h.b16 %v1446
    %v3269 = vunpack.c.l.b16 %v1447
    %v3270 = vunpack.c.h.b16 %v1447
    %v3271 = vunpack.c.l.b16 %v1448
    %v3272 = vunpack.c.h.b16 %v1448
    %v3273 = vunpack.c.l.b16 %v1449
    %v3274 = vunpack.c.h.b16 %v1449
    %v3275 = vunpack.c.l.b16 %v1450
    %v3276 = vunpack.c.h.b16 %v1450
    %v3277 = vunpack.c.l.b16 %v1451
    %v3278 = vunpack.c.h.b16 %v1451
    %v3279 = vunpack.c.l.b16 %v1452
    %v3280 = vunpack.c.h.b16 %v1452
    %v3281 = vunpack.c.l.b16 %v1453
    %v3282 = vunpack.c.h.b16 %v1453
    %v3283 = vunpack.c.l.b16 %v1454
    %v3284 = vunpack.c.h.b16 %v1454
    %v3285 = vunpack.c.l.b16 %v1455
    %v3286 = vunpack.c.h.b16 %v1455
    %v3287 = vunpack.c.l.b16 %v1456
    %v3288 = vunpack.c.h.b16 %v1456
    %v3289 = vunpack.c.l.b16 %v1457
    %v3290 = vunpack.c.h.b16 %v1457
    %v3291 = vunpack.c.l.b16 %v1458
    %v3292 = vunpack.c.h.b16 %v1458
    %v3293 = vunpack.c.l.b16 %v1459
    %v3294 = vunpack.c.h.b16 %v1459
    %v3295 = vunpack.c.l.b16 %v1460
    %v3296 = vunpack.c.h.b16 %v1460
    %v3297 = vunpack.c.l.b16 %v1461
    %v3298 = vunpack.c.h.b16 %v1461
    %v3299 = vunpack.c.l.b16 %v1462
    %v3300 = vunpack.c.h.b16 %v1462
    %v3301 = vunpack.c.l.b16 %v1463
    %v3302 = vunpack.c.h.b16 %v1463
    %v3303 = vunpack.c.l.b16 %v1464
    %v3304 = vunpack.c.h.b16 %v1464
    %v3305 = vunpack.c.l.b16 %v1465
    %v3306 = vunpack.c.h.b16 %v1465
    %v3307 = vunpack.c.l.b16 %v1466
    %v3308 = vunpack.c.h.b16 %v1466
    %v3309 = vunpack.c.l.b16 %v1467
    %v3310 = vunpack.c.h.b16 %v1467
    %v3311 = vunpack.c.l.b16 %v1468
    %v3312 = vunpack.c.h.b16 %v1468
    %v3313 = vunpack.c.l.b16 %v1469
    %v3314 = vunpack.c.h.b16 %v1469
    %v3315 = vunpack.c.l.b16 %v1470
    %v3316 = vunpack.c.h.b16 %v1470
    %v3317 = vunpack.c.l.b16 %v1471
    %v3318 = vunpack.c.h.b16 %v1471
    %v3319 = vunpack.c.l.b16 %v1472
    %v3320 = vunpack.c.h.b16 %v1472
    %v3321 = vunpack.c.l.b16 %v1473
    %v3322 = vunpack.c.h.b16 %v1473
    %v3323 = vunpack.c.l.b16 %v1474
    %v3324 = vunpack.c.h.b16 %v1474
    %v3325 = vunpack.c.l.b16 %v1475
    %v3326 = vunpack.c.h.b16 %v1475
    %v3327 = vunpack.c.l.b16 %v1476
    %v3328 = vunpack.c.h.b16 %v1476
    %v3329 = vunpack.c.l.b16 %v1477
    %v3330 = vunpack.c.h.b16 %v1477
    %v3331 = vunpack.c.l.b16 %v1478
    %v3332 = vunpack.c.h.b16 %v1478
    %v3333 = vunpack.c.l.b16 %v1479
    %v3334 = vunpack.c.h.b16 %v1479
    %v3335 = vunpack.c.l.b16 %v1480
    %v3336 = vunpack.c.h.b16 %v1480
    %v3337 = vunpack.c.l.b16 %v1481
    %v3338 = vunpack.c.h.b16 %v1481
    %v3339 = vunpack.c.l.b16 %v1482
    %v3340 = vunpack.c.h.b16 %v1482
    %v3341 = vunpack.c.l.b16 %v1483
    %v3342 = vunpack.c.h.b16 %v1483
    %v3343 = vunpack.c.l.b16 %v1484
    %v3344 = vunpack.c.h.b16 %v1484
    %v3345 = vunpack.c.l.b16 %v1485
    %v3346 = vunpack.c.h.b16 %v1485
    %v3347 = vunpack.c.l.b16 %v1486
    %v3348 = vunpack.c.h.b16 %v1486
    %v3349 = vunpack.c.l.b16 %v1487
    %v3350 = vunpack.c.h.b16 %v1487
    %v3351 = vunpack.c.l.b16 %v1488
    %v3352 = vunpack.c.h.b16 %v1488
    %v3353 = vunpack.c.l.b16 %v1489
    %v3354 = vunpack.c.h.b16 %v1489
    %v3355 = vunpack.c.l.b16 %v1490
    %v3356 = vunpack.c.h.b16 %v1490
    %v3357 = vunpack.c.l.b16 %v1491
    %v3358 = vunpack.c.h.b16 %v1491
    %v3359 = vunpack.c.l.b16 %v1492
    %v3360 = vunpack.c.h.b16 %v1492
    %v3361 = vunpack.c.l.b16 %v1493
    %v3362 = vunpack.c.h.b16 %v1493
    %v3363 = vunpack.c.l.b16 %v1494
    %v3364 = vunpack.c.h.b16 %v1494
    %v3365 = vunpack.c.l.b16 %v1495
    %v3366 = vunpack.c.h.b16 %v1495
    %v3367 = vunpack.c.l.b16 %v1496
    %v3368 = vunpack.c.h.b16 %v1496
    %v3369 = vunpack.c.l.b16 %v1497
    %v3370 = vunpack.c.h.b16 %v1497
    %v3371 = vunpack.c.l.b16 %v1498
    %v3372 = vunpack.c.h.b16 %v1498
    %v3373 = vunpack.c.l.b16 %v1499
    %v3374 = vunpack.c.h.b16 %v1499
    %v3375 = vunpack.c.l.b16 %v1500
    %v3376 = vunpack.c.h.b16 %v1500
    %v3377 = vunpack.c.l.b16 %v1501
    %v3378 = vunpack.c.h.b16 %v1501
    %v3379 = vunpack.c.l.b16 %v1502
    %v3380 = vunpack.c.h.b16 %v1502
    %v3381 = vunpack.c.l.b16 %v1503
    %v3382 = vunpack.c.h.b16 %v1503
    %v3383 = vunpack.c.l.b16 %v1504
    %v3384 = vunpack.c.h.b16 %v1504
    %v3385 = vunpack.c.l.b16 %v1505
    %v3386 = vunpack.c.h.b16 %v1505
    %v3387 = vunpack.c.l.b16 %v1506
    %v3388 = vunpack.c.h.b16 %v1506
    %v3389 = vunpack.c.l.b16 %v1507
    %v3390 = vunpack.c.h.b16 %v1507
    %v3391 = vunpack.c.l.b16 %v1508
    %v3392 = vunpack.c.h.b16 %v1508
    %v3393 = vunpack.c.l.b16 %v1509
    %v3394 = vunpack.c.h.b16 %v1509
    %v3395 = vunpack.c.l.b16 %v1510
    %v3396 = vunpack.c.h.b16 %v1510
    %v3397 = vunpack.c.l.b16 %v1511
    %v3398 = vunpack.c.h.b16 %v1511
    %v3399 = vunpack.c.l.b16 %v1512
    %v3400 = vunpack.c.h.b16 %v1512
    %v3401 = vunpack.c.l.b16 %v1513
    %v3402 = vunpack.c.h.b16 %v1513
    %v3403 = vunpack.c.l.b16 %v1514
    %v3404 = vunpack.c.h.b16 %v1514
    %v3405 = vunpack.c.l.b16 %v1515
    %v3406 = vunpack.c.h.b16 %v1515
    %v3407 = vunpack.c.l.b16 %v1516
    %v3408 = vunpack.c.h.b16 %v1516
    %v3409 = vunpack.c.l.b16 %v1517
    %v3410 = vunpack.c.h.b16 %v1517
    %v3411 = vunpack.c.l.b16 %v1518
    %v3412 = vunpack.c.h.b16 %v1518
    %v3413 = vunpack.c.l.b16 %v1519
    %v3414 = vunpack.c.h.b16 %v1519
    %v3415 = vunpack.c.l.b16 %v1520
    %v3416 = vunpack.c.h.b16 %v1520
    %v3417 = vunpack.c.l.b16 %v1521
    %v3418 = vunpack.c.h.b16 %v1521
    %v3419 = vunpack.c.l.b16 %v1522
    %v3420 = vunpack.c.h.b16 %v1522
    %v3421 = vunpack.c.l.b16 %v1523
    %v3422 = vunpack.c.h.b16 %v1523
    %v3423 = vunpack.c.l.b16 %v1524
    %v3424 = vunpack.c.h.b16 %v1524
    %v3425 = vunpack.c.l.b16 %v1525
    %v3426 = vunpack.c.h.b16 %v1525
    %v3427 = vunpack.c.l.b16 %v1526
    %v3428 = vunpack.c.h.b16 %v1526
    %v3429 = vunpack.c.l.b16 %v1527
    %v3430 = vunpack.c.h.b16 %v1527
    %v3431 = vunpack.c.l.b16 %v1528
    %v3432 = vunpack.c.h.b16 %v1528
    %v3433 = vunpack.c.l.b16 %v1529
    %v3434 = vunpack.c.h.b16 %v1529
    %v3435 = vunpack.c.l.b16 %v1530
    %v3436 = vunpack.c.h.b16 %v1530
    %v3437 = vunpack.c.l.b16 %v1531
    %v3438 = vunpack.c.h.b16 %v1531
    %v3439 = vunpack.c.l.b16 %v1532
    %v3440 = vunpack.c.h.b16 %v1532
    %v3441 = vunpack.c.l.b16 %v1533
    %v3442 = vunpack.c.h.b16 %v1533
    %v3443 = vunpack.c.l.b16 %v1534
    %v3444 = vunpack.c.h.b16 %v1534
    %v3445 = vunpack.c.l.b16 %v1535
    %v3446 = vunpack.c.h.b16 %v1535
    %v3447 = vunpack.c.l.b16 %v1536
    %v3448 = vunpack.c.h.b16 %v1536
    %v3449 = vunpack.c.l.b16 %v1537
    %v3450 = vunpack.c.h.b16 %v1537
    %v3451 = vunpack.c.l.b16 %v1538
    %v3452 = vunpack.c.h.b16 %v1538
    %v3453 = vunpack.c.l.b16 %v1539
    %v3454 = vunpack.c.h.b16 %v1539
    %v3455 = vunpack.c.l.b16 %v1540
    %v3456 = vunpack.c.h.b16 %v1540
    %v3457 = vunpack.c.l.b16 %v1541
    %v3458 = vunpack.c.h.b16 %v1541
    %v3459 = vunpack.c.l.b16 %v1542
    %v3460 = vunpack.c.h.b16 %v1542
    %v3461 = vunpack.c.l.b16 %v1543
    %v3462 = vunpack.c.h.b16 %v1543
    %v3463 = vunpack.c.l.b16 %v1544
    %v3464 = vunpack.c.h.b16 %v1544
    %v3465 = vunpack.c.l.b16 %v1545
    %v3466 = vunpack.c.h.b16 %v1545
    %v3467 = vunpack.c.l.b16 %v1546
    %v3468 = vunpack.c.h.b16 %v1546
    %v3469 = vunpack.c.l.b16 %v1547
    %v3470 = vunpack.c.h.b16 %v1547
    %v3471 = vunpack.c.l.b16 %v1548
    %v3472 = vunpack.c.h.b16 %v1548
    %v3473 = vunpack.c.l.b16 %v1549
    %v3474 = vunpack.c.h.b16 %v1549
    %v3475 = vunpack.c.l.b16 %v1550
    %v3476 = vunpack.c.h.b16 %v1550
    %v3477 = vunpack.c.l.b16 %v1551
    %v3478 = vunpack.c.h.b16 %v1551
    %v3479 = vunpack.c.l.b16 %v1552
    %v3480 = vunpack.c.h.b16 %v1552
    %v3481 = vunpack.c.l.b16 %v1553
    %v3482 = vunpack.c.h.b16 %v1553
    %v3483 = vunpack.c.l.b16 %v1554
    %v3484 = vunpack.c.h.b16 %v1554
    %v3485 = vunpack.c.l.b16 %v1555
    %v3486 = vunpack.c.h.b16 %v1555
    %v3487 = vunpack.c.l.b16 %v1556
    %v3488 = vunpack.c.h.b16 %v1556
    %v3489 = vunpack.c.l.b16 %v1557
    %v3490 = vunpack.c.h.b16 %v1557
    %v3491 = vunpack.c.l.b16 %v1558
    %v3492 = vunpack.c.h.b16 %v1558
    %v3493 = vunpack.c.l.b16 %v1559
    %v3494 = vunpack.c.h.b16 %v1559
    %v3495 = vunpack.c.l.b16 %v1560
    %v3496 = vunpack.c.h.b16 %v1560
    %v3497 = vunpack.c.l.b16 %v1561
    %v3498 = vunpack.c.h.b16 %v1561
    %v3499 = vunpack.c.l.b16 %v1562
    %v3500 = vunpack.c.h.b16 %v1562
    %v3501 = vunpack.c.l.b16 %v1563
    %v3502 = vunpack.c.h.b16 %v1563
    %v3503 = vunpack.c.l.b16 %v1564
    %v3504 = vunpack.c.h.b16 %v1564
    %v3505 = vunpack.c.l.b16 %v1565
    %v3506 = vunpack.c.h.b16 %v1565
    %v3507 = vunpack.c.l.b16 %v1566
    %v3508 = vunpack.c.h.b16 %v1566
    %v3509 = vunpack.c.l.b16 %v1567
    %v3510 = vunpack.c.h.b16 %v1567
    %v3511 = vunpack.c.l.b16 %v1568
    %v3512 = vunpack.c.h.b16 %v1568
    %v3513 = vunpack.c.l.b16 %v1569
    %v3514 = vunpack.c.h.b16 %v1569
    %v3515 = vunpack.c.l.b16 %v1570
    %v3516 = vunpack.c.h.b16 %v1570
    %v3517 = vunpack.c.l.b16 %v1571
    %v3518 = vunpack.c.h.b16 %v1571
    %v3519 = vunpack.c.l.b16 %v1572
    %v3520 = vunpack.c.h.b16 %v1572
    %v3521 = vunpack.c.l.b16 %v1573
    %v3522 = vunpack.c.h.b16 %v1573
    %v3523 = vunpack.c.l.b16 %v1574
    %v3524 = vunpack.c.h.b16 %v1574
    %v3525 = vunpack.c.l.b16 %v1575
    %v3526 = vunpack.c.h.b16 %v1575
    %v3527 = vunpack.c.l.b16 %v1576
    %v3528 = vunpack.c.h.b16 %v1576
    %v3529 = vunpack.c.l.b16 %v1577
    %v3530 = vunpack.c.h.b16 %v1577
    %v3531 = vunpack.c.l.b16 %v1578
    %v3532 = vunpack.c.h.b16 %v1578
    %v3533 = vunpack.c.l.b16 %v1579
    %v3534 = vunpack.c.h.b16 %v1579
    %v3535 = vunpack.c.l.b16 %v1580
    %v3536 = vunpack.c.h.b16 %v1580
    %v3537 = vunpack.c.l.b16 %v1581
    %v3538 = vunpack.c.h.b16 %v1581
    %v3539 = vunpack.c.l.b16 %v1582
    %v3540 = vunpack.c.h.b16 %v1582
    %v3541 = vunpack.c.l.b16 %v1583
    %v3542 = vunpack.c.h.b16 %v1583
    %v3543 = vunpack.c.l.b16 %v1584
    %v3544 = vunpack.c.h.b16 %v1584
    %v3545 = vunpack.c.l.b16 %v1585
    %v3546 = vunpack.c.h.b16 %v1585
    %v3547 = vunpack.c.l.b16 %v1586
    %v3548 = vunpack.c.h.b16 %v1586
    %v3549 = vunpack.c.l.b16 %v1587
    %v3550 = vunpack.c.h.b16 %v1587
    %v3551 = vunpack.c.l.b16 %v1588
    %v3552 = vunpack.c.h.b16 %v1588
    %v3553 = vunpack.c.l.b16 %v1589
    %v3554 = vunpack.c.h.b16 %v1589
    %v3555 = vunpack.c.l.b16 %v1590
    %v3556 = vunpack.c.h.b16 %v1590
    %v3557 = vunpack.c.l.b16 %v1591
    %v3558 = vunpack.c.h.b16 %v1591
    %v3559 = vunpack.c.l.b16 %v1592
    %v3560 = vunpack.c.h.b16 %v1592
    %v3561 = vunpack.c.l.b16 %v1593
    %v3562 = vunpack.c.h.b16 %v1593
    %v3563 = vunpack.c.l.b16 %v1594
    %v3564 = vunpack.c.h.b16 %v1594
    %v3565 = vunpack.c.l.b16 %v1595
    %v3566 = vunpack.c.h.b16 %v1595
    %v3567 = vunpack.c.l.b16 %v1596
    %v3568 = vunpack.c.h.b16 %v1596
    %v3569 = vpack.c.b16 %v2297, %v2289
    %v3570 = vpack.c.b16 %v2298, %v2290
    %v3571 = vpack.c.b16 %v2299, %v2291
    %v3572 = vpack.c.b16 %v2300, %v2292
    %v3573 = vpack.c.b16 %v2301, %v2293
    %v3574 = vpack.c.b16 %v2302, %v2294
    %v3575 = vpack.c.b16 %v2303, %v2295
    %v3576 = vpack.c.b16 %v2304, %v2296
    %v3577 = vpack.c.b16 %v2313, %v2305
    %v3578 = vpack.c.b16 %v2314, %v2306
    %v3579 = vpack.c.b16 %v2315, %v2307
    %v3580 = vpack.c.b16 %v2316, %v2308
    %v3581 = vpack.c.b16 %v2317, %v2309
    %v3582 = vpack.c.b16 %v2318, %v2310
    %v3583 = vpack.c.b16 %v2319, %v2311
    %v3584 = vpack.c.b16 %v2320, %v2312
    %v3585 = vpack.c.b16 %v2329, %v2321
    %v3586 = vpack.c.b16 %v2330, %v2322
    %v3587 = vpack.c.b16 %v2331, %v2323
    %v3588 = vpack.c.b16 %v2332, %v2324
    %v3589 = vpack.c.b16 %v2333, %v2325
    %v3590 = vpack.c.b16 %v2334, %v2326
    %v3591 = vpack.c.b16 %v2335, %v2327
    %v3592 = vpack.c.b16 %v2336, %v2328
    %v3593 = vpack.c.b16 %v2345, %v2337
    %v3594 = vpack.c.b16 %v2346, %v2338
    %v3595 = vpack.c.b16 %v2347, %v2339
    %v3596 = vpack.c.b16 %v2348, %v2340
    %v3597 = vpack.c.b16 %v2349, %v2341
    %v3598 = vpack.c.b16 %v2350, %v2342
    %v3599 = vpack.c.b16 %v2351, %v2343
    %v3600 = vpack.c.b16 %v2352, %v2344
    %v3601 = vpack.c.b16 %v2361, %v2353
    %v3602 = vpack.c.b16 %v2362, %v2354
    %v3603 = vpack.c.b16 %v2363, %v2355
    %v3604 = vpack.c.b16 %v2364, %v2356
    %v3605 = vpack.c.b16 %v2365, %v2357
    %v3606 = vpack.c.b16 %v2366, %v2358
    %v3607 = vpack.c.b16 %v2367, %v2359
    %v3608 = vpack.c.b16 %v2368, %v2360
    %v3609 = vpack.c.b16 %v2377, %v2369
    %v3610 = vpack.c.b16 %v2378, %v2370
    %v3611 = vpack.c.b16 %v2379, %v2371
    %v3612 = vpack.c.b16 %v2380, %v2372
    %v3613 = vpack.c.b16 %v2381, %v2373
    %v3614 = vpack.c.b16 %v2382, %v2374
    %v3615 = vpack.c.b16 %v2383, %v2375
    %v3616 = vpack.c.b16 %v2384, %v2376
    %v3617 = vpack.c.b16 %v2393, %v2385
    %v3618 = vpack.c.b16 %v2394, %v2386
    %v3619 = vpack.c.b16 %v2395, %v2387
    %v3620 = vpack.c.b16 %v2396, %v2388
    %v3621 = vpack.c.b16 %v2397, %v2389
    %v3622 = vpack.c.b16 %v2398, %v2390
    %v3623 = vpack.c.b16 %v2399, %v2391
    %v3624 = vpack.c.b16 %v2400, %v2392
    %v3625 = vpack.c.b16 %v2409, %v2401
    %v3626 = vpack.c.b16 %v2410, %v2402
    %v3627 = vpack.c.b16 %v2411, %v2403
    %v3628 = vpack.c.b16 %v2412, %v2404
    %v3629 = vpack.c.b16 %v2413, %v2405
    %v3630 = vpack.c.b16 %v2414, %v2406
    %v3631 = vpack.c.b16 %v2415, %v2407
    %v3632 = vpack.c.b16 %v2416, %v2408
    %v3633 = vpack.c.b16 %v2425, %v2417
    %v3634 = vpack.c.b16 %v2426, %v2418
    %v3635 = vpack.c.b16 %v2427, %v2419
    %v3636 = vpack.c.b16 %v2428, %v2420
    %v3637 = vpack.c.b16 %v2429, %v2421
    %v3638 = vpack.c.b16 %v2430, %v2422
    %v3639 = vpack.c.b16 %v2431, %v2423
    %v3640 = vpack.c.b16 %v2432, %v2424
    %v3641 = vpack.c.b16 %v2441, %v2433
    %v3642 = vpack.c.b16 %v2442, %v2434
    %v3643 = vpack.c.b16 %v2443, %v2435
    %v3644 = vpack.c.b16 %v2444, %v2436
    %v3645 = vpack.c.b16 %v2445, %v2437
    %v3646 = vpack.c.b16 %v2446, %v2438
    %v3647 = vpack.c.b16 %v2447, %v2439
    %v3648 = vpack.c.b16 %v2448, %v2440
    %v3649 = vpack.c.b16 %v2457, %v2449
    %v3650 = vpack.c.b16 %v2458, %v2450
    %v3651 = vpack.c.b16 %v2459, %v2451
    %v3652 = vpack.c.b16 %v2460, %v2452
    %v3653 = vpack.c.b16 %v2461, %v2453
    %v3654 = vpack.c.b16 %v2462, %v2454
    %v3655 = vpack.c.b16 %v2463, %v2455
    %v3656 = vpack.c.b16 %v2464, %v2456
    %v3657 = vpack.c.b16 %v2473, %v2465
    %v3658 = vpack.c.b16 %v2474, %v2466
    %v3659 = vpack.c.b16 %v2475, %v2467
    %v3660 = vpack.c.b16 %v2476, %v2468
    %v3661 = vpack.c.b16 %v2477, %v2469
    %v3662 = vpack.c.b16 %v2478, %v2470
    %v3663 = vpack.c.b16 %v2479, %v2471
    %v3664 = vpack.c.b16 %v2480, %v2472
    %v3665 = vpack.c.b16 %v2489, %v2481
    %v3666 = vpack.c.b16 %v2490, %v2482
    %v3667 = vpack.c.b16 %v2491, %v2483
    %v3668 = vpack.c.b16 %v2492, %v2484
    %v3669 = vpack.c.b16 %v2493, %v2485
    %v3670 = vpack.c.b16 %v2494, %v2486
    %v3671 = vpack.c.b16 %v2495, %v2487
    %v3672 = vpack.c.b16 %v2496, %v2488
    %v3673 = vpack.c.b16 %v2505, %v2497
    %v3674 = vpack.c.b16 %v2506, %v2498
    %v3675 = vpack.c.b16 %v2507, %v2499
    %v3676 = vpack.c.b16 %v2508, %v2500
    %v3677 = vpack.c.b16 %v2509, %v2501
    %v3678 = vpack.c.b16 %v2510, %v2502
    %v3679 = vpack.c.b16 %v2511, %v2503
    %v3680 = vpack.c.b16 %v2512, %v2504
    %v3681 = vpack.c.b16 %v2521, %v2513
    %v3682 = vpack.c.b16 %v2522, %v2514
    %v3683 = vpack.c.b16 %v2523, %v2515
    %v3684 = vpack.c.b16 %v2524, %v2516
    %v3685 = vpack.c.b16 %v2525, %v2517
    %v3686 = vpack.c.b16 %v2526, %v2518
    %v3687 = vpack.c.b16 %v2527, %v2519
    %v3688 = vpack.c.b16 %v2528, %v2520
    %v3689 = vpack.c.b16 %v2537, %v2529
    %v3690 = vpack.c.b16 %v2538, %v2530
    %v3691 = vpack.c.b16 %v2539, %v2531
    %v3692 = vpack.c.b16 %v2540, %v2532
    %v3693 = vpack.c.b16 %v2541, %v2533
    %v3694 = vpack.c.b16 %v2542, %v2534
    %v3695 = vpack.c.b16 %v2543, %v2535
    %v3696 = vpack.c.b16 %v2544, %v2536
    %v3697 = vpack.c.b16 %v2553, %v2545
    %v3698 = vpack.c.b16 %v2554, %v2546
    %v3699 = vpack.c.b16 %v2555, %v2547
    %v3700 = vpack.c.b16 %v2556, %v2548
    %v3701 = vpack.c.b16 %v2557, %v2549
    %v3702 = vpack.c.b16 %v2558, %v2550
    %v3703 = vpack.c.b16 %v2559, %v2551
    %v3704 = vpack.c.b16 %v2560, %v2552
    %v3705 = vpack.c.b16 %v2569, %v2561
    %v3706 = vpack.c.b16 %v2570, %v2562
    %v3707 = vpack.c.b16 %v2571, %v2563
    %v3708 = vpack.c.b16 %v2572, %v2564
    %v3709 = vpack.c.b16 %v2573, %v2565
    %v3710 = vpack.c.b16 %v2574, %v2566
    %v3711 = vpack.c.b16 %v2575, %v2567
    %v3712 = vpack.c.b16 %v2576, %v2568
    %v3713 = vpack.c.b16 %v2585, %v2577
    %v3714 = vpack.c.b16 %v2586, %v2578
    %v3715 = vpack.c.b16 %v2587, %v2579
    %v3716 = vpack.c.b16 %v2588, %v2580
    %v3717 = vpack.c.b16 %v2589, %v2581
    %v3718 = vpack.c.b16 %v2590, %v2582
    %v3719 = vpack.c.b16 %v2591, %v2583
    %v3720 = vpack.c.b16 %v2592, %v2584
    %v3721 = vpack.c.b16 %v2601, %v2593
    %v3722 = vpack.c.b16 %v2602, %v2594
    %v3723 = vpack.c.b16 %v2603, %v2595
    %v3724 = vpack.c.b16 %v2604, %v2596
    %v3725 = vpack.c.b16 %v2605, %v2597
    %v3726 = vpack.c.b16 %v2606, %v2598
    %v3727 = vpack.c.b16 %v2607, %v2599
    %v3728 = vpack.c.b16 %v2608, %v2600
    %v3729 = vpack.c.b16 %v2617, %v2609
    %v3730 = vpack.c.b16 %v2618, %v2610
    %v3731 = vpack.c.b16 %v2619, %v2611
    %v3732 = vpack.c.b16 %v2620, %v2612
    %v3733 = vpack.c.b16 %v2621, %v2613
    %v3734 = vpack.c.b16 %v2622, %v2614
    %v3735 = vpack.c.b16 %v2623, %v2615
    %v3736 = vpack.c.b16 %v2624, %v2616
    %v3737 = vpack.c.b16 %v2633, %v2625
    %v3738 = vpack.c.b16 %v2634, %v2626
    %v3739 = vpack.c.b16 %v2635, %v2627
    %v3740 = vpack.c.b16 %v2636, %v2628
    %v3741 = vpack.c.b16 %v2637, %v2629
    %v3742 = vpack.c.b16 %v2638, %v2630
    %v3743 = vpack.c.b16 %v2639, %v2631
    %v3744 = vpack.c.b16 %v2640, %v2632
    %v3745 = vpack.c.b16 %v2649, %v2641
    %v3746 = vpack.c.b16 %v2650, %v2642
    %v3747 = vpack.c.b16 %v2651, %v2643
    %v3748 = vpack.c.b16 %v2652, %v2644
    %v3749 = vpack.c.b16 %v2653, %v2645
    %v3750 = vpack.c.b16 %v2654, %v2646
    %v3751 = vpack.c.b16 %v2655, %v2647
    %v3752 = vpack.c.b16 %v2656, %v2648
    %v3753 = vpack.c.b16 %v2665, %v2657
    %v3754 = vpack.c.b16 %v2666, %v2658
    %v3755 = vpack.c.b16 %v2667, %v2659
    %v3756 = vpack.c.b16 %v2668, %v2660
    %v3757 = vpack.c.b16 %v2669, %v2661
    %v3758 = vpack.c.b16 %v2670, %v2662
    %v3759 = vpack.c.b16 %v2671, %v2663
    %v3760 = vpack.c.b16 %v2672, %v2664
    %v3761 = vpack.c.b16 %v2681, %v2673
    %v3762 = vpack.c.b16 %v2682, %v2674
    %v3763 = vpack.c.b16 %v2683, %v2675
    %v3764 = vpack.c.b16 %v2684, %v2676
    %v3765 = vpack.c.b16 %v2685, %v2677
    %v3766 = vpack.c.b16 %v2686, %v2678
    %v3767 = vpack.c.b16 %v2687, %v2679
    %v3768 = vpack.c.b16 %v2688, %v2680
    %v3769 = vpack.c.b16 %v2697, %v2689
    %v3770 = vpack.c.b16 %v2698, %v2690
    %v3771 = vpack.c.b16 %v2699, %v2691
    %v3772 = vpack.c.b16 %v2700, %v2692
    %v3773 = vpack.c.b16 %v2701, %v2693
    %v3774 = vpack.c.b16 %v2702, %v2694
    %v3775 = vpack.c.b16 %v2703, %v2695
    %v3776 = vpack.c.b16 %v2704, %v2696
    %v3777 = vpack.c.b16 %v2713, %v2705
    %v3778 = vpack.c.b16 %v2714, %v2706
    %v3779 = vpack.c.b16 %v2715, %v2707
    %v3780 = vpack.c.b16 %v2716, %v2708
    %v3781 = vpack.c.b16 %v2717, %v2709
    %v3782 = vpack.c.b16 %v2718, %v2710
    %v3783 = vpack.c.b16 %v2719, %v2711
    %v3784 = vpack.c.b16 %v2720, %v2712
    %v3785 = vpack.c.b16 %v2729, %v2721
    %v3786 = vpack.c.b16 %v2730, %v2722
    %v3787 = vpack.c.b16 %v2731, %v2723
    %v3788 = vpack.c.b16 %v2732, %v2724
    %v3789 = vpack.c.b16 %v2733, %v2725
    %v3790 = vpack.c.b16 %v2734, %v2726
    %v3791 = vpack.c.b16 %v2735, %v2727
    %v3792 = vpack.c.b16 %v2736, %v2728
    %v3793 = vpack.c.b16 %v2745, %v2737
    %v3794 = vpack.c.b16 %v2746, %v2738
    %v3795 = vpack.c.b16 %v2747, %v2739
    %v3796 = vpack.c.b16 %v2748, %v2740
    %v3797 = vpack.c.b16 %v2749, %v2741
    %v3798 = vpack.c.b16 %v2750, %v2742
    %v3799 = vpack.c.b16 %v2751, %v2743
    %v3800 = vpack.c.b16 %v2752, %v2744
    %v3801 = vpack.c.b16 %v2761, %v2753
    %v3802 = vpack.c.b16 %v2762, %v2754
    %v3803 = vpack.c.b16 %v2763, %v2755
    %v3804 = vpack.c.b16 %v2764, %v2756
    %v3805 = vpack.c.b16 %v2765, %v2757
    %v3806 = vpack.c.b16 %v2766, %v2758
    %v3807 = vpack.c.b16 %v2767, %v2759
    %v3808 = vpack.c.b16 %v2768, %v2760
    %v3809 = vpack.c.b16 %v2777, %v2769
    %v3810 = vpack.c.b16 %v2778, %v2770
    %v3811 = vpack.c.b16 %v2779, %v2771
    %v3812 = vpack.c.b16 %v2780, %v2772
    %v3813 = vpack.c.b16 %v2781, %v2773
    %v3814 = vpack.c.b16 %v2782, %v2774
    %v3815 = vpack.c.b16 %v2783, %v2775
    %v3816 = vpack.c.b16 %v2784, %v2776
    %v3817 = vpack.c.b16 %v2793, %v2785
    %v3818 = vpack.c.b16 %v2794, %v2786
    %v3819 = vpack.c.b16 %v2795, %v2787
    %v3820 = vpack.c.b16 %v2796, %v2788
    %v3821 = vpack.c.b16 %v2797, %v2789
    %v3822 = vpack.c.b16 %v2798, %v2790
    %v3823 = vpack.c.b16 %v2799, %v2791
    %v3824 = vpack.c.b16 %v2800, %v2792
    %v3825 = vpack.c.b16 %v2809, %v2801
    %v3826 = vpack.c.b16 %v2810, %v2802
    %v3827 = vpack.c.b16 %v2811, %v2803
    %v3828 = vpack.c.b16 %v2812, %v2804
    %v3829 = vpack.c.b16 %v2813, %v2805
    %v3830 = vpack.c.b16 %v2814, %v2806
    %v3831 = vpack.c.b16 %v2815, %v2807
    %v3832 = vpack.c.b16 %v2816, %v2808
    %v3833 = vpack.c.b16 %v2825, %v2817
    %v3834 = vpack.c.b16 %v2826, %v2818
    %v3835 = vpack.c.b16 %v2827, %v2819
    %v3836 = vpack.c.b16 %v2828, %v2820
    %v3837 = vpack.c.b16 %v2829, %v2821
    %v3838 = vpack.c.b16 %v2830, %v2822
    %v3839 = vpack.c.b16 %v2831, %v2823
    %v3840 = vpack.c.b16 %v2832, %v2824
    %v3841 = vpack.c.b16 %v2841, %v2833
    %v3842 = vpack.c.b16 %v2842, %v2834
    %v3843 = vpack.c.b16 %v2843, %v2835
    %v3844 = vpack.c.b16 %v2844, %v2836
    %v3845 = vpack.c.b16 %v2845, %v2837
    %v3846 = vpack.c.b16 %v2846, %v2838
    %v3847 = vpack.c.b16 %v2847, %v2839
    %v3848 = vpack.c.b16 %v2848, %v2840
    %v3849 = vpack.c.b16 %v2857, %v2849
    %v3850 = vpack.c.b16 %v2858, %v2850
    %v3851 = vpack.c.b16 %v2859, %v2851
    %v3852 = vpack.c.b16 %v2860, %v2852
    %v3853 = vpack.c.b16 %v2861, %v2853
    %v3854 = vpack.c.b16 %v2862, %v2854
    %v3855 = vpack.c.b16 %v2863, %v2855
    %v3856 = vpack.c.b16 %v2864, %v2856
    %v3857 = vpack.c.b16 %v2873, %v2865
    %v3858 = vpack.c.b16 %v2874, %v2866
    %v3859 = vpack.c.b16 %v2875, %v2867
    %v3860 = vpack.c.b16 %v2876, %v2868
    %v3861 = vpack.c.b16 %v2877, %v2869
    %v3862 = vpack.c.b16 %v2878, %v2870
    %v3863 = vpack.c.b16 %v2879, %v2871
    %v3864 = vpack.c.b16 %v2880, %v2872
    %v3865 = vpack.c.b16 %v2889, %v2881
    %v3866 = vpack.c.b16 %v2890, %v2882
    %v3867 = vpack.c.b16 %v2891, %v2883
    %v3868 = vpack.c.b16 %v2892, %v2884
    %v3869 = vpack.c.b16 %v2893, %v2885
    %v3870 = vpack.c.b16 %v2894, %v2886
    %v3871 = vpack.c.b16 %v2895, %v2887
    %v3872 = vpack.c.b16 %v2896, %v2888
    %v3873 = vpack.c.b16 %v2905, %v2897
    %v3874 = vpack.c.b16 %v2906, %v2898
    %v3875 = vpack.c.b16 %v2907, %v2899
    %v3876 = vpack.c.b16 %v2908, %v2900
    %v3877 = vpack.c.b16 %v2909, %v2901
    %v3878 = vpack.c.b16 %v2910, %v2902
    %v3879 = vpack.c.b16 %v2911, %v2903
    %v3880 = vpack.c.b16 %v2912, %v2904
    %v3881 = vpack.c.b16 %v2921, %v2913
    %v3882 = vpack.c.b16 %v2922, %v2914
    %v3883 = vpack.c.b16 %v2923, %v2915
    %v3884 = vpack.c.b16 %v2924, %v2916
    %v3885 = vpack.c.b16 %v2925, %v2917
    %v3886 = vpack.c.b16 %v2926, %v2918
    %v3887 = vpack.c.b16 %v2927, %v2919
    %v3888 = vpack.c.b16 %v2928, %v2920
    %v3889 = vpack.c.b16 %v2937, %v2929
    %v3890 = vpack.c.b16 %v2938, %v2930
    %v3891 = vpack.c.b16 %v2939, %v2931
    %v3892 = vpack.c.b16 %v2940, %v2932
    %v3893 = vpack.c.b16 %v2941, %v2933
    %v3894 = vpack.c.b16 %v2942, %v2934
    %v3895 = vpack.c.b16 %v2943, %v2935
    %v3896 = vpack.c.b16 %v2944, %v2936
    %v3897 = vpack.c.b16 %v2953, %v2945
    %v3898 = vpack.c.b16 %v2954, %v2946
    %v3899 = vpack.c.b16 %v2955, %v2947
    %v3900 = vpack.c.b16 %v2956, %v2948
    %v3901 = vpack.c.b16 %v2957, %v2949
    %v3902 = vpack.c.b16 %v2958, %v2950
    %v3903 = vpack.c.b16 %v2959, %v2951
    %v3904 = vpack.c.b16 %v2960, %v2952
    %v3905 = vpack.c.b16 %v2969, %v2961
    %v3906 = vpack.c.b16 %v2970, %v2962
    %v3907 = vpack.c.b16 %v2971, %v2963
    %v3908 = vpack.c.b16 %v2972, %v2964
    %v3909 = vpack.c.b16 %v2973, %v2965
    %v3910 = vpack.c.b16 %v2974, %v2966
    %v3911 = vpack.c.b16 %v2975, %v2967
    %v3912 = vpack.c.b16 %v2976, %v2968
    %v3913 = vpack.c.b16 %v2985, %v2977
    %v3914 = vpack.c.b16 %v2986, %v2978
    %v3915 = vpack.c.b16 %v2987, %v2979
    %v3916 = vpack.c.b16 %v2988, %v2980
    %v3917 = vpack.c.b16 %v2989, %v2981
    %v3918 = vpack.c.b16 %v2990, %v2982
    %v3919 = vpack.c.b16 %v2991, %v2983
    %v3920 = vpack.c.b16 %v2992, %v2984
    %v3921 = vpack.c.b16 %v3001, %v2993
    %v3922 = vpack.c.b16 %v3002, %v2994
    %v3923 = vpack.c.b16 %v3003, %v2995
    %v3924 = vpack.c.b16 %v3004, %v2996
    %v3925 = vpack.c.b16 %v3005, %v2997
    %v3926 = vpack.c.b16 %v3006, %v2998
    %v3927 = vpack.c.b16 %v3007, %v2999
    %v3928 = vpack.c.b16 %v3008, %v3000
    %v3929 = vpack.c.b16 %v3017, %v3009
    %v3930 = vpack.c.b16 %v3018, %v3010
    %v3931 = vpack.c.b16 %v3019, %v3011
    %v3932 = vpack.c.b16 %v3020, %v3012
    %v3933 = vpack.c.b16 %v3021, %v3013
    %v3934 = vpack.c.b16 %v3022, %v3014
    %v3935 = vpack.c.b16 %v3023, %v3015
    %v3936 = vpack.c.b16 %v3024, %v3016
    %v3937 = vpack.c.b16 %v3033, %v3025
    %v3938 = vpack.c.b16 %v3034, %v3026
    %v3939 = vpack.c.b16 %v3035, %v3027
    %v3940 = vpack.c.b16 %v3036, %v3028
    %v3941 = vpack.c.b16 %v3037, %v3029
    %v3942 = vpack.c.b16 %v3038, %v3030
    %v3943 = vpack.c.b16 %v3039, %v3031
    %v3944 = vpack.c.b16 %v3040, %v3032
    %v3945 = vpack.c.b16 %v3049, %v3041
    %v3946 = vpack.c.b16 %v3050, %v3042
    %v3947 = vpack.c.b16 %v3051, %v3043
    %v3948 = vpack.c.b16 %v3052, %v3044
    %v3949 = vpack.c.b16 %v3053, %v3045
    %v3950 = vpack.c.b16 %v3054, %v3046
    %v3951 = vpack.c.b16 %v3055, %v3047
    %v3952 = vpack.c.b16 %v3056, %v3048
    %v3953 = vpack.c.b16 %v3065, %v3057
    %v3954 = vpack.c.b16 %v3066, %v3058
    %v3955 = vpack.c.b16 %v3067, %v3059
    %v3956 = vpack.c.b16 %v3068, %v3060
    %v3957 = vpack.c.b16 %v3069, %v3061
    %v3958 = vpack.c.b16 %v3070, %v3062
    %v3959 = vpack.c.b16 %v3071, %v3063
    %v3960 = vpack.c.b16 %v3072, %v3064
    %v3961 = vpack.c.b16 %v3081, %v3073
    %v3962 = vpack.c.b16 %v3082, %v3074
    %v3963 = vpack.c.b16 %v3083, %v3075
    %v3964 = vpack.c.b16 %v3084, %v3076
    %v3965 = vpack.c.b16 %v3085, %v3077
    %v3966 = vpack.c.b16 %v3086, %v3078
    %v3967 = vpack.c.b16 %v3087, %v3079
    %v3968 = vpack.c.b16 %v3088, %v3080
    %v3969 = vpack.c.b16 %v3097, %v3089
    %v3970 = vpack.c.b16 %v3098, %v3090
    %v3971 = vpack.c.b16 %v3099, %v3091
    %v3972 = vpack.c.b16 %v3100, %v3092
    %v3973 = vpack.c.b16 %v3101, %v3093
    %v3974 = vpack.c.b16 %v3102, %v3094
    %v3975 = vpack.c.b16 %v3103, %v3095
    %v3976 = vpack.c.b16 %v3104, %v3096
    %v3977 = vpack.c.b16 %v3113, %v3105
    %v3978 = vpack.c.b16 %v3114, %v3106
    %v3979 = vpack.c.b16 %v3115, %v3107
    %v3980 = vpack.c.b16 %v3116, %v3108
    %v3981 = vpack.c.b16 %v3117, %v3109
    %v3982 = vpack.c.b16 %v3118, %v3110
    %v3983 = vpack.c.b16 %v3119, %v3111
    %v3984 = vpack.c.b16 %v3120, %v3112
    %v3985 = vpack.c.b16 %v3129, %v3121
    %v3986 = vpack.c.b16 %v3130, %v3122
    %v3987 = vpack.c.b16 %v3131, %v3123
    %v3988 = vpack.c.b16 %v3132, %v3124
    %v3989 = vpack.c.b16 %v3133, %v3125
    %v3990 = vpack.c.b16 %v3134, %v3126
    %v3991 = vpack.c.b16 %v3135, %v3127
    %v3992 = vpack.c.b16 %v3136, %v3128
    %v3993 = vpack.c.b16 %v3145, %v3137
    %v3994 = vpack.c.b16 %v3146, %v3138
    %v3995 = vpack.c.b16 %v3147, %v3139
    %v3996 = vpack.c.b16 %v3148, %v3140
    %v3997 = vpack.c.b16 %v3149, %v3141
    %v3998 = vpack.c.b16 %v3150, %v3142
    %v3999 = vpack.c.b16 %v3151, %v3143
    %v4000 = vpack.c.b16 %v3152, %v3144
    %v4001 = vpack.c.b16 %v3161, %v3153
    %v4002 = vpack.c.b16 %v3162, %v3154
    %v4003 = vpack.c.b16 %v3163, %v3155
    %v4004 = vpack.c.b16 %v3164, %v3156
    %v4005 = vpack.c.b16 %v3165, %v3157
    %v4006 = vpack.c.b16 %v3166, %v3158
    %v4007 = vpack.c.b16 %v3167, %v3159
    %v4008 = vpack.c.b16 %v3168, %v3160
    %v4009 = vpack.c.b16 %v3177, %v3169
    %v4010 = vpack.c.b16 %v3178, %v3170
    %v4011 = vpack.c.b16 %v3179, %v3171
    %v4012 = vpack.c.b16 %v3180, %v3172
    %v4013 = vpack.c.b16 %v3181, %v3173
    %v4014 = vpack.c.b16 %v3182, %v3174
    %v4015 = vpack.c.b16 %v3183, %v3175
    %v4016 = vpack.c.b16 %v3184, %v3176
    %v4017 = vpack.c.b16 %v3193, %v3185
    %v4018 = vpack.c.b16 %v3194, %v3186
    %v4019 = vpack.c.b16 %v3195, %v3187
    %v4020 = vpack.c.b16 %v3196, %v3188
    %v4021 = vpack.c.b16 %v3197, %v3189
    %v4022 = vpack.c.b16 %v3198, %v3190
    %v4023 = vpack.c.b16 %v3199, %v3191
    %v4024 = vpack.c.b16 %v3200, %v3192
    %v4025 = vpack.c.b16 %v3209, %v3201
    %v4026 = vpack.c.b16 %v3210, %v3202
    %v4027 = vpack.c.b16 %v3211, %v3203
    %v4028 = vpack.c.b16 %v3212, %v3204
    %v4029 = vpack.c.b16 %v3213, %v3205
    %v4030 = vpack.c.b16 %v3214, %v3206
    %v4031 = vpack.c.b16 %v3215, %v3207
    %v4032 = vpack.c.b16 %v3216, %v3208
    %v4033 = vpack.c.b16 %v3225, %v3217
    %v4034 = vpack.c.b16 %v3226, %v3218
    %v4035 = vpack.c.b16 %v3227, %v3219
    %v4036 = vpack.c.b16 %v3228, %v3220
    %v4037 = vpack.c.b16 %v3229, %v3221
    %v4038 = vpack.c.b16 %v3230, %v3222
    %v4039 = vpack.c.b16 %v3231, %v3223
    %v4040 = vpack.c.b16 %v3232, %v3224
    %v4041 = vpack.c.b16 %v3241, %v3233
    %v4042 = vpack.c.b16 %v3242, %v3234
    %v4043 = vpack.c.b16 %v3243, %v3235
    %v4044 = vpack.c.b16 %v3244, %v3236
    %v4045 = vpack.c.b16 %v3245, %v3237
    %v4046 = vpack.c.b16 %v3246, %v3238
    %v4047 = vpack.c.b16 %v3247, %v3239
    %v4048 = vpack.c.b16 %v3248, %v3240
    %v4049 = vpack.c.b16 %v3257, %v3249
    %v4050 = vpack.c.b16 %v3258, %v3250
    %v4051 = vpack.c.b16 %v3259, %v3251
    %v4052 = vpack.c.b16 %v3260, %v3252
    %v4053 = vpack.c.b16 %v3261, %v3253
    %v4054 = vpack.c.b16 %v3262, %v3254
    %v4055 = vpack.c.b16 %v3263, %v3255
    %v4056 = vpack.c.b16 %v3264, %v3256
    %v4057 = vpack.c.b16 %v3273, %v3265
    %v4058 = vpack.c.b16 %v3274, %v3266
    %v4059 = vpack.c.b16 %v3275, %v3267
    %v4060 = vpack.c.b16 %v3276, %v3268
    %v4061 = vpack.c.b16 %v3277, %v3269
    %v4062 = vpack.c.b16 %v3278, %v3270
    %v4063 = vpack.c.b16 %v3279, %v3271
    %v4064 = vpack.c.b16 %v3280, %v3272
    %v4065 = vpack.c.b16 %v3289, %v3281
    %v4066 = vpack.c.b16 %v3290, %v3282
    %v4067 = vpack.c.b16 %v3291, %v3283
    %v4068 = vpack.c.b16 %v3292, %v3284
    %v4069 = vpack.c.b16 %v3293, %v3285
    %v4070 = vpack.c.b16 %v3294, %v3286
    %v4071 = vpack.c.b16 %v3295, %v3287
    %v4072 = vpack.c.b16 %v3296, %v3288
    %v4073 = vpack.c.b16 %v3305, %v3297
    %v4074 = vpack.c.b16 %v3306, %v3298
    %v4075 = vpack.c.b16 %v3307, %v3299
    %v4076 = vpack.c.b16 %v3308, %v3300
    %v4077 = vpack.c.b16 %v3309, %v3301
    %v4078 = vpack.c.b16 %v3310, %v3302
    %v4079 = vpack.c.b16 %v3311, %v3303
    %v4080 = vpack.c.b16 %v3312, %v3304
    %v4081 = vpack.c.b16 %v3321, %v3313
    %v4082 = vpack.c.b16 %v3322, %v3314
    %v4083 = vpack.c.b16 %v3323, %v3315
    %v4084 = vpack.c.b16 %v3324, %v3316
    %v4085 = vpack.c.b16 %v3325, %v3317
    %v4086 = vpack.c.b16 %v3326, %v3318
    %v4087 = vpack.c.b16 %v3327, %v3319
    %v4088 = vpack.c.b16 %v3328, %v3320
    %v4089 = vpack.c.b16 %v3337, %v3329
    %v4090 = vpack.c.b16 %v3338, %v3330
    %v4091 = vpack.c.b16 %v3339, %v3331
    %v4092 = vpack.c.b16 %v3340, %v3332
    %v4093 = vpack.c.b16 %v3341, %v3333
    %v4094 = vpack.c.b16 %v3342, %v3334
    %v4095 = vpack.c.b16 %v3343, %v3335
    %v4096 = vpack.c.b16 %v3344, %v3336
    %v4097 = vpack.c.b16 %v3353, %v3345
    %v4098 = vpack.c.b16 %v3354, %v3346
    %v4099 = vpack.c.b16 %v3355, %v3347
    %v4100 = vpack.c.b16 %v3356, %v3348
    %v4101 = vpack.c.b16 %v3357, %v3349
    %v4102 = vpack.c.b16 %v3358, %v3350
    %v4103 = vpack.c.b16 %v3359, %v3351
    %v4104 = vpack.c.b16 %v3360, %v3352
    %v4105 = vpack.c.b16 %v3369, %v3361
    %v4106 = vpack.c.b16 %v3370, %v3362
    %v4107 = vpack.c.b16 %v3371, %v3363
    %v4108 = vpack.c.b16 %v3372, %v3364
    %v4109 = vpack.c.b16 %v3373, %v3365
    %v4110 = vpack.c.b16 %v3374, %v3366
    %v4111 = vpack.c.b16 %v3375, %v3367
    %v4112 = vpack.c.b16 %v3376, %v3368
    %v4113 = vpack.c.b16 %v3385, %v3377
    %v4114 = vpack.c.b16 %v3386, %v3378
    %v4115 = vpack.c.b16 %v3387, %v3379
    %v4116 = vpack.c.b16 %v3388, %v3380
    %v4117 = vpack.c.b16 %v3389, %v3381
    %v4118 = vpack.c.b16 %v3390, %v3382
    %v4119 = vpack.c.b16 %v3391, %v3383
    %v4120 = vpack.c.b16 %v3392, %v3384
    %v4121 = vpack.c.b16 %v3401, %v3393
    %v4122 = vpack.c.b16 %v3402, %v3394
    %v4123 = vpack.c.b16 %v3403, %v3395
    %v4124 = vpack.c.b16 %v3404, %v3396
    %v4125 = vpack.c.b16 %v3405, %v3397
    %v4126 = vpack.c.b16 %v3406, %v3398
    %v4127 = vpack.c.b16 %v3407, %v3399
    %v4128 = vpack.c.b16 %v3408, %v3400
    %v4129 = vpack.c.b16 %v3417, %v3409
    %v4130 = vpack.c.b16 %v3418, %v3410
    %v4131 = vpack.c.b16 %v3419, %v3411
    %v4132 = vpack.c.b16 %v3420, %v3412
    %v4133 = vpack.c.b16 %v3421, %v3413
    %v4134 = vpack.c.b16 %v3422, %v3414
    %v4135 = vpack.c.b16 %v3423, %v3415
    %v4136 = vpack.c.b16 %v3424, %v3416
    %v4137 = vpack.c.b16 %v3433, %v3425
    %v4138 = vpack.c.b16 %v3434, %v3426
    %v4139 = vpack.c.b16 %v3435, %v3427
    %v4140 = vpack.c.b16 %v3436, %v3428
    %v4141 = vpack.c.b16 %v3437, %v3429
    %v4142 = vpack.c.b16 %v3438, %v3430
    %v4143 = vpack.c.b16 %v3439, %v3431
    %v4144 = vpack.c.b16 %v3440, %v3432
    %v4145 = vpack.c.b16 %v3449, %v3441
    %v4146 = vpack.c.b16 %v3450, %v3442
    %v4147 = vpack.c.b16 %v3451, %v3443
    %v4148 = vpack.c.b16 %v3452, %v3444
    %v4149 = vpack.c.b16 %v3453, %v3445
    %v4150 = vpack.c.b16 %v3454, %v3446
    %v4151 = vpack.c.b16 %v3455, %v3447
    %v4152 = vpack.c.b16 %v3456, %v3448
    %v4153 = vpack.c.b16 %v3465, %v3457
    %v4154 = vpack.c.b16 %v3466, %v3458
    %v4155 = vpack.c.b16 %v3467, %v3459
    %v4156 = vpack.c.b16 %v3468, %v3460
    %v4157 = vpack.c.b16 %v3469, %v3461
    %v4158 = vpack.c.b16 %v3470, %v3462
    %v4159 = vpack.c.b16 %v3471, %v3463
    %v4160 = vpack.c.b16 %v3472, %v3464
    %v4161 = vpack.c.b16 %v3481, %v3473
    %v4162 = vpack.c.b16 %v3482, %v3474
    %v4163 = vpack.c.b16 %v3483, %v3475
    %v4164 = vpack.c.b16 %v3484, %v3476
    %v4165 = vpack.c.b16 %v3485, %v3477
    %v4166 = vpack.c.b16 %v3486, %v3478
    %v4167 = vpack.c.b16 %v3487, %v3479
    %v4168 = vpack.c.b16 %v3488, %v3480
    %v4169 = vpack.c.b16 %v3497, %v3489
    %v4170 = vpack.c.b16 %v3498, %v3490
    %v4171 = vpack.c.b16 %v3499, %v3491
    %v4172 = vpack.c.b16 %v3500, %v3492
    %v4173 = vpack.c.b16 %v3501, %v3493
    %v4174 = vpack.c.b16 %v3502, %v3494
    %v4175 = vpack.c.b16 %v3503, %v3495
    %v4176 = vpack.c.b16 %v3504, %v3496
    %v4177 = vpack.c.b16 %v3513, %v3505
    %v4178 = vpack.c.b16 %v3514, %v3506
    %v4179 = vpack.c.b16 %v3515, %v3507
    %v4180 = vpack.c.b16 %v3516, %v3508
    %v4181 = vpack.c.b16 %v3517, %v3509
    %v4182 = vpack.c.b16 %v3518, %v3510
    %v4183 = vpack.c.b16 %v3519, %v3511
    %v4184 = vpack.c.b16 %v3520, %v3512
    %v4185 = vpack.c.b16 %v3529, %v3521
    %v4186 = vpack.c.b16 %v3530, %v3522
    %v4187 = vpack.c.b16 %v3531, %v3523
    %v4188 = vpack.c.b16 %v3532, %v3524
    %v4189 = vpack.c.b16 %v3533, %v3525
    %v4190 = vpack.c.b16 %v3534, %v3526
    %v4191 = vpack.c.b16 %v3535, %v3527
    %v4192 = vpack.c.b16 %v3536, %v3528
    %v4193 = vpack.c.b16 %v3545, %v3537
    %v4194 = vpack.c.b16 %v3546, %v3538
    %v4195 = vpack.c.b16 %v3547, %v3539
    %v4196 = vpack.c.b16 %v3548, %v3540
    %v4197 = vpack.c.b16 %v3549, %v3541
    %v4198 = vpack.c.b16 %v3550, %v3542
    %v4199 = vpack.c.b16 %v3551, %v3543
    %v4200 = vpack.c.b16 %v3552, %v3544
    %v4201 = vpack.c.b16 %v3561, %v3553
    %v4202 = vpack.c.b16 %v3562, %v3554
    %v4203 = vpack.c.b16 %v3563, %v3555
    %v4204 = vpack.c.b16 %v3564, %v3556
    %v4205 = vpack.c.b16 %v3565, %v3557
    %v4206 = vpack.c.b16 %v3566, %v3558
    %v4207 = vpack.c.b16 %v3567, %v3559
    %v4208 = vpack.c.b16 %v3568, %v3560
    %4849 = vmatprep.subr.bf16.mxu0 %v3570
    %4850 = vmatpush1.bf16.msra.mxu0 %v3569
    %4851 = vmatprep.subr.bf16.mxu0 %v3578
    %4852 = vmatpush1.bf16.msra.mxu0 %v3577
    %4853 = vmatprep.subr.bf16.mxu0 %v3586
    %4854 = vmatpush1.bf16.msra.mxu0 %v3585
    %4855 = vmatprep.subr.bf16.mxu0 %v3594
    %4856 = vmatpush1.bf16.msra.mxu0 %v3593
    %4857 = vmatprep.subr.bf16.mxu0 %v3602
    %4858 = vmatpush1.bf16.msra.mxu0 %v3601
    %4859 = vmatprep.subr.bf16.mxu0 %v3610
    %4860 = vmatpush1.bf16.msra.mxu0 %v3609
    %4861 = vmatprep.subr.bf16.mxu0 %v3618
    %4862 = vmatpush1.bf16.msra.mxu0 %v3617
    %4863 = vmatprep.subr.bf16.mxu0 %v3626
    %4864 = vmatpush1.bf16.msra.mxu0 %v3625
    %4865 = vmatprep.subr.bf16.mxu0 %v3634
    %4866 = vmatpush1.bf16.msra.mxu0 %v3633
    %4867 = vmatprep.subr.bf16.mxu0 %v3642
    %4868 = vmatpush1.bf16.msra.mxu0 %v3641
    %4869 = vmatprep.subr.bf16.mxu0 %v3650
    %4870 = vmatpush1.bf16.msra.mxu0 %v3649
    %4871 = vmatprep.subr.bf16.mxu0 %v3658
    %4872 = vmatpush1.bf16.msra.mxu0 %v3657
    %4873 = vmatprep.subr.bf16.mxu0 %v3666
    %4874 = vmatpush1.bf16.msra.mxu0 %v3665
    %4875 = vmatprep.subr.bf16.mxu0 %v3674
    %4876 = vmatpush1.bf16.msra.mxu0 %v3673
    %4877 = vmatprep.subr.bf16.mxu0 %v3682
    %4878 = vmatpush1.bf16.msra.mxu0 %v3681
    %4879 = vmatprep.subr.bf16.mxu0 %v3690
    %4880 = vmatpush1.bf16.msra.mxu0 %v3689
    %4881 = vmatprep.mubr.bf16.mxu0 %v1599
    %4882 = vmatmul.mubr.bf16.gmra.mrb[0].mxu0 %v1598
    %v4883 = vpop.f32.mrb[0].mxu0
    %v4884 = vadd.f32 %v1612, %v4883
    %v4885 = vpop.f32.mrb[0].mxu0
    %v4886 = vadd.f32 %v1616, %v4885
    %v4887 = vpop.f32.mrb[0].mxu0
    %v4888 = vpop.f32.mrb[0].mxu0
    %4889 = vdwg.mxu0
    %4890 = vmatprep.subr.bf16.mxu0 %v3698
    %4891 = vmatpush1.bf16.msra.mxu0 %v3697
    %4892 = vmatprep.subr.bf16.mxu0 %v3706
    %4893 = vmatpush1.bf16.msra.mxu0 %v3705
    %4894 = vmatprep.subr.bf16.mxu0 %v3714
    %4895 = vmatpush1.bf16.msra.mxu0 %v3713
    %4896 = vmatprep.subr.bf16.mxu0 %v3722
    %4897 = vmatpush1.bf16.msra.mxu0 %v3721
    %4898 = vmatprep.subr.bf16.mxu0 %v3730
    %4899 = vmatpush1.bf16.msra.mxu0 %v3729
    %4900 = vmatprep.subr.bf16.mxu0 %v3738
    %4901 = vmatpush1.bf16.msra.mxu0 %v3737
    %4902 = vmatprep.subr.bf16.mxu0 %v3746
    %4903 = vmatpush1.bf16.msra.mxu0 %v3745
    %4904 = vmatprep.subr.bf16.mxu0 %v3754
    %4905 = vmatpush1.bf16.msra.mxu0 %v3753
    %4906 = vmatprep.subr.bf16.mxu0 %v3762
    %4907 = vmatpush1.bf16.msra.mxu0 %v3761
    %4908 = vmatprep.subr.bf16.mxu0 %v3770
    %4909 = vmatpush1.bf16.msra.mxu0 %v3769
    %4910 = vmatprep.subr.bf16.mxu0 %v3778
    %4911 = vmatpush1.bf16.msra.mxu0 %v3777
    %4912 = vmatprep.subr.bf16.mxu0 %v3786
    %4913 = vmatpush1.bf16.msra.mxu0 %v3785
    %4914 = vmatprep.subr.bf16.mxu0 %v3794
    %4915 = vmatpush1.bf16.msra.mxu0 %v3793
    %4916 = vmatprep.subr.bf16.mxu0 %v3802
    %4917 = vmatpush1.bf16.msra.mxu0 %v3801
    %4918 = vmatprep.subr.bf16.mxu0 %v3810
    %4919 = vmatpush1.bf16.msra.mxu0 %v3809
    %4920 = vmatprep.subr.bf16.mxu0 %v3818
    %4921 = vmatpush1.bf16.msra.mxu0 %v3817
    %4922 = vmatprep.mubr.bf16.mxu0 %v1601
    %4923 = vmatmul.mubr.bf16.gmra.mrb[0].mxu0 %v1600
    %v4924 = vpop.f32.mrb[0].mxu0
    %v4925 = vadd.f32 %v4884, %v4924
    %v4926 = vpop.f32.mrb[0].mxu0
    %v4927 = vadd.f32 %v4886, %v4926
    %v4928 = vpop.f32.mrb[0].mxu0
    %v4929 = vpop.f32.mrb[0].mxu0
    %4930 = vdwg.mxu0
    %4931 = vmatprep.subr.bf16.mxu0 %v3826
    %4932 = vmatpush1.bf16.msra.mxu0 %v3825
    %4933 = vmatprep.subr.bf16.mxu0 %v3834
    %4934 = vmatpush1.bf16.msra.mxu0 %v3833
    %4935 = vmatprep.subr.bf16.mxu0 %v3842
    %4936 = vmatpush1.bf16.msra.mxu0 %v3841
    %4937 = vmatprep.subr.bf16.mxu0 %v3850
    %4938 = vmatpush1.bf16.msra.mxu0 %v3849
    %4939 = vmatprep.subr.bf16.mxu0 %v3858
    %4940 = vmatpush1.bf16.msra.mxu0 %v3857
    %4941 = vmatprep.subr.bf16.mxu0 %v3866
    %4942 = vmatpush1.bf16.msra.mxu0 %v3865
    %4943 = vmatprep.subr.bf16.mxu0 %v3874
    %4944 = vmatpush1.bf16.msra.mxu0 %v3873
    %4945 = vmatprep.subr.bf16.mxu0 %v3882
    %4946 = vmatpush1.bf16.msra.mxu0 %v3881
    %4947 = vmatprep.subr.bf16.mxu0 %v3890
    %4948 = vmatpush1.bf16.msra.mxu0 %v3889
    %4949 = vmatprep.subr.bf16.mxu0 %v3898
    %4950 = vmatpush1.bf16.msra.mxu0 %v3897
    %4951 = vmatprep.subr.bf16.mxu0 %v3906
    %4952 = vmatpush1.bf16.msra.mxu0 %v3905
    %4953 = vmatprep.subr.bf16.mxu0 %v3914
    %4954 = vmatpush1.bf16.msra.mxu0 %v3913
    %4955 = vmatprep.subr.bf16.mxu0 %v3922
    %4956 = vmatpush1.bf16.msra.mxu0 %v3921
    %4957 = vmatprep.subr.bf16.mxu0 %v3930
    %4958 = vmatpush1.bf16.msra.mxu0 %v3929
    %4959 = vmatprep.subr.bf16.mxu0 %v3938
    %4960 = vmatpush1.bf16.msra.mxu0 %v3937
    %4961 = vmatprep.subr.bf16.mxu0 %v3946
    %4962 = vmatpush1.bf16.msra.mxu0 %v3945
    %4963 = vmatprep.mubr.bf16.mxu0 %v1603
    %4964 = vmatmul.mubr.bf16.gmra.mrb[0].mxu0 %v1602
    %v4965 = vpop.f32.mrb[0].mxu0
    %v4966 = vadd.f32 %v4925, %v4965
    %v4967 = vpop.f32.mrb[0].mxu0
    %v4968 = vadd.f32 %v4927, %v4967
    %v4969 = vpop.f32.mrb[0].mxu0
    %v4970 = vpop.f32.mrb[0].mxu0
    %4971 = vdwg.mxu0
    %4972 = vmatprep.subr.bf16.mxu0 %v3954
    %4973 = vmatpush1.bf16.msra.mxu0 %v3953
    %4974 = vmatprep.subr.bf16.mxu0 %v3962
    %4975 = vmatpush1.bf16.msra.mxu0 %v3961
    %4976 = vmatprep.subr.bf16.mxu0 %v3970
    %4977 = vmatpush1.bf16.msra.mxu0 %v3969
    %4978 = vmatprep.subr.bf16.mxu0 %v3978
    %4979 = vmatpush1.bf16.msra.mxu0 %v3977
    %4980 = vmatprep.subr.bf16.mxu0 %v3986
    %4981 = vmatpush1.bf16.msra.mxu0 %v3985
    %4982 = vmatprep.subr.bf16.mxu0 %v3994
    %4983 = vmatpush1.bf16.msra.mxu0 %v3993
    %4984 = vmatprep.subr.bf16.mxu0 %v4002
    %4985 = vmatpush1.bf16.msra.mxu0 %v4001
    %4986 = vmatprep.subr.bf16.mxu0 %v4010
    %4987 = vmatpush1.bf16.msra.mxu0 %v4009
    %4988 = vmatprep.subr.bf16.mxu0 %v4018
    %4989 = vmatpush1.bf16.msra.mxu0 %v4017
    %4990 = vmatprep.subr.bf16.mxu0 %v4026
    %4991 = vmatpush1.bf16.msra.mxu0 %v4025
    %4992 = vmatprep.subr.bf16.mxu0 %v4034
    %4993 = vmatpush1.bf16.msra.mxu0 %v4033
    %4994 = vmatprep.subr.bf16.mxu0 %v4042
    %4995 = vmatpush1.bf16.msra.mxu0 %v4041
    %4996 = vmatprep.subr.bf16.mxu0 %v4050
    %4997 = vmatpush1.bf16.msra.mxu0 %v4049
    %4998 = vmatprep.subr.bf16.mxu0 %v4058
    %4999 = vmatpush1.bf16.msra.mxu0 %v4057
    %5000 = vmatprep.subr.bf16.mxu0 %v4066
    %5001 = vmatpush1.bf16.msra.mxu0 %v4065
    %5002 = vmatprep.subr.bf16.mxu0 %v4074
    %5003 = vmatpush1.bf16.msra.mxu0 %v4073
    %5004 = vmatprep.mubr.bf16.mxu0 %v1605
    %5005 = vmatmul.mubr.bf16.gmra.mrb[0].mxu0 %v1604
    %v5006 = vpop.f32.mrb[0].mxu0
    %v5007 = vadd.f32 %v4966, %v5006
    %v5008 = vpop.f32.mrb[0].mxu0
    %v5009 = vadd.f32 %v4968, %v5008
    %v5010 = vpop.f32.mrb[0].mxu0
    %v5011 = vpop.f32.mrb[0].mxu0
    %5012 = vdwg.mxu0
    %5013 = vmatprep.subr.bf16.mxu0 %v4082
    %5014 = vmatpush1.bf16.msra.mxu0 %v4081
    %5015 = vmatprep.subr.bf16.mxu0 %v4090
    %5016 = vmatpush1.bf16.msra.mxu0 %v4089
    %5017 = vmatprep.subr.bf16.mxu0 %v4098
    %5018 = vmatpush1.bf16.msra.mxu0 %v4097
    %5019 = vmatprep.subr.bf16.mxu0 %v4106
    %5020 = vmatpush1.bf16.msra.mxu0 %v4105
    %5021 = vmatprep.subr.bf16.mxu0 %v4114
    %5022 = vmatpush1.bf16.msra.mxu0 %v4113
    %5023 = vmatprep.subr.bf16.mxu0 %v4122
    %5024 = vmatpush1.bf16.msra.mxu0 %v4121
    %5025 = vmatprep.subr.bf16.mxu0 %v4130
    %5026 = vmatpush1.bf16.msra.mxu0 %v4129
    %5027 = vmatprep.subr.bf16.mxu0 %v4138
    %5028 = vmatpush1.bf16.msra.mxu0 %v4137
    %5029 = vmatprep.subr.bf16.mxu0 %v4146
    %5030 = vmatpush1.bf16.msra.mxu0 %v4145
    %5031 = vmatprep.subr.bf16.mxu0 %v4154
    %5032 = vmatpush1.bf16.msra.mxu0 %v4153
    %5033 = vmatprep.subr.bf16.mxu0 %v4162
    %5034 = vmatpush1.bf16.msra.mxu0 %v4161
    %5035 = vmatprep.subr.bf16.mxu0 %v4170
    %5036 = vmatpush1.bf16.msra.mxu0 %v4169
    %5037 = vmatprep.subr.bf16.mxu0 %v4178
    %5038 = vmatpush1.bf16.msra.mxu0 %v4177
    %5039 = vmatprep.subr.bf16.mxu0 %v4186
    %5040 = vmatpush1.bf16.msra.mxu0 %v4185
    %5041 = vmatprep.subr.bf16.mxu0 %v4194
    %5042 = vmatpush1.bf16.msra.mxu0 %v4193
    %5043 = vmatprep.subr.bf16.mxu0 %v4202
    %5044 = vmatpush1.bf16.msra.mxu0 %v4201
    %5045 = vmatprep.mubr.bf16.mxu0 %v1607
    %5046 = vmatmul.mubr.bf16.gmra.mrb[0].mxu0 %v1606
    %v5047 = vpop.f32.mrb[0].mxu0
    %v5048 = vadd.f32 %v5007, %v5047
    %v5049 = vpop.f32.mrb[0].mxu0
    %v5050 = vadd.f32 %v5009, %v5049
    %v5051 = vpop.f32.mrb[0].mxu0
    %v5052 = vpop.f32.mrb[0].mxu0
    %5053 = vdwg.mxu0
    %5054 = vmatprep.subr.bf16.mxu0 %v3572
    %5055 = vmatpush1.bf16.msra.mxu0 %v3571
    %5056 = vmatprep.subr.bf16.mxu0 %v3580
    %5057 = vmatpush1.bf16.msra.mxu0 %v3579
    %5058 = vmatprep.subr.bf16.mxu0 %v3588
    %5059 = vmatpush1.bf16.msra.mxu0 %v3587
    %5060 = vmatprep.subr.bf16.mxu0 %v3596
    %5061 = vmatpush1.bf16.msra.mxu0 %v3595
    %5062 = vmatprep.subr.bf16.mxu0 %v3604
    %5063 = vmatpush1.bf16.msra.mxu0 %v3603
    %5064 = vmatprep.subr.bf16.mxu0 %v3612
    %5065 = vmatpush1.bf16.msra.mxu0 %v3611
    %5066 = vmatprep.subr.bf16.mxu0 %v3620
    %5067 = vmatpush1.bf16.msra.mxu0 %v3619
    %5068 = vmatprep.subr.bf16.mxu0 %v3628
    %5069 = vmatpush1.bf16.msra.mxu0 %v3627
    %5070 = vmatprep.subr.bf16.mxu0 %v3636
    %5071 = vmatpush1.bf16.msra.mxu0 %v3635
    %5072 = vmatprep.subr.bf16.mxu0 %v3644
    %5073 = vmatpush1.bf16.msra.mxu0 %v3643
    %5074 = vmatprep.subr.bf16.mxu0 %v3652
    %5075 = vmatpush1.bf16.msra.mxu0 %v3651
    %5076 = vmatprep.subr.bf16.mxu0 %v3660
    %5077 = vmatpush1.bf16.msra.mxu0 %v3659
    %5078 = vmatprep.subr.bf16.mxu0 %v3668
    %5079 = vmatpush1.bf16.msra.mxu0 %v3667
    %5080 = vmatprep.subr.bf16.mxu0 %v3676
    %5081 = vmatpush1.bf16.msra.mxu0 %v3675
    %5082 = vmatprep.subr.bf16.mxu0 %v3684
    %5083 = vmatpush1.bf16.msra.mxu0 %v3683
    %5084 = vmatprep.subr.bf16.mxu0 %v3692
    %5085 = vmatpush1.bf16.msra.mxu0 %v3691
    %5086 = vmatprep.mubr.bf16.mxu0 %v1599
    %5087 = vmatmul.mubr.bf16.gmra.mrb[0].mxu0 %v1598
    %v5088 = vpop.f32.mrb[0].mxu0
    %v5089 = vadd.f32 %v1620, %v5088
    %v5090 = vpop.f32.mrb[0].mxu0
    %v5091 = vadd.f32 %v1624, %v5090
    %v5092 = vpop.f32.mrb[0].mxu0
    %v5093 = vpop.f32.mrb[0].mxu0
    %5094 = vdwg.mxu0
    %5095 = vmatprep.subr.bf16.mxu0 %v3700
    %5096 = vmatpush1.bf16.msra.mxu0 %v3699
    %5097 = vmatprep.subr.bf16.mxu0 %v3708
    %5098 = vmatpush1.bf16.msra.mxu0 %v3707
    %5099 = vmatprep.subr.bf16.mxu0 %v3716
    %5100 = vmatpush1.bf16.msra.mxu0 %v3715
    %5101 = vmatprep.subr.bf16.mxu0 %v3724
    %5102 = vmatpush1.bf16.msra.mxu0 %v3723
    %5103 = vmatprep.subr.bf16.mxu0 %v3732
    %5104 = vmatpush1.bf16.msra.mxu0 %v3731
    %5105 = vmatprep.subr.bf16.mxu0 %v3740
    %5106 = vmatpush1.bf16.msra.mxu0 %v3739
    %5107 = vmatprep.subr.bf16.mxu0 %v3748
    %5108 = vmatpush1.bf16.msra.mxu0 %v3747
    %5109 = vmatprep.subr.bf16.mxu0 %v3756
    %5110 = vmatpush1.bf16.msra.mxu0 %v3755
    %5111 = vmatprep.subr.bf16.mxu0 %v3764
    %5112 = vmatpush1.bf16.msra.mxu0 %v3763
    %5113 = vmatprep.subr.bf16.mxu0 %v3772
    %5114 = vmatpush1.bf16.msra.mxu0 %v3771
    %5115 = vmatprep.subr.bf16.mxu0 %v3780
    %5116 = vmatpush1.bf16.msra.mxu0 %v3779
    %5117 = vmatprep.subr.bf16.mxu0 %v3788
    %5118 = vmatpush1.bf16.msra.mxu0 %v3787
    %5119 = vmatprep.subr.bf16.mxu0 %v3796
    %5120 = vmatpush1.bf16.msra.mxu0 %v3795
    %5121 = vmatprep.subr.bf16.mxu0 %v3804
    %5122 = vmatpush1.bf16.msra.mxu0 %v3803
    %5123 = vmatprep.subr.bf16.mxu0 %v3812
    %5124 = vmatpush1.bf16.msra.mxu0 %v3811
    %5125 = vmatprep.subr.bf16.mxu0 %v3820
    %5126 = vmatpush1.bf16.msra.mxu0 %v3819
    %5127 = vmatprep.mubr.bf16.mxu0 %v1601
    %5128 = vmatmul.mubr.bf16.gmra.mrb[0].mxu0 %v1600
    %v5129 = vpop.f32.mrb[0].mxu0
    %v5130 = vadd.f32 %v5089, %v5129
    %v5131 = vpop.f32.mrb[0].mxu0
    %v5132 = vadd.f32 %v5091, %v5131
    %v5133 = vpop.f32.mrb[0].mxu0
    %v5134 = vpop.f32.mrb[0].mxu0
    %5135 = vdwg.mxu0
    %5136 = vmatprep.subr.bf16.mxu0 %v3828
    %5137 = vmatpush1.bf16.msra.mxu0 %v3827
    %5138 = vmatprep.subr.bf16.mxu0 %v3836
    %5139 = vmatpush1.bf16.msra.mxu0 %v3835
    %5140 = vmatprep.subr.bf16.mxu0 %v3844
    %5141 = vmatpush1.bf16.msra.mxu0 %v3843
    %5142 = vmatprep.subr.bf16.mxu0 %v3852
    %5143 = vmatpush1.bf16.msra.mxu0 %v3851
    %5144 = vmatprep.subr.bf16.mxu0 %v3860
    %5145 = vmatpush1.bf16.msra.mxu0 %v3859
    %5146 = vmatprep.subr.bf16.mxu0 %v3868
    %5147 = vmatpush1.bf16.msra.mxu0 %v3867
    %5148 = vmatprep.subr.bf16.mxu0 %v3876
    %5149 = vmatpush1.bf16.msra.mxu0 %v3875
    %5150 = vmatprep.subr.bf16.mxu0 %v3884
    %5151 = vmatpush1.bf16.msra.mxu0 %v3883
    %5152 = vmatprep.subr.bf16.mxu0 %v3892
    %5153 = vmatpush1.bf16.msra.mxu0 %v3891
    %5154 = vmatprep.subr.bf16.mxu0 %v3900
    %5155 = vmatpush1.bf16.msra.mxu0 %v3899
    %5156 = vmatprep.subr.bf16.mxu0 %v3908
    %5157 = vmatpush1.bf16.msra.mxu0 %v3907
    %5158 = vmatprep.subr.bf16.mxu0 %v3916
    %5159 = vmatpush1.bf16.msra.mxu0 %v3915
    %5160 = vmatprep.subr.bf16.mxu0 %v3924
    %5161 = vmatpush1.bf16.msra.mxu0 %v3923
    %5162 = vmatprep.subr.bf16.mxu0 %v3932
    %5163 = vmatpush1.bf16.msra.mxu0 %v3931
    %5164 = vmatprep.subr.bf16.mxu0 %v3940
    %5165 = vmatpush1.bf16.msra.mxu0 %v3939
    %5166 = vmatprep.subr.bf16.mxu0 %v3948
    %5167 = vmatpush1.bf16.msra.mxu0 %v3947
    %5168 = vmatprep.mubr.bf16.mxu0 %v1603
    %5169 = vmatmul.mubr.bf16.gmra.mrb[0].mxu0 %v1602
    %v5170 = vpop.f32.mrb[0].mxu0
    %v5171 = vadd.f32 %v5130, %v5170
    %v5172 = vpop.f32.mrb[0].mxu0
    %v5173 = vadd.f32 %v5132, %v5172
    %v5174 = vpop.f32.mrb[0].mxu0
    %v5175 = vpop.f32.mrb[0].mxu0
    %5176 = vdwg.mxu0
    %5177 = vmatprep.subr.bf16.mxu0 %v3956
    %5178 = vmatpush1.bf16.msra.mxu0 %v3955
    %5179 = vmatprep.subr.bf16.mxu0 %v3964
    %5180 = vmatpush1.bf16.msra.mxu0 %v3963
    %5181 = vmatprep.subr.bf16.mxu0 %v3972
    %5182 = vmatpush1.bf16.msra.mxu0 %v3971
    %5183 = vmatprep.subr.bf16.mxu0 %v3980
    %5184 = vmatpush1.bf16.msra.mxu0 %v3979
    %5185 = vmatprep.subr.bf16.mxu0 %v3988
    %5186 = vmatpush1.bf16.msra.mxu0 %v3987
    %5187 = vmatprep.subr.bf16.mxu0 %v3996
    %5188 = vmatpush1.bf16.msra.mxu0 %v3995
    %5189 = vmatprep.subr.bf16.mxu0 %v4004
    %5190 = vmatpush1.bf16.msra.mxu0 %v4003
    %5191 = vmatprep.subr.bf16.mxu0 %v4012
    %5192 = vmatpush1.bf16.msra.mxu0 %v4011
    %5193 = vmatprep.subr.bf16.mxu0 %v4020
    %5194 = vmatpush1.bf16.msra.mxu0 %v4019
    %5195 = vmatprep.subr.bf16.mxu0 %v4028
    %5196 = vmatpush1.bf16.msra.mxu0 %v4027
    %5197 = vmatprep.subr.bf16.mxu0 %v4036
    %5198 = vmatpush1.bf16.msra.mxu0 %v4035
    %5199 = vmatprep.subr.bf16.mxu0 %v4044
    %5200 = vmatpush1.bf16.msra.mxu0 %v4043
    %5201 = vmatprep.subr.bf16.mxu0 %v4052
    %5202 = vmatpush1.bf16.msra.mxu0 %v4051
    %5203 = vmatprep.subr.bf16.mxu0 %v4060
    %5204 = vmatpush1.bf16.msra.mxu0 %v4059
    %5205 = vmatprep.subr.bf16.mxu0 %v4068
    %5206 = vmatpush1.bf16.msra.mxu0 %v4067
    %5207 = vmatprep.subr.bf16.mxu0 %v4076
    %5208 = vmatpush1.bf16.msra.mxu0 %v4075
    %5209 = vmatprep.mubr.bf16.mxu0 %v1605
    %5210 = vmatmul.mubr.bf16.gmra.mrb[0].mxu0 %v1604
    %v5211 = vpop.f32.mrb[0].mxu0
    %v5212 = vadd.f32 %v5171, %v5211
    %v5213 = vpop.f32.mrb[0].mxu0
    %v5214 = vadd.f32 %v5173, %v5213
    %v5215 = vpop.f32.mrb[0].mxu0
    %v5216 = vpop.f32.mrb[0].mxu0
    %5217 = vdwg.mxu0
    %5218 = vmatprep.subr.bf16.mxu0 %v4084
    %5219 = vmatpush1.bf16.msra.mxu0 %v4083
    %5220 = vmatprep.subr.bf16.mxu0 %v4092
    %5221 = vmatpush1.bf16.msra.mxu0 %v4091
    %5222 = vmatprep.subr.bf16.mxu0 %v4100
    %5223 = vmatpush1.bf16.msra.mxu0 %v4099
    %5224 = vmatprep.subr.bf16.mxu0 %v4108
    %5225 = vmatpush1.bf16.msra.mxu0 %v4107
    %5226 = vmatprep.subr.bf16.mxu0 %v4116
    %5227 = vmatpush1.bf16.msra.mxu0 %v4115
    %5228 = vmatprep.subr.bf16.mxu0 %v4124
    %5229 = vmatpush1.bf16.msra.mxu0 %v4123
    %5230 = vmatprep.subr.bf16.mxu0 %v4132
    %5231 = vmatpush1.bf16.msra.mxu0 %v4131
    %5232 = vmatprep.subr.bf16.mxu0 %v4140
    %5233 = vmatpush1.bf16.msra.mxu0 %v4139
    %5234 = vmatprep.subr.bf16.mxu0 %v4148
    %5235 = vmatpush1.bf16.msra.mxu0 %v4147
    %5236 = vmatprep.subr.bf16.mxu0 %v4156
    %5237 = vmatpush1.bf16.msra.mxu0 %v4155
    %5238 = vmatprep.subr.bf16.mxu0 %v4164
    %5239 = vmatpush1.bf16.msra.mxu0 %v4163
    %5240 = vmatprep.subr.bf16.mxu0 %v4172
    %5241 = vmatpush1.bf16.msra.mxu0 %v4171
    %5242 = vmatprep.subr.bf16.mxu0 %v4180
    %5243 = vmatpush1.bf16.msra.mxu0 %v4179
    %5244 = vmatprep.subr.bf16.mxu0 %v4188
    %5245 = vmatpush1.bf16.msra.mxu0 %v4187
    %5246 = vmatprep.subr.bf16.mxu0 %v4196
    %5247 = vmatpush1.bf16.msra.mxu0 %v4195
    %5248 = vmatprep.subr.bf16.mxu0 %v4204
    %5249 = vmatpush1.bf16.msra.mxu0 %v4203
    %5250 = vmatprep.mubr.bf16.mxu0 %v1607
    %5251 = vmatmul.mubr.bf16.gmra.mrb[0].mxu0 %v1606
    %v5252 = vpop.f32.mrb[0].mxu0
    %v5253 = vadd.f32 %v5212, %v5252
    %v5254 = vpop.f32.mrb[0].mxu0
    %v5255 = vadd.f32 %v5214, %v5254
    %v5256 = vpop.f32.mrb[0].mxu0
    %v5257 = vpop.f32.mrb[0].mxu0
    %5258 = vdwg.mxu0
    %5259 = vmatprep.subr.bf16.mxu0 %v3574
    %5260 = vmatpush1.bf16.msra.mxu0 %v3573
    %5261 = vmatprep.subr.bf16.mxu0 %v3582
    %5262 = vmatpush1.bf16.msra.mxu0 %v3581
    %5263 = vmatprep.subr.bf16.mxu0 %v3590
    %5264 = vmatpush1.bf16.msra.mxu0 %v3589
    %5265 = vmatprep.subr.bf16.mxu0 %v3598
    %5266 = vmatpush1.bf16.msra.mxu0 %v3597
    %5267 = vmatprep.subr.bf16.mxu0 %v3606
    %5268 = vmatpush1.bf16.msra.mxu0 %v3605
    %5269 = vmatprep.subr.bf16.mxu0 %v3614
    %5270 = vmatpush1.bf16.msra.mxu0 %v3613
    %5271 = vmatprep.subr.bf16.mxu0 %v3622
    %5272 = vmatpush1.bf16.msra.mxu0 %v3621
    %5273 = vmatprep.subr.bf16.mxu0 %v3630
    %5274 = vmatpush1.bf16.msra.mxu0 %v3629
    %5275 = vmatprep.subr.bf16.mxu0 %v3638
    %5276 = vmatpush1.bf16.msra.mxu0 %v3637
    %5277 = vmatprep.subr.bf16.mxu0 %v3646
    %5278 = vmatpush1.bf16.msra.mxu0 %v3645
    %5279 = vmatprep.subr.bf16.mxu0 %v3654
    %5280 = vmatpush1.bf16.msra.mxu0 %v3653
    %5281 = vmatprep.subr.bf16.mxu0 %v3662
    %5282 = vmatpush1.bf16.msra.mxu0 %v3661
    %5283 = vmatprep.subr.bf16.mxu0 %v3670
    %5284 = vmatpush1.bf16.msra.mxu0 %v3669
    %5285 = vmatprep.subr.bf16.mxu0 %v3678
    %5286 = vmatpush1.bf16.msra.mxu0 %v3677
    %5287 = vmatprep.subr.bf16.mxu0 %v3686
    %5288 = vmatpush1.bf16.msra.mxu0 %v3685
    %5289 = vmatprep.subr.bf16.mxu0 %v3694
    %5290 = vmatpush1.bf16.msra.mxu0 %v3693
    %5291 = vmatprep.mubr.bf16.mxu0 %v1599
    %5292 = vmatmul.mubr.bf16.gmra.mrb[0].mxu0 %v1598
    %v5293 = vpop.f32.mrb[0].mxu0
    %v5294 = vadd.f32 %v1628, %v5293
    %v5295 = vpop.f32.mrb[0].mxu0
    %v5296 = vadd.f32 %v1632, %v5295
    %v5297 = vpop.f32.mrb[0].mxu0
    %v5298 = vpop.f32.mrb[0].mxu0
    %5299 = vdwg.mxu0
    %5300 = vmatprep.subr.bf16.mxu0 %v3702
    %5301 = vmatpush1.bf16.msra.mxu0 %v3701
    %5302 = vmatprep.subr.bf16.mxu0 %v3710
    %5303 = vmatpush1.bf16.msra.mxu0 %v3709
    %5304 = vmatprep.subr.bf16.mxu0 %v3718
    %5305 = vmatpush1.bf16.msra.mxu0 %v3717
    %5306 = vmatprep.subr.bf16.mxu0 %v3726
    %5307 = vmatpush1.bf16.msra.mxu0 %v3725
    %5308 = vmatprep.subr.bf16.mxu0 %v3734
    %5309 = vmatpush1.bf16.msra.mxu0 %v3733
    %5310 = vmatprep.subr.bf16.mxu0 %v3742
    %5311 = vmatpush1.bf16.msra.mxu0 %v3741
    %5312 = vmatprep.subr.bf16.mxu0 %v3750
    %5313 = vmatpush1.bf16.msra.mxu0 %v3749
    %5314 = vmatprep.subr.bf16.mxu0 %v3758
    %5315 = vmatpush1.bf16.msra.mxu0 %v3757
    %5316 = vmatprep.subr.bf16.mxu0 %v3766
    %5317 = vmatpush1.bf16.msra.mxu0 %v3765
    %5318 = vmatprep.subr.bf16.mxu0 %v3774
    %5319 = vmatpush1.bf16.msra.mxu0 %v3773
    %5320 = vmatprep.subr.bf16.mxu0 %v3782
    %5321 = vmatpush1.bf16.msra.mxu0 %v3781
    %5322 = vmatprep.subr.bf16.mxu0 %v3790
    %5323 = vmatpush1.bf16.msra.mxu0 %v3789
    %5324 = vmatprep.subr.bf16.mxu0 %v3798
    %5325 = vmatpush1.bf16.msra.mxu0 %v3797
    %5326 = vmatprep.subr.bf16.mxu0 %v3806
    %5327 = vmatpush1.bf16.msra.mxu0 %v3805
    %5328 = vmatprep.subr.bf16.mxu0 %v3814
    %5329 = vmatpush1.bf16.msra.mxu0 %v3813
    %5330 = vmatprep.subr.bf16.mxu0 %v3822
    %5331 = vmatpush1.bf16.msra.mxu0 %v3821
    %5332 = vmatprep.mubr.bf16.mxu0 %v1601
    %5333 = vmatmul.mubr.bf16.gmra.mrb[0].mxu0 %v1600
    %v5334 = vpop.f32.mrb[0].mxu0
    %v5335 = vadd.f32 %v5294, %v5334
    %v5336 = vpop.f32.mrb[0].mxu0
    %v5337 = vadd.f32 %v5296, %v5336
    %v5338 = vpop.f32.mrb[0].mxu0
    %v5339 = vpop.f32.mrb[0].mxu0
    %5340 = vdwg.mxu0
    %5341 = vmatprep.subr.bf16.mxu0 %v3830
    %5342 = vmatpush1.bf16.msra.mxu0 %v3829
    %5343 = vmatprep.subr.bf16.mxu0 %v3838
    %5344 = vmatpush1.bf16.msra.mxu0 %v3837
    %5345 = vmatprep.subr.bf16.mxu0 %v3846
    %5346 = vmatpush1.bf16.msra.mxu0 %v3845
    %5347 = vmatprep.subr.bf16.mxu0 %v3854
    %5348 = vmatpush1.bf16.msra.mxu0 %v3853
    %5349 = vmatprep.subr.bf16.mxu0 %v3862
    %5350 = vmatpush1.bf16.msra.mxu0 %v3861
    %5351 = vmatprep.subr.bf16.mxu0 %v3870
    %5352 = vmatpush1.bf16.msra.mxu0 %v3869
    %5353 = vmatprep.subr.bf16.mxu0 %v3878
    %5354 = vmatpush1.bf16.msra.mxu0 %v3877
    %5355 = vmatprep.subr.bf16.mxu0 %v3886
    %5356 = vmatpush1.bf16.msra.mxu0 %v3885
    %5357 = vmatprep.subr.bf16.mxu0 %v3894
    %5358 = vmatpush1.bf16.msra.mxu0 %v3893
    %5359 = vmatprep.subr.bf16.mxu0 %v3902
    %5360 = vmatpush1.bf16.msra.mxu0 %v3901
    %5361 = vmatprep.subr.bf16.mxu0 %v3910
    %5362 = vmatpush1.bf16.msra.mxu0 %v3909
    %5363 = vmatprep.subr.bf16.mxu0 %v3918
    %5364 = vmatpush1.bf16.msra.mxu0 %v3917
    %5365 = vmatprep.subr.bf16.mxu0 %v3926
    %5366 = vmatpush1.bf16.msra.mxu0 %v3925
    %5367 = vmatprep.subr.bf16.mxu0 %v3934
    %5368 = vmatpush1.bf16.msra.mxu0 %v3933
    %5369 = vmatprep.subr.bf16.mxu0 %v3942
    %5370 = vmatpush1.bf16.msra.mxu0 %v3941
    %5371 = vmatprep.subr.bf16.mxu0 %v3950
    %5372 = vmatpush1.bf16.msra.mxu0 %v3949
    %5373 = vmatprep.mubr.bf16.mxu0 %v1603
    %5374 = vmatmul.mubr.bf16.gmra.mrb[0].mxu0 %v1602
    %v5375 = vpop.f32.mrb[0].mxu0
    %v5376 = vadd.f32 %v5335, %v5375
    %v5377 = vpop.f32.mrb[0].mxu0
    %v5378 = vadd.f32 %v5337, %v5377
    %v5379 = vpop.f32.mrb[0].mxu0
    %v5380 = vpop.f32.mrb[0].mxu0
    %5381 = vdwg.mxu0
    %5382 = vmatprep.subr.bf16.mxu0 %v3958
    %5383 = vmatpush1.bf16.msra.mxu0 %v3957
    %5384 = vmatprep.subr.bf16.mxu0 %v3966
    %5385 = vmatpush1.bf16.msra.mxu0 %v3965
    %5386 = vmatprep.subr.bf16.mxu0 %v3974
    %5387 = vmatpush1.bf16.msra.mxu0 %v3973
    %5388 = vmatprep.subr.bf16.mxu0 %v3982
    %5389 = vmatpush1.bf16.msra.mxu0 %v3981
    %5390 = vmatprep.subr.bf16.mxu0 %v3990
    %5391 = vmatpush1.bf16.msra.mxu0 %v3989
    %5392 = vmatprep.subr.bf16.mxu0 %v3998
    %5393 = vmatpush1.bf16.msra.mxu0 %v3997
    %5394 = vmatprep.subr.bf16.mxu0 %v4006
    %5395 = vmatpush1.bf16.msra.mxu0 %v4005
    %5396 = vmatprep.subr.bf16.mxu0 %v4014
    %5397 = vmatpush1.bf16.msra.mxu0 %v4013
    %5398 = vmatprep.subr.bf16.mxu0 %v4022
    %5399 = vmatpush1.bf16.msra.mxu0 %v4021
    %5400 = vmatprep.subr.bf16.mxu0 %v4030
    %5401 = vmatpush1.bf16.msra.mxu0 %v4029
    %5402 = vmatprep.subr.bf16.mxu0 %v4038
    %5403 = vmatpush1.bf16.msra.mxu0 %v4037
    %5404 = vmatprep.subr.bf16.mxu0 %v4046
    %5405 = vmatpush1.bf16.msra.mxu0 %v4045
    %5406 = vmatprep.subr.bf16.mxu0 %v4054
    %5407 = vmatpush1.bf16.msra.mxu0 %v4053
    %5408 = vmatprep.subr.bf16.mxu0 %v4062
    %5409 = vmatpush1.bf16.msra.mxu0 %v4061
    %5410 = vmatprep.subr.bf16.mxu0 %v4070
    %5411 = vmatpush1.bf16.msra.mxu0 %v4069
    %5412 = vmatprep.subr.bf16.mxu0 %v4078
    %5413 = vmatpush1.bf16.msra.mxu0 %v4077
    %5414 = vmatprep.mubr.bf16.mxu0 %v1605
    %5415 = vmatmul.mubr.bf16.gmra.mrb[0].mxu0 %v1604
    %v5416 = vpop.f32.mrb[0].mxu0
    %v5417 = vadd.f32 %v5376, %v5416
    %v5418 = vpop.f32.mrb[0].mxu0
    %v5419 = vadd.f32 %v5378, %v5418
    %v5420 = vpop.f32.mrb[0].mxu0
    %v5421 = vpop.f32.mrb[0].mxu0
    %5422 = vdwg.mxu0
    %5423 = vmatprep.subr.bf16.mxu0 %v4086
    %5424 = vmatpush1.bf16.msra.mxu0 %v4085
    %5425 = vmatprep.subr.bf16.mxu0 %v4094
    %5426 = vmatpush1.bf16.msra.mxu0 %v4093
    %5427 = vmatprep.subr.bf16.mxu0 %v4102
    %5428 = vmatpush1.bf16.msra.mxu0 %v4101
    %5429 = vmatprep.subr.bf16.mxu0 %v4110
    %5430 = vmatpush1.bf16.msra.mxu0 %v4109
    %5431 = vmatprep.subr.bf16.mxu0 %v4118
    %5432 = vmatpush1.bf16.msra.mxu0 %v4117
    %5433 = vmatprep.subr.bf16.mxu0 %v4126
    %5434 = vmatpush1.bf16.msra.mxu0 %v4125
    %5435 = vmatprep.subr.bf16.mxu0 %v4134
    %5436 = vmatpush1.bf16.msra.mxu0 %v4133
    %5437 = vmatprep.subr.bf16.mxu0 %v4142
    %5438 = vmatpush1.bf16.msra.mxu0 %v4141
    %5439 = vmatprep.subr.bf16.mxu0 %v4150
    %5440 = vmatpush1.bf16.msra.mxu0 %v4149
    %5441 = vmatprep.subr.bf16.mxu0 %v4158
    %5442 = vmatpush1.bf16.msra.mxu0 %v4157
    %5443 = vmatprep.subr.bf16.mxu0 %v4166
    %5444 = vmatpush1.bf16.msra.mxu0 %v4165
    %5445 = vmatprep.subr.bf16.mxu0 %v4174
    %5446 = vmatpush1.bf16.msra.mxu0 %v4173
    %5447 = vmatprep.subr.bf16.mxu0 %v4182
    %5448 = vmatpush1.bf16.msra.mxu0 %v4181
    %5449 = vmatprep.subr.bf16.mxu0 %v4190
    %5450 = vmatpush1.bf16.msra.mxu0 %v4189
    %5451 = vmatprep.subr.bf16.mxu0 %v4198
    %5452 = vmatpush1.bf16.msra.mxu0 %v4197
    %5453 = vmatprep.subr.bf16.mxu0 %v4206
    %5454 = vmatpush1.bf16.msra.mxu0 %v4205
    %5455 = vmatprep.mubr.bf16.mxu0 %v1607
    %5456 = vmatmul.mubr.bf16.gmra.mrb[0].mxu0 %v1606
    %v5457 = vpop.f32.mrb[0].mxu0
    %v5458 = vadd.f32 %v5417, %v5457
    %v5459 = vpop.f32.mrb[0].mxu0
    %v5460 = vadd.f32 %v5419, %v5459
    %v5461 = vpop.f32.mrb[0].mxu0
    %v5462 = vpop.f32.mrb[0].mxu0
    %5463 = vdwg.mxu0
    %5464 = vmatprep.subr.bf16.mxu0 %v3576
    %5465 = vmatpush1.bf16.msra.mxu0 %v3575
    %5466 = vmatprep.subr.bf16.mxu0 %v3584
    %5467 = vmatpush1.bf16.msra.mxu0 %v3583
    %5468 = vmatprep.subr.bf16.mxu0 %v3592
    %5469 = vmatpush1.bf16.msra.mxu0 %v3591
    %5470 = vmatprep.subr.bf16.mxu0 %v3600
    %5471 = vmatpush1.bf16.msra.mxu0 %v3599
    %5472 = vmatprep.subr.bf16.mxu0 %v3608
    %5473 = vmatpush1.bf16.msra.mxu0 %v3607
    %5474 = vmatprep.subr.bf16.mxu0 %v3616
    %5475 = vmatpush1.bf16.msra.mxu0 %v3615
    %5476 = vmatprep.subr.bf16.mxu0 %v3624
    %5477 = vmatpush1.bf16.msra.mxu0 %v3623
    %5478 = vmatprep.subr.bf16.mxu0 %v3632
    %5479 = vmatpush1.bf16.msra.mxu0 %v3631
    %5480 = vmatprep.subr.bf16.mxu0 %v3640
    %5481 = vmatpush1.bf16.msra.mxu0 %v3639
    %5482 = vmatprep.subr.bf16.mxu0 %v3648
    %5483 = vmatpush1.bf16.msra.mxu0 %v3647
    %5484 = vmatprep.subr.bf16.mxu0 %v3656
    %5485 = vmatpush1.bf16.msra.mxu0 %v3655
    %5486 = vmatprep.subr.bf16.mxu0 %v3664
    %5487 = vmatpush1.bf16.msra.mxu0 %v3663
    %5488 = vmatprep.subr.bf16.mxu0 %v3672
    %5489 = vmatpush1.bf16.msra.mxu0 %v3671
    %5490 = vmatprep.subr.bf16.mxu0 %v3680
    %5491 = vmatpush1.bf16.msra.mxu0 %v3679
    %5492 = vmatprep.subr.bf16.mxu0 %v3688
    %5493 = vmatpush1.bf16.msra.mxu0 %v3687
    %5494 = vmatprep.subr.bf16.mxu0 %v3696
    %5495 = vmatpush1.bf16.msra.mxu0 %v3695
    %5496 = vmatprep.mubr.bf16.mxu0 %v1599
    %5497 = vmatmul.mubr.bf16.gmra.mrb[0].mxu0 %v1598
    %v5498 = vpop.f32.mrb[0].mxu0
    %v5499 = vadd.f32 %v1636, %v5498
    %v5500 = vpop.f32.mrb[0].mxu0
    %v5501 = vadd.f32 %v1640, %v5500
    %v5502 = vpop.f32.mrb[0].mxu0
    %v5503 = vpop.f32.mrb[0].mxu0
    %5504 = vdwg.mxu0
    %5505 = vmatprep.subr.bf16.mxu0 %v3704
    %5506 = vmatpush1.bf16.msra.mxu0 %v3703
    %5507 = vmatprep.subr.bf16.mxu0 %v3712
    %5508 = vmatpush1.bf16.msra.mxu0 %v3711
    %5509 = vmatprep.subr.bf16.mxu0 %v3720
    %5510 = vmatpush1.bf16.msra.mxu0 %v3719
    %5511 = vmatprep.subr.bf16.mxu0 %v3728
    %5512 = vmatpush1.bf16.msra.mxu0 %v3727
    %5513 = vmatprep.subr.bf16.mxu0 %v3736
    %5514 = vmatpush1.bf16.msra.mxu0 %v3735
    %5515 = vmatprep.subr.bf16.mxu0 %v3744
    %5516 = vmatpush1.bf16.msra.mxu0 %v3743
    %5517 = vmatprep.subr.bf16.mxu0 %v3752
    %5518 = vmatpush1.bf16.msra.mxu0 %v3751
    %5519 = vmatprep.subr.bf16.mxu0 %v3760
    %5520 = vmatpush1.bf16.msra.mxu0 %v3759
    %5521 = vmatprep.subr.bf16.mxu0 %v3768
    %5522 = vmatpush1.bf16.msra.mxu0 %v3767
    %5523 = vmatprep.subr.bf16.mxu0 %v3776
    %5524 = vmatpush1.bf16.msra.mxu0 %v3775
    %5525 = vmatprep.subr.bf16.mxu0 %v3784
    %5526 = vmatpush1.bf16.msra.mxu0 %v3783
    %5527 = vmatprep.subr.bf16.mxu0 %v3792
    %5528 = vmatpush1.bf16.msra.mxu0 %v3791
    %5529 = vmatprep.subr.bf16.mxu0 %v3800
    %5530 = vmatpush1.bf16.msra.mxu0 %v3799
    %5531 = vmatprep.subr.bf16.mxu0 %v3808
    %5532 = vmatpush1.bf16.msra.mxu0 %v3807
    %5533 = vmatprep.subr.bf16.mxu0 %v3816
    %5534 = vmatpush1.bf16.msra.mxu0 %v3815
    %5535 = vmatprep.subr.bf16.mxu0 %v3824
    %5536 = vmatpush1.bf16.msra.mxu0 %v3823
    %5537 = vmatprep.mubr.bf16.mxu0 %v1601
    %5538 = vmatmul.mubr.bf16.gmra.mrb[0].mxu0 %v1600
    %v5539 = vpop.f32.mrb[0].mxu0
    %v5540 = vadd.f32 %v5499, %v5539
    %v5541 = vpop.f32.mrb[0].mxu0
    %v5542 = vadd.f32 %v5501, %v5541
    %v5543 = vpop.f32.mrb[0].mxu0
    %v5544 = vpop.f32.mrb[0].mxu0
    %5545 = vdwg.mxu0
    %5546 = vmatprep.subr.bf16.mxu0 %v3832
    %5547 = vmatpush1.bf16.msra.mxu0 %v3831
    %5548 = vmatprep.subr.bf16.mxu0 %v3840
    %5549 = vmatpush1.bf16.msra.mxu0 %v3839
    %5550 = vmatprep.subr.bf16.mxu0 %v3848
    %5551 = vmatpush1.bf16.msra.mxu0 %v3847
    %5552 = vmatprep.subr.bf16.mxu0 %v3856
    %5553 = vmatpush1.bf16.msra.mxu0 %v3855
    %5554 = vmatprep.subr.bf16.mxu0 %v3864
    %5555 = vmatpush1.bf16.msra.mxu0 %v3863
    %5556 = vmatprep.subr.bf16.mxu0 %v3872
    %5557 = vmatpush1.bf16.msra.mxu0 %v3871
    %5558 = vmatprep.subr.bf16.mxu0 %v3880
    %5559 = vmatpush1.bf16.msra.mxu0 %v3879
    %5560 = vmatprep.subr.bf16.mxu0 %v3888
    %5561 = vmatpush1.bf16.msra.mxu0 %v3887
    %5562 = vmatprep.subr.bf16.mxu0 %v3896
    %5563 = vmatpush1.bf16.msra.mxu0 %v3895
    %5564 = vmatprep.subr.bf16.mxu0 %v3904
    %5565 = vmatpush1.bf16.msra.mxu0 %v3903
    %5566 = vmatprep.subr.bf16.mxu0 %v3912
    %5567 = vmatpush1.bf16.msra.mxu0 %v3911
    %5568 = vmatprep.subr.bf16.mxu0 %v3920
    %5569 = vmatpush1.bf16.msra.mxu0 %v3919
    %5570 = vmatprep.subr.bf16.mxu0 %v3928
    %5571 = vmatpush1.bf16.msra.mxu0 %v3927
    %5572 = vmatprep.subr.bf16.mxu0 %v3936
    %5573 = vmatpush1.bf16.msra.mxu0 %v3935
    %5574 = vmatprep.subr.bf16.mxu0 %v3944
    %5575 = vmatpush1.bf16.msra.mxu0 %v3943
    %5576 = vmatprep.subr.bf16.mxu0 %v3952
    %5577 = vmatpush1.bf16.msra.mxu0 %v3951
    %5578 = vmatprep.mubr.bf16.mxu0 %v1603
    %5579 = vmatmul.mubr.bf16.gmra.mrb[0].mxu0 %v1602
    %v5580 = vpop.f32.mrb[0].mxu0
    %v5581 = vadd.f32 %v5540, %v5580
    %v5582 = vpop.f32.mrb[0].mxu0
    %v5583 = vadd.f32 %v5542, %v5582
    %v5584 = vpop.f32.mrb[0].mxu0
    %v5585 = vpop.f32.mrb[0].mxu0
    %5586 = vdwg.mxu0
    %5587 = vmatprep.subr.bf16.mxu0 %v3960
    %5588 = vmatpush1.bf16.msra.mxu0 %v3959
    %5589 = vmatprep.subr.bf16.mxu0 %v3968
    %5590 = vmatpush1.bf16.msra.mxu0 %v3967
    %5591 = vmatprep.subr.bf16.mxu0 %v3976
    %5592 = vmatpush1.bf16.msra.mxu0 %v3975
    %5593 = vmatprep.subr.bf16.mxu0 %v3984
    %5594 = vmatpush1.bf16.msra.mxu0 %v3983
    %5595 = vmatprep.subr.bf16.mxu0 %v3992
    %5596 = vmatpush1.bf16.msra.mxu0 %v3991
    %5597 = vmatprep.subr.bf16.mxu0 %v4000
    %5598 = vmatpush1.bf16.msra.mxu0 %v3999
    %5599 = vmatprep.subr.bf16.mxu0 %v4008
    %5600 = vmatpush1.bf16.msra.mxu0 %v4007
    %5601 = vmatprep.subr.bf16.mxu0 %v4016
    %5602 = vmatpush1.bf16.msra.mxu0 %v4015
    %5603 = vmatprep.subr.bf16.mxu0 %v4024
    %5604 = vmatpush1.bf16.msra.mxu0 %v4023
    %5605 = vmatprep.subr.bf16.mxu0 %v4032
    %5606 = vmatpush1.bf16.msra.mxu0 %v4031
    %5607 = vmatprep.subr.bf16.mxu0 %v4040
    %5608 = vmatpush1.bf16.msra.mxu0 %v4039
    %5609 = vmatprep.subr.bf16.mxu0 %v4048
    %5610 = vmatpush1.bf16.msra.mxu0 %v4047
    %5611 = vmatprep.subr.bf16.mxu0 %v4056
    %5612 = vmatpush1.bf16.msra.mxu0 %v4055
    %5613 = vmatprep.subr.bf16.mxu0 %v4064
    %5614 = vmatpush1.bf16.msra.mxu0 %v4063
    %5615 = vmatprep.subr.bf16.mxu0 %v4072
    %5616 = vmatpush1.bf16.msra.mxu0 %v4071
    %5617 = vmatprep.subr.bf16.mxu0 %v4080
    %5618 = vmatpush1.bf16.msra.mxu0 %v4079
    %5619 = vmatprep.mubr.bf16.mxu0 %v1605
    %5620 = vmatmul.mubr.bf16.gmra.mrb[0].mxu0 %v1604
    %v5621 = vpop.f32.mrb[0].mxu0
    %v5622 = vadd.f32 %v5581, %v5621
    %v5623 = vpop.f32.mrb[0].mxu0
    %v5624 = vadd.f32 %v5583, %v5623
    %v5625 = vpop.f32.mrb[0].mxu0
    %v5626 = vpop.f32.mrb[0].mxu0
    %5627 = vdwg.mxu0
    %5628 = vmatprep.subr.bf16.mxu0 %v4088
    %5629 = vmatpush1.bf16.msra.mxu0 %v4087
    %5630 = vmatprep.subr.bf16.mxu0 %v4096
    %5631 = vmatpush1.bf16.msra.mxu0 %v4095
    %5632 = vmatprep.subr.bf16.mxu0 %v4104
    %5633 = vmatpush1.bf16.msra.mxu0 %v4103
    %5634 = vmatprep.subr.bf16.mxu0 %v4112
    %5635 = vmatpush1.bf16.msra.mxu0 %v4111
    %5636 = vmatprep.subr.bf16.mxu0 %v4120
    %5637 = vmatpush1.bf16.msra.mxu0 %v4119
    %5638 = vmatprep.subr.bf16.mxu0 %v4128
    %5639 = vmatpush1.bf16.msra.mxu0 %v4127
    %5640 = vmatprep.subr.bf16.mxu0 %v4136
    %5641 = vmatpush1.bf16.msra.mxu0 %v4135
    %5642 = vmatprep.subr.bf16.mxu0 %v4144
    %5643 = vmatpush1.bf16.msra.mxu0 %v4143
    %5644 = vmatprep.subr.bf16.mxu0 %v4152
    %5645 = vmatpush1.bf16.msra.mxu0 %v4151
    %5646 = vmatprep.subr.bf16.mxu0 %v4160
    %5647 = vmatpush1.bf16.msra.mxu0 %v4159
    %5648 = vmatprep.subr.bf16.mxu0 %v4168
    %5649 = vmatpush1.bf16.msra.mxu0 %v4167
    %5650 = vmatprep.subr.bf16.mxu0 %v4176
    %5651 = vmatpush1.bf16.msra.mxu0 %v4175
    %5652 = vmatprep.subr.bf16.mxu0 %v4184
    %5653 = vmatpush1.bf16.msra.mxu0 %v4183
    %5654 = vmatprep.subr.bf16.mxu0 %v4192
    %5655 = vmatpush1.bf16.msra.mxu0 %v4191
    %5656 = vmatprep.subr.bf16.mxu0 %v4200
    %5657 = vmatpush1.bf16.msra.mxu0 %v4199
    %5658 = vmatprep.subr.bf16.mxu0 %v4208
    %5659 = vmatpush1.bf16.msra.mxu0 %v4207
    %5660 = vmatprep.mubr.bf16.mxu0 %v1607
    %5661 = vmatmul.mubr.bf16.gmra.mrb[0].mxu0 %v1606
    %v5662 = vpop.f32.mrb[0].mxu0
    %v5663 = vadd.f32 %v5622, %v5662
    %v5664 = vpop.f32.mrb[0].mxu0
    %v5665 = vadd.f32 %v5624, %v5664
    %v5666 = vpop.f32.mrb[0].mxu0
    %v5667 = vpop.f32.mrb[0].mxu0
    %5668 = vdwg.mxu0
    %v5669 = vmax.f32 %v5048, 0.0
    %v5670 = vmax.f32 %v5050, 0.0
    %v5671 = vmax.f32 %v5253, 0.0
    %v5672 = vmax.f32 %v5255, 0.0
    %v5673 = vmax.f32 %v5458, 0.0
    %v5674 = vmax.f32 %v5460, 0.0
    %v5675 = vmax.f32 %v5663, 0.0
    %v5676 = vmax.f32 %v5665, 0.0
    %v5677 = vld [vmem:[#allocation11] sm:$0xff]
    %v5678 = vld [vmem:[#allocation11 + $0x8] sm:$0xff]
    %v5679 = vld [vmem:[#allocation11 + $0x10] sm:$0xff]
    %v5680 = vld [vmem:[#allocation11 + $0x18] sm:$0xff]
    %v5681 = vld [vmem:[#allocation11 + $0x20] sm:$0xff]
    %v5682 = vld [vmem:[#allocation11 + $0x28] sm:$0xff]
    %v5683 = vld [vmem:[#allocation11 + $0x30] sm:$0xff]
    %v5684 = vld [vmem:[#allocation11 + $0x38] sm:$0xff]
    %v5685 = vld [vmem:[#allocation11 + $0x40] sm:$0xff]
    %v5686 = vld [vmem:[#allocation11 + $0x48] sm:$0xff]
    %v5687 = vld [vmem:[#allocation11 + $0x50] sm:$0xff]
    %v5688 = vld [vmem:[#allocation11 + $0x58] sm:$0xff]
    %v5689 = vld [vmem:[#allocation11 + $0x60] sm:$0xff]
    %v5690 = vld [vmem:[#allocation11 + $0x68] sm:$0xff]
    %v5691 = vld [vmem:[#allocation11 + $0x70] sm:$0xff]
    %v5692 = vld [vmem:[#allocation11 + $0x78] sm:$0xff]
    %v5693 = vld [vmem:[#allocation11 + $0x80] sm:$0xff]
    %v5694 = vld [vmem:[#allocation11 + $0x88] sm:$0xff]
    %v5695 = vld [vmem:[#allocation11 + $0x90] sm:$0xff]
    %v5696 = vld [vmem:[#allocation11 + $0x98] sm:$0xff]
    %v5697 = vld [vmem:[#allocation11 + $0xa0] sm:$0xff]
    %v5698 = vld [vmem:[#allocation11 + $0xa8] sm:$0xff]
    %v5699 = vld [vmem:[#allocation11 + $0xb0] sm:$0xff]
    %v5700 = vld [vmem:[#allocation11 + $0xb8] sm:$0xff]
    %v5701 = vld [vmem:[#allocation11 + $0xc0] sm:$0xff]
    %v5702 = vld [vmem:[#allocation11 + $0xc8] sm:$0xff]
    %v5703 = vld [vmem:[#allocation11 + $0xd0] sm:$0xff]
    %v5704 = vld [vmem:[#allocation11 + $0xd8] sm:$0xff]
    %v5705 = vld [vmem:[#allocation11 + $0xe0] sm:$0xff]
    %v5706 = vld [vmem:[#allocation11 + $0xe8] sm:$0xff]
    %v5707 = vld [vmem:[#allocation11 + $0xf0] sm:$0xff]
    %v5708 = vld [vmem:[#allocation11 + $0xf8] sm:$0xff]
    %v5709 = vld [vmem:[#allocation11 + $0x100] sm:$0xff]
    %v5710 = vld [vmem:[#allocation11 + $0x108] sm:$0xff]
    %v5711 = vld [vmem:[#allocation11 + $0x110] sm:$0xff]
    %v5712 = vld [vmem:[#allocation11 + $0x118] sm:$0xff]
    %v5713 = vld [vmem:[#allocation11 + $0x120] sm:$0xff]
    %v5714 = vld [vmem:[#allocation11 + $0x128] sm:$0xff]
    %v5715 = vld [vmem:[#allocation11 + $0x130] sm:$0xff]
    %v5716 = vld [vmem:[#allocation11 + $0x138] sm:$0xff]
    %v5717 = vld [vmem:[#allocation11 + $0x140] sm:$0xff]
    %v5718 = vld [vmem:[#allocation11 + $0x148] sm:$0xff]
    %v5719 = vld [vmem:[#allocation11 + $0x150] sm:$0xff]
    %v5720 = vld [vmem:[#allocation11 + $0x158] sm:$0xff]
    %v5721 = vld [vmem:[#allocation11 + $0x160] sm:$0xff]
    %v5722 = vld [vmem:[#allocation11 + $0x168] sm:$0xff]
    %v5723 = vld [vmem:[#allocation11 + $0x170] sm:$0xff]
    %v5724 = vld [vmem:[#allocation11 + $0x178] sm:$0xff]
    %v5725 = vld [vmem:[#allocation11 + $0x180] sm:$0xff]
    %v5726 = vld [vmem:[#allocation11 + $0x188] sm:$0xff]
    %v5727 = vld [vmem:[#allocation11 + $0x190] sm:$0xff]
    %v5728 = vld [vmem:[#allocation11 + $0x198] sm:$0xff]
    %v5729 = vld [vmem:[#allocation11 + $0x1a0] sm:$0xff]
    %v5730 = vld [vmem:[#allocation11 + $0x1a8] sm:$0xff]
    %v5731 = vld [vmem:[#allocation11 + $0x1b0] sm:$0xff]
    %v5732 = vld [vmem:[#allocation11 + $0x1b8] sm:$0xff]
    %v5733 = vld [vmem:[#allocation11 + $0x1c0] sm:$0xff]
    %v5734 = vld [vmem:[#allocation11 + $0x1c8] sm:$0xff]
    %v5735 = vld [vmem:[#allocation11 + $0x1d0] sm:$0xff]
    %v5736 = vld [vmem:[#allocation11 + $0x1d8] sm:$0xff]
    %v5737 = vld [vmem:[#allocation11 + $0x1e0] sm:$0xff]
    %v5738 = vld [vmem:[#allocation11 + $0x1e8] sm:$0xff]
    %v5739 = vld [vmem:[#allocation11 + $0x1f0] sm:$0xff]
    %v5740 = vld [vmem:[#allocation11 + $0x1f8] sm:$0xff]
    %v5741 = vld [vmem:[#allocation11 + $0x200] sm:$0xff]
    %v5742 = vld [vmem:[#allocation11 + $0x208] sm:$0xff]
    %v5743 = vld [vmem:[#allocation11 + $0x210] sm:$0xff]
    %v5744 = vld [vmem:[#allocation11 + $0x218] sm:$0xff]
    %v5745 = vld [vmem:[#allocation11 + $0x220] sm:$0xff]
    %v5746 = vld [vmem:[#allocation11 + $0x228] sm:$0xff]
    %v5747 = vld [vmem:[#allocation11 + $0x230] sm:$0xff]
    %v5748 = vld [vmem:[#allocation11 + $0x238] sm:$0xff]
    %v5749 = vld [vmem:[#allocation11 + $0x240] sm:$0xff]
    %v5750 = vld [vmem:[#allocation11 + $0x248] sm:$0xff]
    %v5751 = vld [vmem:[#allocation11 + $0x250] sm:$0xff]
    %v5752 = vld [vmem:[#allocation11 + $0x258] sm:$0xff]
    %v5753 = vld [vmem:[#allocation11 + $0x260] sm:$0xff]
    %v5754 = vld [vmem:[#allocation11 + $0x268] sm:$0xff]
    %v5755 = vld [vmem:[#allocation11 + $0x270] sm:$0xff]
    %v5756 = vld [vmem:[#allocation11 + $0x278] sm:$0xff]
    %v5757 = vld [vmem:[#allocation11 + $0x280] sm:$0xff]
    %v5758 = vld [vmem:[#allocation11 + $0x288] sm:$0xff]
    %v5759 = vld [vmem:[#allocation11 + $0x290] sm:$0xff]
    %v5760 = vld [vmem:[#allocation11 + $0x298] sm:$0xff]
    %v5761 = vld [vmem:[#allocation11 + $0x2a0] sm:$0xff]
    %v5762 = vld [vmem:[#allocation11 + $0x2a8] sm:$0xff]
    %v5763 = vld [vmem:[#allocation11 + $0x2b0] sm:$0xff]
    %v5764 = vld [vmem:[#allocation11 + $0x2b8] sm:$0xff]
    %v5765 = vld [vmem:[#allocation11 + $0x2c0] sm:$0xff]
    %v5766 = vld [vmem:[#allocation11 + $0x2c8] sm:$0xff]
    %v5767 = vld [vmem:[#allocation11 + $0x2d0] sm:$0xff]
    %v5768 = vld [vmem:[#allocation11 + $0x2d8] sm:$0xff]
    %v5769 = vld [vmem:[#allocation11 + $0x2e0] sm:$0xff]
    %v5770 = vld [vmem:[#allocation11 + $0x2e8] sm:$0xff]
    %v5771 = vld [vmem:[#allocation11 + $0x2f0] sm:$0xff]
    %v5772 = vld [vmem:[#allocation11 + $0x2f8] sm:$0xff]
    %v5773 = vld [vmem:[#allocation11 + $0x300] sm:$0xff]
    %v5774 = vld [vmem:[#allocation11 + $0x308] sm:$0xff]
    %v5775 = vld [vmem:[#allocation11 + $0x310] sm:$0xff]
    %v5776 = vld [vmem:[#allocation11 + $0x318] sm:$0xff]
    %v5777 = vld [vmem:[#allocation11 + $0x320] sm:$0xff]
    %v5778 = vld [vmem:[#allocation11 + $0x328] sm:$0xff]
    %v5779 = vld [vmem:[#allocation11 + $0x330] sm:$0xff]
    %v5780 = vld [vmem:[#allocation11 + $0x338] sm:$0xff]
    %v5781 = vld [vmem:[#allocation11 + $0x340] sm:$0xff]
    %v5782 = vld [vmem:[#allocation11 + $0x348] sm:$0xff]
    %v5783 = vld [vmem:[#allocation11 + $0x350] sm:$0xff]
    %v5784 = vld [vmem:[#allocation11 + $0x358] sm:$0xff]
    %v5785 = vld [vmem:[#allocation11 + $0x360] sm:$0xff]
    %v5786 = vld [vmem:[#allocation11 + $0x368] sm:$0xff]
    %v5787 = vld [vmem:[#allocation11 + $0x370] sm:$0xff]
    %v5788 = vld [vmem:[#allocation11 + $0x378] sm:$0xff]
    %v5789 = vld [vmem:[#allocation11 + $0x380] sm:$0xff]
    %v5790 = vld [vmem:[#allocation11 + $0x388] sm:$0xff]
    %v5791 = vld [vmem:[#allocation11 + $0x390] sm:$0xff]
    %v5792 = vld [vmem:[#allocation11 + $0x398] sm:$0xff]
    %v5793 = vld [vmem:[#allocation11 + $0x3a0] sm:$0xff]
    %v5794 = vld [vmem:[#allocation11 + $0x3a8] sm:$0xff]
    %v5795 = vld [vmem:[#allocation11 + $0x3b0] sm:$0xff]
    %v5796 = vld [vmem:[#allocation11 + $0x3b8] sm:$0xff]
    %v5797 = vld [vmem:[#allocation11 + $0x3c0] sm:$0xff]
    %v5798 = vld [vmem:[#allocation11 + $0x3c8] sm:$0xff]
    %v5799 = vld [vmem:[#allocation11 + $0x3d0] sm:$0xff]
    %v5800 = vld [vmem:[#allocation11 + $0x3d8] sm:$0xff]
    %v5801 = vld [vmem:[#allocation11 + $0x3e0] sm:$0xff]
    %v5802 = vld [vmem:[#allocation11 + $0x3e8] sm:$0xff]
    %v5803 = vld [vmem:[#allocation11 + $0x3f0] sm:$0xff]
    %v5804 = vld [vmem:[#allocation11 + $0x3f8] sm:$0xff]
    %v5805 = vld [vmem:[#allocation11 + $0x400] sm:$0xff]
    %v5806 = vld [vmem:[#allocation11 + $0x408] sm:$0xff]
    %v5807 = vld [vmem:[#allocation11 + $0x410] sm:$0xff]
    %v5808 = vld [vmem:[#allocation11 + $0x418] sm:$0xff]
    %v5809 = vld [vmem:[#allocation11 + $0x420] sm:$0xff]
    %v5810 = vld [vmem:[#allocation11 + $0x428] sm:$0xff]
    %v5811 = vld [vmem:[#allocation11 + $0x430] sm:$0xff]
    %v5812 = vld [vmem:[#allocation11 + $0x438] sm:$0xff]
    %v5813 = vld [vmem:[#allocation11 + $0x440] sm:$0xff]
    %v5814 = vld [vmem:[#allocation11 + $0x448] sm:$0xff]
    %v5815 = vld [vmem:[#allocation11 + $0x450] sm:$0xff]
    %v5816 = vld [vmem:[#allocation11 + $0x458] sm:$0xff]
    %v5817 = vld [vmem:[#allocation11 + $0x460] sm:$0xff]
    %v5818 = vld [vmem:[#allocation11 + $0x468] sm:$0xff]
    %v5819 = vld [vmem:[#allocation11 + $0x470] sm:$0xff]
    %v5820 = vld [vmem:[#allocation11 + $0x478] sm:$0xff]
    %v5821 = vld [vmem:[#allocation11 + $0x480] sm:$0xff]
    %v5822 = vld [vmem:[#allocation11 + $0x488] sm:$0xff]
    %v5823 = vld [vmem:[#allocation11 + $0x490] sm:$0xff]
    %v5824 = vld [vmem:[#allocation11 + $0x498] sm:$0xff]
    %v5825 = vld [vmem:[#allocation11 + $0x4a0] sm:$0xff]
    %v5826 = vld [vmem:[#allocation11 + $0x4a8] sm:$0xff]
    %v5827 = vld [vmem:[#allocation11 + $0x4b0] sm:$0xff]
    %v5828 = vld [vmem:[#allocation11 + $0x4b8] sm:$0xff]
    %v5829 = vld [vmem:[#allocation11 + $0x4c0] sm:$0xff]
    %v5830 = vld [vmem:[#allocation11 + $0x4c8] sm:$0xff]
    %v5831 = vld [vmem:[#allocation11 + $0x4d0] sm:$0xff]
    %v5832 = vld [vmem:[#allocation11 + $0x4d8] sm:$0xff]
    %v5833 = vld [vmem:[#allocation11 + $0x4e0] sm:$0xff]
    %v5834 = vld [vmem:[#allocation11 + $0x4e8] sm:$0xff]
    %v5835 = vld [vmem:[#allocation11 + $0x4f0] sm:$0xff]
    %v5836 = vld [vmem:[#allocation11 + $0x4f8] sm:$0xff]
    %v5837 = vld [vmem:[#allocation11 + $0x500] sm:$0xff]
    %v5838 = vld [vmem:[#allocation11 + $0x508] sm:$0xff]
    %v5839 = vld [vmem:[#allocation11 + $0x510] sm:$0xff]
    %v5840 = vld [vmem:[#allocation11 + $0x518] sm:$0xff]
    %v5841 = vld [vmem:[#allocation11 + $0x520] sm:$0xff]
    %v5842 = vld [vmem:[#allocation11 + $0x528] sm:$0xff]
    %v5843 = vld [vmem:[#allocation11 + $0x530] sm:$0xff]
    %v5844 = vld [vmem:[#allocation11 + $0x538] sm:$0xff]
    %v5845 = vld [vmem:[#allocation11 + $0x540] sm:$0xff]
    %v5846 = vld [vmem:[#allocation11 + $0x548] sm:$0xff]
    %v5847 = vld [vmem:[#allocation11 + $0x550] sm:$0xff]
    %v5848 = vld [vmem:[#allocation11 + $0x558] sm:$0xff]
    %v5849 = vld [vmem:[#allocation11 + $0x560] sm:$0xff]
    %v5850 = vld [vmem:[#allocation11 + $0x568] sm:$0xff]
    %v5851 = vld [vmem:[#allocation11 + $0x570] sm:$0xff]
    %v5852 = vld [vmem:[#allocation11 + $0x578] sm:$0xff]
    %v5853 = vld [vmem:[#allocation11 + $0x580] sm:$0xff]
    %v5854 = vld [vmem:[#allocation11 + $0x588] sm:$0xff]
    %v5855 = vld [vmem:[#allocation11 + $0x590] sm:$0xff]
    %v5856 = vld [vmem:[#allocation11 + $0x598] sm:$0xff]
    %v5857 = vld [vmem:[#allocation11 + $0x5a0] sm:$0xff]
    %v5858 = vld [vmem:[#allocation11 + $0x5a8] sm:$0xff]
    %v5859 = vld [vmem:[#allocation11 + $0x5b0] sm:$0xff]
    %v5860 = vld [vmem:[#allocation11 + $0x5b8] sm:$0xff]
    %v5861 = vld [vmem:[#allocation11 + $0x5c0] sm:$0xff]
    %v5862 = vld [vmem:[#allocation11 + $0x5c8] sm:$0xff]
    %v5863 = vld [vmem:[#allocation11 + $0x5d0] sm:$0xff]
    %v5864 = vld [vmem:[#allocation11 + $0x5d8] sm:$0xff]
    %v5865 = vld [vmem:[#allocation11 + $0x5e0] sm:$0xff]
    %v5866 = vld [vmem:[#allocation11 + $0x5e8] sm:$0xff]
    %v5867 = vld [vmem:[#allocation11 + $0x5f0] sm:$0xff]
    %v5868 = vld [vmem:[#allocation11 + $0x5f8] sm:$0xff]
    %v5869 = vld [vmem:[#allocation11 + $0x600] sm:$0xff]
    %v5870 = vld [vmem:[#allocation11 + $0x608] sm:$0xff]
    %v5871 = vld [vmem:[#allocation11 + $0x610] sm:$0xff]
    %v5872 = vld [vmem:[#allocation11 + $0x618] sm:$0xff]
    %v5873 = vld [vmem:[#allocation11 + $0x620] sm:$0xff]
    %v5874 = vld [vmem:[#allocation11 + $0x628] sm:$0xff]
    %v5875 = vld [vmem:[#allocation11 + $0x630] sm:$0xff]
    %v5876 = vld [vmem:[#allocation11 + $0x638] sm:$0xff]
    %v5877 = vld [vmem:[#allocation11 + $0x640] sm:$0xff]
    %v5878 = vld [vmem:[#allocation11 + $0x648] sm:$0xff]
    %v5879 = vld [vmem:[#allocation11 + $0x650] sm:$0xff]
    %v5880 = vld [vmem:[#allocation11 + $0x658] sm:$0xff]
    %v5881 = vld [vmem:[#allocation11 + $0x660] sm:$0xff]
    %v5882 = vld [vmem:[#allocation11 + $0x668] sm:$0xff]
    %v5883 = vld [vmem:[#allocation11 + $0x670] sm:$0xff]
    %v5884 = vld [vmem:[#allocation11 + $0x678] sm:$0xff]
    %v5885 = vld [vmem:[#allocation11 + $0x680] sm:$0xff]
    %v5886 = vld [vmem:[#allocation11 + $0x688] sm:$0xff]
    %v5887 = vld [vmem:[#allocation11 + $0x690] sm:$0xff]
    %v5888 = vld [vmem:[#allocation11 + $0x698] sm:$0xff]
    %v5889 = vld [vmem:[#allocation11 + $0x6a0] sm:$0xff]
    %v5890 = vld [vmem:[#allocation11 + $0x6a8] sm:$0xff]
    %v5891 = vld [vmem:[#allocation11 + $0x6b0] sm:$0xff]
    %v5892 = vld [vmem:[#allocation11 + $0x6b8] sm:$0xff]
    %v5893 = vld [vmem:[#allocation11 + $0x6c0] sm:$0xff]
    %v5894 = vld [vmem:[#allocation11 + $0x6c8] sm:$0xff]
    %v5895 = vld [vmem:[#allocation11 + $0x6d0] sm:$0xff]
    %v5896 = vld [vmem:[#allocation11 + $0x6d8] sm:$0xff]
    %v5897 = vld [vmem:[#allocation11 + $0x6e0] sm:$0xff]
    %v5898 = vld [vmem:[#allocation11 + $0x6e8] sm:$0xff]
    %v5899 = vld [vmem:[#allocation11 + $0x6f0] sm:$0xff]
    %v5900 = vld [vmem:[#allocation11 + $0x6f8] sm:$0xff]
    %v5901 = vld [vmem:[#allocation11 + $0x700] sm:$0xff]
    %v5902 = vld [vmem:[#allocation11 + $0x708] sm:$0xff]
    %v5903 = vld [vmem:[#allocation11 + $0x710] sm:$0xff]
    %v5904 = vld [vmem:[#allocation11 + $0x718] sm:$0xff]
    %v5905 = vld [vmem:[#allocation11 + $0x720] sm:$0xff]
    %v5906 = vld [vmem:[#allocation11 + $0x728] sm:$0xff]
    %v5907 = vld [vmem:[#allocation11 + $0x730] sm:$0xff]
    %v5908 = vld [vmem:[#allocation11 + $0x738] sm:$0xff]
    %v5909 = vld [vmem:[#allocation11 + $0x740] sm:$0xff]
    %v5910 = vld [vmem:[#allocation11 + $0x748] sm:$0xff]
    %v5911 = vld [vmem:[#allocation11 + $0x750] sm:$0xff]
    %v5912 = vld [vmem:[#allocation11 + $0x758] sm:$0xff]
    %v5913 = vld [vmem:[#allocation11 + $0x760] sm:$0xff]
    %v5914 = vld [vmem:[#allocation11 + $0x768] sm:$0xff]
    %v5915 = vld [vmem:[#allocation11 + $0x770] sm:$0xff]
    %v5916 = vld [vmem:[#allocation11 + $0x778] sm:$0xff]
    %v5917 = vld [vmem:[#allocation11 + $0x780] sm:$0xff]
    %v5918 = vld [vmem:[#allocation11 + $0x788] sm:$0xff]
    %v5919 = vld [vmem:[#allocation11 + $0x790] sm:$0xff]
    %v5920 = vld [vmem:[#allocation11 + $0x798] sm:$0xff]
    %v5921 = vld [vmem:[#allocation11 + $0x7a0] sm:$0xff]
    %v5922 = vld [vmem:[#allocation11 + $0x7a8] sm:$0xff]
    %v5923 = vld [vmem:[#allocation11 + $0x7b0] sm:$0xff]
    %v5924 = vld [vmem:[#allocation11 + $0x7b8] sm:$0xff]
    %v5925 = vld [vmem:[#allocation11 + $0x7c0] sm:$0xff]
    %v5926 = vld [vmem:[#allocation11 + $0x7c8] sm:$0xff]
    %v5927 = vld [vmem:[#allocation11 + $0x7d0] sm:$0xff]
    %v5928 = vld [vmem:[#allocation11 + $0x7d8] sm:$0xff]
    %v5929 = vld [vmem:[#allocation11 + $0x7e0] sm:$0xff]
    %v5930 = vld [vmem:[#allocation11 + $0x7e8] sm:$0xff]
    %v5931 = vld [vmem:[#allocation11 + $0x7f0] sm:$0xff]
    %v5932 = vld [vmem:[#allocation11 + $0x7f8] sm:$0xff]
    %v5933 = vld [vmem:[#allocation13] sm:$0xf]
    %v5934 = vpack.c.bf16 %v5669, %v5669
    %v5935 = vpack.c.bf16 %v5670, %v5670
    %v5936 = vpack.c.bf16 %v5671, %v5671
    %v5937 = vpack.c.bf16 %v5672, %v5672
    %v5938 = vpack.c.bf16 %v5673, %v5673
    %v5939 = vpack.c.bf16 %v5674, %v5674
    %v5940 = vpack.c.bf16 %v5675, %v5675
    %v5941 = vpack.c.bf16 %v5676, %v5676
    %v5943 = vlaneseq
    %v5944 = vshrl.u32 %v5943, 7
    %v5945 = vsub.s32 0, %v5944
    %v5946 = vrot.slane %v5933, %v5945
    %v5947 = vlaneseq
    %v5948 = vshrl.u32 %v5947, 7
    %v5949 = vsub.s32 1, %v5948
    %v5950 = vrot.slane %v5933, %v5949
    %v5951 = vlaneseq
    %v5952 = vshrl.u32 %v5951, 7
    %v5953 = vsub.s32 2, %v5952
    %v5954 = vrot.slane %v5933, %v5953
    %v5955 = vlaneseq
    %v5956 = vshrl.u32 %v5955, 7
    %v5957 = vsub.s32 3, %v5956
    %v5958 = vrot.slane %v5933, %v5957
    %v6219 = vunpack.c.l.b16 %v5677
    %v6220 = vunpack.c.h.b16 %v5677
    %v6221 = vunpack.c.l.b16 %v5678
    %v6222 = vunpack.c.h.b16 %v5678
    %v6223 = vunpack.c.l.b16 %v5679
    %v6224 = vunpack.c.h.b16 %v5679
    %v6225 = vunpack.c.l.b16 %v5680
    %v6226 = vunpack.c.h.b16 %v5680
    %v6227 = vunpack.c.l.b16 %v5681
    %v6228 = vunpack.c.h.b16 %v5681
    %v6229 = vunpack.c.l.b16 %v5682
    %v6230 = vunpack.c.h.b16 %v5682
    %v6231 = vunpack.c.l.b16 %v5683
    %v6232 = vunpack.c.h.b16 %v5683
    %v6233 = vunpack.c.l.b16 %v5684
    %v6234 = vunpack.c.h.b16 %v5684
    %v6235 = vunpack.c.l.b16 %v5685
    %v6236 = vunpack.c.h.b16 %v5685
    %v6237 = vunpack.c.l.b16 %v5686
    %v6238 = vunpack.c.h.b16 %v5686
    %v6239 = vunpack.c.l.b16 %v5687
    %v6240 = vunpack.c.h.b16 %v5687
    %v6241 = vunpack.c.l.b16 %v5688
    %v6242 = vunpack.c.h.b16 %v5688
    %v6243 = vunpack.c.l.b16 %v5689
    %v6244 = vunpack.c.h.b16 %v5689
    %v6245 = vunpack.c.l.b16 %v5690
    %v6246 = vunpack.c.h.b16 %v5690
    %v6247 = vunpack.c.l.b16 %v5691
    %v6248 = vunpack.c.h.b16 %v5691
    %v6249 = vunpack.c.l.b16 %v5692
    %v6250 = vunpack.c.h.b16 %v5692
    %v6251 = vunpack.c.l.b16 %v5693
    %v6252 = vunpack.c.h.b16 %v5693
    %v6253 = vunpack.c.l.b16 %v5694
    %v6254 = vunpack.c.h.b16 %v5694
    %v6255 = vunpack.c.l.b16 %v5695
    %v6256 = vunpack.c.h.b16 %v5695
    %v6257 = vunpack.c.l.b16 %v5696
    %v6258 = vunpack.c.h.b16 %v5696
    %v6259 = vunpack.c.l.b16 %v5697
    %v6260 = vunpack.c.h.b16 %v5697
    %v6261 = vunpack.c.l.b16 %v5698
    %v6262 = vunpack.c.h.b16 %v5698
    %v6263 = vunpack.c.l.b16 %v5699
    %v6264 = vunpack.c.h.b16 %v5699
    %v6265 = vunpack.c.l.b16 %v5700
    %v6266 = vunpack.c.h.b16 %v5700
    %v6267 = vunpack.c.l.b16 %v5701
    %v6268 = vunpack.c.h.b16 %v5701
    %v6269 = vunpack.c.l.b16 %v5702
    %v6270 = vunpack.c.h.b16 %v5702
    %v6271 = vunpack.c.l.b16 %v5703
    %v6272 = vunpack.c.h.b16 %v5703
    %v6273 = vunpack.c.l.b16 %v5704
    %v6274 = vunpack.c.h.b16 %v5704
    %v6275 = vunpack.c.l.b16 %v5705
    %v6276 = vunpack.c.h.b16 %v5705
    %v6277 = vunpack.c.l.b16 %v5706
    %v6278 = vunpack.c.h.b16 %v5706
    %v6279 = vunpack.c.l.b16 %v5707
    %v6280 = vunpack.c.h.b16 %v5707
    %v6281 = vunpack.c.l.b16 %v5708
    %v6282 = vunpack.c.h.b16 %v5708
    %v6283 = vunpack.c.l.b16 %v5709
    %v6284 = vunpack.c.h.b16 %v5709
    %v6285 = vunpack.c.l.b16 %v5710
    %v6286 = vunpack.c.h.b16 %v5710
    %v6287 = vunpack.c.l.b16 %v5711
    %v6288 = vunpack.c.h.b16 %v5711
    %v6289 = vunpack.c.l.b16 %v5712
    %v6290 = vunpack.c.h.b16 %v5712
    %v6291 = vunpack.c.l.b16 %v5713
    %v6292 = vunpack.c.h.b16 %v5713
    %v6293 = vunpack.c.l.b16 %v5714
    %v6294 = vunpack.c.h.b16 %v5714
    %v6295 = vunpack.c.l.b16 %v5715
    %v6296 = vunpack.c.h.b16 %v5715
    %v6297 = vunpack.c.l.b16 %v5716
    %v6298 = vunpack.c.h.b16 %v5716
    %v6299 = vunpack.c.l.b16 %v5717
    %v6300 = vunpack.c.h.b16 %v5717
    %v6301 = vunpack.c.l.b16 %v5718
    %v6302 = vunpack.c.h.b16 %v5718
    %v6303 = vunpack.c.l.b16 %v5719
    %v6304 = vunpack.c.h.b16 %v5719
    %v6305 = vunpack.c.l.b16 %v5720
    %v6306 = vunpack.c.h.b16 %v5720
    %v6307 = vunpack.c.l.b16 %v5721
    %v6308 = vunpack.c.h.b16 %v5721
    %v6309 = vunpack.c.l.b16 %v5722
    %v6310 = vunpack.c.h.b16 %v5722
    %v6311 = vunpack.c.l.b16 %v5723
    %v6312 = vunpack.c.h.b16 %v5723
    %v6313 = vunpack.c.l.b16 %v5724
    %v6314 = vunpack.c.h.b16 %v5724
    %v6315 = vunpack.c.l.b16 %v5725
    %v6316 = vunpack.c.h.b16 %v5725
    %v6317 = vunpack.c.l.b16 %v5726
    %v6318 = vunpack.c.h.b16 %v5726
    %v6319 = vunpack.c.l.b16 %v5727
    %v6320 = vunpack.c.h.b16 %v5727
    %v6321 = vunpack.c.l.b16 %v5728
    %v6322 = vunpack.c.h.b16 %v5728
    %v6323 = vunpack.c.l.b16 %v5729
    %v6324 = vunpack.c.h.b16 %v5729
    %v6325 = vunpack.c.l.b16 %v5730
    %v6326 = vunpack.c.h.b16 %v5730
    %v6327 = vunpack.c.l.b16 %v5731
    %v6328 = vunpack.c.h.b16 %v5731
    %v6329 = vunpack.c.l.b16 %v5732
    %v6330 = vunpack.c.h.b16 %v5732
    %v6331 = vunpack.c.l.b16 %v5733
    %v6332 = vunpack.c.h.b16 %v5733
    %v6333 = vunpack.c.l.b16 %v5734
    %v6334 = vunpack.c.h.b16 %v5734
    %v6335 = vunpack.c.l.b16 %v5735
    %v6336 = vunpack.c.h.b16 %v5735
    %v6337 = vunpack.c.l.b16 %v5736
    %v6338 = vunpack.c.h.b16 %v5736
    %v6339 = vunpack.c.l.b16 %v5737
    %v6340 = vunpack.c.h.b16 %v5737
    %v6341 = vunpack.c.l.b16 %v5738
    %v6342 = vunpack.c.h.b16 %v5738
    %v6343 = vunpack.c.l.b16 %v5739
    %v6344 = vunpack.c.h.b16 %v5739
    %v6345 = vunpack.c.l.b16 %v5740
    %v6346 = vunpack.c.h.b16 %v5740
    %v6347 = vunpack.c.l.b16 %v5741
    %v6348 = vunpack.c.h.b16 %v5741
    %v6349 = vunpack.c.l.b16 %v5742
    %v6350 = vunpack.c.h.b16 %v5742
    %v6351 = vunpack.c.l.b16 %v5743
    %v6352 = vunpack.c.h.b16 %v5743
    %v6353 = vunpack.c.l.b16 %v5744
    %v6354 = vunpack.c.h.b16 %v5744
    %v6355 = vunpack.c.l.b16 %v5745
    %v6356 = vunpack.c.h.b16 %v5745
    %v6357 = vunpack.c.l.b16 %v5746
    %v6358 = vunpack.c.h.b16 %v5746
    %v6359 = vunpack.c.l.b16 %v5747
    %v6360 = vunpack.c.h.b16 %v5747
    %v6361 = vunpack.c.l.b16 %v5748
    %v6362 = vunpack.c.h.b16 %v5748
    %v6363 = vunpack.c.l.b16 %v5749
    %v6364 = vunpack.c.h.b16 %v5749
    %v6365 = vunpack.c.l.b16 %v5750
    %v6366 = vunpack.c.h.b16 %v5750
    %v6367 = vunpack.c.l.b16 %v5751
    %v6368 = vunpack.c.h.b16 %v5751
    %v6369 = vunpack.c.l.b16 %v5752
    %v6370 = vunpack.c.h.b16 %v5752
    %v6371 = vunpack.c.l.b16 %v5753
    %v6372 = vunpack.c.h.b16 %v5753
    %v6373 = vunpack.c.l.b16 %v5754
    %v6374 = vunpack.c.h.b16 %v5754
    %v6375 = vunpack.c.l.b16 %v5755
    %v6376 = vunpack.c.h.b16 %v5755
    %v6377 = vunpack.c.l.b16 %v5756
    %v6378 = vunpack.c.h.b16 %v5756
    %v6379 = vunpack.c.l.b16 %v5757
    %v6380 = vunpack.c.h.b16 %v5757
    %v6381 = vunpack.c.l.b16 %v5758
    %v6382 = vunpack.c.h.b16 %v5758
    %v6383 = vunpack.c.l.b16 %v5759
    %v6384 = vunpack.c.h.b16 %v5759
    %v6385 = vunpack.c.l.b16 %v5760
    %v6386 = vunpack.c.h.b16 %v5760
    %v6387 = vunpack.c.l.b16 %v5761
    %v6388 = vunpack.c.h.b16 %v5761
    %v6389 = vunpack.c.l.b16 %v5762
    %v6390 = vunpack.c.h.b16 %v5762
    %v6391 = vunpack.c.l.b16 %v5763
    %v6392 = vunpack.c.h.b16 %v5763
    %v6393 = vunpack.c.l.b16 %v5764
    %v6394 = vunpack.c.h.b16 %v5764
    %v6395 = vunpack.c.l.b16 %v5765
    %v6396 = vunpack.c.h.b16 %v5765
    %v6397 = vunpack.c.l.b16 %v5766
    %v6398 = vunpack.c.h.b16 %v5766
    %v6399 = vunpack.c.l.b16 %v5767
    %v6400 = vunpack.c.h.b16 %v5767
    %v6401 = vunpack.c.l.b16 %v5768
    %v6402 = vunpack.c.h.b16 %v5768
    %v6403 = vunpack.c.l.b16 %v5769
    %v6404 = vunpack.c.h.b16 %v5769
    %v6405 = vunpack.c.l.b16 %v5770
    %v6406 = vunpack.c.h.b16 %v5770
    %v6407 = vunpack.c.l.b16 %v5771
    %v6408 = vunpack.c.h.b16 %v5771
    %v6409 = vunpack.c.l.b16 %v5772
    %v6410 = vunpack.c.h.b16 %v5772
    %v6411 = vunpack.c.l.b16 %v5773
    %v6412 = vunpack.c.h.b16 %v5773
    %v6413 = vunpack.c.l.b16 %v5774
    %v6414 = vunpack.c.h.b16 %v5774
    %v6415 = vunpack.c.l.b16 %v5775
    %v6416 = vunpack.c.h.b16 %v5775
    %v6417 = vunpack.c.l.b16 %v5776
    %v6418 = vunpack.c.h.b16 %v5776
    %v6419 = vunpack.c.l.b16 %v5777
    %v6420 = vunpack.c.h.b16 %v5777
    %v6421 = vunpack.c.l.b16 %v5778
    %v6422 = vunpack.c.h.b16 %v5778
    %v6423 = vunpack.c.l.b16 %v5779
    %v6424 = vunpack.c.h.b16 %v5779
    %v6425 = vunpack.c.l.b16 %v5780
    %v6426 = vunpack.c.h.b16 %v5780
    %v6427 = vunpack.c.l.b16 %v5781
    %v6428 = vunpack.c.h.b16 %v5781
    %v6429 = vunpack.c.l.b16 %v5782
    %v6430 = vunpack.c.h.b16 %v5782
    %v6431 = vunpack.c.l.b16 %v5783
    %v6432 = vunpack.c.h.b16 %v5783
    %v6433 = vunpack.c.l.b16 %v5784
    %v6434 = vunpack.c.h.b16 %v5784
    %v6435 = vunpack.c.l.b16 %v5785
    %v6436 = vunpack.c.h.b16 %v5785
    %v6437 = vunpack.c.l.b16 %v5786
    %v6438 = vunpack.c.h.b16 %v5786
    %v6439 = vunpack.c.l.b16 %v5787
    %v6440 = vunpack.c.h.b16 %v5787
    %v6441 = vunpack.c.l.b16 %v5788
    %v6442 = vunpack.c.h.b16 %v5788
    %v6443 = vunpack.c.l.b16 %v5789
    %v6444 = vunpack.c.h.b16 %v5789
    %v6445 = vunpack.c.l.b16 %v5790
    %v6446 = vunpack.c.h.b16 %v5790
    %v6447 = vunpack.c.l.b16 %v5791
    %v6448 = vunpack.c.h.b16 %v5791
    %v6449 = vunpack.c.l.b16 %v5792
    %v6450 = vunpack.c.h.b16 %v5792
    %v6451 = vunpack.c.l.b16 %v5793
    %v6452 = vunpack.c.h.b16 %v5793
    %v6453 = vunpack.c.l.b16 %v5794
    %v6454 = vunpack.c.h.b16 %v5794
    %v6455 = vunpack.c.l.b16 %v5795
    %v6456 = vunpack.c.h.b16 %v5795
    %v6457 = vunpack.c.l.b16 %v5796
    %v6458 = vunpack.c.h.b16 %v5796
    %v6459 = vunpack.c.l.b16 %v5797
    %v6460 = vunpack.c.h.b16 %v5797
    %v6461 = vunpack.c.l.b16 %v5798
    %v6462 = vunpack.c.h.b16 %v5798
    %v6463 = vunpack.c.l.b16 %v5799
    %v6464 = vunpack.c.h.b16 %v5799
    %v6465 = vunpack.c.l.b16 %v5800
    %v6466 = vunpack.c.h.b16 %v5800
    %v6467 = vunpack.c.l.b16 %v5801
    %v6468 = vunpack.c.h.b16 %v5801
    %v6469 = vunpack.c.l.b16 %v5802
    %v6470 = vunpack.c.h.b16 %v5802
    %v6471 = vunpack.c.l.b16 %v5803
    %v6472 = vunpack.c.h.b16 %v5803
    %v6473 = vunpack.c.l.b16 %v5804
    %v6474 = vunpack.c.h.b16 %v5804
    %v6475 = vunpack.c.l.b16 %v5805
    %v6476 = vunpack.c.h.b16 %v5805
    %v6477 = vunpack.c.l.b16 %v5806
    %v6478 = vunpack.c.h.b16 %v5806
    %v6479 = vunpack.c.l.b16 %v5807
    %v6480 = vunpack.c.h.b16 %v5807
    %v6481 = vunpack.c.l.b16 %v5808
    %v6482 = vunpack.c.h.b16 %v5808
    %v6483 = vunpack.c.l.b16 %v5809
    %v6484 = vunpack.c.h.b16 %v5809
    %v6485 = vunpack.c.l.b16 %v5810
    %v6486 = vunpack.c.h.b16 %v5810
    %v6487 = vunpack.c.l.b16 %v5811
    %v6488 = vunpack.c.h.b16 %v5811
    %v6489 = vunpack.c.l.b16 %v5812
    %v6490 = vunpack.c.h.b16 %v5812
    %v6491 = vunpack.c.l.b16 %v5813
    %v6492 = vunpack.c.h.b16 %v5813
    %v6493 = vunpack.c.l.b16 %v5814
    %v6494 = vunpack.c.h.b16 %v5814
    %v6495 = vunpack.c.l.b16 %v5815
    %v6496 = vunpack.c.h.b16 %v5815
    %v6497 = vunpack.c.l.b16 %v5816
    %v6498 = vunpack.c.h.b16 %v5816
    %v6499 = vunpack.c.l.b16 %v5817
    %v6500 = vunpack.c.h.b16 %v5817
    %v6501 = vunpack.c.l.b16 %v5818
    %v6502 = vunpack.c.h.b16 %v5818
    %v6503 = vunpack.c.l.b16 %v5819
    %v6504 = vunpack.c.h.b16 %v5819
    %v6505 = vunpack.c.l.b16 %v5820
    %v6506 = vunpack.c.h.b16 %v5820
    %v6507 = vunpack.c.l.b16 %v5821
    %v6508 = vunpack.c.h.b16 %v5821
    %v6509 = vunpack.c.l.b16 %v5822
    %v6510 = vunpack.c.h.b16 %v5822
    %v6511 = vunpack.c.l.b16 %v5823
    %v6512 = vunpack.c.h.b16 %v5823
    %v6513 = vunpack.c.l.b16 %v5824
    %v6514 = vunpack.c.h.b16 %v5824
    %v6515 = vunpack.c.l.b16 %v5825
    %v6516 = vunpack.c.h.b16 %v5825
    %v6517 = vunpack.c.l.b16 %v5826
    %v6518 = vunpack.c.h.b16 %v5826
    %v6519 = vunpack.c.l.b16 %v5827
    %v6520 = vunpack.c.h.b16 %v5827
    %v6521 = vunpack.c.l.b16 %v5828
    %v6522 = vunpack.c.h.b16 %v5828
    %v6523 = vunpack.c.l.b16 %v5829
    %v6524 = vunpack.c.h.b16 %v5829
    %v6525 = vunpack.c.l.b16 %v5830
    %v6526 = vunpack.c.h.b16 %v5830
    %v6527 = vunpack.c.l.b16 %v5831
    %v6528 = vunpack.c.h.b16 %v5831
    %v6529 = vunpack.c.l.b16 %v5832
    %v6530 = vunpack.c.h.b16 %v5832
    %v6531 = vunpack.c.l.b16 %v5833
    %v6532 = vunpack.c.h.b16 %v5833
    %v6533 = vunpack.c.l.b16 %v5834
    %v6534 = vunpack.c.h.b16 %v5834
    %v6535 = vunpack.c.l.b16 %v5835
    %v6536 = vunpack.c.h.b16 %v5835
    %v6537 = vunpack.c.l.b16 %v5836
    %v6538 = vunpack.c.h.b16 %v5836
    %v6539 = vunpack.c.l.b16 %v5837
    %v6540 = vunpack.c.h.b16 %v5837
    %v6541 = vunpack.c.l.b16 %v5838
    %v6542 = vunpack.c.h.b16 %v5838
    %v6543 = vunpack.c.l.b16 %v5839
    %v6544 = vunpack.c.h.b16 %v5839
    %v6545 = vunpack.c.l.b16 %v5840
    %v6546 = vunpack.c.h.b16 %v5840
    %v6547 = vunpack.c.l.b16 %v5841
    %v6548 = vunpack.c.h.b16 %v5841
    %v6549 = vunpack.c.l.b16 %v5842
    %v6550 = vunpack.c.h.b16 %v5842
    %v6551 = vunpack.c.l.b16 %v5843
    %v6552 = vunpack.c.h.b16 %v5843
    %v6553 = vunpack.c.l.b16 %v5844
    %v6554 = vunpack.c.h.b16 %v5844
    %v6555 = vunpack.c.l.b16 %v5845
    %v6556 = vunpack.c.h.b16 %v5845
    %v6557 = vunpack.c.l.b16 %v5846
    %v6558 = vunpack.c.h.b16 %v5846
    %v6559 = vunpack.c.l.b16 %v5847
    %v6560 = vunpack.c.h.b16 %v5847
    %v6561 = vunpack.c.l.b16 %v5848
    %v6562 = vunpack.c.h.b16 %v5848
    %v6563 = vunpack.c.l.b16 %v5849
    %v6564 = vunpack.c.h.b16 %v5849
    %v6565 = vunpack.c.l.b16 %v5850
    %v6566 = vunpack.c.h.b16 %v5850
    %v6567 = vunpack.c.l.b16 %v5851
    %v6568 = vunpack.c.h.b16 %v5851
    %v6569 = vunpack.c.l.b16 %v5852
    %v6570 = vunpack.c.h.b16 %v5852
    %v6571 = vunpack.c.l.b16 %v5853
    %v6572 = vunpack.c.h.b16 %v5853
    %v6573 = vunpack.c.l.b16 %v5854
    %v6574 = vunpack.c.h.b16 %v5854
    %v6575 = vunpack.c.l.b16 %v5855
    %v6576 = vunpack.c.h.b16 %v5855
    %v6577 = vunpack.c.l.b16 %v5856
    %v6578 = vunpack.c.h.b16 %v5856
    %v6579 = vunpack.c.l.b16 %v5857
    %v6580 = vunpack.c.h.b16 %v5857
    %v6581 = vunpack.c.l.b16 %v5858
    %v6582 = vunpack.c.h.b16 %v5858
    %v6583 = vunpack.c.l.b16 %v5859
    %v6584 = vunpack.c.h.b16 %v5859
    %v6585 = vunpack.c.l.b16 %v5860
    %v6586 = vunpack.c.h.b16 %v5860
    %v6587 = vunpack.c.l.b16 %v5861
    %v6588 = vunpack.c.h.b16 %v5861
    %v6589 = vunpack.c.l.b16 %v5862
    %v6590 = vunpack.c.h.b16 %v5862
    %v6591 = vunpack.c.l.b16 %v5863
    %v6592 = vunpack.c.h.b16 %v5863
    %v6593 = vunpack.c.l.b16 %v5864
    %v6594 = vunpack.c.h.b16 %v5864
    %v6595 = vunpack.c.l.b16 %v5865
    %v6596 = vunpack.c.h.b16 %v5865
    %v6597 = vunpack.c.l.b16 %v5866
    %v6598 = vunpack.c.h.b16 %v5866
    %v6599 = vunpack.c.l.b16 %v5867
    %v6600 = vunpack.c.h.b16 %v5867
    %v6601 = vunpack.c.l.b16 %v5868
    %v6602 = vunpack.c.h.b16 %v5868
    %v6603 = vunpack.c.l.b16 %v5869
    %v6604 = vunpack.c.h.b16 %v5869
    %v6605 = vunpack.c.l.b16 %v5870
    %v6606 = vunpack.c.h.b16 %v5870
    %v6607 = vunpack.c.l.b16 %v5871
    %v6608 = vunpack.c.h.b16 %v5871
    %v6609 = vunpack.c.l.b16 %v5872
    %v6610 = vunpack.c.h.b16 %v5872
    %v6611 = vunpack.c.l.b16 %v5873
    %v6612 = vunpack.c.h.b16 %v5873
    %v6613 = vunpack.c.l.b16 %v5874
    %v6614 = vunpack.c.h.b16 %v5874
    %v6615 = vunpack.c.l.b16 %v5875
    %v6616 = vunpack.c.h.b16 %v5875
    %v6617 = vunpack.c.l.b16 %v5876
    %v6618 = vunpack.c.h.b16 %v5876
    %v6619 = vunpack.c.l.b16 %v5877
    %v6620 = vunpack.c.h.b16 %v5877
    %v6621 = vunpack.c.l.b16 %v5878
    %v6622 = vunpack.c.h.b16 %v5878
    %v6623 = vunpack.c.l.b16 %v5879
    %v6624 = vunpack.c.h.b16 %v5879
    %v6625 = vunpack.c.l.b16 %v5880
    %v6626 = vunpack.c.h.b16 %v5880
    %v6627 = vunpack.c.l.b16 %v5881
    %v6628 = vunpack.c.h.b16 %v5881
    %v6629 = vunpack.c.l.b16 %v5882
    %v6630 = vunpack.c.h.b16 %v5882
    %v6631 = vunpack.c.l.b16 %v5883
    %v6632 = vunpack.c.h.b16 %v5883
    %v6633 = vunpack.c.l.b16 %v5884
    %v6634 = vunpack.c.h.b16 %v5884
    %v6635 = vunpack.c.l.b16 %v5885
    %v6636 = vunpack.c.h.b16 %v5885
    %v6637 = vunpack.c.l.b16 %v5886
    %v6638 = vunpack.c.h.b16 %v5886
    %v6639 = vunpack.c.l.b16 %v5887
    %v6640 = vunpack.c.h.b16 %v5887
    %v6641 = vunpack.c.l.b16 %v5888
    %v6642 = vunpack.c.h.b16 %v5888
    %v6643 = vunpack.c.l.b16 %v5889
    %v6644 = vunpack.c.h.b16 %v5889
    %v6645 = vunpack.c.l.b16 %v5890
    %v6646 = vunpack.c.h.b16 %v5890
    %v6647 = vunpack.c.l.b16 %v5891
    %v6648 = vunpack.c.h.b16 %v5891
    %v6649 = vunpack.c.l.b16 %v5892
    %v6650 = vunpack.c.h.b16 %v5892
    %v6651 = vunpack.c.l.b16 %v5893
    %v6652 = vunpack.c.h.b16 %v5893
    %v6653 = vunpack.c.l.b16 %v5894
    %v6654 = vunpack.c.h.b16 %v5894
    %v6655 = vunpack.c.l.b16 %v5895
    %v6656 = vunpack.c.h.b16 %v5895
    %v6657 = vunpack.c.l.b16 %v5896
    %v6658 = vunpack.c.h.b16 %v5896
    %v6659 = vunpack.c.l.b16 %v5897
    %v6660 = vunpack.c.h.b16 %v5897
    %v6661 = vunpack.c.l.b16 %v5898
    %v6662 = vunpack.c.h.b16 %v5898
    %v6663 = vunpack.c.l.b16 %v5899
    %v6664 = vunpack.c.h.b16 %v5899
    %v6665 = vunpack.c.l.b16 %v5900
    %v6666 = vunpack.c.h.b16 %v5900
    %v6667 = vunpack.c.l.b16 %v5901
    %v6668 = vunpack.c.h.b16 %v5901
    %v6669 = vunpack.c.l.b16 %v5902
    %v6670 = vunpack.c.h.b16 %v5902
    %v6671 = vunpack.c.l.b16 %v5903
    %v6672 = vunpack.c.h.b16 %v5903
    %v6673 = vunpack.c.l.b16 %v5904
    %v6674 = vunpack.c.h.b16 %v5904
    %v6675 = vunpack.c.l.b16 %v5905
    %v6676 = vunpack.c.h.b16 %v5905
    %v6677 = vunpack.c.l.b16 %v5906
    %v6678 = vunpack.c.h.b16 %v5906
    %v6679 = vunpack.c.l.b16 %v5907
    %v6680 = vunpack.c.h.b16 %v5907
    %v6681 = vunpack.c.l.b16 %v5908
    %v6682 = vunpack.c.h.b16 %v5908
    %v6683 = vunpack.c.l.b16 %v5909
    %v6684 = vunpack.c.h.b16 %v5909
    %v6685 = vunpack.c.l.b16 %v5910
    %v6686 = vunpack.c.h.b16 %v5910
    %v6687 = vunpack.c.l.b16 %v5911
    %v6688 = vunpack.c.h.b16 %v5911
    %v6689 = vunpack.c.l.b16 %v5912
    %v6690 = vunpack.c.h.b16 %v5912
    %v6691 = vunpack.c.l.b16 %v5913
    %v6692 = vunpack.c.h.b16 %v5913
    %v6693 = vunpack.c.l.b16 %v5914
    %v6694 = vunpack.c.h.b16 %v5914
    %v6695 = vunpack.c.l.b16 %v5915
    %v6696 = vunpack.c.h.b16 %v5915
    %v6697 = vunpack.c.l.b16 %v5916
    %v6698 = vunpack.c.h.b16 %v5916
    %v6699 = vunpack.c.l.b16 %v5917
    %v6700 = vunpack.c.h.b16 %v5917
    %v6701 = vunpack.c.l.b16 %v5918
    %v6702 = vunpack.c.h.b16 %v5918
    %v6703 = vunpack.c.l.b16 %v5919
    %v6704 = vunpack.c.h.b16 %v5919
    %v6705 = vunpack.c.l.b16 %v5920
    %v6706 = vunpack.c.h.b16 %v5920
    %v6707 = vunpack.c.l.b16 %v5921
    %v6708 = vunpack.c.h.b16 %v5921
    %v6709 = vunpack.c.l.b16 %v5922
    %v6710 = vunpack.c.h.b16 %v5922
    %v6711 = vunpack.c.l.b16 %v5923
    %v6712 = vunpack.c.h.b16 %v5923
    %v6713 = vunpack.c.l.b16 %v5924
    %v6714 = vunpack.c.h.b16 %v5924
    %v6715 = vunpack.c.l.b16 %v5925
    %v6716 = vunpack.c.h.b16 %v5925
    %v6717 = vunpack.c.l.b16 %v5926
    %v6718 = vunpack.c.h.b16 %v5926
    %v6719 = vunpack.c.l.b16 %v5927
    %v6720 = vunpack.c.h.b16 %v5927
    %v6721 = vunpack.c.l.b16 %v5928
    %v6722 = vunpack.c.h.b16 %v5928
    %v6723 = vunpack.c.l.b16 %v5929
    %v6724 = vunpack.c.h.b16 %v5929
    %v6725 = vunpack.c.l.b16 %v5930
    %v6726 = vunpack.c.h.b16 %v5930
    %v6727 = vunpack.c.l.b16 %v5931
    %v6728 = vunpack.c.h.b16 %v5931
    %v6729 = vunpack.c.l.b16 %v5932
    %v6730 = vunpack.c.h.b16 %v5932
    %v6731 = vpack.c.b16 %v6223, %v6219
    %v6732 = vpack.c.b16 %v6224, %v6220
    %v6733 = vpack.c.b16 %v6225, %v6221
    %v6734 = vpack.c.b16 %v6226, %v6222
    %v6735 = vpack.c.b16 %v6231, %v6227
    %v6736 = vpack.c.b16 %v6232, %v6228
    %v6737 = vpack.c.b16 %v6233, %v6229
    %v6738 = vpack.c.b16 %v6234, %v6230
    %v6739 = vpack.c.b16 %v6239, %v6235
    %v6740 = vpack.c.b16 %v6240, %v6236
    %v6741 = vpack.c.b16 %v6241, %v6237
    %v6742 = vpack.c.b16 %v6242, %v6238
    %v6743 = vpack.c.b16 %v6247, %v6243
    %v6744 = vpack.c.b16 %v6248, %v6244
    %v6745 = vpack.c.b16 %v6249, %v6245
    %v6746 = vpack.c.b16 %v6250, %v6246
    %v6747 = vpack.c.b16 %v6255, %v6251
    %v6748 = vpack.c.b16 %v6256, %v6252
    %v6749 = vpack.c.b16 %v6257, %v6253
    %v6750 = vpack.c.b16 %v6258, %v6254
    %v6751 = vpack.c.b16 %v6263, %v6259
    %v6752 = vpack.c.b16 %v6264, %v6260
    %v6753 = vpack.c.b16 %v6265, %v6261
    %v6754 = vpack.c.b16 %v6266, %v6262
    %v6755 = vpack.c.b16 %v6271, %v6267
    %v6756 = vpack.c.b16 %v6272, %v6268
    %v6757 = vpack.c.b16 %v6273, %v6269
    %v6758 = vpack.c.b16 %v6274, %v6270
    %v6759 = vpack.c.b16 %v6279, %v6275
    %v6760 = vpack.c.b16 %v6280, %v6276
    %v6761 = vpack.c.b16 %v6281, %v6277
    %v6762 = vpack.c.b16 %v6282, %v6278
    %v6763 = vpack.c.b16 %v6287, %v6283
    %v6764 = vpack.c.b16 %v6288, %v6284
    %v6765 = vpack.c.b16 %v6289, %v6285
    %v6766 = vpack.c.b16 %v6290, %v6286
    %v6767 = vpack.c.b16 %v6295, %v6291
    %v6768 = vpack.c.b16 %v6296, %v6292
    %v6769 = vpack.c.b16 %v6297, %v6293
    %v6770 = vpack.c.b16 %v6298, %v6294
    %v6771 = vpack.c.b16 %v6303, %v6299
    %v6772 = vpack.c.b16 %v6304, %v6300
    %v6773 = vpack.c.b16 %v6305, %v6301
    %v6774 = vpack.c.b16 %v6306, %v6302
    %v6775 = vpack.c.b16 %v6311, %v6307
    %v6776 = vpack.c.b16 %v6312, %v6308
    %v6777 = vpack.c.b16 %v6313, %v6309
    %v6778 = vpack.c.b16 %v6314, %v6310
    %v6779 = vpack.c.b16 %v6319, %v6315
    %v6780 = vpack.c.b16 %v6320, %v6316
    %v6781 = vpack.c.b16 %v6321, %v6317
    %v6782 = vpack.c.b16 %v6322, %v6318
    %v6783 = vpack.c.b16 %v6327, %v6323
    %v6784 = vpack.c.b16 %v6328, %v6324
    %v6785 = vpack.c.b16 %v6329, %v6325
    %v6786 = vpack.c.b16 %v6330, %v6326
    %v6787 = vpack.c.b16 %v6335, %v6331
    %v6788 = vpack.c.b16 %v6336, %v6332
    %v6789 = vpack.c.b16 %v6337, %v6333
    %v6790 = vpack.c.b16 %v6338, %v6334
    %v6791 = vpack.c.b16 %v6343, %v6339
    %v6792 = vpack.c.b16 %v6344, %v6340
    %v6793 = vpack.c.b16 %v6345, %v6341
    %v6794 = vpack.c.b16 %v6346, %v6342
    %v6795 = vpack.c.b16 %v6351, %v6347
    %v6796 = vpack.c.b16 %v6352, %v6348
    %v6797 = vpack.c.b16 %v6353, %v6349
    %v6798 = vpack.c.b16 %v6354, %v6350
    %v6799 = vpack.c.b16 %v6359, %v6355
    %v6800 = vpack.c.b16 %v6360, %v6356
    %v6801 = vpack.c.b16 %v6361, %v6357
    %v6802 = vpack.c.b16 %v6362, %v6358
    %v6803 = vpack.c.b16 %v6367, %v6363
    %v6804 = vpack.c.b16 %v6368, %v6364
    %v6805 = vpack.c.b16 %v6369, %v6365
    %v6806 = vpack.c.b16 %v6370, %v6366
    %v6807 = vpack.c.b16 %v6375, %v6371
    %v6808 = vpack.c.b16 %v6376, %v6372
    %v6809 = vpack.c.b16 %v6377, %v6373
    %v6810 = vpack.c.b16 %v6378, %v6374
    %v6811 = vpack.c.b16 %v6383, %v6379
    %v6812 = vpack.c.b16 %v6384, %v6380
    %v6813 = vpack.c.b16 %v6385, %v6381
    %v6814 = vpack.c.b16 %v6386, %v6382
    %v6815 = vpack.c.b16 %v6391, %v6387
    %v6816 = vpack.c.b16 %v6392, %v6388
    %v6817 = vpack.c.b16 %v6393, %v6389
    %v6818 = vpack.c.b16 %v6394, %v6390
    %v6819 = vpack.c.b16 %v6399, %v6395
    %v6820 = vpack.c.b16 %v6400, %v6396
    %v6821 = vpack.c.b16 %v6401, %v6397
    %v6822 = vpack.c.b16 %v6402, %v6398
    %v6823 = vpack.c.b16 %v6407, %v6403
    %v6824 = vpack.c.b16 %v6408, %v6404
    %v6825 = vpack.c.b16 %v6409, %v6405
    %v6826 = vpack.c.b16 %v6410, %v6406
    %v6827 = vpack.c.b16 %v6415, %v6411
    %v6828 = vpack.c.b16 %v6416, %v6412
    %v6829 = vpack.c.b16 %v6417, %v6413
    %v6830 = vpack.c.b16 %v6418, %v6414
    %v6831 = vpack.c.b16 %v6423, %v6419
    %v6832 = vpack.c.b16 %v6424, %v6420
    %v6833 = vpack.c.b16 %v6425, %v6421
    %v6834 = vpack.c.b16 %v6426, %v6422
    %v6835 = vpack.c.b16 %v6431, %v6427
    %v6836 = vpack.c.b16 %v6432, %v6428
    %v6837 = vpack.c.b16 %v6433, %v6429
    %v6838 = vpack.c.b16 %v6434, %v6430
    %v6839 = vpack.c.b16 %v6439, %v6435
    %v6840 = vpack.c.b16 %v6440, %v6436
    %v6841 = vpack.c.b16 %v6441, %v6437
    %v6842 = vpack.c.b16 %v6442, %v6438
    %v6843 = vpack.c.b16 %v6447, %v6443
    %v6844 = vpack.c.b16 %v6448, %v6444
    %v6845 = vpack.c.b16 %v6449, %v6445
    %v6846 = vpack.c.b16 %v6450, %v6446
    %v6847 = vpack.c.b16 %v6455, %v6451
    %v6848 = vpack.c.b16 %v6456, %v6452
    %v6849 = vpack.c.b16 %v6457, %v6453
    %v6850 = vpack.c.b16 %v6458, %v6454
    %v6851 = vpack.c.b16 %v6463, %v6459
    %v6852 = vpack.c.b16 %v6464, %v6460
    %v6853 = vpack.c.b16 %v6465, %v6461
    %v6854 = vpack.c.b16 %v6466, %v6462
    %v6855 = vpack.c.b16 %v6471, %v6467
    %v6856 = vpack.c.b16 %v6472, %v6468
    %v6857 = vpack.c.b16 %v6473, %v6469
    %v6858 = vpack.c.b16 %v6474, %v6470
    %v6859 = vpack.c.b16 %v6479, %v6475
    %v6860 = vpack.c.b16 %v6480, %v6476
    %v6861 = vpack.c.b16 %v6481, %v6477
    %v6862 = vpack.c.b16 %v6482, %v6478
    %v6863 = vpack.c.b16 %v6487, %v6483
    %v6864 = vpack.c.b16 %v6488, %v6484
    %v6865 = vpack.c.b16 %v6489, %v6485
    %v6866 = vpack.c.b16 %v6490, %v6486
    %v6867 = vpack.c.b16 %v6495, %v6491
    %v6868 = vpack.c.b16 %v6496, %v6492
    %v6869 = vpack.c.b16 %v6497, %v6493
    %v6870 = vpack.c.b16 %v6498, %v6494
    %v6871 = vpack.c.b16 %v6503, %v6499
    %v6872 = vpack.c.b16 %v6504, %v6500
    %v6873 = vpack.c.b16 %v6505, %v6501
    %v6874 = vpack.c.b16 %v6506, %v6502
    %v6875 = vpack.c.b16 %v6511, %v6507
    %v6876 = vpack.c.b16 %v6512, %v6508
    %v6877 = vpack.c.b16 %v6513, %v6509
    %v6878 = vpack.c.b16 %v6514, %v6510
    %v6879 = vpack.c.b16 %v6519, %v6515
    %v6880 = vpack.c.b16 %v6520, %v6516
    %v6881 = vpack.c.b16 %v6521, %v6517
    %v6882 = vpack.c.b16 %v6522, %v6518
    %v6883 = vpack.c.b16 %v6527, %v6523
    %v6884 = vpack.c.b16 %v6528, %v6524
    %v6885 = vpack.c.b16 %v6529, %v6525
    %v6886 = vpack.c.b16 %v6530, %v6526
    %v6887 = vpack.c.b16 %v6535, %v6531
    %v6888 = vpack.c.b16 %v6536, %v6532
    %v6889 = vpack.c.b16 %v6537, %v6533
    %v6890 = vpack.c.b16 %v6538, %v6534
    %v6891 = vpack.c.b16 %v6543, %v6539
    %v6892 = vpack.c.b16 %v6544, %v6540
    %v6893 = vpack.c.b16 %v6545, %v6541
    %v6894 = vpack.c.b16 %v6546, %v6542
    %v6895 = vpack.c.b16 %v6551, %v6547
    %v6896 = vpack.c.b16 %v6552, %v6548
    %v6897 = vpack.c.b16 %v6553, %v6549
    %v6898 = vpack.c.b16 %v6554, %v6550
    %v6899 = vpack.c.b16 %v6559, %v6555
    %v6900 = vpack.c.b16 %v6560, %v6556
    %v6901 = vpack.c.b16 %v6561, %v6557
    %v6902 = vpack.c.b16 %v6562, %v6558
    %v6903 = vpack.c.b16 %v6567, %v6563
    %v6904 = vpack.c.b16 %v6568, %v6564
    %v6905 = vpack.c.b16 %v6569, %v6565
    %v6906 = vpack.c.b16 %v6570, %v6566
    %v6907 = vpack.c.b16 %v6575, %v6571
    %v6908 = vpack.c.b16 %v6576, %v6572
    %v6909 = vpack.c.b16 %v6577, %v6573
    %v6910 = vpack.c.b16 %v6578, %v6574
    %v6911 = vpack.c.b16 %v6583, %v6579
    %v6912 = vpack.c.b16 %v6584, %v6580
    %v6913 = vpack.c.b16 %v6585, %v6581
    %v6914 = vpack.c.b16 %v6586, %v6582
    %v6915 = vpack.c.b16 %v6591, %v6587
    %v6916 = vpack.c.b16 %v6592, %v6588
    %v6917 = vpack.c.b16 %v6593, %v6589
    %v6918 = vpack.c.b16 %v6594, %v6590
    %v6919 = vpack.c.b16 %v6599, %v6595
    %v6920 = vpack.c.b16 %v6600, %v6596
    %v6921 = vpack.c.b16 %v6601, %v6597
    %v6922 = vpack.c.b16 %v6602, %v6598
    %v6923 = vpack.c.b16 %v6607, %v6603
    %v6924 = vpack.c.b16 %v6608, %v6604
    %v6925 = vpack.c.b16 %v6609, %v6605
    %v6926 = vpack.c.b16 %v6610, %v6606
    %v6927 = vpack.c.b16 %v6615, %v6611
    %v6928 = vpack.c.b16 %v6616, %v6612
    %v6929 = vpack.c.b16 %v6617, %v6613
    %v6930 = vpack.c.b16 %v6618, %v6614
    %v6931 = vpack.c.b16 %v6623, %v6619
    %v6932 = vpack.c.b16 %v6624, %v6620
    %v6933 = vpack.c.b16 %v6625, %v6621
    %v6934 = vpack.c.b16 %v6626, %v6622
    %v6935 = vpack.c.b16 %v6631, %v6627
    %v6936 = vpack.c.b16 %v6632, %v6628
    %v6937 = vpack.c.b16 %v6633, %v6629
    %v6938 = vpack.c.b16 %v6634, %v6630
    %v6939 = vpack.c.b16 %v6639, %v6635
    %v6940 = vpack.c.b16 %v6640, %v6636
    %v6941 = vpack.c.b16 %v6641, %v6637
    %v6942 = vpack.c.b16 %v6642, %v6638
    %v6943 = vpack.c.b16 %v6647, %v6643
    %v6944 = vpack.c.b16 %v6648, %v6644
    %v6945 = vpack.c.b16 %v6649, %v6645
    %v6946 = vpack.c.b16 %v6650, %v6646
    %v6947 = vpack.c.b16 %v6655, %v6651
    %v6948 = vpack.c.b16 %v6656, %v6652
    %v6949 = vpack.c.b16 %v6657, %v6653
    %v6950 = vpack.c.b16 %v6658, %v6654
    %v6951 = vpack.c.b16 %v6663, %v6659
    %v6952 = vpack.c.b16 %v6664, %v6660
    %v6953 = vpack.c.b16 %v6665, %v6661
    %v6954 = vpack.c.b16 %v6666, %v6662
    %v6955 = vpack.c.b16 %v6671, %v6667
    %v6956 = vpack.c.b16 %v6672, %v6668
    %v6957 = vpack.c.b16 %v6673, %v6669
    %v6958 = vpack.c.b16 %v6674, %v6670
    %v6959 = vpack.c.b16 %v6679, %v6675
    %v6960 = vpack.c.b16 %v6680, %v6676
    %v6961 = vpack.c.b16 %v6681, %v6677
    %v6962 = vpack.c.b16 %v6682, %v6678
    %v6963 = vpack.c.b16 %v6687, %v6683
    %v6964 = vpack.c.b16 %v6688, %v6684
    %v6965 = vpack.c.b16 %v6689, %v6685
    %v6966 = vpack.c.b16 %v6690, %v6686
    %v6967 = vpack.c.b16 %v6695, %v6691
    %v6968 = vpack.c.b16 %v6696, %v6692
    %v6969 = vpack.c.b16 %v6697, %v6693
    %v6970 = vpack.c.b16 %v6698, %v6694
    %v6971 = vpack.c.b16 %v6703, %v6699
    %v6972 = vpack.c.b16 %v6704, %v6700
    %v6973 = vpack.c.b16 %v6705, %v6701
    %v6974 = vpack.c.b16 %v6706, %v6702
    %v6975 = vpack.c.b16 %v6711, %v6707
    %v6976 = vpack.c.b16 %v6712, %v6708
    %v6977 = vpack.c.b16 %v6713, %v6709
    %v6978 = vpack.c.b16 %v6714, %v6710
    %v6979 = vpack.c.b16 %v6719, %v6715
    %v6980 = vpack.c.b16 %v6720, %v6716
    %v6981 = vpack.c.b16 %v6721, %v6717
    %v6982 = vpack.c.b16 %v6722, %v6718
    %v6983 = vpack.c.b16 %v6727, %v6723
    %v6984 = vpack.c.b16 %v6728, %v6724
    %v6985 = vpack.c.b16 %v6729, %v6725
    %v6986 = vpack.c.b16 %v6730, %v6726
    %7243 = vmatprep.subr.bf16.mxu0 %v6732
    %7244 = vmatpush1.bf16.msra.mxu0 %v6731
    %7245 = vmatprep.subr.bf16.mxu0 %v6736
    %7246 = vmatpush1.bf16.msra.mxu0 %v6735
    %7247 = vmatprep.subr.bf16.mxu0 %v6740
    %7248 = vmatpush1.bf16.msra.mxu0 %v6739
    %7249 = vmatprep.subr.bf16.mxu0 %v6744
    %7250 = vmatpush1.bf16.msra.mxu0 %v6743
    %7251 = vmatprep.subr.bf16.mxu0 %v6748
    %7252 = vmatpush1.bf16.msra.mxu0 %v6747
    %7253 = vmatprep.subr.bf16.mxu0 %v6752
    %7254 = vmatpush1.bf16.msra.mxu0 %v6751
    %7255 = vmatprep.subr.bf16.mxu0 %v6756
    %7256 = vmatpush1.bf16.msra.mxu0 %v6755
    %7257 = vmatprep.subr.bf16.mxu0 %v6760
    %7258 = vmatpush1.bf16.msra.mxu0 %v6759
    %7259 = vmatprep.subr.bf16.mxu0 %v6764
    %7260 = vmatpush1.bf16.msra.mxu0 %v6763
    %7261 = vmatprep.subr.bf16.mxu0 %v6768
    %7262 = vmatpush1.bf16.msra.mxu0 %v6767
    %7263 = vmatprep.subr.bf16.mxu0 %v6772
    %7264 = vmatpush1.bf16.msra.mxu0 %v6771
    %7265 = vmatprep.subr.bf16.mxu0 %v6776
    %7266 = vmatpush1.bf16.msra.mxu0 %v6775
    %7267 = vmatprep.subr.bf16.mxu0 %v6780
    %7268 = vmatpush1.bf16.msra.mxu0 %v6779
    %7269 = vmatprep.subr.bf16.mxu0 %v6784
    %7270 = vmatpush1.bf16.msra.mxu0 %v6783
    %7271 = vmatprep.subr.bf16.mxu0 %v6788
    %7272 = vmatpush1.bf16.msra.mxu0 %v6787
    %7273 = vmatprep.subr.bf16.mxu0 %v6792
    %7274 = vmatpush1.bf16.msra.mxu0 %v6791
    %7275 = vmatprep.mubr.bf16.mxu0 %v5935
    %7276 = vmatmul.mubr.bf16.gmra.mrb[0].mxu0 %v5934
    %v7277 = vpop.f32.mrb[0].mxu0
    %v7278 = vadd.f32 %v5946, %v7277
    %v7279 = vpop.f32.mrb[0].mxu0
    %v7280 = vadd.f32 %v5950, %v7279
    %v7281 = vpop.f32.mrb[0].mxu0
    %v7282 = vpop.f32.mrb[0].mxu0
    %7283 = vdwg.mxu0
    %7284 = vmatprep.subr.bf16.mxu0 %v6796
    %7285 = vmatpush1.bf16.msra.mxu0 %v6795
    %7286 = vmatprep.subr.bf16.mxu0 %v6800
    %7287 = vmatpush1.bf16.msra.mxu0 %v6799
    %7288 = vmatprep.subr.bf16.mxu0 %v6804
    %7289 = vmatpush1.bf16.msra.mxu0 %v6803
    %7290 = vmatprep.subr.bf16.mxu0 %v6808
    %7291 = vmatpush1.bf16.msra.mxu0 %v6807
    %7292 = vmatprep.subr.bf16.mxu0 %v6812
    %7293 = vmatpush1.bf16.msra.mxu0 %v6811
    %7294 = vmatprep.subr.bf16.mxu0 %v6816
    %7295 = vmatpush1.bf16.msra.mxu0 %v6815
    %7296 = vmatprep.subr.bf16.mxu0 %v6820
    %7297 = vmatpush1.bf16.msra.mxu0 %v6819
    %7298 = vmatprep.subr.bf16.mxu0 %v6824
    %7299 = vmatpush1.bf16.msra.mxu0 %v6823
    %7300 = vmatprep.subr.bf16.mxu0 %v6828
    %7301 = vmatpush1.bf16.msra.mxu0 %v6827
    %7302 = vmatprep.subr.bf16.mxu0 %v6832
    %7303 = vmatpush1.bf16.msra.mxu0 %v6831
    %7304 = vmatprep.subr.bf16.mxu0 %v6836
    %7305 = vmatpush1.bf16.msra.mxu0 %v6835
    %7306 = vmatprep.subr.bf16.mxu0 %v6840
    %7307 = vmatpush1.bf16.msra.mxu0 %v6839
    %7308 = vmatprep.subr.bf16.mxu0 %v6844
    %7309 = vmatpush1.bf16.msra.mxu0 %v6843
    %7310 = vmatprep.subr.bf16.mxu0 %v6848
    %7311 = vmatpush1.bf16.msra.mxu0 %v6847
    %7312 = vmatprep.subr.bf16.mxu0 %v6852
    %7313 = vmatpush1.bf16.msra.mxu0 %v6851
    %7314 = vmatprep.subr.bf16.mxu0 %v6856
    %7315 = vmatpush1.bf16.msra.mxu0 %v6855
    %7316 = vmatprep.mubr.bf16.mxu0 %v5937
    %7317 = vmatmul.mubr.bf16.gmra.mrb[0].mxu0 %v5936
    %v7318 = vpop.f32.mrb[0].mxu0
    %v7319 = vadd.f32 %v7278, %v7318
    %v7320 = vpop.f32.mrb[0].mxu0
    %v7321 = vadd.f32 %v7280, %v7320
    %v7322 = vpop.f32.mrb[0].mxu0
    %v7323 = vpop.f32.mrb[0].mxu0
    %7324 = vdwg.mxu0
    %7325 = vmatprep.subr.bf16.mxu0 %v6860
    %7326 = vmatpush1.bf16.msra.mxu0 %v6859
    %7327 = vmatprep.subr.bf16.mxu0 %v6864
    %7328 = vmatpush1.bf16.msra.mxu0 %v6863
    %7329 = vmatprep.subr.bf16.mxu0 %v6868
    %7330 = vmatpush1.bf16.msra.mxu0 %v6867
    %7331 = vmatprep.subr.bf16.mxu0 %v6872
    %7332 = vmatpush1.bf16.msra.mxu0 %v6871
    %7333 = vmatprep.subr.bf16.mxu0 %v6876
    %7334 = vmatpush1.bf16.msra.mxu0 %v6875
    %7335 = vmatprep.subr.bf16.mxu0 %v6880
    %7336 = vmatpush1.bf16.msra.mxu0 %v6879
    %7337 = vmatprep.subr.bf16.mxu0 %v6884
    %7338 = vmatpush1.bf16.msra.mxu0 %v6883
    %7339 = vmatprep.subr.bf16.mxu0 %v6888
    %7340 = vmatpush1.bf16.msra.mxu0 %v6887
    %7341 = vmatprep.subr.bf16.mxu0 %v6892
    %7342 = vmatpush1.bf16.msra.mxu0 %v6891
    %7343 = vmatprep.subr.bf16.mxu0 %v6896
    %7344 = vmatpush1.bf16.msra.mxu0 %v6895
    %7345 = vmatprep.subr.bf16.mxu0 %v6900
    %7346 = vmatpush1.bf16.msra.mxu0 %v6899
    %7347 = vmatprep.subr.bf16.mxu0 %v6904
    %7348 = vmatpush1.bf16.msra.mxu0 %v6903
    %7349 = vmatprep.subr.bf16.mxu0 %v6908
    %7350 = vmatpush1.bf16.msra.mxu0 %v6907
    %7351 = vmatprep.subr.bf16.mxu0 %v6912
    %7352 = vmatpush1.bf16.msra.mxu0 %v6911
    %7353 = vmatprep.subr.bf16.mxu0 %v6916
    %7354 = vmatpush1.bf16.msra.mxu0 %v6915
    %7355 = vmatprep.subr.bf16.mxu0 %v6920
    %7356 = vmatpush1.bf16.msra.mxu0 %v6919
    %7357 = vmatprep.mubr.bf16.mxu0 %v5939
    %7358 = vmatmul.mubr.bf16.gmra.mrb[0].mxu0 %v5938
    %v7359 = vpop.f32.mrb[0].mxu0
    %v7360 = vadd.f32 %v7319, %v7359
    %v7361 = vpop.f32.mrb[0].mxu0
    %v7362 = vadd.f32 %v7321, %v7361
    %v7363 = vpop.f32.mrb[0].mxu0
    %v7364 = vpop.f32.mrb[0].mxu0
    %7365 = vdwg.mxu0
    %7366 = vmatprep.subr.bf16.mxu0 %v6924
    %7367 = vmatpush1.bf16.msra.mxu0 %v6923
    %7368 = vmatprep.subr.bf16.mxu0 %v6928
    %7369 = vmatpush1.bf16.msra.mxu0 %v6927
    %7370 = vmatprep.subr.bf16.mxu0 %v6932
    %7371 = vmatpush1.bf16.msra.mxu0 %v6931
    %7372 = vmatprep.subr.bf16.mxu0 %v6936
    %7373 = vmatpush1.bf16.msra.mxu0 %v6935
    %7374 = vmatprep.subr.bf16.mxu0 %v6940
    %7375 = vmatpush1.bf16.msra.mxu0 %v6939
    %7376 = vmatprep.subr.bf16.mxu0 %v6944
    %7377 = vmatpush1.bf16.msra.mxu0 %v6943
    %7378 = vmatprep.subr.bf16.mxu0 %v6948
    %7379 = vmatpush1.bf16.msra.mxu0 %v6947
    %7380 = vmatprep.subr.bf16.mxu0 %v6952
    %7381 = vmatpush1.bf16.msra.mxu0 %v6951
    %7382 = vmatprep.subr.bf16.mxu0 %v6956
    %7383 = vmatpush1.bf16.msra.mxu0 %v6955
    %7384 = vmatprep.subr.bf16.mxu0 %v6960
    %7385 = vmatpush1.bf16.msra.mxu0 %v6959
    %7386 = vmatprep.subr.bf16.mxu0 %v6964
    %7387 = vmatpush1.bf16.msra.mxu0 %v6963
    %7388 = vmatprep.subr.bf16.mxu0 %v6968
    %7389 = vmatpush1.bf16.msra.mxu0 %v6967
    %7390 = vmatprep.subr.bf16.mxu0 %v6972
    %7391 = vmatpush1.bf16.msra.mxu0 %v6971
    %7392 = vmatprep.subr.bf16.mxu0 %v6976
    %7393 = vmatpush1.bf16.msra.mxu0 %v6975
    %7394 = vmatprep.subr.bf16.mxu0 %v6980
    %7395 = vmatpush1.bf16.msra.mxu0 %v6979
    %7396 = vmatprep.subr.bf16.mxu0 %v6984
    %7397 = vmatpush1.bf16.msra.mxu0 %v6983
    %7398 = vmatprep.mubr.bf16.mxu0 %v5941
    %7399 = vmatmul.mubr.bf16.gmra.mrb[0].mxu0 %v5940
    %v7400 = vpop.f32.mrb[0].mxu0
    %v7401 = vadd.f32 %v7360, %v7400
    %v7402 = vpop.f32.mrb[0].mxu0
    %v7403 = vadd.f32 %v7362, %v7402
    %v7404 = vpop.f32.mrb[0].mxu0
    %v7405 = vpop.f32.mrb[0].mxu0
    %7406 = vdwg.mxu0
    %7407 = vmatprep.subr.bf16.mxu0 %v6734
    %7408 = vmatpush1.bf16.msra.mxu0 %v6733
    %7409 = vmatprep.subr.bf16.mxu0 %v6738
    %7410 = vmatpush1.bf16.msra.mxu0 %v6737
    %7411 = vmatprep.subr.bf16.mxu0 %v6742
    %7412 = vmatpush1.bf16.msra.mxu0 %v6741
    %7413 = vmatprep.subr.bf16.mxu0 %v6746
    %7414 = vmatpush1.bf16.msra.mxu0 %v6745
    %7415 = vmatprep.subr.bf16.mxu0 %v6750
    %7416 = vmatpush1.bf16.msra.mxu0 %v6749
    %7417 = vmatprep.subr.bf16.mxu0 %v6754
    %7418 = vmatpush1.bf16.msra.mxu0 %v6753
    %7419 = vmatprep.subr.bf16.mxu0 %v6758
    %7420 = vmatpush1.bf16.msra.mxu0 %v6757
    %7421 = vmatprep.subr.bf16.mxu0 %v6762
    %7422 = vmatpush1.bf16.msra.mxu0 %v6761
    %7423 = vmatprep.subr.bf16.mxu0 %v6766
    %7424 = vmatpush1.bf16.msra.mxu0 %v6765
    %7425 = vmatprep.subr.bf16.mxu0 %v6770
    %7426 = vmatpush1.bf16.msra.mxu0 %v6769
    %7427 = vmatprep.subr.bf16.mxu0 %v6774
    %7428 = vmatpush1.bf16.msra.mxu0 %v6773
    %7429 = vmatprep.subr.bf16.mxu0 %v6778
    %7430 = vmatpush1.bf16.msra.mxu0 %v6777
    %7431 = vmatprep.subr.bf16.mxu0 %v6782
    %7432 = vmatpush1.bf16.msra.mxu0 %v6781
    %7433 = vmatprep.subr.bf16.mxu0 %v6786
    %7434 = vmatpush1.bf16.msra.mxu0 %v6785
    %7435 = vmatprep.subr.bf16.mxu0 %v6790
    %7436 = vmatpush1.bf16.msra.mxu0 %v6789
    %7437 = vmatprep.subr.bf16.mxu0 %v6794
    %7438 = vmatpush1.bf16.msra.mxu0 %v6793
    %7439 = vmatprep.mubr.bf16.mxu0 %v5935
    %7440 = vmatmul.mubr.bf16.gmra.mrb[0].mxu0 %v5934
    %v7441 = vpop.f32.mrb[0].mxu0
    %v7442 = vadd.f32 %v5954, %v7441
    %v7443 = vpop.f32.mrb[0].mxu0
    %v7444 = vadd.f32 %v5958, %v7443
    %v7445 = vpop.f32.mrb[0].mxu0
    %v7446 = vpop.f32.mrb[0].mxu0
    %7447 = vdwg.mxu0
    %7448 = vmatprep.subr.bf16.mxu0 %v6798
    %7449 = vmatpush1.bf16.msra.mxu0 %v6797
    %7450 = vmatprep.subr.bf16.mxu0 %v6802
    %7451 = vmatpush1.bf16.msra.mxu0 %v6801
    %7452 = vmatprep.subr.bf16.mxu0 %v6806
    %7453 = vmatpush1.bf16.msra.mxu0 %v6805
    %7454 = vmatprep.subr.bf16.mxu0 %v6810
    %7455 = vmatpush1.bf16.msra.mxu0 %v6809
    %7456 = vmatprep.subr.bf16.mxu0 %v6814
    %7457 = vmatpush1.bf16.msra.mxu0 %v6813
    %7458 = vmatprep.subr.bf16.mxu0 %v6818
    %7459 = vmatpush1.bf16.msra.mxu0 %v6817
    %7460 = vmatprep.subr.bf16.mxu0 %v6822
    %7461 = vmatpush1.bf16.msra.mxu0 %v6821
    %7462 = vmatprep.subr.bf16.mxu0 %v6826
    %7463 = vmatpush1.bf16.msra.mxu0 %v6825
    %7464 = vmatprep.subr.bf16.mxu0 %v6830
    %7465 = vmatpush1.bf16.msra.mxu0 %v6829
    %7466 = vmatprep.subr.bf16.mxu0 %v6834
    %7467 = vmatpush1.bf16.msra.mxu0 %v6833
    %7468 = vmatprep.subr.bf16.mxu0 %v6838
    %7469 = vmatpush1.bf16.msra.mxu0 %v6837
    %7470 = vmatprep.subr.bf16.mxu0 %v6842
    %7471 = vmatpush1.bf16.msra.mxu0 %v6841
    %7472 = vmatprep.subr.bf16.mxu0 %v6846
    %7473 = vmatpush1.bf16.msra.mxu0 %v6845
    %7474 = vmatprep.subr.bf16.mxu0 %v6850
    %7475 = vmatpush1.bf16.msra.mxu0 %v6849
    %7476 = vmatprep.subr.bf16.mxu0 %v6854
    %7477 = vmatpush1.bf16.msra.mxu0 %v6853
    %7478 = vmatprep.subr.bf16.mxu0 %v6858
    %7479 = vmatpush1.bf16.msra.mxu0 %v6857
    %7480 = vmatprep.mubr.bf16.mxu0 %v5937
    %7481 = vmatmul.mubr.bf16.gmra.mrb[0].mxu0 %v5936
    %v7482 = vpop.f32.mrb[0].mxu0
    %v7483 = vadd.f32 %v7442, %v7482
    %v7484 = vpop.f32.mrb[0].mxu0
    %v7485 = vadd.f32 %v7444, %v7484
    %v7486 = vpop.f32.mrb[0].mxu0
    %v7487 = vpop.f32.mrb[0].mxu0
    %7488 = vdwg.mxu0
    %7489 = vmatprep.subr.bf16.mxu0 %v6862
    %7490 = vmatpush1.bf16.msra.mxu0 %v6861
    %7491 = vmatprep.subr.bf16.mxu0 %v6866
    %7492 = vmatpush1.bf16.msra.mxu0 %v6865
    %7493 = vmatprep.subr.bf16.mxu0 %v6870
    %7494 = vmatpush1.bf16.msra.mxu0 %v6869
    %7495 = vmatprep.subr.bf16.mxu0 %v6874
    %7496 = vmatpush1.bf16.msra.mxu0 %v6873
    %7497 = vmatprep.subr.bf16.mxu0 %v6878
    %7498 = vmatpush1.bf16.msra.mxu0 %v6877
    %7499 = vmatprep.subr.bf16.mxu0 %v6882
    %7500 = vmatpush1.bf16.msra.mxu0 %v6881
    %7501 = vmatprep.subr.bf16.mxu0 %v6886
    %7502 = vmatpush1.bf16.msra.mxu0 %v6885
    %7503 = vmatprep.subr.bf16.mxu0 %v6890
    %7504 = vmatpush1.bf16.msra.mxu0 %v6889
    %7505 = vmatprep.subr.bf16.mxu0 %v6894
    %7506 = vmatpush1.bf16.msra.mxu0 %v6893
    %7507 = vmatprep.subr.bf16.mxu0 %v6898
    %7508 = vmatpush1.bf16.msra.mxu0 %v6897
    %7509 = vmatprep.subr.bf16.mxu0 %v6902
    %7510 = vmatpush1.bf16.msra.mxu0 %v6901
    %7511 = vmatprep.subr.bf16.mxu0 %v6906
    %7512 = vmatpush1.bf16.msra.mxu0 %v6905
    %7513 = vmatprep.subr.bf16.mxu0 %v6910
    %7514 = vmatpush1.bf16.msra.mxu0 %v6909
    %7515 = vmatprep.subr.bf16.mxu0 %v6914
    %7516 = vmatpush1.bf16.msra.mxu0 %v6913
    %7517 = vmatprep.subr.bf16.mxu0 %v6918
    %7518 = vmatpush1.bf16.msra.mxu0 %v6917
    %7519 = vmatprep.subr.bf16.mxu0 %v6922
    %7520 = vmatpush1.bf16.msra.mxu0 %v6921
    %7521 = vmatprep.mubr.bf16.mxu0 %v5939
    %7522 = vmatmul.mubr.bf16.gmra.mrb[0].mxu0 %v5938
    %v7523 = vpop.f32.mrb[0].mxu0
    %v7524 = vadd.f32 %v7483, %v7523
    %v7525 = vpop.f32.mrb[0].mxu0
    %v7526 = vadd.f32 %v7485, %v7525
    %v7527 = vpop.f32.mrb[0].mxu0
    %v7528 = vpop.f32.mrb[0].mxu0
    %7529 = vdwg.mxu0
    %7530 = vmatprep.subr.bf16.mxu0 %v6926
    %7531 = vmatpush1.bf16.msra.mxu0 %v6925
    %7532 = vmatprep.subr.bf16.mxu0 %v6930
    %7533 = vmatpush1.bf16.msra.mxu0 %v6929
    %7534 = vmatprep.subr.bf16.mxu0 %v6934
    %7535 = vmatpush1.bf16.msra.mxu0 %v6933
    %7536 = vmatprep.subr.bf16.mxu0 %v6938
    %7537 = vmatpush1.bf16.msra.mxu0 %v6937
    %7538 = vmatprep.subr.bf16.mxu0 %v6942
    %7539 = vmatpush1.bf16.msra.mxu0 %v6941
    %7540 = vmatprep.subr.bf16.mxu0 %v6946
    %7541 = vmatpush1.bf16.msra.mxu0 %v6945
    %7542 = vmatprep.subr.bf16.mxu0 %v6950
    %7543 = vmatpush1.bf16.msra.mxu0 %v6949
    %7544 = vmatprep.subr.bf16.mxu0 %v6954
    %7545 = vmatpush1.bf16.msra.mxu0 %v6953
    %7546 = vmatprep.subr.bf16.mxu0 %v6958
    %7547 = vmatpush1.bf16.msra.mxu0 %v6957
    %7548 = vmatprep.subr.bf16.mxu0 %v6962
    %7549 = vmatpush1.bf16.msra.mxu0 %v6961
    %7550 = vmatprep.subr.bf16.mxu0 %v6966
    %7551 = vmatpush1.bf16.msra.mxu0 %v6965
    %7552 = vmatprep.subr.bf16.mxu0 %v6970
    %7553 = vmatpush1.bf16.msra.mxu0 %v6969
    %7554 = vmatprep.subr.bf16.mxu0 %v6974
    %7555 = vmatpush1.bf16.msra.mxu0 %v6973
    %7556 = vmatprep.subr.bf16.mxu0 %v6978
    %7557 = vmatpush1.bf16.msra.mxu0 %v6977
    %7558 = vmatprep.subr.bf16.mxu0 %v6982
    %7559 = vmatpush1.bf16.msra.mxu0 %v6981
    %7560 = vmatprep.subr.bf16.mxu0 %v6986
    %7561 = vmatpush1.bf16.msra.mxu0 %v6985
    %7562 = vmatprep.mubr.bf16.mxu0 %v5941
    %7563 = vmatmul.mubr.bf16.gmra.mrb[0].mxu0 %v5940
    %v7564 = vpop.f32.mrb[0].mxu0
    %v7565 = vadd.f32 %v7524, %v7564
    %v7566 = vpop.f32.mrb[0].mxu0
    %v7567 = vadd.f32 %v7526, %v7566
    %v7568 = vpop.f32.mrb[0].mxu0
    %v7569 = vpop.f32.mrb[0].mxu0
    %7570 = vdwg.mxu0
    %v7571 = vmax.f32 %v7401, 0.0
    %v7572 = vmax.f32 %v7403, 0.0
    %v7573 = vmax.f32 %v7565, 0.0
    %v7574 = vmax.f32 %v7567, 0.0
    %v7575 = vld [vmem:[#allocation14] sm:$0xf]
    %v7576 = vld [vmem:[#allocation14 + $0x4] sm:$0xf]
    %v7577 = vld [vmem:[#allocation14 + $0x8] sm:$0xf]
    %v7578 = vld [vmem:[#allocation14 + $0xc] sm:$0xf]
    %v7579 = vld [vmem:[#allocation14 + $0x10] sm:$0xf]
    %v7580 = vld [vmem:[#allocation14 + $0x14] sm:$0xf]
    %v7581 = vld [vmem:[#allocation14 + $0x18] sm:$0xf]
    %v7582 = vld [vmem:[#allocation14 + $0x1c] sm:$0xf]
    %v7583 = vld [vmem:[#allocation14 + $0x20] sm:$0xf]
    %v7584 = vld [vmem:[#allocation14 + $0x24] sm:$0xf]
    %v7585 = vld [vmem:[#allocation14 + $0x28] sm:$0xf]
    %v7586 = vld [vmem:[#allocation14 + $0x2c] sm:$0xf]
    %v7587 = vld [vmem:[#allocation14 + $0x30] sm:$0xf]
    %v7588 = vld [vmem:[#allocation14 + $0x34] sm:$0xf]
    %v7589 = vld [vmem:[#allocation14 + $0x38] sm:$0xf]
    %v7590 = vld [vmem:[#allocation14 + $0x3c] sm:$0xf]
    %v7591 = vld [vmem:[#allocation14 + $0x40] sm:$0xf]
    %v7592 = vld [vmem:[#allocation14 + $0x44] sm:$0xf]
    %v7593 = vld [vmem:[#allocation14 + $0x48] sm:$0xf]
    %v7594 = vld [vmem:[#allocation14 + $0x4c] sm:$0xf]
    %v7595 = vld [vmem:[#allocation14 + $0x50] sm:$0xf]
    %v7596 = vld [vmem:[#allocation14 + $0x54] sm:$0xf]
    %v7597 = vld [vmem:[#allocation14 + $0x58] sm:$0xf]
    %v7598 = vld [vmem:[#allocation14 + $0x5c] sm:$0xf]
    %v7599 = vld [vmem:[#allocation14 + $0x60] sm:$0xf]
    %v7600 = vld [vmem:[#allocation14 + $0x64] sm:$0xf]
    %v7601 = vld [vmem:[#allocation14 + $0x68] sm:$0xf]
    %v7602 = vld [vmem:[#allocation14 + $0x6c] sm:$0xf]
    %v7603 = vld [vmem:[#allocation14 + $0x70] sm:$0xf]
    %v7604 = vld [vmem:[#allocation14 + $0x74] sm:$0xf]
    %v7605 = vld [vmem:[#allocation14 + $0x78] sm:$0xf]
    %v7606 = vld [vmem:[#allocation14 + $0x7c] sm:$0xf]
    %v7607 = vld [vmem:[#allocation14 + $0x80] sm:$0xf]
    %v7608 = vld [vmem:[#allocation14 + $0x84] sm:$0xf]
    %v7609 = vld [vmem:[#allocation14 + $0x88] sm:$0xf]
    %v7610 = vld [vmem:[#allocation14 + $0x8c] sm:$0xf]
    %v7611 = vld [vmem:[#allocation14 + $0x90] sm:$0xf]
    %v7612 = vld [vmem:[#allocation14 + $0x94] sm:$0xf]
    %v7613 = vld [vmem:[#allocation14 + $0x98] sm:$0xf]
    %v7614 = vld [vmem:[#allocation14 + $0x9c] sm:$0xf]
    %v7615 = vld [vmem:[#allocation14 + $0xa0] sm:$0xf]
    %v7616 = vld [vmem:[#allocation14 + $0xa4] sm:$0xf]
    %v7617 = vld [vmem:[#allocation14 + $0xa8] sm:$0xf]
    %v7618 = vld [vmem:[#allocation14 + $0xac] sm:$0xf]
    %v7619 = vld [vmem:[#allocation14 + $0xb0] sm:$0xf]
    %v7620 = vld [vmem:[#allocation14 + $0xb4] sm:$0xf]
    %v7621 = vld [vmem:[#allocation14 + $0xb8] sm:$0xf]
    %v7622 = vld [vmem:[#allocation14 + $0xbc] sm:$0xf]
    %v7623 = vld [vmem:[#allocation14 + $0xc0] sm:$0xf]
    %v7624 = vld [vmem:[#allocation14 + $0xc4] sm:$0xf]
    %v7625 = vld [vmem:[#allocation14 + $0xc8] sm:$0xf]
    %v7626 = vld [vmem:[#allocation14 + $0xcc] sm:$0xf]
    %v7627 = vld [vmem:[#allocation14 + $0xd0] sm:$0xf]
    %v7628 = vld [vmem:[#allocation14 + $0xd4] sm:$0xf]
    %v7629 = vld [vmem:[#allocation14 + $0xd8] sm:$0xf]
    %v7630 = vld [vmem:[#allocation14 + $0xdc] sm:$0xf]
    %v7631 = vld [vmem:[#allocation14 + $0xe0] sm:$0xf]
    %v7632 = vld [vmem:[#allocation14 + $0xe4] sm:$0xf]
    %v7633 = vld [vmem:[#allocation14 + $0xe8] sm:$0xf]
    %v7634 = vld [vmem:[#allocation14 + $0xec] sm:$0xf]
    %v7635 = vld [vmem:[#allocation14 + $0xf0] sm:$0xf]
    %v7636 = vld [vmem:[#allocation14 + $0xf4] sm:$0xf]
    %v7637 = vld [vmem:[#allocation14 + $0xf8] sm:$0xf]
    %v7638 = vld [vmem:[#allocation14 + $0xfc] sm:$0xf]
    %v7639 = vld [vmem:[#allocation16] sm:$0x1]
    %v7640 = vpack.c.bf16 %v7571, %v7571
    %v7641 = vpack.c.bf16 %v7572, %v7572
    %v7642 = vpack.c.bf16 %v7573, %v7573
    %v7643 = vpack.c.bf16 %v7574, %v7574
    %v7645 = vlaneseq
    %v7646 = vshrl.u32 %v7645, 7
    %v7647 = vsub.s32 0, %v7646
    %v7648 = vrot.slane %v7639, %v7647
    %v7714 = vunpack.c.l.b16 %v7575
    %v7715 = vunpack.c.l.b16 %v7576
    %v7716 = vunpack.c.l.b16 %v7577
    %v7717 = vunpack.c.l.b16 %v7578
    %v7718 = vunpack.c.l.b16 %v7579
    %v7719 = vunpack.c.l.b16 %v7580
    %v7720 = vunpack.c.l.b16 %v7581
    %v7721 = vunpack.c.l.b16 %v7582
    %v7722 = vunpack.c.l.b16 %v7583
    %v7723 = vunpack.c.l.b16 %v7584
    %v7724 = vunpack.c.l.b16 %v7585
    %v7725 = vunpack.c.l.b16 %v7586
    %v7726 = vunpack.c.l.b16 %v7587
    %v7727 = vunpack.c.l.b16 %v7588
    %v7728 = vunpack.c.l.b16 %v7589
    %v7729 = vunpack.c.l.b16 %v7590
    %v7730 = vunpack.c.l.b16 %v7591
    %v7731 = vunpack.c.l.b16 %v7592
    %v7732 = vunpack.c.l.b16 %v7593
    %v7733 = vunpack.c.l.b16 %v7594
    %v7734 = vunpack.c.l.b16 %v7595
    %v7735 = vunpack.c.l.b16 %v7596
    %v7736 = vunpack.c.l.b16 %v7597
    %v7737 = vunpack.c.l.b16 %v7598
    %v7738 = vunpack.c.l.b16 %v7599
    %v7739 = vunpack.c.l.b16 %v7600
    %v7740 = vunpack.c.l.b16 %v7601
    %v7741 = vunpack.c.l.b16 %v7602
    %v7742 = vunpack.c.l.b16 %v7603
    %v7743 = vunpack.c.l.b16 %v7604
    %v7744 = vunpack.c.l.b16 %v7605
    %v7745 = vunpack.c.l.b16 %v7606
    %v7746 = vunpack.c.l.b16 %v7607
    %v7747 = vunpack.c.l.b16 %v7608
    %v7748 = vunpack.c.l.b16 %v7609
    %v7749 = vunpack.c.l.b16 %v7610
    %v7750 = vunpack.c.l.b16 %v7611
    %v7751 = vunpack.c.l.b16 %v7612
    %v7752 = vunpack.c.l.b16 %v7613
    %v7753 = vunpack.c.l.b16 %v7614
    %v7754 = vunpack.c.l.b16 %v7615
    %v7755 = vunpack.c.l.b16 %v7616
    %v7756 = vunpack.c.l.b16 %v7617
    %v7757 = vunpack.c.l.b16 %v7618
    %v7758 = vunpack.c.l.b16 %v7619
    %v7759 = vunpack.c.l.b16 %v7620
    %v7760 = vunpack.c.l.b16 %v7621
    %v7761 = vunpack.c.l.b16 %v7622
    %v7762 = vunpack.c.l.b16 %v7623
    %v7763 = vunpack.c.l.b16 %v7624
    %v7764 = vunpack.c.l.b16 %v7625
    %v7765 = vunpack.c.l.b16 %v7626
    %v7766 = vunpack.c.l.b16 %v7627
    %v7767 = vunpack.c.l.b16 %v7628
    %v7768 = vunpack.c.l.b16 %v7629
    %v7769 = vunpack.c.l.b16 %v7630
    %v7770 = vunpack.c.l.b16 %v7631
    %v7771 = vunpack.c.l.b16 %v7632
    %v7772 = vunpack.c.l.b16 %v7633
    %v7773 = vunpack.c.l.b16 %v7634
    %v7774 = vunpack.c.l.b16 %v7635
    %v7775 = vunpack.c.l.b16 %v7636
    %v7776 = vunpack.c.l.b16 %v7637
    %v7777 = vunpack.c.l.b16 %v7638
    %v7778 = vpack.c.b16 %v7715, %v7714
    %v7779 = vpack.c.b16 %v7717, %v7716
    %v7780 = vpack.c.b16 %v7719, %v7718
    %v7781 = vpack.c.b16 %v7721, %v7720
    %v7782 = vpack.c.b16 %v7723, %v7722
    %v7783 = vpack.c.b16 %v7725, %v7724
    %v7784 = vpack.c.b16 %v7727, %v7726
    %v7785 = vpack.c.b16 %v7729, %v7728
    %v7786 = vpack.c.b16 %v7731, %v7730
    %v7787 = vpack.c.b16 %v7733, %v7732
    %v7788 = vpack.c.b16 %v7735, %v7734
    %v7789 = vpack.c.b16 %v7737, %v7736
    %v7790 = vpack.c.b16 %v7739, %v7738
    %v7791 = vpack.c.b16 %v7741, %v7740
    %v7792 = vpack.c.b16 %v7743, %v7742
    %v7793 = vpack.c.b16 %v7745, %v7744
    %v7794 = vpack.c.b16 %v7747, %v7746
    %v7795 = vpack.c.b16 %v7749, %v7748
    %v7796 = vpack.c.b16 %v7751, %v7750
    %v7797 = vpack.c.b16 %v7753, %v7752
    %v7798 = vpack.c.b16 %v7755, %v7754
    %v7799 = vpack.c.b16 %v7757, %v7756
    %v7800 = vpack.c.b16 %v7759, %v7758
    %v7801 = vpack.c.b16 %v7761, %v7760
    %v7802 = vpack.c.b16 %v7763, %v7762
    %v7803 = vpack.c.b16 %v7765, %v7764
    %v7804 = vpack.c.b16 %v7767, %v7766
    %v7805 = vpack.c.b16 %v7769, %v7768
    %v7806 = vpack.c.b16 %v7771, %v7770
    %v7807 = vpack.c.b16 %v7773, %v7772
    %v7808 = vpack.c.b16 %v7775, %v7774
    %v7809 = vpack.c.b16 %v7777, %v7776
    %7842 = vmatprep.subr.bf16.mxu0 0
    %7843 = vmatpush1.bf16.msra.mxu0 %v7778
    %7844 = vmatprep.subr.bf16.mxu0 0
    %7845 = vmatpush1.bf16.msra.mxu0 %v7779
    %7846 = vmatprep.subr.bf16.mxu0 0
    %7847 = vmatpush1.bf16.msra.mxu0 %v7780
    %7848 = vmatprep.subr.bf16.mxu0 0
    %7849 = vmatpush1.bf16.msra.mxu0 %v7781
    %7850 = vmatprep.subr.bf16.mxu0 0
    %7851 = vmatpush1.bf16.msra.mxu0 %v7782
    %7852 = vmatprep.subr.bf16.mxu0 0
    %7853 = vmatpush1.bf16.msra.mxu0 %v7783
    %7854 = vmatprep.subr.bf16.mxu0 0
    %7855 = vmatpush1.bf16.msra.mxu0 %v7784
    %7856 = vmatprep.subr.bf16.mxu0 0
    %7857 = vmatpush1.bf16.msra.mxu0 %v7785
    %7858 = vmatprep.subr.bf16.mxu0 0
    %7859 = vmatpush1.bf16.msra.mxu0 %v7786
    %7860 = vmatprep.subr.bf16.mxu0 0
    %7861 = vmatpush1.bf16.msra.mxu0 %v7787
    %7862 = vmatprep.subr.bf16.mxu0 0
    %7863 = vmatpush1.bf16.msra.mxu0 %v7788
    %7864 = vmatprep.subr.bf16.mxu0 0
    %7865 = vmatpush1.bf16.msra.mxu0 %v7789
    %7866 = vmatprep.subr.bf16.mxu0 0
    %7867 = vmatpush1.bf16.msra.mxu0 %v7790
    %7868 = vmatprep.subr.bf16.mxu0 0
    %7869 = vmatpush1.bf16.msra.mxu0 %v7791
    %7870 = vmatprep.subr.bf16.mxu0 0
    %7871 = vmatpush1.bf16.msra.mxu0 %v7792
    %7872 = vmatprep.subr.bf16.mxu0 0
    %7873 = vmatpush1.bf16.msra.mxu0 %v7793
    %7874 = vmatprep.mubr.bf16.mxu0 %v7641
    %7875 = vmatmul.mubr.bf16.gmra.mrb[0].mxu0 %v7640
    %v7876 = vpop.f32.mrb[0].mxu0
    %v7877 = vadd.f32 %v7648, %v7876
    %v7878 = vpop.f32.mrb[0].mxu0
    %v7879 = vpop.f32.mrb[0].mxu0
    %v7880 = vpop.f32.mrb[0].mxu0
    %7881 = vdwg.mxu0
    %7882 = vmatprep.subr.bf16.mxu0 0
    %7883 = vmatpush1.bf16.msra.mxu0 %v7794
    %7884 = vmatprep.subr.bf16.mxu0 0
    %7885 = vmatpush1.bf16.msra.mxu0 %v7795
    %7886 = vmatprep.subr.bf16.mxu0 0
    %7887 = vmatpush1.bf16.msra.mxu0 %v7796
    %7888 = vmatprep.subr.bf16.mxu0 0
    %7889 = vmatpush1.bf16.msra.mxu0 %v7797
    %7890 = vmatprep.subr.bf16.mxu0 0
    %7891 = vmatpush1.bf16.msra.mxu0 %v7798
    %7892 = vmatprep.subr.bf16.mxu0 0
    %7893 = vmatpush1.bf16.msra.mxu0 %v7799
    %7894 = vmatprep.subr.bf16.mxu0 0
    %7895 = vmatpush1.bf16.msra.mxu0 %v7800
    %7896 = vmatprep.subr.bf16.mxu0 0
    %7897 = vmatpush1.bf16.msra.mxu0 %v7801
    %7898 = vmatprep.subr.bf16.mxu0 0
    %7899 = vmatpush1.bf16.msra.mxu0 %v7802
    %7900 = vmatprep.subr.bf16.mxu0 0
    %7901 = vmatpush1.bf16.msra.mxu0 %v7803
    %7902 = vmatprep.subr.bf16.mxu0 0
    %7903 = vmatpush1.bf16.msra.mxu0 %v7804
    %7904 = vmatprep.subr.bf16.mxu0 0
    %7905 = vmatpush1.bf16.msra.mxu0 %v7805
    %7906 = vmatprep.subr.bf16.mxu0 0
    %7907 = vmatpush1.bf16.msra.mxu0 %v7806
    %7908 = vmatprep.subr.bf16.mxu0 0
    %7909 = vmatpush1.bf16.msra.mxu0 %v7807
    %7910 = vmatprep.subr.bf16.mxu0 0
    %7911 = vmatpush1.bf16.msra.mxu0 %v7808
    %7912 = vmatprep.subr.bf16.mxu0 0
    %7913 = vmatpush1.bf16.msra.mxu0 %v7809
    %7914 = vmatprep.mubr.bf16.mxu0 %v7643
    %7915 = vmatmul.mubr.bf16.gmra.mrb[0].mxu0 %v7642
    %v7916 = vpop.f32.mrb[0].mxu0
    %v7917 = vadd.f32 %v7877, %v7916
    %v7918 = vpop.f32.mrb[0].mxu0
    %v7919 = vpop.f32.mrb[0].mxu0
    %v7920 = vpop.f32.mrb[0].mxu0
    %7921 = vdwg.mxu0
    %7922 = vst [vmem:[#allocation17] sm:$0xff] %v7917
    // Predicated region
    $region74: #{improved_pokemon_classifier_forward.3} parent=1 // pred_check
      _
    $region75: #{improved_pokemon_classifier_forward.3} parent=1 // pred_check_branch
      %7924 = sbr.rel (0) target = $region77
    $region76: #{improved_pokemon_classifier_forward.3} parent=1 // pred_region
      %s7926 = ssub.s32 128, 128
      %7927 = vsyncadd [#allocation4], %s7926
      %s7929 = sshll.u32 [#allocation17], 4
      %s7930 = int_to_ptr.vmem [resolvable:$true] %s7929
      %7932 = dma.vmem_to_hbm [thread:$0]  %s7930, 128, %s9, [#allocation4]
    $region77: #{improved_pokemon_classifier_forward.3} parent=1 // pred_fallthru
      _
    // Predicated region
    $region78: #{improved_pokemon_classifier_forward.3} parent=1 // pred_check
      _
    $region79: #{improved_pokemon_classifier_forward.3} parent=1 // pred_check_branch
      %7934 = sbr.rel (0) target = $region81
    $region80: #{improved_pokemon_classifier_forward.3} parent=1 // pred_region
      %7935 = dma.done [#allocation4], 128
    $region81: #{improved_pokemon_classifier_forward.3} parent=1 // pred_fallthru
      _
    %7936 = vsyncpa [#allocation3], 1
    %7937 = vsyncpa [#allocation6], 1
    %7938 = vsyncpa [#allocation9], 1
    %7939 = vsyncpa [#allocation12], 1
    %7940 = vsyncpa [#allocation15], 1
    %7941 = vsyncpa [#allocation4], 1

</llo_original>
